<compile_context>
chip_gen: v7x
topology: tpu7x:2x2x1
jax: 0.10.0
libtpu: 0.0.40
codegen_flags: <defaults>
</compile_context>

<pallas_src>
import functools
import math

import jax
import jax.numpy as jnp
from jax import lax
from jax.experimental import pallas as pl
from jax.experimental.pallas import tpu as pltpu


def _rezero_kernel(rw_ref, x_ref,
                   wq_ref, bq_ref, wk_ref, bk_ref, wv_ref, bv_ref,
                   wo_ref, bo_ref, w1_ref, b1_ref, w2_ref, b2_ref,
                   o_ref, k_sc, v_sc, ctx_sc,
                   *, n_heads, q_tile, k_tile, ffn_tile, scale, compute_dtype):
    f32 = jnp.float32
    cd = compute_dtype
    approx = cd == jnp.bfloat16     # exact reciprocal on the f32 verification path

    S = x_ref.shape[1]
    D = x_ref.shape[2]
    DFF = w1_ref.shape[1]
    dk = D // n_heads
    TQ = q_tile
    TK = k_tile
    NK = S // TK

    qi = pl.program_id(1)

    # ---- K / V projections once per batch element (qi == 0); resident in
    # VMEM scratch across all q-tiles.  K stored transposed (D, S). ----------
    @pl.when(qi == 0)
    def _():
        xf = x_ref[0].astype(cd)                                   # (S, D)
        k = jnp.dot(xf, wk_ref[...], preferred_element_type=f32) + bk_ref[...]
        v = jnp.dot(xf, wv_ref[...], preferred_element_type=f32) + bv_ref[...]
        k_sc[...] = jnp.transpose(k).astype(k_sc.dtype)            # (D, S)
        v_sc[...] = v.astype(v_sc.dtype)                           # (S, D)

    # ---- Residual rows for this q-tile. ------------------------------------
    row0 = pl.multiple_of(qi * TQ, TQ)
    x_q = x_ref[0, pl.ds(row0, TQ), :]                             # (TQ, D) f32

    # ---- Q projection (softmax scale folded into Q). ------------------------
    q = jnp.dot(x_q.astype(cd), wq_ref[...], preferred_element_type=f32)
    q = ((q + bq_ref[...]) * scale).astype(cd)                     # (TQ, D)

    # ---- Flash attention per head.  Head contexts land at lane offset h*dk
    # in ctx_sc; a single full-D output projection follows the head loop. ----
    for h in range(n_heads):
        lo, hi = h * dk, (h + 1) * dk
        q_h = q[:, lo:hi]                                          # (TQ, dk)

        def k_body(kt, carry):
            m_i, l_i, acc = carry
            ks = pl.multiple_of(kt * TK, TK)
            k_blk = k_sc[lo:hi, pl.ds(ks, TK)]                     # (dk, TK) lane-dense
            v_blk = v_sc[pl.ds(ks, TK), lo:hi]                     # (TK, dk)
            s = lax.dot_general(q_h, k_blk, (((1,), (0,)), ((), ())),
                                preferred_element_type=f32)        # (TQ, TK)
            m_new = jnp.maximum(m_i, s.max(axis=-1, keepdims=True))
            alpha = jnp.exp(m_i - m_new)                           # (TQ,1): keep f32
            # Big (TQ,TK) exp in the compute dtype (bf16 EUP ~2x f32 on
            # v6e/v7x); p feeds the PV matmul in that dtype anyway.
            p = jnp.exp((s - m_new).astype(cd))
            l_new = alpha * l_i + jnp.sum(p.astype(f32), axis=-1, keepdims=True)
            acc_new = alpha * acc + jnp.dot(p, v_blk, preferred_element_type=f32)
            return m_new, l_new, acc_new

        carry0 = (jnp.full((TQ, 1), -jnp.inf, f32),
                  jnp.zeros((TQ, 1), f32),
                  jnp.zeros((TQ, dk), f32))
        # Bounded unroll: keep LLO scheduler visibility without code bloat.
        _, l_f, acc_f = lax.fori_loop(0, NK, k_body, carry0,
                                      unroll=min(2, NK))
        ctx = acc_f * pl.reciprocal(l_f, approx=approx)            # (TQ, dk) f32
        ctx_sc[:, lo:hi] = ctx.astype(ctx_sc.dtype)

    # One full-depth (TQ,D)@(D,D) output projection (hoisted out of head loop).
    attn = jnp.dot(ctx_sc[...], wo_ref[...], preferred_element_type=f32)

    rw = rw_ref[0]                                                 # scalar from SMEM
    x1 = x_q + rw * (attn + bo_ref[...])                           # first ReZero residual

    # ---- Position-wise FFN, tiled over d_ff slabs (f32 accumulation). ------
    x1_cd = x1.astype(cd)
    ffn = jnp.zeros((TQ, D), f32)
    for j0 in range(0, DFF, ffn_tile):
        j1 = j0 + ffn_tile
        h1 = jnp.dot(x1_cd, w1_ref[:, j0:j1], preferred_element_type=f32)
        h1 = jnp.maximum(h1 + b1_ref[:, j0:j1], 0.0).astype(cd)
        ffn = ffn + jnp.dot(h1, w2_ref[j0:j1, :], preferred_element_type=f32)

    out = x1 + rw * (ffn + b2_ref[...])                            # second ReZero residual
    o_ref[0] = out.astype(o_ref.dtype)


def _pick_tile(n, target, align):
    """Largest divisor of n that is <= target and a multiple of `align`;
    falls back to n (full dimension, always a legal block dim)."""
    if n <= target:
        return n
    for t in range(target, align - 1, -1):
        if n % t == 0 and t % align == 0:
            return t
    return n


def rezero_transformer_layer(x, params, *, n_heads,
                             compute_dtype=jnp.bfloat16,
                             q_tile=None, k_tile=None, ffn_tile=None):
    """x: (B, S, D) float32.  params: dict of weights (see __main__)."""
    B, S, D = x.shape
    DFF = params["w1"].shape[1]
    assert D % n_heads == 0
    dk = D // n_heads

    TQ = q_tile or _pick_tile(S, 256, 8)        # row tile (q / residual / FFN rows)
    TK = k_tile or _pick_tile(S, 512, 128)      # 128-lane-aligned score tiles
    KF = ffn_tile or _pick_tile(DFF, 512, 128)  # d_ff slab width
    assert S % TQ == 0 and S % TK == 0 and DFF % KF == 0

    cd = compute_dtype
    wcast = lambda name: params[name].astype(cd)

    kernel = functools.partial(
        _rezero_kernel, n_heads=n_heads, q_tile=TQ, k_tile=TK, ffn_tile=KF,
        scale=1.0 / math.sqrt(dk), compute_dtype=cd)

    def build(single_buffer):
        if single_buffer:
            # Constant-index blocks: one pipeline buffer is enough (their index
            # maps never change across the grid, except batch for x).
            const = lambda shape: pl.BlockSpec(
                shape, lambda b, qi: (0,) * len(shape),
                pipeline_mode=pl.Buffered(1))
            x_spec = pl.BlockSpec((1, S, D), lambda b, qi: (b, 0, 0),
                                  pipeline_mode=pl.Buffered(1))
        else:
            const = lambda shape: pl.BlockSpec(
                shape, lambda b, qi: (0,) * len(shape))
            x_spec = pl.BlockSpec((1, S, D), lambda b, qi: (b, 0, 0))

        grid_spec = pltpu.PrefetchScalarGridSpec(
            num_scalar_prefetch=0,
            grid=(B, S // TQ),
            in_specs=[
                pl.BlockSpec(memory_space=pltpu.MemorySpace.SMEM),   # resweight
                x_spec,                                              # x (full seq per batch)
                const((D, D)), const((1, D)),                        # Wq, bq
                const((D, D)), const((1, D)),                        # Wk, bk
                const((D, D)), const((1, D)),                        # Wv, bv
                const((D, D)), const((1, D)),                        # Wo, bo
                const((D, DFF)), const((1, DFF)),                    # W1, b1
                const((DFF, D)), const((1, D)),                      # W2, b2
            ],
            out_specs=pl.BlockSpec((1, TQ, D), lambda b, qi: (b, qi, 0)),
            scratch_shapes=[pltpu.VMEM((D, S), cd),                  # K^T resident
                            pltpu.VMEM((S, D), cd),                  # V resident
                            pltpu.VMEM((TQ, D), cd)],                # per-head contexts
        )

        return pl.pallas_call(
            kernel,
            out_shape=jax.ShapeDtypeStruct((B, S, D), x.dtype),
            grid_spec=grid_spec,
            compiler_params=pltpu.CompilerParams(
                dimension_semantics=("parallel", "arbitrary"),
                # Comfortably below v7x's 64 MiB physical VMEM, with headroom
                # for Mosaic internal scratch; plenty on v5e/v6e (128 MiB).
                vmem_limit_bytes=40 * 1024 * 1024),
        )(params["resweight"], x,
          wcast("wq"), params["bq"], wcast("wk"), params["bk"],
          wcast("wv"), params["bv"], wcast("wo"), params["bo"],
          wcast("w1"), params["b1"], wcast("w2"), params["b2"])

    try:
        return build(single_buffer=True)
    except Exception:
        # pl.Buffered(1) is a VMEM/perf-only optimization; fall back to the
        # default double-buffering if this JAX build rejects it.
        return build(single_buffer=False)


def _reference(x, params, *, n_heads):
    """Pure-JAX f32 reference of the same forward pass (for verification)."""
    rw = params["resweight"][0]
    B, S, D = x.shape
    d_k = D // n_heads

    def attn_one(xb):
        q = xb @ params["wq"] + params["bq"][0]
        k = xb @ params["wk"] + params["bk"][0]
        v = xb @ params["wv"] + params["bv"][0]
        q = q.reshape(S, n_heads, d_k).transpose(1, 0, 2)
        k = k.reshape(S, n_heads, d_k).transpose(1, 0, 2)
        v = v.reshape(S, n_heads, d_k).transpose(1, 0, 2)
        s = jnp.einsum("hqd,hkd->hqk", q, k) / math.sqrt(d_k)
        p = jax.nn.softmax(s, axis=-1)
        o = jnp.einsum("hqk,hkd->hqd", p, v).transpose(1, 0, 2).reshape(S, D)
        return o @ params["wo"] + params["bo"][0]

    a = jax.vmap(attn_one)(x)
    x1 = x + rw * a
    h1 = jnp.maximum(x1 @ params["w1"] + params["b1"][0], 0.0)
    ffn = h1 @ params["w2"] + params["b2"][0]
    return x1 + rw * ffn


if __name__ == "__main__":
    # Small shapes consistent with the module (scaled down from 512/8/2048),
    # chosen layout-friendly for TPU (lane-dense last dims).
    B, S, D, H, DFF = 2, 128, 128, 4, 256

    key = jax.random.PRNGKey(0)
    ks = jax.random.split(key, 13)
    sd = 0.05
    params = {
        "wq": sd * jax.random.normal(ks[0], (D, D), jnp.float32),
        "bq": sd * jax.random.normal(ks[1], (1, D), jnp.float32),
        "wk": sd * jax.random.normal(ks[2], (D, D), jnp.float32),
        "bk": sd * jax.random.normal(ks[3], (1, D), jnp.float32),
        "wv": sd * jax.random.normal(ks[4], (D, D), jnp.float32),
        "bv": sd * jax.random.normal(ks[5], (1, D), jnp.float32),
        "wo": sd * jax.random.normal(ks[6], (D, D), jnp.float32),
        "bo": sd * jax.random.normal(ks[7], (1, D), jnp.float32),
        "w1": sd * jax.random.normal(ks[8], (D, DFF), jnp.float32),
        "b1": sd * jax.random.normal(ks[9], (1, DFF), jnp.float32),
        "w2": sd * jax.random.normal(ks[10], (DFF, D), jnp.float32),
        "b2": sd * jax.random.normal(ks[11], (1, D), jnp.float32),
        # __init__ sets resweight = 0.0; use a nonzero deterministic value so
        # the attention/FFN paths are actually exercised numerically.
        "resweight": jnp.full((1,), 0.1, jnp.float32),
    }

    x = jax.random.normal(ks[12], (B, S, D), jnp.float32)
    with jax.default_matmul_precision("float32"):
        ref = jax.block_until_ready(_reference(x, params, n_heads=H))

    # 1) f32 compute path with small q-tiles: validates the algorithm tightly
    #    and exercises the multi-q-tile / resident-K/V path.
    out_f32 = jax.block_until_ready(
        rezero_transformer_layer(x, params, n_heads=H,
                                 compute_dtype=jnp.float32, q_tile=32))
    assert out_f32.shape == (B, S, D)
    assert jnp.allclose(out_f32, ref, atol=5e-4, rtol=5e-4), "f32 mismatch"

    # 2) default bf16 fast path: f32 residual/softmax-stats/accum, looser tol.
    out_bf16 = jax.block_until_ready(
        rezero_transformer_layer(x, params, n_heads=H))
    assert out_bf16.shape == (B, S, D)
    assert jnp.allclose(out_bf16, ref, atol=3e-2, rtol=3e-2), "bf16 mismatch"

    print("KERNEL_OK")
</pallas_src>

<mosaic_0001>
module attributes {stable_mosaic.version = 11 : i64} {
  func.func @_rezero_kernel(%arg0: i32, %arg1: i32, %arg2: memref<1xf32, #tpu.memory_space<smem>>, %arg3: memref<1x128x128xf32, #tpu.memory_space<vmem>>, %arg4: memref<128x128xf32, #tpu.memory_space<vmem>>, %arg5: memref<1x128xf32, #tpu.memory_space<vmem>>, %arg6: memref<128x128xf32, #tpu.memory_space<vmem>>, %arg7: memref<1x128xf32, #tpu.memory_space<vmem>>, %arg8: memref<128x128xf32, #tpu.memory_space<vmem>>, %arg9: memref<1x128xf32, #tpu.memory_space<vmem>>, %arg10: memref<128x128xf32, #tpu.memory_space<vmem>>, %arg11: memref<1x128xf32, #tpu.memory_space<vmem>>, %arg12: memref<128x256xf32, #tpu.memory_space<vmem>>, %arg13: memref<1x256xf32, #tpu.memory_space<vmem>>, %arg14: memref<256x128xf32, #tpu.memory_space<vmem>>, %arg15: memref<1x128xf32, #tpu.memory_space<vmem>>, %arg16: memref<1x32x128xf32, #tpu.memory_space<vmem>>, %arg17: memref<128x128xf32, #tpu.memory_space<vmem>>, %arg18: memref<128x128xf32, #tpu.memory_space<vmem>>, %arg19: memref<32x128xf32, #tpu.memory_space<vmem>>) attributes {dimension_semantics = [#tpu.dimension_semantics<parallel>, #tpu.dimension_semantics<arbitrary>], iteration_bounds = array<i64: 2, 4>, scalar_prefetch = 0 : i64, scratch_operands = 3 : i64, tpu.core_type = #tpu.core_type<tc>, window_params = [{transform_indices = @transform_0, window_bounds = array<i64: 1>}, {pipeline_mode = #tpu.pipeline_mode<synchronous>, transform_indices = @transform_1, window_bounds = array<i64: 1, 128, 128>}, {pipeline_mode = #tpu.pipeline_mode<synchronous>, transform_indices = @transform_2, window_bounds = array<i64: 128, 128>}, {pipeline_mode = #tpu.pipeline_mode<synchronous>, transform_indices = @transform_3, window_bounds = array<i64: 1, 128>}, {pipeline_mode = #tpu.pipeline_mode<synchronous>, transform_indices = @transform_4, window_bounds = array<i64: 128, 128>}, {pipeline_mode = #tpu.pipeline_mode<synchronous>, transform_indices = @transform_5, window_bounds = array<i64: 1, 128>}, {pipeline_mode = #tpu.pipeline_mode<synchronous>, transform_indices = @transform_6, window_bounds = array<i64: 128, 128>}, {pipeline_mode = #tpu.pipeline_mode<synchronous>, transform_indices = @transform_7, window_bounds = array<i64: 1, 128>}, {pipeline_mode = #tpu.pipeline_mode<synchronous>, transform_indices = @transform_8, window_bounds = array<i64: 128, 128>}, {pipeline_mode = #tpu.pipeline_mode<synchronous>, transform_indices = @transform_9, window_bounds = array<i64: 1, 128>}, {pipeline_mode = #tpu.pipeline_mode<synchronous>, transform_indices = @transform_10, window_bounds = array<i64: 128, 256>}, {pipeline_mode = #tpu.pipeline_mode<synchronous>, transform_indices = @transform_11, window_bounds = array<i64: 1, 256>}, {pipeline_mode = #tpu.pipeline_mode<synchronous>, transform_indices = @transform_12, window_bounds = array<i64: 256, 128>}, {pipeline_mode = #tpu.pipeline_mode<synchronous>, transform_indices = @transform_13, window_bounds = array<i64: 1, 128>}, {transform_indices = @transform_14, window_bounds = array<i64: 1, 32, 128>}]} {
    %c0_i32 = arith.constant 0 : i32
    %0 = arith.cmpi eq, %arg1, %c0_i32 : i32
    %1 = arith.extui %0 : i1 to i32
    %c0_i32_0 = arith.constant 0 : i32
    %2 = arith.cmpi ne, %1, %c0_i32_0 : i32
    scf.if %2 {
      %c0_81 = arith.constant 0 : index
      %c0_82 = arith.constant 0 : index
      %c0_83 = arith.constant 0 : index
      %169 = vector.load %arg3[%c0_81, %c0_82, %c0_83] : memref<1x128x128xf32, #tpu.memory_space<vmem>>, vector<1x128x128xf32>
      %170 = vector.shape_cast %169 : vector<1x128x128xf32> to vector<128x128xf32>
      %c0_84 = arith.constant 0 : index
      %c0_85 = arith.constant 0 : index
      %171 = vector.load %arg6[%c0_84, %c0_85] : memref<128x128xf32, #tpu.memory_space<vmem>>, vector<128x128xf32>
      %cst_86 = arith.constant dense<0.000000e+00> : vector<128x128xf32>
      %172 = tpu.matmul %170, %171, %cst_86 {dimension_numbers = #tpu.dot_dimension_numbers<[1], [0], [0], [1], [0, 0, 1, 1], [], []>} : vector<128x128xf32>, vector<128x128xf32>, vector<128x128xf32> -> vector<128x128xf32>
      %c0_87 = arith.constant 0 : index
      %c0_88 = arith.constant 0 : index
      %173 = vector.load %arg7[%c0_87, %c0_88] : memref<1x128xf32, #tpu.memory_space<vmem>>, vector<1x128xf32>
      %174 = vector.broadcast %173 : vector<1x128xf32> to vector<128x128xf32>
      %175 = arith.addf %172, %174 : vector<128x128xf32>
      %c0_89 = arith.constant 0 : index
      %c0_90 = arith.constant 0 : index
      %176 = vector.load %arg8[%c0_89, %c0_90] : memref<128x128xf32, #tpu.memory_space<vmem>>, vector<128x128xf32>
      %cst_91 = arith.constant dense<0.000000e+00> : vector<128x128xf32>
      %177 = tpu.matmul %170, %176, %cst_91 {dimension_numbers = #tpu.dot_dimension_numbers<[1], [0], [0], [1], [0, 0, 1, 1], [], []>} : vector<128x128xf32>, vector<128x128xf32>, vector<128x128xf32> -> vector<128x128xf32>
      %c0_92 = arith.constant 0 : index
      %c0_93 = arith.constant 0 : index
      %178 = vector.load %arg9[%c0_92, %c0_93] : memref<1x128xf32, #tpu.memory_space<vmem>>, vector<1x128xf32>
      %179 = vector.broadcast %178 : vector<1x128xf32> to vector<128x128xf32>
      %180 = arith.addf %177, %179 : vector<128x128xf32>
      %181 = tpu.transpose %175, [1, 0] : vector<128x128xf32> -> vector<128x128xf32>
      %c0_94 = arith.constant 0 : index
      %c0_95 = arith.constant 0 : index
      %182 = vector.load %arg17[%c0_94, %c0_95] : memref<128x128xf32, #tpu.memory_space<vmem>>, vector<128x128xf32>
      tpu.vector_store %arg17[%c0_94, %c0_95], %181 {strides = array<i32>} : memref<128x128xf32, #tpu.memory_space<vmem>>, vector<128x128xf32>,
      %c0_96 = arith.constant 0 : index
      %c0_97 = arith.constant 0 : index
      %183 = vector.load %arg18[%c0_96, %c0_97] : memref<128x128xf32, #tpu.memory_space<vmem>>, vector<128x128xf32>
      tpu.vector_store %arg18[%c0_96, %c0_97], %180 {strides = array<i32>} : memref<128x128xf32, #tpu.memory_space<vmem>>, vector<128x128xf32>,
    } else {
    }
    %c32_i32 = arith.constant 32 : i32
    %3 = arith.muli %arg1, %c32_i32 : i32
    %4 = tpu.assume_multiple %3, 32 : i32
    %c0 = arith.constant 0 : index
    %5 = arith.index_cast %4 : i32 to index
    %c0_1 = arith.constant 0 : index
    %6 = vector.load %arg3[%c0, %5, %c0_1] : memref<1x128x128xf32, #tpu.memory_space<vmem>>, vector<1x32x128xf32>
    %7 = vector.shape_cast %6 : vector<1x32x128xf32> to vector<32x128xf32>
    %c0_2 = arith.constant 0 : index
    %c0_3 = arith.constant 0 : index
    %8 = vector.load %arg4[%c0_2, %c0_3] : memref<128x128xf32, #tpu.memory_space<vmem>>, vector<128x128xf32>
    %cst = arith.constant dense<0.000000e+00> : vector<32x128xf32>
    %9 = tpu.matmul %7, %8, %cst {dimension_numbers = #tpu.dot_dimension_numbers<[1], [0], [0], [1], [0, 0, 1, 1], [], []>} : vector<32x128xf32>, vector<128x128xf32>, vector<32x128xf32> -> vector<32x128xf32>
    %c0_4 = arith.constant 0 : index
    %c0_5 = arith.constant 0 : index
    %10 = vector.load %arg5[%c0_4, %c0_5] : memref<1x128xf32, #tpu.memory_space<vmem>>, vector<1x128xf32>
    %11 = vector.broadcast %10 : vector<1x128xf32> to vector<32x128xf32>
    %12 = arith.addf %9, %11 : vector<32x128xf32>
    %cst_6 = arith.constant 0.176776692 : f32
    %13 = vector.broadcast %cst_6 : f32 to vector<32x128xf32>
    %14 = arith.mulf %12, %13 : vector<32x128xf32>
    %15 = vector.extract_strided_slice %14 {offsets = [0, 0], sizes = [32, 32], strides = [1, 1]} : vector<32x128xf32> to vector<32x32xf32>
    %cst_7 = arith.constant 0xFF800000 : f32
    %16 = vector.broadcast %cst_7 : f32 to vector<32x1xf32>
    %cst_8 = arith.constant 0.000000e+00 : f32
    %17 = vector.broadcast %cst_8 : f32 to vector<32x1xf32>
    %cst_9 = arith.constant 0.000000e+00 : f32
    %18 = vector.broadcast %cst_9 : f32 to vector<32x32xf32>
    %c0_i32_10 = arith.constant 0 : i32
    %c128_i32 = arith.constant 128 : i32
    %19 = arith.muli %c0_i32_10, %c128_i32 : i32
    %20 = tpu.assume_multiple %19, 128 : i32
    %c0_11 = arith.constant 0 : index
    %21 = arith.index_cast %20 : i32 to index
    %22 = vector.load %arg17[%c0_11, %21] : memref<128x128xf32, #tpu.memory_space<vmem>>, vector<32x128xf32>
    %23 = arith.index_cast %20 : i32 to index
    %c0_12 = arith.constant 0 : index
    %24 = vector.load %arg18[%23, %c0_12] : memref<128x128xf32, #tpu.memory_space<vmem>>, vector<128x32xf32>
    %cst_13 = arith.constant dense<0.000000e+00> : vector<32x128xf32>
    %25 = tpu.matmul %15, %22, %cst_13 {dimension_numbers = #tpu.dot_dimension_numbers<[1], [0], [0], [1], [0, 0, 1, 1], [], []>} : vector<32x32xf32>, vector<32x128xf32>, vector<32x128xf32> -> vector<32x128xf32>
    %cst_14 = arith.constant dense<0xFF800000> : vector<32xf32>
    %26 = vector.multi_reduction <maximumf>, %25, %cst_14 [1] : vector<32x128xf32> to vector<32xf32>
    %27 = vector.shape_cast %26 : vector<32xf32> to vector<32x1xf32>
    %28 = arith.maximumf %16, %27 : vector<32x1xf32>
    %29 = arith.subf %16, %28 : vector<32x1xf32>
    %30 = math.exp %29 : vector<32x1xf32>
    %31 = vector.broadcast %28 : vector<32x1xf32> to vector<32x128xf32>
    %32 = arith.subf %25, %31 : vector<32x128xf32>
    %33 = math.exp %32 : vector<32x128xf32>
    %34 = arith.mulf %30, %17 : vector<32x1xf32>
    %cst_15 = arith.constant dense<0.000000e+00> : vector<32xf32>
    %35 = vector.multi_reduction <add>, %33, %cst_15 [1] : vector<32x128xf32> to vector<32xf32>
    %36 = vector.shape_cast %35 : vector<32xf32> to vector<32x1xf32>
    %37 = arith.addf %34, %36 : vector<32x1xf32>
    %38 = vector.broadcast %30 : vector<32x1xf32> to vector<32x32xf32>
    %39 = arith.mulf %38, %18 : vector<32x32xf32>
    %cst_16 = arith.constant dense<0.000000e+00> : vector<32x32xf32>
    %40 = tpu.matmul %33, %24, %cst_16 {dimension_numbers = #tpu.dot_dimension_numbers<[1], [0], [0], [1], [0, 0, 1, 1], [], []>} : vector<32x128xf32>, vector<128x32xf32>, vector<32x32xf32> -> vector<32x32xf32>
    %41 = arith.addf %39, %40 : vector<32x32xf32>
    %c1_i32 = arith.constant 1 : i32
    %42 = tpu.reciprocal %37 : vector<32x1xf32> -> vector<32x1xf32>
    %43 = vector.broadcast %42 : vector<32x1xf32> to vector<32x32xf32>
    %44 = arith.mulf %41, %43 : vector<32x32xf32>
    %c0_17 = arith.constant 0 : index
    %c0_18 = arith.constant 0 : index
    %45 = vector.load %arg19[%c0_17, %c0_18] : memref<32x128xf32, #tpu.memory_space<vmem>>, vector<32x32xf32>
    tpu.vector_store %arg19[%c0_17, %c0_18], %44 {strides = array<i32>} : memref<32x128xf32, #tpu.memory_space<vmem>>, vector<32x32xf32>,
    %46 = vector.extract_strided_slice %14 {offsets = [0, 32], sizes = [32, 32], strides = [1, 1]} : vector<32x128xf32> to vector<32x32xf32>
    %cst_19 = arith.constant 0xFF800000 : f32
    %47 = vector.broadcast %cst_19 : f32 to vector<32x1xf32>
    %cst_20 = arith.constant 0.000000e+00 : f32
    %48 = vector.broadcast %cst_20 : f32 to vector<32x1xf32>
    %cst_21 = arith.constant 0.000000e+00 : f32
    %49 = vector.broadcast %cst_21 : f32 to vector<32x32xf32>
    %c0_i32_22 = arith.constant 0 : i32
    %c128_i32_23 = arith.constant 128 : i32
    %50 = arith.muli %c0_i32_22, %c128_i32_23 : i32
    %51 = tpu.assume_multiple %50, 128 : i32
    %c32 = arith.constant 32 : index
    %52 = arith.index_cast %51 : i32 to index
    %53 = vector.load %arg17[%c32, %52] : memref<128x128xf32, #tpu.memory_space<vmem>>, vector<32x128xf32>
    %54 = arith.index_cast %51 : i32 to index
    %c32_24 = arith.constant 32 : index
    %55 = vector.load %arg18[%54, %c32_24] : memref<128x128xf32, #tpu.memory_space<vmem>>, vector<128x32xf32>
    %cst_25 = arith.constant dense<0.000000e+00> : vector<32x128xf32>
    %56 = tpu.matmul %46, %53, %cst_25 {dimension_numbers = #tpu.dot_dimension_numbers<[1], [0], [0], [1], [0, 0, 1, 1], [], []>} : vector<32x32xf32>, vector<32x128xf32>, vector<32x128xf32> -> vector<32x128xf32>
    %cst_26 = arith.constant dense<0xFF800000> : vector<32xf32>
    %57 = vector.multi_reduction <maximumf>, %56, %cst_26 [1] : vector<32x128xf32> to vector<32xf32>
    %58 = vector.shape_cast %57 : vector<32xf32> to vector<32x1xf32>
    %59 = arith.maximumf %47, %58 : vector<32x1xf32>
    %60 = arith.subf %47, %59 : vector<32x1xf32>
    %61 = math.exp %60 : vector<32x1xf32>
    %62 = vector.broadcast %59 : vector<32x1xf32> to vector<32x128xf32>
    %63 = arith.subf %56, %62 : vector<32x128xf32>
    %64 = math.exp %63 : vector<32x128xf32>
    %65 = arith.mulf %61, %48 : vector<32x1xf32>
    %cst_27 = arith.constant dense<0.000000e+00> : vector<32xf32>
    %66 = vector.multi_reduction <add>, %64, %cst_27 [1] : vector<32x128xf32> to vector<32xf32>
    %67 = vector.shape_cast %66 : vector<32xf32> to vector<32x1xf32>
    %68 = arith.addf %65, %67 : vector<32x1xf32>
    %69 = vector.broadcast %61 : vector<32x1xf32> to vector<32x32xf32>
    %70 = arith.mulf %69, %49 : vector<32x32xf32>
    %cst_28 = arith.constant dense<0.000000e+00> : vector<32x32xf32>
    %71 = tpu.matmul %64, %55, %cst_28 {dimension_numbers = #tpu.dot_dimension_numbers<[1], [0], [0], [1], [0, 0, 1, 1], [], []>} : vector<32x128xf32>, vector<128x32xf32>, vector<32x32xf32> -> vector<32x32xf32>
    %72 = arith.addf %70, %71 : vector<32x32xf32>
    %c1_i32_29 = arith.constant 1 : i32
    %73 = tpu.reciprocal %68 : vector<32x1xf32> -> vector<32x1xf32>
    %74 = vector.broadcast %73 : vector<32x1xf32> to vector<32x32xf32>
    %75 = arith.mulf %72, %74 : vector<32x32xf32>
    %c0_30 = arith.constant 0 : index
    %c32_31 = arith.constant 32 : index
    %76 = vector.load %arg19[%c0_30, %c32_31] : memref<32x128xf32, #tpu.memory_space<vmem>>, vector<32x32xf32>
    tpu.vector_store %arg19[%c0_30, %c32_31], %75 {strides = array<i32>} : memref<32x128xf32, #tpu.memory_space<vmem>>, vector<32x32xf32>,
    %77 = vector.extract_strided_slice %14 {offsets = [0, 64], sizes = [32, 32], strides = [1, 1]} : vector<32x128xf32> to vector<32x32xf32>
    %cst_32 = arith.constant 0xFF800000 : f32
    %78 = vector.broadcast %cst_32 : f32 to vector<32x1xf32>
    %cst_33 = arith.constant 0.000000e+00 : f32
    %79 = vector.broadcast %cst_33 : f32 to vector<32x1xf32>
    %cst_34 = arith.constant 0.000000e+00 : f32
    %80 = vector.broadcast %cst_34 : f32 to vector<32x32xf32>
    %c0_i32_35 = arith.constant 0 : i32
    %c128_i32_36 = arith.constant 128 : i32
    %81 = arith.muli %c0_i32_35, %c128_i32_36 : i32
    %82 = tpu.assume_multiple %81, 128 : i32
    %c64 = arith.constant 64 : index
    %83 = arith.index_cast %82 : i32 to index
    %84 = vector.load %arg17[%c64, %83] : memref<128x128xf32, #tpu.memory_space<vmem>>, vector<32x128xf32>
    %85 = arith.index_cast %82 : i32 to index
    %c64_37 = arith.constant 64 : index
    %86 = vector.load %arg18[%85, %c64_37] : memref<128x128xf32, #tpu.memory_space<vmem>>, vector<128x32xf32>
    %cst_38 = arith.constant dense<0.000000e+00> : vector<32x128xf32>
    %87 = tpu.matmul %77, %84, %cst_38 {dimension_numbers = #tpu.dot_dimension_numbers<[1], [0], [0], [1], [0, 0, 1, 1], [], []>} : vector<32x32xf32>, vector<32x128xf32>, vector<32x128xf32> -> vector<32x128xf32>
    %cst_39 = arith.constant dense<0xFF800000> : vector<32xf32>
    %88 = vector.multi_reduction <maximumf>, %87, %cst_39 [1] : vector<32x128xf32> to vector<32xf32>
    %89 = vector.shape_cast %88 : vector<32xf32> to vector<32x1xf32>
    %90 = arith.maximumf %78, %89 : vector<32x1xf32>
    %91 = arith.subf %78, %90 : vector<32x1xf32>
    %92 = math.exp %91 : vector<32x1xf32>
    %93 = vector.broadcast %90 : vector<32x1xf32> to vector<32x128xf32>
    %94 = arith.subf %87, %93 : vector<32x128xf32>
    %95 = math.exp %94 : vector<32x128xf32>
    %96 = arith.mulf %92, %79 : vector<32x1xf32>
    %cst_40 = arith.constant dense<0.000000e+00> : vector<32xf32>
    %97 = vector.multi_reduction <add>, %95, %cst_40 [1] : vector<32x128xf32> to vector<32xf32>
    %98 = vector.shape_cast %97 : vector<32xf32> to vector<32x1xf32>
    %99 = arith.addf %96, %98 : vector<32x1xf32>
    %100 = vector.broadcast %92 : vector<32x1xf32> to vector<32x32xf32>
    %101 = arith.mulf %100, %80 : vector<32x32xf32>
    %cst_41 = arith.constant dense<0.000000e+00> : vector<32x32xf32>
    %102 = tpu.matmul %95, %86, %cst_41 {dimension_numbers = #tpu.dot_dimension_numbers<[1], [0], [0], [1], [0, 0, 1, 1], [], []>} : vector<32x128xf32>, vector<128x32xf32>, vector<32x32xf32> -> vector<32x32xf32>
    %103 = arith.addf %101, %102 : vector<32x32xf32>
    %c1_i32_42 = arith.constant 1 : i32
    %104 = tpu.reciprocal %99 : vector<32x1xf32> -> vector<32x1xf32>
    %105 = vector.broadcast %104 : vector<32x1xf32> to vector<32x32xf32>
    %106 = arith.mulf %103, %105 : vector<32x32xf32>
    %c0_43 = arith.constant 0 : index
    %c64_44 = arith.constant 64 : index
    %107 = vector.load %arg19[%c0_43, %c64_44] : memref<32x128xf32, #tpu.memory_space<vmem>>, vector<32x32xf32>
    tpu.vector_store %arg19[%c0_43, %c64_44], %106 {strides = array<i32>} : memref<32x128xf32, #tpu.memory_space<vmem>>, vector<32x32xf32>,
    %108 = vector.extract_strided_slice %14 {offsets = [0, 96], sizes = [32, 32], strides = [1, 1]} : vector<32x128xf32> to vector<32x32xf32>
    %cst_45 = arith.constant 0xFF800000 : f32
    %109 = vector.broadcast %cst_45 : f32 to vector<32x1xf32>
    %cst_46 = arith.constant 0.000000e+00 : f32
    %110 = vector.broadcast %cst_46 : f32 to vector<32x1xf32>
    %cst_47 = arith.constant 0.000000e+00 : f32
    %111 = vector.broadcast %cst_47 : f32 to vector<32x32xf32>
    %c0_i32_48 = arith.constant 0 : i32
    %c128_i32_49 = arith.constant 128 : i32
    %112 = arith.muli %c0_i32_48, %c128_i32_49 : i32
    %113 = tpu.assume_multiple %112, 128 : i32
    %c96 = arith.constant 96 : index
    %114 = arith.index_cast %113 : i32 to index
    %115 = vector.load %arg17[%c96, %114] : memref<128x128xf32, #tpu.memory_space<vmem>>, vector<32x128xf32>
    %116 = arith.index_cast %113 : i32 to index
    %c96_50 = arith.constant 96 : index
    %117 = vector.load %arg18[%116, %c96_50] : memref<128x128xf32, #tpu.memory_space<vmem>>, vector<128x32xf32>
    %cst_51 = arith.constant dense<0.000000e+00> : vector<32x128xf32>
    %118 = tpu.matmul %108, %115, %cst_51 {dimension_numbers = #tpu.dot_dimension_numbers<[1], [0], [0], [1], [0, 0, 1, 1], [], []>} : vector<32x32xf32>, vector<32x128xf32>, vector<32x128xf32> -> vector<32x128xf32>
    %cst_52 = arith.constant dense<0xFF800000> : vector<32xf32>
    %119 = vector.multi_reduction <maximumf>, %118, %cst_52 [1] : vector<32x128xf32> to vector<32xf32>
    %120 = vector.shape_cast %119 : vector<32xf32> to vector<32x1xf32>
    %121 = arith.maximumf %109, %120 : vector<32x1xf32>
    %122 = arith.subf %109, %121 : vector<32x1xf32>
    %123 = math.exp %122 : vector<32x1xf32>
    %124 = vector.broadcast %121 : vector<32x1xf32> to vector<32x128xf32>
    %125 = arith.subf %118, %124 : vector<32x128xf32>
    %126 = math.exp %125 : vector<32x128xf32>
    %127 = arith.mulf %123, %110 : vector<32x1xf32>
    %cst_53 = arith.constant dense<0.000000e+00> : vector<32xf32>
    %128 = vector.multi_reduction <add>, %126, %cst_53 [1] : vector<32x128xf32> to vector<32xf32>
    %129 = vector.shape_cast %128 : vector<32xf32> to vector<32x1xf32>
    %130 = arith.addf %127, %129 : vector<32x1xf32>
    %131 = vector.broadcast %123 : vector<32x1xf32> to vector<32x32xf32>
    %132 = arith.mulf %131, %111 : vector<32x32xf32>
    %cst_54 = arith.constant dense<0.000000e+00> : vector<32x32xf32>
    %133 = tpu.matmul %126, %117, %cst_54 {dimension_numbers = #tpu.dot_dimension_numbers<[1], [0], [0], [1], [0, 0, 1, 1], [], []>} : vector<32x128xf32>, vector<128x32xf32>, vector<32x32xf32> -> vector<32x32xf32>
    %134 = arith.addf %132, %133 : vector<32x32xf32>
    %c1_i32_55 = arith.constant 1 : i32
    %135 = tpu.reciprocal %130 : vector<32x1xf32> -> vector<32x1xf32>
    %136 = vector.broadcast %135 : vector<32x1xf32> to vector<32x32xf32>
    %137 = arith.mulf %134, %136 : vector<32x32xf32>
    %c0_56 = arith.constant 0 : index
    %c96_57 = arith.constant 96 : index
    %138 = vector.load %arg19[%c0_56, %c96_57] : memref<32x128xf32, #tpu.memory_space<vmem>>, vector<32x32xf32>
    tpu.vector_store %arg19[%c0_56, %c96_57], %137 {strides = array<i32>} : memref<32x128xf32, #tpu.memory_space<vmem>>, vector<32x32xf32>,
    %c0_58 = arith.constant 0 : index
    %c0_59 = arith.constant 0 : index
    %139 = vector.load %arg19[%c0_58, %c0_59] : memref<32x128xf32, #tpu.memory_space<vmem>>, vector<32x128xf32>
    %c0_60 = arith.constant 0 : index
    %c0_61 = arith.constant 0 : index
    %140 = vector.load %arg10[%c0_60, %c0_61] : memref<128x128xf32, #tpu.memory_space<vmem>>, vector<128x128xf32>
    %cst_62 = arith.constant dense<0.000000e+00> : vector<32x128xf32>
    %141 = tpu.matmul %139, %140, %cst_62 {dimension_numbers = #tpu.dot_dimension_numbers<[1], [0], [0], [1], [0, 0, 1, 1], [], []>} : vector<32x128xf32>, vector<128x128xf32>, vector<32x128xf32> -> vector<32x128xf32>
    %c0_63 = arith.constant 0 : index
    %142 = memref.load %arg2[%c0_63] : memref<1xf32, #tpu.memory_space<smem>>
    %c0_64 = arith.constant 0 : index
    %c0_65 = arith.constant 0 : index
    %143 = vector.load %arg11[%c0_64, %c0_65] : memref<1x128xf32, #tpu.memory_space<vmem>>, vector<1x128xf32>
    %144 = vector.broadcast %143 : vector<1x128xf32> to vector<32x128xf32>
    %145 = arith.addf %141, %144 : vector<32x128xf32>
    %146 = vector.broadcast %142 : f32 to vector<32x128xf32>
    %147 = arith.mulf %146, %145 : vector<32x128xf32>
    %148 = arith.addf %7, %147 : vector<32x128xf32>
    %cst_66 = arith.constant 0.000000e+00 : f32
    %149 = vector.broadcast %cst_66 : f32 to vector<32x128xf32>
    %c0_67 = arith.constant 0 : index
    %c0_68 = arith.constant 0 : index
    %150 = vector.load %arg12[%c0_67, %c0_68] : memref<128x256xf32, #tpu.memory_space<vmem>>, vector<128x256xf32>
    %cst_69 = arith.constant dense<0.000000e+00> : vector<32x256xf32>
    %151 = tpu.matmul %148, %150, %cst_69 {dimension_numbers = #tpu.dot_dimension_numbers<[1], [0], [0], [1], [0, 0, 1, 1], [], []>} : vector<32x128xf32>, vector<128x256xf32>, vector<32x256xf32> -> vector<32x256xf32>
    %c0_70 = arith.constant 0 : index
    %c0_71 = arith.constant 0 : index
    %152 = vector.load %arg13[%c0_70, %c0_71] : memref<1x256xf32, #tpu.memory_space<vmem>>, vector<1x256xf32>
    %153 = vector.broadcast %152 : vector<1x256xf32> to vector<32x256xf32>
    %154 = arith.addf %151, %153 : vector<32x256xf32>
    %cst_72 = arith.constant 0.000000e+00 : f32
    %155 = vector.broadcast %cst_72 : f32 to vector<32x256xf32>
    %156 = arith.maximumf %154, %155 : vector<32x256xf32>
    %c0_73 = arith.constant 0 : index
    %c0_74 = arith.constant 0 : index
    %157 = vector.load %arg14[%c0_73, %c0_74] : memref<256x128xf32, #tpu.memory_space<vmem>>, vector<256x128xf32>
    %cst_75 = arith.constant dense<0.000000e+00> : vector<32x128xf32>
    %158 = tpu.matmul %156, %157, %cst_75 {dimension_numbers = #tpu.dot_dimension_numbers<[1], [0], [0], [1], [0, 0, 1, 1], [], []>} : vector<32x256xf32>, vector<256x128xf32>, vector<32x128xf32> -> vector<32x128xf32>
    %159 = arith.addf %149, %158 : vector<32x128xf32>
    %c0_76 = arith.constant 0 : index
    %c0_77 = arith.constant 0 : index
    %160 = vector.load %arg15[%c0_76, %c0_77] : memref<1x128xf32, #tpu.memory_space<vmem>>, vector<1x128xf32>
    %161 = vector.broadcast %160 : vector<1x128xf32> to vector<32x128xf32>
    %162 = arith.addf %159, %161 : vector<32x128xf32>
    %163 = vector.broadcast %142 : f32 to vector<32x128xf32>
    %164 = arith.mulf %163, %162 : vector<32x128xf32>
    %165 = arith.addf %148, %164 : vector<32x128xf32>
    %c0_78 = arith.constant 0 : index
    %c0_79 = arith.constant 0 : index
    %c0_80 = arith.constant 0 : index
    %166 = vector.load %arg16[%c0_78, %c0_79, %c0_80] : memref<1x32x128xf32, #tpu.memory_space<vmem>>, vector<1x32x128xf32>
    %167 = vector.shape_cast %166 : vector<1x32x128xf32> to vector<32x128xf32>
    %168 = vector.shape_cast %165 : vector<32x128xf32> to vector<1x32x128xf32>
    tpu.vector_store %arg16[%c0_78, %c0_79, %c0_80], %168 {strides = array<i32>} : memref<1x32x128xf32, #tpu.memory_space<vmem>>, vector<1x32x128xf32>,
    return
  }
  func.func @transform_0(%arg0: i32, %arg1: i32) -> i32 {
    %c0_i32 = arith.constant 0 : i32
    %c0_i32_0 = arith.constant 0 : i32
    return %c0_i32 : i32
  }
  func.func @transform_1(%arg0: i32, %arg1: i32) -> (i32, i32, i32) {
    %c0_i32 = arith.constant 0 : i32
    %c0_i32_0 = arith.constant 0 : i32
    %c0_i32_1 = arith.constant 0 : i32
    return %arg0, %c0_i32, %c0_i32_0 : i32, i32, i32
  }
  func.func @transform_2(%arg0: i32, %arg1: i32) -> (i32, i32) {
    %c0_i32 = arith.constant 0 : i32
    %c0_i32_0 = arith.constant 0 : i32
    %c0_i32_1 = arith.constant 0 : i32
    return %c0_i32, %c0_i32_0 : i32, i32
  }
  func.func @transform_3(%arg0: i32, %arg1: i32) -> (i32, i32) {
    %c0_i32 = arith.constant 0 : i32
    %c0_i32_0 = arith.constant 0 : i32
    %c0_i32_1 = arith.constant 0 : i32
    return %c0_i32, %c0_i32_0 : i32, i32
  }
  func.func @transform_4(%arg0: i32, %arg1: i32) -> (i32, i32) {
    %c0_i32 = arith.constant 0 : i32
    %c0_i32_0 = arith.constant 0 : i32
    %c0_i32_1 = arith.constant 0 : i32
    return %c0_i32, %c0_i32_0 : i32, i32
  }
  func.func @transform_5(%arg0: i32, %arg1: i32) -> (i32, i32) {
    %c0_i32 = arith.constant 0 : i32
    %c0_i32_0 = arith.constant 0 : i32
    %c0_i32_1 = arith.constant 0 : i32
    return %c0_i32, %c0_i32_0 : i32, i32
  }
  func.func @transform_6(%arg0: i32, %arg1: i32) -> (i32, i32) {
    %c0_i32 = arith.constant 0 : i32
    %c0_i32_0 = arith.constant 0 : i32
    %c0_i32_1 = arith.constant 0 : i32
    return %c0_i32, %c0_i32_0 : i32, i32
  }
  func.func @transform_7(%arg0: i32, %arg1: i32) -> (i32, i32) {
    %c0_i32 = arith.constant 0 : i32
    %c0_i32_0 = arith.constant 0 : i32
    %c0_i32_1 = arith.constant 0 : i32
    return %c0_i32, %c0_i32_0 : i32, i32
  }
  func.func @transform_8(%arg0: i32, %arg1: i32) -> (i32, i32) {
    %c0_i32 = arith.constant 0 : i32
    %c0_i32_0 = arith.constant 0 : i32
    %c0_i32_1 = arith.constant 0 : i32
    return %c0_i32, %c0_i32_0 : i32, i32
  }
  func.func @transform_9(%arg0: i32, %arg1: i32) -> (i32, i32) {
    %c0_i32 = arith.constant 0 : i32
    %c0_i32_0 = arith.constant 0 : i32
    %c0_i32_1 = arith.constant 0 : i32
    return %c0_i32, %c0_i32_0 : i32, i32
  }
  func.func @transform_10(%arg0: i32, %arg1: i32) -> (i32, i32) {
    %c0_i32 = arith.constant 0 : i32
    %c0_i32_0 = arith.constant 0 : i32
    %c0_i32_1 = arith.constant 0 : i32
    return %c0_i32, %c0_i32_0 : i32, i32
  }
  func.func @transform_11(%arg0: i32, %arg1: i32) -> (i32, i32) {
    %c0_i32 = arith.constant 0 : i32
    %c0_i32_0 = arith.constant 0 : i32
    %c0_i32_1 = arith.constant 0 : i32
    return %c0_i32, %c0_i32_0 : i32, i32
  }
  func.func @transform_12(%arg0: i32, %arg1: i32) -> (i32, i32) {
    %c0_i32 = arith.constant 0 : i32
    %c0_i32_0 = arith.constant 0 : i32
    %c0_i32_1 = arith.constant 0 : i32
    return %c0_i32, %c0_i32_0 : i32, i32
  }
  func.func @transform_13(%arg0: i32, %arg1: i32) -> (i32, i32) {
    %c0_i32 = arith.constant 0 : i32
    %c0_i32_0 = arith.constant 0 : i32
    %c0_i32_1 = arith.constant 0 : i32
    return %c0_i32, %c0_i32_0 : i32, i32
  }
  func.func @transform_14(%arg0: i32, %arg1: i32) -> (i32, i32, i32) {
    %c0_i32 = arith.constant 0 : i32
    %c0_i32_0 = arith.constant 0 : i32
    return %arg0, %arg1, %c0_i32 : i32, i32, i32
  }
}

module attributes {stable_mosaic.version = 11 : i64} {
  func.func @_rezero_kernel(%arg0: i32, %arg1: i32, %arg2: memref<1xf32, #tpu.memory_space<smem>>, %arg3: memref<1x128x128xf32, #tpu.memory_space<vmem>>, %arg4: memref<128x128xf32, #tpu.memory_space<vmem>>, %arg5: memref<1x128xf32, #tpu.memory_space<vmem>>, %arg6: memref<128x128xf32, #tpu.memory_space<vmem>>, %arg7: memref<1x128xf32, #tpu.memory_space<vmem>>, %arg8: memref<128x128xf32, #tpu.memory_space<vmem>>, %arg9: memref<1x128xf32, #tpu.memory_space<vmem>>, %arg10: memref<128x128xf32, #tpu.memory_space<vmem>>, %arg11: memref<1x128xf32, #tpu.memory_space<vmem>>, %arg12: memref<128x256xf32, #tpu.memory_space<vmem>>, %arg13: memref<1x256xf32, #tpu.memory_space<vmem>>, %arg14: memref<256x128xf32, #tpu.memory_space<vmem>>, %arg15: memref<1x128xf32, #tpu.memory_space<vmem>>, %arg16: memref<1x32x128xf32, #tpu.memory_space<vmem>>, %arg17: memref<128x128xf32, #tpu.memory_space<vmem>>, %arg18: memref<128x128xf32, #tpu.memory_space<vmem>>, %arg19: memref<32x128xf32, #tpu.memory_space<vmem>>) attributes {dimension_semantics = [#tpu.dimension_semantics<parallel>, #tpu.dimension_semantics<arbitrary>], iteration_bounds = array<i64: 2, 4>, scalar_prefetch = 0 : i64, scratch_operands = 3 : i64, tpu.core_type = #tpu.core_type<tc>, window_params = [{transform_indices = @transform_0, window_bounds = array<i64: 1>}, {transform_indices = @transform_1, window_bounds = array<i64: 1, 128, 128>}, {pipeline_mode = #tpu.pipeline_mode<synchronous>, transform_indices = @transform_2, window_bounds = array<i64: 128, 128>}, {pipeline_mode = #tpu.pipeline_mode<synchronous>, transform_indices = @transform_3, window_bounds = array<i64: 1, 128>}, {pipeline_mode = #tpu.pipeline_mode<synchronous>, transform_indices = @transform_4, window_bounds = array<i64: 128, 128>}, {pipeline_mode = #tpu.pipeline_mode<synchronous>, transform_indices = @transform_5, window_bounds = array<i64: 1, 128>}, {pipeline_mode = #tpu.pipeline_mode<synchronous>, transform_indices = @transform_6, window_bounds = array<i64: 128, 128>}, {pipeline_mode = #tpu.pipeline_mode<synchronous>, transform_indices = @transform_7, window_bounds = array<i64: 1, 128>}, {pipeline_mode = #tpu.pipeline_mode<synchronous>, transform_indices = @transform_8, window_bounds = array<i64: 128, 128>}, {pipeline_mode = #tpu.pipeline_mode<synchronous>, transform_indices = @transform_9, window_bounds = array<i64: 1, 128>}, {pipeline_mode = #tpu.pipeline_mode<synchronous>, transform_indices = @transform_10, window_bounds = array<i64: 128, 256>}, {pipeline_mode = #tpu.pipeline_mode<synchronous>, transform_indices = @transform_11, window_bounds = array<i64: 1, 256>}, {pipeline_mode = #tpu.pipeline_mode<synchronous>, transform_indices = @transform_12, window_bounds = array<i64: 256, 128>}, {pipeline_mode = #tpu.pipeline_mode<synchronous>, transform_indices = @transform_13, window_bounds = array<i64: 1, 128>}, {transform_indices = @transform_14, window_bounds = array<i64: 1, 32, 128>}]} {
    %c0_i32 = arith.constant 0 : i32
    %0 = arith.cmpi eq, %arg1, %c0_i32 : i32
    %1 = arith.extui %0 : i1 to i32
    %c0_i32_0 = arith.constant 0 : i32
    %2 = arith.cmpi ne, %1, %c0_i32_0 : i32
    scf.if %2 {
      %c0_81 = arith.constant 0 : index
      %c0_82 = arith.constant 0 : index
      %c0_83 = arith.constant 0 : index
      %169 = vector.load %arg3[%c0_81, %c0_82, %c0_83] : memref<1x128x128xf32, #tpu.memory_space<vmem>>, vector<1x128x128xf32>
      %170 = vector.shape_cast %169 : vector<1x128x128xf32> to vector<128x128xf32>
      %c0_84 = arith.constant 0 : index
      %c0_85 = arith.constant 0 : index
      %171 = vector.load %arg6[%c0_84, %c0_85] : memref<128x128xf32, #tpu.memory_space<vmem>>, vector<128x128xf32>
      %cst_86 = arith.constant dense<0.000000e+00> : vector<128x128xf32>
      %172 = tpu.matmul %170, %171, %cst_86 {dimension_numbers = #tpu.dot_dimension_numbers<[1], [0], [0], [1], [0, 0, 1, 1], [], []>} : vector<128x128xf32>, vector<128x128xf32>, vector<128x128xf32> -> vector<128x128xf32>
      %c0_87 = arith.constant 0 : index
      %c0_88 = arith.constant 0 : index
      %173 = vector.load %arg7[%c0_87, %c0_88] : memref<1x128xf32, #tpu.memory_space<vmem>>, vector<1x128xf32>
      %174 = vector.broadcast %173 : vector<1x128xf32> to vector<128x128xf32>
      %175 = arith.addf %172, %174 : vector<128x128xf32>
      %c0_89 = arith.constant 0 : index
      %c0_90 = arith.constant 0 : index
      %176 = vector.load %arg8[%c0_89, %c0_90] : memref<128x128xf32, #tpu.memory_space<vmem>>, vector<128x128xf32>
      %cst_91 = arith.constant dense<0.000000e+00> : vector<128x128xf32>
      %177 = tpu.matmul %170, %176, %cst_91 {dimension_numbers = #tpu.dot_dimension_numbers<[1], [0], [0], [1], [0, 0, 1, 1], [], []>} : vector<128x128xf32>, vector<128x128xf32>, vector<128x128xf32> -> vector<128x128xf32>
      %c0_92 = arith.constant 0 : index
      %c0_93 = arith.constant 0 : index
      %178 = vector.load %arg9[%c0_92, %c0_93] : memref<1x128xf32, #tpu.memory_space<vmem>>, vector<1x128xf32>
      %179 = vector.broadcast %178 : vector<1x128xf32> to vector<128x128xf32>
      %180 = arith.addf %177, %179 : vector<128x128xf32>
      %181 = tpu.transpose %175, [1, 0] : vector<128x128xf32> -> vector<128x128xf32>
      %c0_94 = arith.constant 0 : index
      %c0_95 = arith.constant 0 : index
      %182 = vector.load %arg17[%c0_94, %c0_95] : memref<128x128xf32, #tpu.memory_space<vmem>>, vector<128x128xf32>
      tpu.vector_store %arg17[%c0_94, %c0_95], %181 {strides = array<i32>} : memref<128x128xf32, #tpu.memory_space<vmem>>, vector<128x128xf32>,
      %c0_96 = arith.constant 0 : index
      %c0_97 = arith.constant 0 : index
      %183 = vector.load %arg18[%c0_96, %c0_97] : memref<128x128xf32, #tpu.memory_space<vmem>>, vector<128x128xf32>
      tpu.vector_store %arg18[%c0_96, %c0_97], %180 {strides = array<i32>} : memref<128x128xf32, #tpu.memory_space<vmem>>, vector<128x128xf32>,
    } else {
    }
    %c32_i32 = arith.constant 32 : i32
    %3 = arith.muli %arg1, %c32_i32 : i32
    %4 = tpu.assume_multiple %3, 32 : i32
    %c0 = arith.constant 0 : index
    %5 = arith.index_cast %4 : i32 to index
    %c0_1 = arith.constant 0 : index
    %6 = vector.load %arg3[%c0, %5, %c0_1] : memref<1x128x128xf32, #tpu.memory_space<vmem>>, vector<1x32x128xf32>
    %7 = vector.shape_cast %6 : vector<1x32x128xf32> to vector<32x128xf32>
    %c0_2 = arith.constant 0 : index
    %c0_3 = arith.constant 0 : index
    %8 = vector.load %arg4[%c0_2, %c0_3] : memref<128x128xf32, #tpu.memory_space<vmem>>, vector<128x128xf32>
    %cst = arith.constant dense<0.000000e+00> : vector<32x128xf32>
    %9 = tpu.matmul %7, %8, %cst {dimension_numbers = #tpu.dot_dimension_numbers<[1], [0], [0], [1], [0, 0, 1, 1], [], []>} : vector<32x128xf32>, vector<128x128xf32>, vector<32x128xf32> -> vector<32x128xf32>
    %c0_4 = arith.constant 0 : index
    %c0_5 = arith.constant 0 : index
    %10 = vector.load %arg5[%c0_4, %c0_5] : memref<1x128xf32, #tpu.memory_space<vmem>>, vector<1x128xf32>
    %11 = vector.broadcast %10 : vector<1x128xf32> to vector<32x128xf32>
    %12 = arith.addf %9, %11 : vector<32x128xf32>
    %cst_6 = arith.constant 0.176776692 : f32
    %13 = vector.broadcast %cst_6 : f32 to vector<32x128xf32>
    %14 = arith.mulf %12, %13 : vector<32x128xf32>
    %15 = vector.extract_strided_slice %14 {offsets = [0, 0], sizes = [32, 32], strides = [1, 1]} : vector<32x128xf32> to vector<32x32xf32>
    %cst_7 = arith.constant 0xFF800000 : f32
    %16 = vector.broadcast %cst_7 : f32 to vector<32x1xf32>
    %cst_8 = arith.constant 0.000000e+00 : f32
    %17 = vector.broadcast %cst_8 : f32 to vector<32x1xf32>
    %cst_9 = arith.constant 0.000000e+00 : f32
    %18 = vector.broadcast %cst_9 : f32 to vector<32x32xf32>
    %c0_i32_10 = arith.constant 0 : i32
    %c128_i32 = arith.constant 128 : i32
    %19 = arith.muli %c0_i32_10, %c128_i32 : i32
    %20 = tpu.assume_multiple %19, 128 : i32
    %c0_11 = arith.constant 0 : index
    %21 = arith.index_cast %20 : i32 to index
    %22 = vector.load %arg17[%c0_11, %21] : memref<128x128xf32, #tpu.memory_space<vmem>>, vector<32x128xf32>
    %23 = arith.index_cast %20 : i32 to index
    %c0_12 = arith.constant 0 : index
    %24 = vector.load %arg18[%23, %c0_12] : memref<128x128xf32, #tpu.memory_space<vmem>>, vector<128x32xf32>
    %cst_13 = arith.constant dense<0.000000e+00> : vector<32x128xf32>
    %25 = tpu.matmul %15, %22, %cst_13 {dimension_numbers = #tpu.dot_dimension_numbers<[1], [0], [0], [1], [0, 0, 1, 1], [], []>} : vector<32x32xf32>, vector<32x128xf32>, vector<32x128xf32> -> vector<32x128xf32>
    %cst_14 = arith.constant dense<0xFF800000> : vector<32xf32>
    %26 = vector.multi_reduction <maximumf>, %25, %cst_14 [1] : vector<32x128xf32> to vector<32xf32>
    %27 = vector.shape_cast %26 : vector<32xf32> to vector<32x1xf32>
    %28 = arith.maximumf %16, %27 : vector<32x1xf32>
    %29 = arith.subf %16, %28 : vector<32x1xf32>
    %30 = math.exp %29 : vector<32x1xf32>
    %31 = vector.broadcast %28 : vector<32x1xf32> to vector<32x128xf32>
    %32 = arith.subf %25, %31 : vector<32x128xf32>
    %33 = math.exp %32 : vector<32x128xf32>
    %34 = arith.mulf %30, %17 : vector<32x1xf32>
    %cst_15 = arith.constant dense<0.000000e+00> : vector<32xf32>
    %35 = vector.multi_reduction <add>, %33, %cst_15 [1] : vector<32x128xf32> to vector<32xf32>
    %36 = vector.shape_cast %35 : vector<32xf32> to vector<32x1xf32>
    %37 = arith.addf %34, %36 : vector<32x1xf32>
    %38 = vector.broadcast %30 : vector<32x1xf32> to vector<32x32xf32>
    %39 = arith.mulf %38, %18 : vector<32x32xf32>
    %cst_16 = arith.constant dense<0.000000e+00> : vector<32x32xf32>
    %40 = tpu.matmul %33, %24, %cst_16 {dimension_numbers = #tpu.dot_dimension_numbers<[1], [0], [0], [1], [0, 0, 1, 1], [], []>} : vector<32x128xf32>, vector<128x32xf32>, vector<32x32xf32> -> vector<32x32xf32>
    %41 = arith.addf %39, %40 : vector<32x32xf32>
    %c1_i32 = arith.constant 1 : i32
    %42 = tpu.reciprocal %37 : vector<32x1xf32> -> vector<32x1xf32>
    %43 = vector.broadcast %42 : vector<32x1xf32> to vector<32x32xf32>
    %44 = arith.mulf %41, %43 : vector<32x32xf32>
    %c0_17 = arith.constant 0 : index
    %c0_18 = arith.constant 0 : index
    %45 = vector.load %arg19[%c0_17, %c0_18] : memref<32x128xf32, #tpu.memory_space<vmem>>, vector<32x32xf32>
    tpu.vector_store %arg19[%c0_17, %c0_18], %44 {strides = array<i32>} : memref<32x128xf32, #tpu.memory_space<vmem>>, vector<32x32xf32>,
    %46 = vector.extract_strided_slice %14 {offsets = [0, 32], sizes = [32, 32], strides = [1, 1]} : vector<32x128xf32> to vector<32x32xf32>
    %cst_19 = arith.constant 0xFF800000 : f32
    %47 = vector.broadcast %cst_19 : f32 to vector<32x1xf32>
    %cst_20 = arith.constant 0.000000e+00 : f32
    %48 = vector.broadcast %cst_20 : f32 to vector<32x1xf32>
    %cst_21 = arith.constant 0.000000e+00 : f32
    %49 = vector.broadcast %cst_21 : f32 to vector<32x32xf32>
    %c0_i32_22 = arith.constant 0 : i32
    %c128_i32_23 = arith.constant 128 : i32
    %50 = arith.muli %c0_i32_22, %c128_i32_23 : i32
    %51 = tpu.assume_multiple %50, 128 : i32
    %c32 = arith.constant 32 : index
    %52 = arith.index_cast %51 : i32 to index
    %53 = vector.load %arg17[%c32, %52] : memref<128x128xf32, #tpu.memory_space<vmem>>, vector<32x128xf32>
    %54 = arith.index_cast %51 : i32 to index
    %c32_24 = arith.constant 32 : index
    %55 = vector.load %arg18[%54, %c32_24] : memref<128x128xf32, #tpu.memory_space<vmem>>, vector<128x32xf32>
    %cst_25 = arith.constant dense<0.000000e+00> : vector<32x128xf32>
    %56 = tpu.matmul %46, %53, %cst_25 {dimension_numbers = #tpu.dot_dimension_numbers<[1], [0], [0], [1], [0, 0, 1, 1], [], []>} : vector<32x32xf32>, vector<32x128xf32>, vector<32x128xf32> -> vector<32x128xf32>
    %cst_26 = arith.constant dense<0xFF800000> : vector<32xf32>
    %57 = vector.multi_reduction <maximumf>, %56, %cst_26 [1] : vector<32x128xf32> to vector<32xf32>
    %58 = vector.shape_cast %57 : vector<32xf32> to vector<32x1xf32>
    %59 = arith.maximumf %47, %58 : vector<32x1xf32>
    %60 = arith.subf %47, %59 : vector<32x1xf32>
    %61 = math.exp %60 : vector<32x1xf32>
    %62 = vector.broadcast %59 : vector<32x1xf32> to vector<32x128xf32>
    %63 = arith.subf %56, %62 : vector<32x128xf32>
    %64 = math.exp %63 : vector<32x128xf32>
    %65 = arith.mulf %61, %48 : vector<32x1xf32>
    %cst_27 = arith.constant dense<0.000000e+00> : vector<32xf32>
    %66 = vector.multi_reduction <add>, %64, %cst_27 [1] : vector<32x128xf32> to vector<32xf32>
    %67 = vector.shape_cast %66 : vector<32xf32> to vector<32x1xf32>
    %68 = arith.addf %65, %67 : vector<32x1xf32>
    %69 = vector.broadcast %61 : vector<32x1xf32> to vector<32x32xf32>
    %70 = arith.mulf %69, %49 : vector<32x32xf32>
    %cst_28 = arith.constant dense<0.000000e+00> : vector<32x32xf32>
    %71 = tpu.matmul %64, %55, %cst_28 {dimension_numbers = #tpu.dot_dimension_numbers<[1], [0], [0], [1], [0, 0, 1, 1], [], []>} : vector<32x128xf32>, vector<128x32xf32>, vector<32x32xf32> -> vector<32x32xf32>
    %72 = arith.addf %70, %71 : vector<32x32xf32>
    %c1_i32_29 = arith.constant 1 : i32
    %73 = tpu.reciprocal %68 : vector<32x1xf32> -> vector<32x1xf32>
    %74 = vector.broadcast %73 : vector<32x1xf32> to vector<32x32xf32>
    %75 = arith.mulf %72, %74 : vector<32x32xf32>
    %c0_30 = arith.constant 0 : index
    %c32_31 = arith.constant 32 : index
    %76 = vector.load %arg19[%c0_30, %c32_31] : memref<32x128xf32, #tpu.memory_space<vmem>>, vector<32x32xf32>
    tpu.vector_store %arg19[%c0_30, %c32_31], %75 {strides = array<i32>} : memref<32x128xf32, #tpu.memory_space<vmem>>, vector<32x32xf32>,
    %77 = vector.extract_strided_slice %14 {offsets = [0, 64], sizes = [32, 32], strides = [1, 1]} : vector<32x128xf32> to vector<32x32xf32>
    %cst_32 = arith.constant 0xFF800000 : f32
    %78 = vector.broadcast %cst_32 : f32 to vector<32x1xf32>
    %cst_33 = arith.constant 0.000000e+00 : f32
    %79 = vector.broadcast %cst_33 : f32 to vector<32x1xf32>
    %cst_34 = arith.constant 0.000000e+00 : f32
    %80 = vector.broadcast %cst_34 : f32 to vector<32x32xf32>
    %c0_i32_35 = arith.constant 0 : i32
    %c128_i32_36 = arith.constant 128 : i32
    %81 = arith.muli %c0_i32_35, %c128_i32_36 : i32
    %82 = tpu.assume_multiple %81, 128 : i32
    %c64 = arith.constant 64 : index
    %83 = arith.index_cast %82 : i32 to index
    %84 = vector.load %arg17[%c64, %83] : memref<128x128xf32, #tpu.memory_space<vmem>>, vector<32x128xf32>
    %85 = arith.index_cast %82 : i32 to index
    %c64_37 = arith.constant 64 : index
    %86 = vector.load %arg18[%85, %c64_37] : memref<128x128xf32, #tpu.memory_space<vmem>>, vector<128x32xf32>
    %cst_38 = arith.constant dense<0.000000e+00> : vector<32x128xf32>
    %87 = tpu.matmul %77, %84, %cst_38 {dimension_numbers = #tpu.dot_dimension_numbers<[1], [0], [0], [1], [0, 0, 1, 1], [], []>} : vector<32x32xf32>, vector<32x128xf32>, vector<32x128xf32> -> vector<32x128xf32>
    %cst_39 = arith.constant dense<0xFF800000> : vector<32xf32>
    %88 = vector.multi_reduction <maximumf>, %87, %cst_39 [1] : vector<32x128xf32> to vector<32xf32>
    %89 = vector.shape_cast %88 : vector<32xf32> to vector<32x1xf32>
    %90 = arith.maximumf %78, %89 : vector<32x1xf32>
    %91 = arith.subf %78, %90 : vector<32x1xf32>
    %92 = math.exp %91 : vector<32x1xf32>
    %93 = vector.broadcast %90 : vector<32x1xf32> to vector<32x128xf32>
    %94 = arith.subf %87, %93 : vector<32x128xf32>
    %95 = math.exp %94 : vector<32x128xf32>
    %96 = arith.mulf %92, %79 : vector<32x1xf32>
    %cst_40 = arith.constant dense<0.000000e+00> : vector<32xf32>
    %97 = vector.multi_reduction <add>, %95, %cst_40 [1] : vector<32x128xf32> to vector<32xf32>
    %98 = vector.shape_cast %97 : vector<32xf32> to vector<32x1xf32>
    %99 = arith.addf %96, %98 : vector<32x1xf32>
    %100 = vector.broadcast %92 : vector<32x1xf32> to vector<32x32xf32>
    %101 = arith.mulf %100, %80 : vector<32x32xf32>
    %cst_41 = arith.constant dense<0.000000e+00> : vector<32x32xf32>
    %102 = tpu.matmul %95, %86, %cst_41 {dimension_numbers = #tpu.dot_dimension_numbers<[1], [0], [0], [1], [0, 0, 1, 1], [], []>} : vector<32x128xf32>, vector<128x32xf32>, vector<32x32xf32> -> vector<32x32xf32>
    %103 = arith.addf %101, %102 : vector<32x32xf32>
    %c1_i32_42 = arith.constant 1 : i32
    %104 = tpu.reciprocal %99 : vector<32x1xf32> -> vector<32x1xf32>
    %105 = vector.broadcast %104 : vector<32x1xf32> to vector<32x32xf32>
    %106 = arith.mulf %103, %105 : vector<32x32xf32>
    %c0_43 = arith.constant 0 : index
    %c64_44 = arith.constant 64 : index
    %107 = vector.load %arg19[%c0_43, %c64_44] : memref<32x128xf32, #tpu.memory_space<vmem>>, vector<32x32xf32>
    tpu.vector_store %arg19[%c0_43, %c64_44], %106 {strides = array<i32>} : memref<32x128xf32, #tpu.memory_space<vmem>>, vector<32x32xf32>,
    %108 = vector.extract_strided_slice %14 {offsets = [0, 96], sizes = [32, 32], strides = [1, 1]} : vector<32x128xf32> to vector<32x32xf32>
    %cst_45 = arith.constant 0xFF800000 : f32
    %109 = vector.broadcast %cst_45 : f32 to vector<32x1xf32>
    %cst_46 = arith.constant 0.000000e+00 : f32
    %110 = vector.broadcast %cst_46 : f32 to vector<32x1xf32>
    %cst_47 = arith.constant 0.000000e+00 : f32
    %111 = vector.broadcast %cst_47 : f32 to vector<32x32xf32>
    %c0_i32_48 = arith.constant 0 : i32
    %c128_i32_49 = arith.constant 128 : i32
    %112 = arith.muli %c0_i32_48, %c128_i32_49 : i32
    %113 = tpu.assume_multiple %112, 128 : i32
    %c96 = arith.constant 96 : index
    %114 = arith.index_cast %113 : i32 to index
    %115 = vector.load %arg17[%c96, %114] : memref<128x128xf32, #tpu.memory_space<vmem>>, vector<32x128xf32>
    %116 = arith.index_cast %113 : i32 to index
    %c96_50 = arith.constant 96 : index
    %117 = vector.load %arg18[%116, %c96_50] : memref<128x128xf32, #tpu.memory_space<vmem>>, vector<128x32xf32>
    %cst_51 = arith.constant dense<0.000000e+00> : vector<32x128xf32>
    %118 = tpu.matmul %108, %115, %cst_51 {dimension_numbers = #tpu.dot_dimension_numbers<[1], [0], [0], [1], [0, 0, 1, 1], [], []>} : vector<32x32xf32>, vector<32x128xf32>, vector<32x128xf32> -> vector<32x128xf32>
    %cst_52 = arith.constant dense<0xFF800000> : vector<32xf32>
    %119 = vector.multi_reduction <maximumf>, %118, %cst_52 [1] : vector<32x128xf32> to vector<32xf32>
    %120 = vector.shape_cast %119 : vector<32xf32> to vector<32x1xf32>
    %121 = arith.maximumf %109, %120 : vector<32x1xf32>
    %122 = arith.subf %109, %121 : vector<32x1xf32>
    %123 = math.exp %122 : vector<32x1xf32>
    %124 = vector.broadcast %121 : vector<32x1xf32> to vector<32x128xf32>
    %125 = arith.subf %118, %124 : vector<32x128xf32>
    %126 = math.exp %125 : vector<32x128xf32>
    %127 = arith.mulf %123, %110 : vector<32x1xf32>
    %cst_53 = arith.constant dense<0.000000e+00> : vector<32xf32>
    %128 = vector.multi_reduction <add>, %126, %cst_53 [1] : vector<32x128xf32> to vector<32xf32>
    %129 = vector.shape_cast %128 : vector<32xf32> to vector<32x1xf32>
    %130 = arith.addf %127, %129 : vector<32x1xf32>
    %131 = vector.broadcast %123 : vector<32x1xf32> to vector<32x32xf32>
    %132 = arith.mulf %131, %111 : vector<32x32xf32>
    %cst_54 = arith.constant dense<0.000000e+00> : vector<32x32xf32>
    %133 = tpu.matmul %126, %117, %cst_54 {dimension_numbers = #tpu.dot_dimension_numbers<[1], [0], [0], [1], [0, 0, 1, 1], [], []>} : vector<32x128xf32>, vector<128x32xf32>, vector<32x32xf32> -> vector<32x32xf32>
    %134 = arith.addf %132, %133 : vector<32x32xf32>
    %c1_i32_55 = arith.constant 1 : i32
    %135 = tpu.reciprocal %130 : vector<32x1xf32> -> vector<32x1xf32>
    %136 = vector.broadcast %135 : vector<32x1xf32> to vector<32x32xf32>
    %137 = arith.mulf %134, %136 : vector<32x32xf32>
    %c0_56 = arith.constant 0 : index
    %c96_57 = arith.constant 96 : index
    %138 = vector.load %arg19[%c0_56, %c96_57] : memref<32x128xf32, #tpu.memory_space<vmem>>, vector<32x32xf32>
    tpu.vector_store %arg19[%c0_56, %c96_57], %137 {strides = array<i32>} : memref<32x128xf32, #tpu.memory_space<vmem>>, vector<32x32xf32>,
    %c0_58 = arith.constant 0 : index
    %c0_59 = arith.constant 0 : index
    %139 = vector.load %arg19[%c0_58, %c0_59] : memref<32x128xf32, #tpu.memory_space<vmem>>, vector<32x128xf32>
    %c0_60 = arith.constant 0 : index
    %c0_61 = arith.constant 0 : index
    %140 = vector.load %arg10[%c0_60, %c0_61] : memref<128x128xf32, #tpu.memory_space<vmem>>, vector<128x128xf32>
    %cst_62 = arith.constant dense<0.000000e+00> : vector<32x128xf32>
    %141 = tpu.matmul %139, %140, %cst_62 {dimension_numbers = #tpu.dot_dimension_numbers<[1], [0], [0], [1], [0, 0, 1, 1], [], []>} : vector<32x128xf32>, vector<128x128xf32>, vector<32x128xf32> -> vector<32x128xf32>
    %c0_63 = arith.constant 0 : index
    %142 = memref.load %arg2[%c0_63] : memref<1xf32, #tpu.memory_space<smem>>
    %c0_64 = arith.constant 0 : index
    %c0_65 = arith.constant 0 : index
    %143 = vector.load %arg11[%c0_64, %c0_65] : memref<1x128xf32, #tpu.memory_space<vmem>>, vector<1x128xf32>
    %144 = vector.broadcast %143 : vector<1x128xf32> to vector<32x128xf32>
    %145 = arith.addf %141, %144 : vector<32x128xf32>
    %146 = vector.broadcast %142 : f32 to vector<32x128xf32>
    %147 = arith.mulf %146, %145 : vector<32x128xf32>
    %148 = arith.addf %7, %147 : vector<32x128xf32>
    %cst_66 = arith.constant 0.000000e+00 : f32
    %149 = vector.broadcast %cst_66 : f32 to vector<32x128xf32>
    %c0_67 = arith.constant 0 : index
    %c0_68 = arith.constant 0 : index
    %150 = vector.load %arg12[%c0_67, %c0_68] : memref<128x256xf32, #tpu.memory_space<vmem>>, vector<128x256xf32>
    %cst_69 = arith.constant dense<0.000000e+00> : vector<32x256xf32>
    %151 = tpu.matmul %148, %150, %cst_69 {dimension_numbers = #tpu.dot_dimension_numbers<[1], [0], [0], [1], [0, 0, 1, 1], [], []>} : vector<32x128xf32>, vector<128x256xf32>, vector<32x256xf32> -> vector<32x256xf32>
    %c0_70 = arith.constant 0 : index
    %c0_71 = arith.constant 0 : index
    %152 = vector.load %arg13[%c0_70, %c0_71] : memref<1x256xf32, #tpu.memory_space<vmem>>, vector<1x256xf32>
    %153 = vector.broadcast %152 : vector<1x256xf32> to vector<32x256xf32>
    %154 = arith.addf %151, %153 : vector<32x256xf32>
    %cst_72 = arith.constant 0.000000e+00 : f32
    %155 = vector.broadcast %cst_72 : f32 to vector<32x256xf32>
    %156 = arith.maximumf %154, %155 : vector<32x256xf32>
    %c0_73 = arith.constant 0 : index
    %c0_74 = arith.constant 0 : index
    %157 = vector.load %arg14[%c0_73, %c0_74] : memref<256x128xf32, #tpu.memory_space<vmem>>, vector<256x128xf32>
    %cst_75 = arith.constant dense<0.000000e+00> : vector<32x128xf32>
    %158 = tpu.matmul %156, %157, %cst_75 {dimension_numbers = #tpu.dot_dimension_numbers<[1], [0], [0], [1], [0, 0, 1, 1], [], []>} : vector<32x256xf32>, vector<256x128xf32>, vector<32x128xf32> -> vector<32x128xf32>
    %159 = arith.addf %149, %158 : vector<32x128xf32>
    %c0_76 = arith.constant 0 : index
    %c0_77 = arith.constant 0 : index
    %160 = vector.load %arg15[%c0_76, %c0_77] : memref<1x128xf32, #tpu.memory_space<vmem>>, vector<1x128xf32>
    %161 = vector.broadcast %160 : vector<1x128xf32> to vector<32x128xf32>
    %162 = arith.addf %159, %161 : vector<32x128xf32>
    %163 = vector.broadcast %142 : f32 to vector<32x128xf32>
    %164 = arith.mulf %163, %162 : vector<32x128xf32>
    %165 = arith.addf %148, %164 : vector<32x128xf32>
    %c0_78 = arith.constant 0 : index
    %c0_79 = arith.constant 0 : index
    %c0_80 = arith.constant 0 : index
    %166 = vector.load %arg16[%c0_78, %c0_79, %c0_80] : memref<1x32x128xf32, #tpu.memory_space<vmem>>, vector<1x32x128xf32>
    %167 = vector.shape_cast %166 : vector<1x32x128xf32> to vector<32x128xf32>
    %168 = vector.shape_cast %165 : vector<32x128xf32> to vector<1x32x128xf32>
    tpu.vector_store %arg16[%c0_78, %c0_79, %c0_80], %168 {strides = array<i32>} : memref<1x32x128xf32, #tpu.memory_space<vmem>>, vector<1x32x128xf32>,
    return
  }
  func.func @transform_0(%arg0: i32, %arg1: i32) -> i32 {
    %c0_i32 = arith.constant 0 : i32
    %c0_i32_0 = arith.constant 0 : i32
    return %c0_i32 : i32
  }
  func.func @transform_1(%arg0: i32, %arg1: i32) -> (i32, i32, i32) {
    %c0_i32 = arith.constant 0 : i32
    %c0_i32_0 = arith.constant 0 : i32
    %c0_i32_1 = arith.constant 0 : i32
    return %arg0, %c0_i32, %c0_i32_0 : i32, i32, i32
  }
  func.func @transform_2(%arg0: i32, %arg1: i32) -> (i32, i32) {
    %c0_i32 = arith.constant 0 : i32
    %c0_i32_0 = arith.constant 0 : i32
    %c0_i32_1 = arith.constant 0 : i32
    return %c0_i32, %c0_i32_0 : i32, i32
  }
  func.func @transform_3(%arg0: i32, %arg1: i32) -> (i32, i32) {
    %c0_i32 = arith.constant 0 : i32
    %c0_i32_0 = arith.constant 0 : i32
    %c0_i32_1 = arith.constant 0 : i32
    return %c0_i32, %c0_i32_0 : i32, i32
  }
  func.func @transform_4(%arg0: i32, %arg1: i32) -> (i32, i32) {
    %c0_i32 = arith.constant 0 : i32
    %c0_i32_0 = arith.constant 0 : i32
    %c0_i32_1 = arith.constant 0 : i32
    return %c0_i32, %c0_i32_0 : i32, i32
  }
  func.func @transform_5(%arg0: i32, %arg1: i32) -> (i32, i32) {
    %c0_i32 = arith.constant 0 : i32
    %c0_i32_0 = arith.constant 0 : i32
    %c0_i32_1 = arith.constant 0 : i32
    return %c0_i32, %c0_i32_0 : i32, i32
  }
  func.func @transform_6(%arg0: i32, %arg1: i32) -> (i32, i32) {
    %c0_i32 = arith.constant 0 : i32
    %c0_i32_0 = arith.constant 0 : i32
    %c0_i32_1 = arith.constant 0 : i32
    return %c0_i32, %c0_i32_0 : i32, i32
  }
  func.func @transform_7(%arg0: i32, %arg1: i32) -> (i32, i32) {
    %c0_i32 = arith.constant 0 : i32
    %c0_i32_0 = arith.constant 0 : i32
    %c0_i32_1 = arith.constant 0 : i32
    return %c0_i32, %c0_i32_0 : i32, i32
  }
  func.func @transform_8(%arg0: i32, %arg1: i32) -> (i32, i32) {
    %c0_i32 = arith.constant 0 : i32
    %c0_i32_0 = arith.constant 0 : i32
    %c0_i32_1 = arith.constant 0 : i32
    return %c0_i32, %c0_i32_0 : i32, i32
  }
  func.func @transform_9(%arg0: i32, %arg1: i32) -> (i32, i32) {
    %c0_i32 = arith.constant 0 : i32
    %c0_i32_0 = arith.constant 0 : i32
    %c0_i32_1 = arith.constant 0 : i32
    return %c0_i32, %c0_i32_0 : i32, i32
  }
  func.func @transform_10(%arg0: i32, %arg1: i32) -> (i32, i32) {
    %c0_i32 = arith.constant 0 : i32
    %c0_i32_0 = arith.constant 0 : i32
    %c0_i32_1 = arith.constant 0 : i32
    return %c0_i32, %c0_i32_0 : i32, i32
  }
  func.func @transform_11(%arg0: i32, %arg1: i32) -> (i32, i32) {
    %c0_i32 = arith.constant 0 : i32
    %c0_i32_0 = arith.constant 0 : i32
    %c0_i32_1 = arith.constant 0 : i32
    return %c0_i32, %c0_i32_0 : i32, i32
  }
  func.func @transform_12(%arg0: i32, %arg1: i32) -> (i32, i32) {
    %c0_i32 = arith.constant 0 : i32
    %c0_i32_0 = arith.constant 0 : i32
    %c0_i32_1 = arith.constant 0 : i32
    return %c0_i32, %c0_i32_0 : i32, i32
  }
  func.func @transform_13(%arg0: i32, %arg1: i32) -> (i32, i32) {
    %c0_i32 = arith.constant 0 : i32
    %c0_i32_0 = arith.constant 0 : i32
    %c0_i32_1 = arith.constant 0 : i32
    return %c0_i32, %c0_i32_0 : i32, i32
  }
  func.func @transform_14(%arg0: i32, %arg1: i32) -> (i32, i32, i32) {
    %c0_i32 = arith.constant 0 : i32
    %c0_i32_0 = arith.constant 0 : i32
    return %arg0, %arg1, %c0_i32 : i32, i32, i32
  }
}

</mosaic_0001>

<llo_original>
// kernel: tpu_custom_call.1
$region0: #{tpu_custom_call.1}
  #allocation0 [shape = 'u32[]', space=smem, size = 0x4, offset = 0x4, fixed_abs, tag = 'smem constant byte address 0x4 - core index']
  #allocation1 [shape = 'u32[144,128]{1,0:T(1,128)}', space=vmem, size = 0x12000, scoped, tag = 'internal scratch']
  #allocation2 [shape = 'f32[128,128]{1,0:T(8,128)}', space=vmem, size = 0x10000, scoped, tag = 'scratch operand']
  #allocation3 [shape = 'f32[128,128]{1,0:T(8,128)}', space=vmem, size = 0x10000, scoped, tag = 'scratch operand']
  #allocation4 [shape = 'f32[32,128]{1,0:T(8,128)}', space=vmem, size = 0x4000, scoped, tag = 'scratch operand']
  #allocation5 [shape = 'f32[1]{0:T(128)S(6)}', space=smem, size = 0x200, scoped, tag = 'scoped memory for tpu_custom_call.1']
  %s0 = inlined_call_operand.<no memory space> [shape: f32[1], index: 0, kind: input, shape index: {}]
  %s1 = inlined_call_operand.hbm [shape: f32[2,128,128], index: 1, kind: input, shape index: {}]
  %s2 = inlined_call_operand.hbm [shape: f32[128,128], index: 2, kind: input, shape index: {}]
  %s3 = inlined_call_operand.vmem [shape: f32[1,128], index: 3, kind: input, shape index: {}]
  %s4 = inlined_call_operand.hbm [shape: f32[128,128], index: 4, kind: input, shape index: {}]
  %s5 = inlined_call_operand.vmem [shape: f32[1,128], index: 5, kind: input, shape index: {}]
  %s6 = inlined_call_operand.hbm [shape: f32[128,128], index: 6, kind: input, shape index: {}]
  %s7 = inlined_call_operand.vmem [shape: f32[1,128], index: 7, kind: input, shape index: {}]
  %s8 = inlined_call_operand.hbm [shape: f32[128,128], index: 8, kind: input, shape index: {}]
  %s9 = inlined_call_operand.vmem [shape: f32[1,128], index: 9, kind: input, shape index: {}]
  %s10 = inlined_call_operand.hbm [shape: f32[128,256], index: 10, kind: input, shape index: {}]
  %s11 = inlined_call_operand.vmem [shape: f32[1,256], index: 11, kind: input, shape index: {}]
  %s12 = inlined_call_operand.hbm [shape: f32[256,128], index: 12, kind: input, shape index: {}]
  %s13 = inlined_call_operand.vmem [shape: f32[1,128], index: 13, kind: input, shape index: {}]
  %s14 = inlined_call_operand.hbm [shape: f32[2,128,128], index: 14, kind: output, shape index: {}]
  %s15 = sld [smem:[#allocation0]]
  $region121: #{tpu_custom_call.1} parent=0
    _
  %s17 = ssub.s32 1, %s15
  %s18 = scalar_select 0, %s17, %s15
  %19 = sst [smem:[#allocation5]] %s0
  $region1: #{tpu_custom_call.1} parent=0
    #allocation6 [shape = 'u8[65536]{0}', space=vmem, size = 0x10000, scoped, tag = 'input window, operand 1, single buffered']
    #allocation7 [shape = 's32[2]{0}', space=sflag, size = 0x8, scoped, tag = 'scoped memory for tpu_custom_call.1']
    #allocation8 [shape = 's32[2]{0}', space=sflag, size = 0x8, scoped, tag = 'scoped memory for tpu_custom_call.1']
    #allocation9 [shape = 'u8[65536]{0}', space=vmem, size = 0x10000, scoped, tag = 'input window, operand 2, single buffered']
    #allocation10 [shape = 's32[1]{0}', space=sflag, size = 0x4, scoped, tag = 'scoped memory for tpu_custom_call.1']
    #allocation11 [shape = 'u8[65536]{0}', space=vmem, size = 0x10000, scoped, tag = 'input window, operand 4, single buffered']
    #allocation12 [shape = 'u8[65536]{0}', space=vmem, size = 0x10000, scoped, tag = 'input window, operand 6, single buffered']
    #allocation13 [shape = 's32[1]{0}', space=sflag, size = 0x4, scoped, tag = 'scoped memory for tpu_custom_call.1']
    #allocation14 [shape = 'u8[65536]{0}', space=vmem, size = 0x10000, scoped, tag = 'input window, operand 8, single buffered']
    #allocation15 [shape = 'u8[131072]{0}', space=vmem, size = 0x20000, scoped, tag = 'input window, operand 10, single buffered']
    #allocation16 [shape = 's32[1]{0}', space=sflag, size = 0x4, scoped, tag = 'scoped memory for tpu_custom_call.1']
    #allocation17 [shape = 'u8[131072]{0}', space=vmem, size = 0x20000, scoped, tag = 'input window, operand 12, single buffered']
    #allocation18 [shape = 'u8[32768]{0}', space=vmem, size = 0x8000, scoped, tag = 'output window, operand 0']
    %20 = vsyncpa [#allocation7], 0
    %21 = vsyncpa [#allocation10], 0
    %22 = vsyncpa [#allocation13], 0
    %23 = vsyncpa [#allocation16], 0
    %24 = vsyncpa [#allocation8], 0
    %s25 = scalar_lea.sflag [#allocation8], 1
    %26 = vsyncpa %s25, 0
    loop: start=0, step=1, limit=10
    $region2: #{tpu_custom_call.1} parent=1 // loop_pre_header
      _
    $region3: #{tpu_custom_call.1} parent=1 // loop_header
      %s28 = sphi 0, %s32
      %p29 = scmp.ge.s32.totalorder %s28, 10
      %s35 = sphi 0, %s47
      %s36 = sphi 0, %s43
      %s37 = sphi 0, %s35
      %s38 = sphi 0, %s36
      %s39 = sphi 0, %s37
      %s40 = sphi 0, %s38
      %s48 = sphi 0, %s48
      %s50 = sphi 0, %s48
      %s51 = sphi 0, %s50
      %s65 = sphi 0, %s51
      %s71 = sphi 0, %s73
      %s74 = sphi 0, %s71
      %s75 = sphi 0, %s74
      %s91 = sphi 0, %s75
      %s95 = sphi 0, %s95
      %s97 = sphi 0, %s95
      %s98 = sphi 0, %s97
      %s112 = sphi 0, %s98
      %s116 = sphi 0, %s116
      %s118 = sphi 0, %s116
      %s119 = sphi 0, %s118
      %s133 = sphi 0, %s119
      %s137 = sphi 0, %s137
      %s139 = sphi 0, %s137
      %s140 = sphi 0, %s139
      %s154 = sphi 0, %s140
      %s158 = sphi 0, %s158
      %s160 = sphi 0, %s158
      %s161 = sphi 0, %s160
      %s175 = sphi 0, %s161
      %s179 = sphi 0, %s179
      %s181 = sphi 0, %s179
      %s182 = sphi 0, %s181
      %s196 = sphi 0, %s182
      %s200 = sphi 0, %s200
      %s202 = sphi 0, %s200
      %s203 = sphi 0, %s202
      %s217 = sphi 0, %s203
      %s221 = sphi 0, %s221
      %s223 = sphi 0, %s221
      %s224 = sphi 0, %s223
      %s238 = sphi 0, %s224
      %s242 = sphi 0, %s242
      %s244 = sphi 0, %s242
      %s245 = sphi 0, %s244
      %s259 = sphi 0, %s245
      %s263 = sphi 0, %s263
      %s265 = sphi 0, %s263
      %s266 = sphi 0, %s265
      %s280 = sphi 0, %s266
      %s284 = sphi 0, %s284
      %s286 = sphi 0, %s284
      %s287 = sphi 0, %s286
      %s301 = sphi 0, %s287
      %s305 = sphi 0, %s305
      %s307 = sphi 0, %s305
      %s308 = sphi 0, %s307
      %s322 = sphi 0, %s308
      %s326 = sphi 0, %s326
      %s328 = sphi 0, %s326
      %s329 = sphi 0, %s328
      %s343 = sphi 0, %s329
      %s351 = sphi 0, %s353
      %s354 = sphi 0, %s351
      %s355 = sphi 0, %s354
      %s371 = sphi 0, %s355
    $region4: #{tpu_custom_call.1} parent=1 // loop_header_branch
      %31 = sbr.rel (%p29) target = $region8
    $region5: #{tpu_custom_call.1} parent=1 // loop_body
      %s33 = ssub.s32 %s28, 1
      %s34 = ssub.s32 %s28, 2
      %s41 = sadd.s32 1, %s36
      %p42 = scmp.ge.s32.totalorder %s41, 4
      %s43 = scalar_select %p42, 0, %s41
      %s44 = sadd.s32 1, %s35
      %s45 = scalar_select %p42, %s44, %s35
      %p46 = scmp.ge.s32.totalorder %s45, 2
      %s47 = scalar_select %p46, 0, %s45
      %s49 = sadd.s32 %s48, 1
      %p52 = scmp.eq.s32.totalorder %s28, 7
      %p53 = scmp.ne.s32.totalorder %s48, %s50
      %p54 = scmp.eq.s32.totalorder %s28, 0
      %p55 = por %p53, %p54
      %p56 = scmp.ne.s32.totalorder %s48, %s50
      %p57 = scmp.eq.s32.totalorder %s33, 7
      %p58 = por %p56, %p57
      %p59 = scmp.ne.s32.totalorder %s50, %s51
      %p60 = scmp.eq.s32.totalorder %s33, 0
      %p61 = por %p59, %p60
      %p62 = scmp.ne.s32.totalorder %s50, %s51
      %p63 = scmp.eq.s32.totalorder %s34, 7
      %p64 = por %p62, %p63
      %p66 = scmp.ne.s32.totalorder %s51, %s65
      %p67 = scmp.eq.s32.totalorder %s34, 0
      %p68 = por %p66, %p67
      %s69 = ssub.s32 %s35, %s47
      %p70 = scmp.eq.s32.totalorder %s69, 0
      %s72 = sadd.s32 %s71, 1
      %s73 = scalar_select %p70, %s71, %s72
      %p76 = pneg %p70
      %p77 = scmp.eq.s32.totalorder %s28, 7
      %p78 = por %p76, %p77
      %p79 = scmp.ne.s32.totalorder %s71, %s74
      %p80 = scmp.eq.s32.totalorder %s28, 0
      %p81 = por %p79, %p80
      %p82 = scmp.ne.s32.totalorder %s71, %s74
      %p83 = scmp.eq.s32.totalorder %s33, 7
      %p84 = por %p82, %p83
      %p85 = scmp.ne.s32.totalorder %s74, %s75
      %p86 = scmp.eq.s32.totalorder %s33, 0
      %p87 = por %p85, %p86
      %p88 = scmp.ne.s32.totalorder %s74, %s75
      %p89 = scmp.eq.s32.totalorder %s34, 7
      %p90 = por %p88, %p89
      %p92 = scmp.ne.s32.totalorder %s75, %s91
      %p93 = scmp.eq.s32.totalorder %s34, 0
      %p94 = por %p92, %p93
      %s96 = sadd.s32 %s95, 1
      %p99 = scmp.eq.s32.totalorder %s28, 7
      %p100 = scmp.ne.s32.totalorder %s95, %s97
      %p101 = scmp.eq.s32.totalorder %s28, 0
      %p102 = por %p100, %p101
      %p103 = scmp.ne.s32.totalorder %s95, %s97
      %p104 = scmp.eq.s32.totalorder %s33, 7
      %p105 = por %p103, %p104
      %p106 = scmp.ne.s32.totalorder %s97, %s98
      %p107 = scmp.eq.s32.totalorder %s33, 0
      %p108 = por %p106, %p107
      %p109 = scmp.ne.s32.totalorder %s97, %s98
      %p110 = scmp.eq.s32.totalorder %s34, 7
      %p111 = por %p109, %p110
      %p113 = scmp.ne.s32.totalorder %s98, %s112
      %p114 = scmp.eq.s32.totalorder %s34, 0
      %p115 = por %p113, %p114
      %s117 = sadd.s32 %s116, 1
      %p120 = scmp.eq.s32.totalorder %s28, 7
      %p121 = scmp.ne.s32.totalorder %s116, %s118
      %p122 = scmp.eq.s32.totalorder %s28, 0
      %p123 = por %p121, %p122
      %p124 = scmp.ne.s32.totalorder %s116, %s118
      %p125 = scmp.eq.s32.totalorder %s33, 7
      %p126 = por %p124, %p125
      %p127 = scmp.ne.s32.totalorder %s118, %s119
      %p128 = scmp.eq.s32.totalorder %s33, 0
      %p129 = por %p127, %p128
      %p130 = scmp.ne.s32.totalorder %s118, %s119
      %p131 = scmp.eq.s32.totalorder %s34, 7
      %p132 = por %p130, %p131
      %p134 = scmp.ne.s32.totalorder %s119, %s133
      %p135 = scmp.eq.s32.totalorder %s34, 0
      %p136 = por %p134, %p135
      %s138 = sadd.s32 %s137, 1
      %p141 = scmp.eq.s32.totalorder %s28, 7
      %p142 = scmp.ne.s32.totalorder %s137, %s139
      %p143 = scmp.eq.s32.totalorder %s28, 0
      %p144 = por %p142, %p143
      %p145 = scmp.ne.s32.totalorder %s137, %s139
      %p146 = scmp.eq.s32.totalorder %s33, 7
      %p147 = por %p145, %p146
      %p148 = scmp.ne.s32.totalorder %s139, %s140
      %p149 = scmp.eq.s32.totalorder %s33, 0
      %p150 = por %p148, %p149
      %p151 = scmp.ne.s32.totalorder %s139, %s140
      %p152 = scmp.eq.s32.totalorder %s34, 7
      %p153 = por %p151, %p152
      %p155 = scmp.ne.s32.totalorder %s140, %s154
      %p156 = scmp.eq.s32.totalorder %s34, 0
      %p157 = por %p155, %p156
      %s159 = sadd.s32 %s158, 1
      %p162 = scmp.eq.s32.totalorder %s28, 7
      %p163 = scmp.ne.s32.totalorder %s158, %s160
      %p164 = scmp.eq.s32.totalorder %s28, 0
      %p165 = por %p163, %p164
      %p166 = scmp.ne.s32.totalorder %s158, %s160
      %p167 = scmp.eq.s32.totalorder %s33, 7
      %p168 = por %p166, %p167
      %p169 = scmp.ne.s32.totalorder %s160, %s161
      %p170 = scmp.eq.s32.totalorder %s33, 0
      %p171 = por %p169, %p170
      %p172 = scmp.ne.s32.totalorder %s160, %s161
      %p173 = scmp.eq.s32.totalorder %s34, 7
      %p174 = por %p172, %p173
      %p176 = scmp.ne.s32.totalorder %s161, %s175
      %p177 = scmp.eq.s32.totalorder %s34, 0
      %p178 = por %p176, %p177
      %s180 = sadd.s32 %s179, 1
      %p183 = scmp.eq.s32.totalorder %s28, 7
      %p184 = scmp.ne.s32.totalorder %s179, %s181
      %p185 = scmp.eq.s32.totalorder %s28, 0
      %p186 = por %p184, %p185
      %p187 = scmp.ne.s32.totalorder %s179, %s181
      %p188 = scmp.eq.s32.totalorder %s33, 7
      %p189 = por %p187, %p188
      %p190 = scmp.ne.s32.totalorder %s181, %s182
      %p191 = scmp.eq.s32.totalorder %s33, 0
      %p192 = por %p190, %p191
      %p193 = scmp.ne.s32.totalorder %s181, %s182
      %p194 = scmp.eq.s32.totalorder %s34, 7
      %p195 = por %p193, %p194
      %p197 = scmp.ne.s32.totalorder %s182, %s196
      %p198 = scmp.eq.s32.totalorder %s34, 0
      %p199 = por %p197, %p198
      %s201 = sadd.s32 %s200, 1
      %p204 = scmp.eq.s32.totalorder %s28, 7
      %p205 = scmp.ne.s32.totalorder %s200, %s202
      %p206 = scmp.eq.s32.totalorder %s28, 0
      %p207 = por %p205, %p206
      %p208 = scmp.ne.s32.totalorder %s200, %s202
      %p209 = scmp.eq.s32.totalorder %s33, 7
      %p210 = por %p208, %p209
      %p211 = scmp.ne.s32.totalorder %s202, %s203
      %p212 = scmp.eq.s32.totalorder %s33, 0
      %p213 = por %p211, %p212
      %p214 = scmp.ne.s32.totalorder %s202, %s203
      %p215 = scmp.eq.s32.totalorder %s34, 7
      %p216 = por %p214, %p215
      %p218 = scmp.ne.s32.totalorder %s203, %s217
      %p219 = scmp.eq.s32.totalorder %s34, 0
      %p220 = por %p218, %p219
      %s222 = sadd.s32 %s221, 1
      %p225 = scmp.eq.s32.totalorder %s28, 7
      %p226 = scmp.ne.s32.totalorder %s221, %s223
      %p227 = scmp.eq.s32.totalorder %s28, 0
      %p228 = por %p226, %p227
      %p229 = scmp.ne.s32.totalorder %s221, %s223
      %p230 = scmp.eq.s32.totalorder %s33, 7
      %p231 = por %p229, %p230
      %p232 = scmp.ne.s32.totalorder %s223, %s224
      %p233 = scmp.eq.s32.totalorder %s33, 0
      %p234 = por %p232, %p233
      %p235 = scmp.ne.s32.totalorder %s223, %s224
      %p236 = scmp.eq.s32.totalorder %s34, 7
      %p237 = por %p235, %p236
      %p239 = scmp.ne.s32.totalorder %s224, %s238
      %p240 = scmp.eq.s32.totalorder %s34, 0
      %p241 = por %p239, %p240
      %s243 = sadd.s32 %s242, 1
      %p246 = scmp.eq.s32.totalorder %s28, 7
      %p247 = scmp.ne.s32.totalorder %s242, %s244
      %p248 = scmp.eq.s32.totalorder %s28, 0
      %p249 = por %p247, %p248
      %p250 = scmp.ne.s32.totalorder %s242, %s244
      %p251 = scmp.eq.s32.totalorder %s33, 7
      %p252 = por %p250, %p251
      %p253 = scmp.ne.s32.totalorder %s244, %s245
      %p254 = scmp.eq.s32.totalorder %s33, 0
      %p255 = por %p253, %p254
      %p256 = scmp.ne.s32.totalorder %s244, %s245
      %p257 = scmp.eq.s32.totalorder %s34, 7
      %p258 = por %p256, %p257
      %p260 = scmp.ne.s32.totalorder %s245, %s259
      %p261 = scmp.eq.s32.totalorder %s34, 0
      %p262 = por %p260, %p261
      %s264 = sadd.s32 %s263, 1
      %p267 = scmp.eq.s32.totalorder %s28, 7
      %p268 = scmp.ne.s32.totalorder %s263, %s265
      %p269 = scmp.eq.s32.totalorder %s28, 0
      %p270 = por %p268, %p269
      %p271 = scmp.ne.s32.totalorder %s263, %s265
      %p272 = scmp.eq.s32.totalorder %s33, 7
      %p273 = por %p271, %p272
      %p274 = scmp.ne.s32.totalorder %s265, %s266
      %p275 = scmp.eq.s32.totalorder %s33, 0
      %p276 = por %p274, %p275
      %p277 = scmp.ne.s32.totalorder %s265, %s266
      %p278 = scmp.eq.s32.totalorder %s34, 7
      %p279 = por %p277, %p278
      %p281 = scmp.ne.s32.totalorder %s266, %s280
      %p282 = scmp.eq.s32.totalorder %s34, 0
      %p283 = por %p281, %p282
      %s285 = sadd.s32 %s284, 1
      %p288 = scmp.eq.s32.totalorder %s28, 7
      %p289 = scmp.ne.s32.totalorder %s284, %s286
      %p290 = scmp.eq.s32.totalorder %s28, 0
      %p291 = por %p289, %p290
      %p292 = scmp.ne.s32.totalorder %s284, %s286
      %p293 = scmp.eq.s32.totalorder %s33, 7
      %p294 = por %p292, %p293
      %p295 = scmp.ne.s32.totalorder %s286, %s287
      %p296 = scmp.eq.s32.totalorder %s33, 0
      %p297 = por %p295, %p296
      %p298 = scmp.ne.s32.totalorder %s286, %s287
      %p299 = scmp.eq.s32.totalorder %s34, 7
      %p300 = por %p298, %p299
      %p302 = scmp.ne.s32.totalorder %s287, %s301
      %p303 = scmp.eq.s32.totalorder %s34, 0
      %p304 = por %p302, %p303
      %s306 = sadd.s32 %s305, 1
      %p309 = scmp.eq.s32.totalorder %s28, 7
      %p310 = scmp.ne.s32.totalorder %s305, %s307
      %p311 = scmp.eq.s32.totalorder %s28, 0
      %p312 = por %p310, %p311
      %p313 = scmp.ne.s32.totalorder %s305, %s307
      %p314 = scmp.eq.s32.totalorder %s33, 7
      %p315 = por %p313, %p314
      %p316 = scmp.ne.s32.totalorder %s307, %s308
      %p317 = scmp.eq.s32.totalorder %s33, 0
      %p318 = por %p316, %p317
      %p319 = scmp.ne.s32.totalorder %s307, %s308
      %p320 = scmp.eq.s32.totalorder %s34, 7
      %p321 = por %p319, %p320
      %p323 = scmp.ne.s32.totalorder %s308, %s322
      %p324 = scmp.eq.s32.totalorder %s34, 0
      %p325 = por %p323, %p324
      %s327 = sadd.s32 %s326, 1
      %p330 = scmp.eq.s32.totalorder %s28, 7
      %p331 = scmp.ne.s32.totalorder %s326, %s328
      %p332 = scmp.eq.s32.totalorder %s28, 0
      %p333 = por %p331, %p332
      %p334 = scmp.ne.s32.totalorder %s326, %s328
      %p335 = scmp.eq.s32.totalorder %s33, 7
      %p336 = por %p334, %p335
      %p337 = scmp.ne.s32.totalorder %s328, %s329
      %p338 = scmp.eq.s32.totalorder %s33, 0
      %p339 = por %p337, %p338
      %p340 = scmp.ne.s32.totalorder %s328, %s329
      %p341 = scmp.eq.s32.totalorder %s34, 7
      %p342 = por %p340, %p341
      %p344 = scmp.ne.s32.totalorder %s329, %s343
      %p345 = scmp.eq.s32.totalorder %s34, 0
      %p346 = por %p344, %p345
      %s347 = ssub.s32 %s35, %s47
      %s348 = ssub.s32 %s36, %s43
      %s349 = sor.u32 %s347, %s348
      %p350 = scmp.eq.s32.totalorder %s349, 0
      %s352 = sadd.s32 %s351, 1
      %s353 = scalar_select %p350, %s351, %s352
      %p356 = pneg %p350
      %p357 = scmp.eq.s32.totalorder %s28, 7
      %p358 = por %p356, %p357
      %p359 = scmp.ne.s32.totalorder %s351, %s354
      %p360 = scmp.eq.s32.totalorder %s28, 0
      %p361 = por %p359, %p360
      %p362 = scmp.ne.s32.totalorder %s351, %s354
      %p363 = scmp.eq.s32.totalorder %s33, 7
      %p364 = por %p362, %p363
      %p365 = scmp.ne.s32.totalorder %s354, %s355
      %p366 = scmp.eq.s32.totalorder %s33, 0
      %p367 = por %p365, %p366
      %p368 = scmp.ne.s32.totalorder %s354, %s355
      %p369 = scmp.eq.s32.totalorder %s34, 7
      %p370 = por %p368, %p369
      %p372 = scmp.ne.s32.totalorder %s355, %s371
      %p373 = scmp.eq.s32.totalorder %s34, 0
      %p374 = por %p372, %p373
      %p375 = scmp.le.s32.totalorder 1, %s28
      %p376 = scmp.lt.s32.totalorder %s28, 9
      %p377 = pnand %p375, %p376
      %p378 = pneg %p377
      // Predicated region
      $region9: #{tpu_custom_call.1} parent=5 // pred_check
        _
      $region10: #{tpu_custom_call.1} parent=5 // pred_check_branch
        %380 = sbr.rel (%p377) target = $region12
      $region11: #{tpu_custom_call.1} parent=5 // pred_region
        %s381 = ssub.s32 %s28, 1
        // Predicated region
        $region13: #{tpu_custom_call.1} parent=11 // pred_check
          %p382 = pneg %p61
        $region14: #{tpu_custom_call.1} parent=11 // pred_check_branch
          %384 = sbr.rel (%p382) target = $region16
        $region15: #{tpu_custom_call.1} parent=11 // pred_region
          _
        $region16: #{tpu_custom_call.1} parent=11 // pred_fallthru
          _
        // Predicated region
        $region17: #{tpu_custom_call.1} parent=11 // pred_check
          %p385 = pneg %p87
        $region18: #{tpu_custom_call.1} parent=11 // pred_check_branch
          %387 = sbr.rel (%p385) target = $region20
        $region19: #{tpu_custom_call.1} parent=11 // pred_region
          %s389 = ssub.s32 2048, 2048
          %390 = vsyncadd [#allocation7], %s389
          %s391 = smul.addr %s37, 16
          %s392 = smul.addr %s391, 128
          %s393 = scalar_lea.hbm %s1, %s392
          %s394 = sshll.u32 [#allocation6], 4
          %s395 = int_to_ptr.vmem [resolvable:$true] %s394
          %400 = dma.hbm_to_vmem [thread:$0]  %s393, 2048, %s395, [#allocation7], 128, 128, 8
        $region20: #{tpu_custom_call.1} parent=11 // pred_fallthru
          _
        // Predicated region
        $region21: #{tpu_custom_call.1} parent=11 // pred_check
          %p401 = pneg %p108
        $region22: #{tpu_custom_call.1} parent=11 // pred_check_branch
          %403 = sbr.rel (%p401) target = $region24
        $region23: #{tpu_custom_call.1} parent=11 // pred_region
          %s405 = ssub.s32 2048, 2048
          %406 = vsyncadd [#allocation10], %s405
          %s407 = sshll.u32 [#allocation9], 4
          %s408 = int_to_ptr.vmem [resolvable:$true] %s407
          %413 = dma.hbm_to_vmem [thread:$0]  %s2, 2048, %s408, [#allocation10], 128, 128, 8
        $region24: #{tpu_custom_call.1} parent=11 // pred_fallthru
          _
        // Predicated region
        $region25: #{tpu_custom_call.1} parent=11 // pred_check
          %p414 = pneg %p129
        $region26: #{tpu_custom_call.1} parent=11 // pred_check_branch
          %416 = sbr.rel (%p414) target = $region28
        $region27: #{tpu_custom_call.1} parent=11 // pred_region
          _
        $region28: #{tpu_custom_call.1} parent=11 // pred_fallthru
          _
        // Predicated region
        $region29: #{tpu_custom_call.1} parent=11 // pred_check
          %p417 = pneg %p150
        $region30: #{tpu_custom_call.1} parent=11 // pred_check_branch
          %419 = sbr.rel (%p417) target = $region32
        $region31: #{tpu_custom_call.1} parent=11 // pred_region
          %s421 = ssub.s32 2048, 2048
          %422 = vsyncadd [#allocation10], %s421
          %s423 = sshll.u32 [#allocation11], 4
          %s424 = int_to_ptr.vmem [resolvable:$true] %s423
          %429 = dma.hbm_to_vmem [thread:$0]  %s4, 2048, %s424, [#allocation10], 128, 128, 8
        $region32: #{tpu_custom_call.1} parent=11 // pred_fallthru
          _
        // Predicated region
        $region33: #{tpu_custom_call.1} parent=11 // pred_check
          %p430 = pneg %p171
        $region34: #{tpu_custom_call.1} parent=11 // pred_check_branch
          %432 = sbr.rel (%p430) target = $region36
        $region35: #{tpu_custom_call.1} parent=11 // pred_region
          _
        $region36: #{tpu_custom_call.1} parent=11 // pred_fallthru
          _
        // Predicated region
        $region37: #{tpu_custom_call.1} parent=11 // pred_check
          %p433 = pneg %p192
        $region38: #{tpu_custom_call.1} parent=11 // pred_check_branch
          %435 = sbr.rel (%p433) target = $region40
        $region39: #{tpu_custom_call.1} parent=11 // pred_region
          %s437 = ssub.s32 2048, 2048
          %438 = vsyncadd [#allocation13], %s437
          %s439 = sshll.u32 [#allocation12], 4
          %s440 = int_to_ptr.vmem [resolvable:$true] %s439
          %445 = dma.hbm_to_vmem [thread:$0]  %s6, 2048, %s440, [#allocation13], 128, 128, 8
        $region40: #{tpu_custom_call.1} parent=11 // pred_fallthru
          _
        // Predicated region
        $region41: #{tpu_custom_call.1} parent=11 // pred_check
          %p446 = pneg %p213
        $region42: #{tpu_custom_call.1} parent=11 // pred_check_branch
          %448 = sbr.rel (%p446) target = $region44
        $region43: #{tpu_custom_call.1} parent=11 // pred_region
          _
        $region44: #{tpu_custom_call.1} parent=11 // pred_fallthru
          _
        // Predicated region
        $region45: #{tpu_custom_call.1} parent=11 // pred_check
          %p449 = pneg %p234
        $region46: #{tpu_custom_call.1} parent=11 // pred_check_branch
          %451 = sbr.rel (%p449) target = $region48
        $region47: #{tpu_custom_call.1} parent=11 // pred_region
          %s453 = ssub.s32 2048, 2048
          %454 = vsyncadd [#allocation13], %s453
          %s455 = sshll.u32 [#allocation14], 4
          %s456 = int_to_ptr.vmem [resolvable:$true] %s455
          %461 = dma.hbm_to_vmem [thread:$0]  %s8, 2048, %s456, [#allocation13], 128, 128, 8
        $region48: #{tpu_custom_call.1} parent=11 // pred_fallthru
          _
        // Predicated region
        $region49: #{tpu_custom_call.1} parent=11 // pred_check
          %p462 = pneg %p255
        $region50: #{tpu_custom_call.1} parent=11 // pred_check_branch
          %464 = sbr.rel (%p462) target = $region52
        $region51: #{tpu_custom_call.1} parent=11 // pred_region
          _
        $region52: #{tpu_custom_call.1} parent=11 // pred_fallthru
          _
        // Predicated region
        $region53: #{tpu_custom_call.1} parent=11 // pred_check
          %p465 = pneg %p276
        $region54: #{tpu_custom_call.1} parent=11 // pred_check_branch
          %467 = sbr.rel (%p465) target = $region56
        $region55: #{tpu_custom_call.1} parent=11 // pred_region
          %s469 = ssub.s32 4096, 4096
          %470 = vsyncadd [#allocation16], %s469
          %s471 = sshll.u32 [#allocation15], 4
          %s472 = int_to_ptr.vmem [resolvable:$true] %s471
          %477 = dma.hbm_to_vmem [thread:$0]  %s10, 4096, %s472, [#allocation16], 256, 256, 16
        $region56: #{tpu_custom_call.1} parent=11 // pred_fallthru
          _
        // Predicated region
        $region57: #{tpu_custom_call.1} parent=11 // pred_check
          %p478 = pneg %p297
        $region58: #{tpu_custom_call.1} parent=11 // pred_check_branch
          %480 = sbr.rel (%p478) target = $region60
        $region59: #{tpu_custom_call.1} parent=11 // pred_region
          _
        $region60: #{tpu_custom_call.1} parent=11 // pred_fallthru
          _
        // Predicated region
        $region61: #{tpu_custom_call.1} parent=11 // pred_check
          %p481 = pneg %p318
        $region62: #{tpu_custom_call.1} parent=11 // pred_check_branch
          %483 = sbr.rel (%p481) target = $region64
        $region63: #{tpu_custom_call.1} parent=11 // pred_region
          %s485 = ssub.s32 4096, 4096
          %486 = vsyncadd [#allocation16], %s485
          %s487 = sshll.u32 [#allocation17], 4
          %s488 = int_to_ptr.vmem [resolvable:$true] %s487
          %493 = dma.hbm_to_vmem [thread:$0]  %s12, 4096, %s488, [#allocation16], 128, 128, 8
        $region64: #{tpu_custom_call.1} parent=11 // pred_fallthru
          _
        // Predicated region
        $region65: #{tpu_custom_call.1} parent=11 // pred_check
          %p494 = pneg %p339
        $region66: #{tpu_custom_call.1} parent=11 // pred_check_branch
          %496 = sbr.rel (%p494) target = $region68
        $region67: #{tpu_custom_call.1} parent=11 // pred_region
          _
        $region68: #{tpu_custom_call.1} parent=11 // pred_fallthru
          _
      $region12: #{tpu_custom_call.1} parent=5 // pred_fallthru
        _
      %p497 = scmp.lt.s32.totalorder %s28, 8
      // Predicated region
      $region69: #{tpu_custom_call.1} parent=5 // pred_check
        %p498 = pneg %p497
      $region70: #{tpu_custom_call.1} parent=5 // pred_check_branch
        %500 = sbr.rel (%p498) target = $region72
      $region71: #{tpu_custom_call.1} parent=5 // pred_region
        _
      $region72: #{tpu_custom_call.1} parent=5 // pred_fallthru
        _
      %p501 = scmp.le.s32.totalorder 1, %s28
      %p502 = scmp.lt.s32.totalorder %s28, 9
      %p503 = pnand %p501, %p502
      %p504 = pneg %p503
      // Predicated region
      $region73: #{tpu_custom_call.1} parent=5 // pred_check
        _
      $region74: #{tpu_custom_call.1} parent=5 // pred_check_branch
        %506 = sbr.rel (%p503) target = $region76
      $region75: #{tpu_custom_call.1} parent=5 // pred_region
        %s507 = ssub.s32 %s28, 1
        // Predicated region
        $region77: #{tpu_custom_call.1} parent=75 // pred_check
          %p508 = pneg %p87
        $region78: #{tpu_custom_call.1} parent=75 // pred_check_branch
          %510 = sbr.rel (%p508) target = $region80
        $region79: #{tpu_custom_call.1} parent=75 // pred_region
          %511 = dma.done [#allocation7], 2048
        $region80: #{tpu_custom_call.1} parent=75 // pred_fallthru
          _
        // Predicated region
        $region81: #{tpu_custom_call.1} parent=75 // pred_check
          %p512 = pneg %p108
        $region82: #{tpu_custom_call.1} parent=75 // pred_check_branch
          %514 = sbr.rel (%p512) target = $region84
        $region83: #{tpu_custom_call.1} parent=75 // pred_region
          %515 = dma.done [#allocation10], 2048
        $region84: #{tpu_custom_call.1} parent=75 // pred_fallthru
          _
        // Predicated region
        $region85: #{tpu_custom_call.1} parent=75 // pred_check
          %p516 = pneg %p150
        $region86: #{tpu_custom_call.1} parent=75 // pred_check_branch
          %518 = sbr.rel (%p516) target = $region88
        $region87: #{tpu_custom_call.1} parent=75 // pred_region
          %519 = dma.done [#allocation10], 2048
        $region88: #{tpu_custom_call.1} parent=75 // pred_fallthru
          _
        // Predicated region
        $region89: #{tpu_custom_call.1} parent=75 // pred_check
          %p520 = pneg %p192
        $region90: #{tpu_custom_call.1} parent=75 // pred_check_branch
          %522 = sbr.rel (%p520) target = $region92
        $region91: #{tpu_custom_call.1} parent=75 // pred_region
          %523 = dma.done [#allocation13], 2048
        $region92: #{tpu_custom_call.1} parent=75 // pred_fallthru
          _
        // Predicated region
        $region93: #{tpu_custom_call.1} parent=75 // pred_check
          %p524 = pneg %p234
        $region94: #{tpu_custom_call.1} parent=75 // pred_check_branch
          %526 = sbr.rel (%p524) target = $region96
        $region95: #{tpu_custom_call.1} parent=75 // pred_region
          %527 = dma.done [#allocation13], 2048
        $region96: #{tpu_custom_call.1} parent=75 // pred_fallthru
          _
        // Predicated region
        $region97: #{tpu_custom_call.1} parent=75 // pred_check
          %p528 = pneg %p276
        $region98: #{tpu_custom_call.1} parent=75 // pred_check_branch
          %530 = sbr.rel (%p528) target = $region100
        $region99: #{tpu_custom_call.1} parent=75 // pred_region
          %531 = dma.done [#allocation16], 4096
        $region100: #{tpu_custom_call.1} parent=75 // pred_fallthru
          _
        // Predicated region
        $region101: #{tpu_custom_call.1} parent=75 // pred_check
          %p532 = pneg %p318
        $region102: #{tpu_custom_call.1} parent=75 // pred_check_branch
          %534 = sbr.rel (%p532) target = $region104
        $region103: #{tpu_custom_call.1} parent=75 // pred_region
          %535 = dma.done [#allocation16], 4096
        $region104: #{tpu_custom_call.1} parent=75 // pred_fallthru
          _
        %p536 = pneg %p61
        %p537 = pneg %p58
        %p538 = pneg %p87
        %p539 = pneg %p84
        %p540 = pneg %p108
        %p541 = pneg %p105
        %p542 = pneg %p129
        %p543 = pneg %p126
        %p544 = pneg %p150
        %p545 = pneg %p147
        %p546 = pneg %p171
        %p547 = pneg %p168
        %p548 = pneg %p192
        %p549 = pneg %p189
        %p550 = pneg %p213
        %p551 = pneg %p210
        %p552 = pneg %p234
        %p553 = pneg %p231
        %p554 = pneg %p255
        %p555 = pneg %p252
        %p556 = pneg %p276
        %p557 = pneg %p273
        %p558 = pneg %p297
        %p559 = pneg %p294
        %p560 = pneg %p318
        %p561 = pneg %p315
        %p562 = pneg %p339
        %p563 = pneg %p336
        %p564 = pneg %p367
        %p565 = pneg %p364
        %s566 = sand.u32 %s354, 1
        %s567 = scalar_lea.sflag [#allocation8], %s566
        %s568 = sand.u32 %s354, 1
        %s569 = smul.addr %s568, 32
        %s570 = scalar_lea.vmem [#allocation18], %s569
        %s571 = smul.u32 4, %s38
        %p572 = scmp.eq.s32.totalorder %s38, 0
        // Predicated region
        $region105: #{tpu_custom_call.1} parent=75 // pred_check
          %p573 = pneg %p572
        $region106: #{tpu_custom_call.1} parent=75 // pred_check_branch
          %575 = sbr.rel (%p573) target = $region108
        $region107: #{tpu_custom_call.1} parent=75 // pred_region
          %v576 = vld [vmem:[#allocation6] sm:$0xff]
          %v577 = vld [vmem:[#allocation6 + $0x8] sm:$0xff]
          %v578 = vld [vmem:[#allocation6 + $0x10] sm:$0xff]
          %v579 = vld [vmem:[#allocation6 + $0x18] sm:$0xff]
          %v580 = vld [vmem:[#allocation6 + $0x20] sm:$0xff]
          %v581 = vld [vmem:[#allocation6 + $0x28] sm:$0xff]
          %v582 = vld [vmem:[#allocation6 + $0x30] sm:$0xff]
          %v583 = vld [vmem:[#allocation6 + $0x38] sm:$0xff]
          %v584 = vld [vmem:[#allocation6 + $0x40] sm:$0xff]
          %v585 = vld [vmem:[#allocation6 + $0x48] sm:$0xff]
          %v586 = vld [vmem:[#allocation6 + $0x50] sm:$0xff]
          %v587 = vld [vmem:[#allocation6 + $0x58] sm:$0xff]
          %v588 = vld [vmem:[#allocation6 + $0x60] sm:$0xff]
          %v589 = vld [vmem:[#allocation6 + $0x68] sm:$0xff]
          %v590 = vld [vmem:[#allocation6 + $0x70] sm:$0xff]
          %v591 = vld [vmem:[#allocation6 + $0x78] sm:$0xff]
          %v592 = vld [vmem:[#allocation11] sm:$0xff]
          %v593 = vld [vmem:[#allocation11 + $0x8] sm:$0xff]
          %v594 = vld [vmem:[#allocation11 + $0x10] sm:$0xff]
          %v595 = vld [vmem:[#allocation11 + $0x18] sm:$0xff]
          %v596 = vld [vmem:[#allocation11 + $0x20] sm:$0xff]
          %v597 = vld [vmem:[#allocation11 + $0x28] sm:$0xff]
          %v598 = vld [vmem:[#allocation11 + $0x30] sm:$0xff]
          %v599 = vld [vmem:[#allocation11 + $0x38] sm:$0xff]
          %v600 = vld [vmem:[#allocation11 + $0x40] sm:$0xff]
          %v601 = vld [vmem:[#allocation11 + $0x48] sm:$0xff]
          %v602 = vld [vmem:[#allocation11 + $0x50] sm:$0xff]
          %v603 = vld [vmem:[#allocation11 + $0x58] sm:$0xff]
          %v604 = vld [vmem:[#allocation11 + $0x60] sm:$0xff]
          %v605 = vld [vmem:[#allocation11 + $0x68] sm:$0xff]
          %v606 = vld [vmem:[#allocation11 + $0x70] sm:$0xff]
          %v607 = vld [vmem:[#allocation11 + $0x78] sm:$0xff]
          %v608 = vld [vmem:[%s5] sm:$0x1]
          %v610 = vlaneseq
          %v611 = vshrl.u32 %v610, 7
          %v612 = vsub.s32 0, %v611
          %v613 = vrot.slane %v608, %v612
          %615 = vmatprep.subr.mxu0 0.0
          %616 = vmatpush1.msra.mxu0 %v592
          %617 = vmatprep.subr.mxu0 0.0
          %618 = vmatpush1.msra.mxu0 %v593
          %619 = vmatprep.subr.mxu0 0.0
          %620 = vmatpush1.msra.mxu0 %v594
          %621 = vmatprep.subr.mxu0 0.0
          %622 = vmatpush1.msra.mxu0 %v595
          %623 = vmatprep.subr.mxu0 0.0
          %624 = vmatpush1.msra.mxu0 %v596
          %625 = vmatprep.subr.mxu0 0.0
          %626 = vmatpush1.msra.mxu0 %v597
          %627 = vmatprep.subr.mxu0 0.0
          %628 = vmatpush1.msra.mxu0 %v598
          %629 = vmatprep.subr.mxu0 0.0
          %630 = vmatpush1.msra.mxu0 %v599
          %631 = vmatprep.subr.mxu0 0.0
          %632 = vmatpush1.msra.mxu0 %v600
          %633 = vmatprep.subr.mxu0 0.0
          %634 = vmatpush1.msra.mxu0 %v601
          %635 = vmatprep.subr.mxu0 0.0
          %636 = vmatpush1.msra.mxu0 %v602
          %637 = vmatprep.subr.mxu0 0.0
          %638 = vmatpush1.msra.mxu0 %v603
          %639 = vmatprep.subr.mxu0 0.0
          %640 = vmatpush1.msra.mxu0 %v604
          %641 = vmatprep.subr.mxu0 0.0
          %642 = vmatpush1.msra.mxu0 %v605
          %643 = vmatprep.subr.mxu0 0.0
          %644 = vmatpush1.msra.mxu0 %v606
          %645 = vmatprep.subr.mxu0 0.0
          %646 = vmatpush1.msra.mxu0 %v607
          %647 = vmatprep.subr.mxu0 0.0
          %648 = vmatpush1.msra.mxu0 0.0
          %649 = vmatprep.subr.mxu0 0.0
          %650 = vmatpush1.msra.mxu0 0.0
          %651 = vmatprep.subr.mxu0 0.0
          %652 = vmatpush1.msra.mxu0 0.0
          %653 = vmatprep.subr.mxu0 0.0
          %654 = vmatpush1.msra.mxu0 0.0
          %655 = vmatprep.subr.mxu0 0.0
          %656 = vmatpush1.msra.mxu0 0.0
          %657 = vmatprep.subr.mxu0 0.0
          %658 = vmatpush1.msra.mxu0 0.0
          %659 = vmatprep.subr.mxu0 0.0
          %660 = vmatpush1.msra.mxu0 0.0
          %661 = vmatprep.subr.mxu0 0.0
          %662 = vmatpush1.msra.mxu0 0.0
          %663 = vmatprep.subr.mxu0 0.0
          %664 = vmatpush1.msra.mxu0 0.0
          %665 = vmatprep.subr.mxu0 0.0
          %666 = vmatpush1.msra.mxu0 0.0
          %667 = vmatprep.subr.mxu0 0.0
          %668 = vmatpush1.msra.mxu0 0.0
          %669 = vmatprep.subr.mxu0 0.0
          %670 = vmatpush1.msra.mxu0 0.0
          %671 = vmatprep.subr.mxu0 0.0
          %672 = vmatpush1.msra.mxu0 0.0
          %673 = vmatprep.subr.mxu0 0.0
          %674 = vmatpush1.msra.mxu0 0.0
          %675 = vmatprep.subr.mxu0 0.0
          %676 = vmatpush1.msra.mxu0 0.0
          %677 = vmatprep.subr.mxu0 0.0
          %678 = vmatpush1.msra.mxu0 0.0
          %679 = vmatprep.mubr.f32.mxu0 0.0
          %680 = vmatmul.mubr.f32.gmra.mrb[0].mxu0 %v576
          %v681 = vpop.f32.mrb[0].mxu0
          %v682 = vadd.f32 %v613, %v681
          %v683 = vpop.f32.mrb[0].mxu0
          %684 = vmatprep.mubr.f32.mxu0 0.0
          %685 = vmatmul.mubr.f32.gmra.mrb[0].mxu0 %v577
          %v686 = vpop.f32.mrb[0].mxu0
          %v687 = vadd.f32 %v613, %v686
          %v688 = vpop.f32.mrb[0].mxu0
          %689 = vmatprep.mubr.f32.mxu0 0.0
          %690 = vmatmul.mubr.f32.gmra.mrb[0].mxu0 %v578
          %v691 = vpop.f32.mrb[0].mxu0
          %v692 = vadd.f32 %v613, %v691
          %v693 = vpop.f32.mrb[0].mxu0
          %694 = vmatprep.mubr.f32.mxu0 0.0
          %695 = vmatmul.mubr.f32.gmra.mrb[0].mxu0 %v579
          %v696 = vpop.f32.mrb[0].mxu0
          %v697 = vadd.f32 %v613, %v696
          %v698 = vpop.f32.mrb[0].mxu0
          %699 = vmatprep.mubr.f32.mxu0 0.0
          %700 = vmatmul.mubr.f32.gmra.mrb[0].mxu0 %v580
          %v701 = vpop.f32.mrb[0].mxu0
          %v702 = vadd.f32 %v613, %v701
          %v703 = vpop.f32.mrb[0].mxu0
          %704 = vmatprep.mubr.f32.mxu0 0.0
          %705 = vmatmul.mubr.f32.gmra.mrb[0].mxu0 %v581
          %v706 = vpop.f32.mrb[0].mxu0
          %v707 = vadd.f32 %v613, %v706
          %v708 = vpop.f32.mrb[0].mxu0
          %709 = vmatprep.mubr.f32.mxu0 0.0
          %710 = vmatmul.mubr.f32.gmra.mrb[0].mxu0 %v582
          %v711 = vpop.f32.mrb[0].mxu0
          %v712 = vadd.f32 %v613, %v711
          %v713 = vpop.f32.mrb[0].mxu0
          %714 = vmatprep.mubr.f32.mxu0 0.0
          %715 = vmatmul.mubr.f32.gmra.mrb[0].mxu0 %v583
          %v716 = vpop.f32.mrb[0].mxu0
          %v717 = vadd.f32 %v613, %v716
          %v718 = vpop.f32.mrb[0].mxu0
          %719 = vmatprep.mubr.f32.mxu0 0.0
          %720 = vmatmul.mubr.f32.gmra.mrb[0].mxu0 %v584
          %v721 = vpop.f32.mrb[0].mxu0
          %v722 = vadd.f32 %v613, %v721
          %v723 = vpop.f32.mrb[0].mxu0
          %724 = vmatprep.mubr.f32.mxu0 0.0
          %725 = vmatmul.mubr.f32.gmra.mrb[0].mxu0 %v585
          %v726 = vpop.f32.mrb[0].mxu0
          %v727 = vadd.f32 %v613, %v726
          %v728 = vpop.f32.mrb[0].mxu0
          %729 = vmatprep.mubr.f32.mxu0 0.0
          %730 = vmatmul.mubr.f32.gmra.mrb[0].mxu0 %v586
          %v731 = vpop.f32.mrb[0].mxu0
          %v732 = vadd.f32 %v613, %v731
          %v733 = vpop.f32.mrb[0].mxu0
          %734 = vmatprep.mubr.f32.mxu0 0.0
          %735 = vmatmul.mubr.f32.gmra.mrb[0].mxu0 %v587
          %v736 = vpop.f32.mrb[0].mxu0
          %v737 = vadd.f32 %v613, %v736
          %v738 = vpop.f32.mrb[0].mxu0
          %739 = vmatprep.mubr.f32.mxu0 0.0
          %740 = vmatmul.mubr.f32.gmra.mrb[0].mxu0 %v588
          %v741 = vpop.f32.mrb[0].mxu0
          %v742 = vadd.f32 %v613, %v741
          %v743 = vpop.f32.mrb[0].mxu0
          %744 = vmatprep.mubr.f32.mxu0 0.0
          %745 = vmatmul.mubr.f32.gmra.mrb[0].mxu0 %v589
          %v746 = vpop.f32.mrb[0].mxu0
          %v747 = vadd.f32 %v613, %v746
          %v748 = vpop.f32.mrb[0].mxu0
          %749 = vmatprep.mubr.f32.mxu0 0.0
          %750 = vmatmul.mubr.f32.gmra.mrb[0].mxu0 %v590
          %v751 = vpop.f32.mrb[0].mxu0
          %v752 = vadd.f32 %v613, %v751
          %v753 = vpop.f32.mrb[0].mxu0
          %754 = vmatprep.mubr.f32.mxu0 0.0
          %755 = vmatmul.mubr.f32.gmra.mrb[0].mxu0 %v591
          %v756 = vpop.f32.mrb[0].mxu0
          %v757 = vadd.f32 %v613, %v756
          %v758 = vpop.f32.mrb[0].mxu0
          %759 = vdwg.mxu0
          %v760 = vld [vmem:[#allocation12] sm:$0xff]
          %v761 = vld [vmem:[#allocation12 + $0x8] sm:$0xff]
          %v762 = vld [vmem:[#allocation12 + $0x10] sm:$0xff]
          %v763 = vld [vmem:[#allocation12 + $0x18] sm:$0xff]
          %v764 = vld [vmem:[#allocation12 + $0x20] sm:$0xff]
          %v765 = vld [vmem:[#allocation12 + $0x28] sm:$0xff]
          %v766 = vld [vmem:[#allocation12 + $0x30] sm:$0xff]
          %v767 = vld [vmem:[#allocation12 + $0x38] sm:$0xff]
          %v768 = vld [vmem:[#allocation12 + $0x40] sm:$0xff]
          %v769 = vld [vmem:[#allocation12 + $0x48] sm:$0xff]
          %v770 = vld [vmem:[#allocation12 + $0x50] sm:$0xff]
          %v771 = vld [vmem:[#allocation12 + $0x58] sm:$0xff]
          %v772 = vld [vmem:[#allocation12 + $0x60] sm:$0xff]
          %v773 = vld [vmem:[#allocation12 + $0x68] sm:$0xff]
          %v774 = vld [vmem:[#allocation12 + $0x70] sm:$0xff]
          %v775 = vld [vmem:[#allocation12 + $0x78] sm:$0xff]
          %v776 = vld [vmem:[%s7] sm:$0x1]
          %v778 = vlaneseq
          %v779 = vshrl.u32 %v778, 7
          %v780 = vsub.s32 0, %v779
          %v781 = vrot.slane %v776, %v780
          %783 = vmatprep.subr.mxu0 0.0
          %784 = vmatpush1.msra.mxu0 %v760
          %785 = vmatprep.subr.mxu0 0.0
          %786 = vmatpush1.msra.mxu0 %v761
          %787 = vmatprep.subr.mxu0 0.0
          %788 = vmatpush1.msra.mxu0 %v762
          %789 = vmatprep.subr.mxu0 0.0
          %790 = vmatpush1.msra.mxu0 %v763
          %791 = vmatprep.subr.mxu0 0.0
          %792 = vmatpush1.msra.mxu0 %v764
          %793 = vmatprep.subr.mxu0 0.0
          %794 = vmatpush1.msra.mxu0 %v765
          %795 = vmatprep.subr.mxu0 0.0
          %796 = vmatpush1.msra.mxu0 %v766
          %797 = vmatprep.subr.mxu0 0.0
          %798 = vmatpush1.msra.mxu0 %v767
          %799 = vmatprep.subr.mxu0 0.0
          %800 = vmatpush1.msra.mxu0 %v768
          %801 = vmatprep.subr.mxu0 0.0
          %802 = vmatpush1.msra.mxu0 %v769
          %803 = vmatprep.subr.mxu0 0.0
          %804 = vmatpush1.msra.mxu0 %v770
          %805 = vmatprep.subr.mxu0 0.0
          %806 = vmatpush1.msra.mxu0 %v771
          %807 = vmatprep.subr.mxu0 0.0
          %808 = vmatpush1.msra.mxu0 %v772
          %809 = vmatprep.subr.mxu0 0.0
          %810 = vmatpush1.msra.mxu0 %v773
          %811 = vmatprep.subr.mxu0 0.0
          %812 = vmatpush1.msra.mxu0 %v774
          %813 = vmatprep.subr.mxu0 0.0
          %814 = vmatpush1.msra.mxu0 %v775
          %815 = vmatprep.subr.mxu0 0.0
          %816 = vmatpush1.msra.mxu0 0.0
          %817 = vmatprep.subr.mxu0 0.0
          %818 = vmatpush1.msra.mxu0 0.0
          %819 = vmatprep.subr.mxu0 0.0
          %820 = vmatpush1.msra.mxu0 0.0
          %821 = vmatprep.subr.mxu0 0.0
          %822 = vmatpush1.msra.mxu0 0.0
          %823 = vmatprep.subr.mxu0 0.0
          %824 = vmatpush1.msra.mxu0 0.0
          %825 = vmatprep.subr.mxu0 0.0
          %826 = vmatpush1.msra.mxu0 0.0
          %827 = vmatprep.subr.mxu0 0.0
          %828 = vmatpush1.msra.mxu0 0.0
          %829 = vmatprep.subr.mxu0 0.0
          %830 = vmatpush1.msra.mxu0 0.0
          %831 = vmatprep.subr.mxu0 0.0
          %832 = vmatpush1.msra.mxu0 0.0
          %833 = vmatprep.subr.mxu0 0.0
          %834 = vmatpush1.msra.mxu0 0.0
          %835 = vmatprep.subr.mxu0 0.0
          %836 = vmatpush1.msra.mxu0 0.0
          %837 = vmatprep.subr.mxu0 0.0
          %838 = vmatpush1.msra.mxu0 0.0
          %839 = vmatprep.subr.mxu0 0.0
          %840 = vmatpush1.msra.mxu0 0.0
          %841 = vmatprep.subr.mxu0 0.0
          %842 = vmatpush1.msra.mxu0 0.0
          %843 = vmatprep.subr.mxu0 0.0
          %844 = vmatpush1.msra.mxu0 0.0
          %845 = vmatprep.subr.mxu0 0.0
          %846 = vmatpush1.msra.mxu0 0.0
          %847 = vmatprep.mubr.f32.mxu0 0.0
          %848 = vmatmul.mubr.f32.gmra.mrb[0].mxu0 %v576
          %v849 = vpop.f32.mrb[0].mxu0
          %v850 = vadd.f32 %v781, %v849
          %v851 = vpop.f32.mrb[0].mxu0
          %852 = vmatprep.mubr.f32.mxu0 0.0
          %853 = vmatmul.mubr.f32.gmra.mrb[0].mxu0 %v577
          %v854 = vpop.f32.mrb[0].mxu0
          %v855 = vadd.f32 %v781, %v854
          %v856 = vpop.f32.mrb[0].mxu0
          %857 = vmatprep.mubr.f32.mxu0 0.0
          %858 = vmatmul.mubr.f32.gmra.mrb[0].mxu0 %v578
          %v859 = vpop.f32.mrb[0].mxu0
          %v860 = vadd.f32 %v781, %v859
          %v861 = vpop.f32.mrb[0].mxu0
          %862 = vmatprep.mubr.f32.mxu0 0.0
          %863 = vmatmul.mubr.f32.gmra.mrb[0].mxu0 %v579
          %v864 = vpop.f32.mrb[0].mxu0
          %v865 = vadd.f32 %v781, %v864
          %v866 = vpop.f32.mrb[0].mxu0
          %867 = vmatprep.mubr.f32.mxu0 0.0
          %868 = vmatmul.mubr.f32.gmra.mrb[0].mxu0 %v580
          %v869 = vpop.f32.mrb[0].mxu0
          %v870 = vadd.f32 %v781, %v869
          %v871 = vpop.f32.mrb[0].mxu0
          %872 = vmatprep.mubr.f32.mxu0 0.0
          %873 = vmatmul.mubr.f32.gmra.mrb[0].mxu0 %v581
          %v874 = vpop.f32.mrb[0].mxu0
          %v875 = vadd.f32 %v781, %v874
          %v876 = vpop.f32.mrb[0].mxu0
          %877 = vmatprep.mubr.f32.mxu0 0.0
          %878 = vmatmul.mubr.f32.gmra.mrb[0].mxu0 %v582
          %v879 = vpop.f32.mrb[0].mxu0
          %v880 = vadd.f32 %v781, %v879
          %v881 = vpop.f32.mrb[0].mxu0
          %882 = vmatprep.mubr.f32.mxu0 0.0
          %883 = vmatmul.mubr.f32.gmra.mrb[0].mxu0 %v583
          %v884 = vpop.f32.mrb[0].mxu0
          %v885 = vadd.f32 %v781, %v884
          %v886 = vpop.f32.mrb[0].mxu0
          %887 = vmatprep.mubr.f32.mxu0 0.0
          %888 = vmatmul.mubr.f32.gmra.mrb[0].mxu0 %v584
          %v889 = vpop.f32.mrb[0].mxu0
          %v890 = vadd.f32 %v781, %v889
          %v891 = vpop.f32.mrb[0].mxu0
          %892 = vmatprep.mubr.f32.mxu0 0.0
          %893 = vmatmul.mubr.f32.gmra.mrb[0].mxu0 %v585
          %v894 = vpop.f32.mrb[0].mxu0
          %v895 = vadd.f32 %v781, %v894
          %v896 = vpop.f32.mrb[0].mxu0
          %897 = vmatprep.mubr.f32.mxu0 0.0
          %898 = vmatmul.mubr.f32.gmra.mrb[0].mxu0 %v586
          %v899 = vpop.f32.mrb[0].mxu0
          %v900 = vadd.f32 %v781, %v899
          %v901 = vpop.f32.mrb[0].mxu0
          %902 = vmatprep.mubr.f32.mxu0 0.0
          %903 = vmatmul.mubr.f32.gmra.mrb[0].mxu0 %v587
          %v904 = vpop.f32.mrb[0].mxu0
          %v905 = vadd.f32 %v781, %v904
          %v906 = vpop.f32.mrb[0].mxu0
          %907 = vmatprep.mubr.f32.mxu0 0.0
          %908 = vmatmul.mubr.f32.gmra.mrb[0].mxu0 %v588
          %v909 = vpop.f32.mrb[0].mxu0
          %v910 = vadd.f32 %v781, %v909
          %v911 = vpop.f32.mrb[0].mxu0
          %912 = vmatprep.mubr.f32.mxu0 0.0
          %913 = vmatmul.mubr.f32.gmra.mrb[0].mxu0 %v589
          %v914 = vpop.f32.mrb[0].mxu0
          %v915 = vadd.f32 %v781, %v914
          %v916 = vpop.f32.mrb[0].mxu0
          %917 = vmatprep.mubr.f32.mxu0 0.0
          %918 = vmatmul.mubr.f32.gmra.mrb[0].mxu0 %v590
          %v919 = vpop.f32.mrb[0].mxu0
          %v920 = vadd.f32 %v781, %v919
          %v921 = vpop.f32.mrb[0].mxu0
          %922 = vmatprep.mubr.f32.mxu0 0.0
          %923 = vmatmul.mubr.f32.gmra.mrb[0].mxu0 %v591
          %v924 = vpop.f32.mrb[0].mxu0
          %v925 = vadd.f32 %v781, %v924
          %v926 = vpop.f32.mrb[0].mxu0
          %927 = vdwg.mxu0
          %928 = vxpose.xlu0.b32.start [1/16] %v682, 128
          %929 = vxpose.xlu0.b32.cont [2/16] %v687, 128
          %930 = vxpose.xlu0.b32.cont [3/16] %v692, 128
          %931 = vxpose.xlu0.b32.cont [4/16] %v697, 128
          %932 = vxpose.xlu0.b32.cont [5/16] %v702, 128
          %933 = vxpose.xlu0.b32.cont [6/16] %v707, 128
          %934 = vxpose.xlu0.b32.cont [7/16] %v712, 128
          %935 = vxpose.xlu0.b32.cont [8/16] %v717, 128
          %936 = vxpose.xlu0.b32.cont [9/16] %v722, 128
          %937 = vxpose.xlu0.b32.cont [10/16] %v727, 128
          %938 = vxpose.xlu0.b32.cont [11/16] %v732, 128
          %939 = vxpose.xlu0.b32.cont [12/16] %v737, 128
          %940 = vxpose.xlu0.b32.cont [13/16] %v742, 128
          %941 = vxpose.xlu0.b32.cont [14/16] %v747, 128
          %942 = vxpose.xlu0.b32.cont [15/16] %v752, 128
          %943 = vxpose.xlu0.b32.end [16/16] %v757, 128
          %v944 = vpop.trf.xlu0
          %v945 = vpop.trf.xlu0
          %v946 = vpop.trf.xlu0
          %v947 = vpop.trf.xlu0
          %v948 = vpop.trf.xlu0
          %v949 = vpop.trf.xlu0
          %v950 = vpop.trf.xlu0
          %v951 = vpop.trf.xlu0
          %v952 = vpop.trf.xlu0
          %v953 = vpop.trf.xlu0
          %v954 = vpop.trf.xlu0
          %v955 = vpop.trf.xlu0
          %v956 = vpop.trf.xlu0
          %v957 = vpop.trf.xlu0
          %v958 = vpop.trf.xlu0
          %v959 = vpop.trf.xlu0
          %960 = vst [vmem:[#allocation2] sm:$0xff] %v944
          %961 = vst [vmem:[#allocation2 + $0x8] sm:$0xff] %v945
          %962 = vst [vmem:[#allocation2 + $0x10] sm:$0xff] %v946
          %963 = vst [vmem:[#allocation2 + $0x18] sm:$0xff] %v947
          %964 = vst [vmem:[#allocation2 + $0x20] sm:$0xff] %v948
          %965 = vst [vmem:[#allocation2 + $0x28] sm:$0xff] %v949
          %966 = vst [vmem:[#allocation2 + $0x30] sm:$0xff] %v950
          %967 = vst [vmem:[#allocation2 + $0x38] sm:$0xff] %v951
          %968 = vst [vmem:[#allocation2 + $0x40] sm:$0xff] %v952
          %969 = vst [vmem:[#allocation2 + $0x48] sm:$0xff] %v953
          %970 = vst [vmem:[#allocation2 + $0x50] sm:$0xff] %v954
          %971 = vst [vmem:[#allocation2 + $0x58] sm:$0xff] %v955
          %972 = vst [vmem:[#allocation2 + $0x60] sm:$0xff] %v956
          %973 = vst [vmem:[#allocation2 + $0x68] sm:$0xff] %v957
          %974 = vst [vmem:[#allocation2 + $0x70] sm:$0xff] %v958
          %975 = vst [vmem:[#allocation2 + $0x78] sm:$0xff] %v959
          %976 = vst [vmem:[#allocation3] sm:$0xff] %v850
          %977 = vst [vmem:[#allocation3 + $0x8] sm:$0xff] %v855
          %978 = vst [vmem:[#allocation3 + $0x10] sm:$0xff] %v860
          %979 = vst [vmem:[#allocation3 + $0x18] sm:$0xff] %v865
          %980 = vst [vmem:[#allocation3 + $0x20] sm:$0xff] %v870
          %981 = vst [vmem:[#allocation3 + $0x28] sm:$0xff] %v875
          %982 = vst [vmem:[#allocation3 + $0x30] sm:$0xff] %v880
          %983 = vst [vmem:[#allocation3 + $0x38] sm:$0xff] %v885
          %984 = vst [vmem:[#allocation3 + $0x40] sm:$0xff] %v890
          %985 = vst [vmem:[#allocation3 + $0x48] sm:$0xff] %v895
          %986 = vst [vmem:[#allocation3 + $0x50] sm:$0xff] %v900
          %987 = vst [vmem:[#allocation3 + $0x58] sm:$0xff] %v905
          %988 = vst [vmem:[#allocation3 + $0x60] sm:$0xff] %v910
          %989 = vst [vmem:[#allocation3 + $0x68] sm:$0xff] %v915
          %990 = vst [vmem:[#allocation3 + $0x70] sm:$0xff] %v920
          %991 = vst [vmem:[#allocation3 + $0x78] sm:$0xff] %v925
        $region108: #{tpu_custom_call.1} parent=75 // pred_fallthru
          _
        %s992 = smul.u32 %s38, 32
        %s993 = scalar_lea.vmem [#allocation6], %s992
        %v994 = vld [vmem:[%s993] sm:$0xff]
        %v995 = vld [vmem:[%s993 + $0x8] sm:$0xff]
        %v996 = vld [vmem:[%s993 + $0x10] sm:$0xff]
        %v997 = vld [vmem:[%s993 + $0x18] sm:$0xff]
        %v998 = vld [vmem:[#allocation9] sm:$0xff]
        %v999 = vld [vmem:[#allocation9 + $0x8] sm:$0xff]
        %v1000 = vld [vmem:[#allocation9 + $0x10] sm:$0xff]
        %v1001 = vld [vmem:[#allocation9 + $0x18] sm:$0xff]
        %v1002 = vld [vmem:[#allocation9 + $0x20] sm:$0xff]
        %v1003 = vld [vmem:[#allocation9 + $0x28] sm:$0xff]
        %v1004 = vld [vmem:[#allocation9 + $0x30] sm:$0xff]
        %v1005 = vld [vmem:[#allocation9 + $0x38] sm:$0xff]
        %v1006 = vld [vmem:[#allocation9 + $0x40] sm:$0xff]
        %v1007 = vld [vmem:[#allocation9 + $0x48] sm:$0xff]
        %v1008 = vld [vmem:[#allocation9 + $0x50] sm:$0xff]
        %v1009 = vld [vmem:[#allocation9 + $0x58] sm:$0xff]
        %v1010 = vld [vmem:[#allocation9 + $0x60] sm:$0xff]
        %v1011 = vld [vmem:[#allocation9 + $0x68] sm:$0xff]
        %v1012 = vld [vmem:[#allocation9 + $0x70] sm:$0xff]
        %v1013 = vld [vmem:[#allocation9 + $0x78] sm:$0xff]
        %v1014 = vld [vmem:[%s3] sm:$0x1]
        %v1016 = vlaneseq
        %v1017 = vshrl.u32 %v1016, 7
        %v1018 = vsub.s32 0, %v1017
        %v1019 = vrot.slane %v1014, %v1018
        %1021 = vmatprep.subr.mxu0 0.0
        %1022 = vmatpush1.msra.mxu0 %v998
        %1023 = vmatprep.subr.mxu0 0.0
        %1024 = vmatpush1.msra.mxu0 %v999
        %1025 = vmatprep.subr.mxu0 0.0
        %1026 = vmatpush1.msra.mxu0 %v1000
        %1027 = vmatprep.subr.mxu0 0.0
        %1028 = vmatpush1.msra.mxu0 %v1001
        %1029 = vmatprep.subr.mxu0 0.0
        %1030 = vmatpush1.msra.mxu0 %v1002
        %1031 = vmatprep.subr.mxu0 0.0
        %1032 = vmatpush1.msra.mxu0 %v1003
        %1033 = vmatprep.subr.mxu0 0.0
        %1034 = vmatpush1.msra.mxu0 %v1004
        %1035 = vmatprep.subr.mxu0 0.0
        %1036 = vmatpush1.msra.mxu0 %v1005
        %1037 = vmatprep.subr.mxu0 0.0
        %1038 = vmatpush1.msra.mxu0 %v1006
        %1039 = vmatprep.subr.mxu0 0.0
        %1040 = vmatpush1.msra.mxu0 %v1007
        %1041 = vmatprep.subr.mxu0 0.0
        %1042 = vmatpush1.msra.mxu0 %v1008
        %1043 = vmatprep.subr.mxu0 0.0
        %1044 = vmatpush1.msra.mxu0 %v1009
        %1045 = vmatprep.subr.mxu0 0.0
        %1046 = vmatpush1.msra.mxu0 %v1010
        %1047 = vmatprep.subr.mxu0 0.0
        %1048 = vmatpush1.msra.mxu0 %v1011
        %1049 = vmatprep.subr.mxu0 0.0
        %1050 = vmatpush1.msra.mxu0 %v1012
        %1051 = vmatprep.subr.mxu0 0.0
        %1052 = vmatpush1.msra.mxu0 %v1013
        %1053 = vmatprep.subr.mxu0 0.0
        %1054 = vmatpush1.msra.mxu0 0.0
        %1055 = vmatprep.subr.mxu0 0.0
        %1056 = vmatpush1.msra.mxu0 0.0
        %1057 = vmatprep.subr.mxu0 0.0
        %1058 = vmatpush1.msra.mxu0 0.0
        %1059 = vmatprep.subr.mxu0 0.0
        %1060 = vmatpush1.msra.mxu0 0.0
        %1061 = vmatprep.subr.mxu0 0.0
        %1062 = vmatpush1.msra.mxu0 0.0
        %1063 = vmatprep.subr.mxu0 0.0
        %1064 = vmatpush1.msra.mxu0 0.0
        %1065 = vmatprep.subr.mxu0 0.0
        %1066 = vmatpush1.msra.mxu0 0.0
        %1067 = vmatprep.subr.mxu0 0.0
        %1068 = vmatpush1.msra.mxu0 0.0
        %1069 = vmatprep.subr.mxu0 0.0
        %1070 = vmatpush1.msra.mxu0 0.0
        %1071 = vmatprep.subr.mxu0 0.0
        %1072 = vmatpush1.msra.mxu0 0.0
        %1073 = vmatprep.subr.mxu0 0.0
        %1074 = vmatpush1.msra.mxu0 0.0
        %1075 = vmatprep.subr.mxu0 0.0
        %1076 = vmatpush1.msra.mxu0 0.0
        %1077 = vmatprep.subr.mxu0 0.0
        %1078 = vmatpush1.msra.mxu0 0.0
        %1079 = vmatprep.subr.mxu0 0.0
        %1080 = vmatpush1.msra.mxu0 0.0
        %1081 = vmatprep.subr.mxu0 0.0
        %1082 = vmatpush1.msra.mxu0 0.0
        %1083 = vmatprep.subr.mxu0 0.0
        %1084 = vmatpush1.msra.mxu0 0.0
        %1085 = vmatprep.mubr.f32.mxu0 0.0
        %1086 = vmatmul.mubr.f32.gmra.mrb[0].mxu0 %v994
        %v1087 = vpop.f32.mrb[0].mxu0
        %v1088 = vadd.f32 %v1019, %v1087
        %v1089 = vpop.f32.mrb[0].mxu0
        %1090 = vmatprep.mubr.f32.mxu0 0.0
        %1091 = vmatmul.mubr.f32.gmra.mrb[0].mxu0 %v995
        %v1092 = vpop.f32.mrb[0].mxu0
        %v1093 = vadd.f32 %v1019, %v1092
        %v1094 = vpop.f32.mrb[0].mxu0
        %1095 = vmatprep.mubr.f32.mxu0 0.0
        %1096 = vmatmul.mubr.f32.gmra.mrb[0].mxu0 %v996
        %v1097 = vpop.f32.mrb[0].mxu0
        %v1098 = vadd.f32 %v1019, %v1097
        %v1099 = vpop.f32.mrb[0].mxu0
        %1100 = vmatprep.mubr.f32.mxu0 0.0
        %1101 = vmatmul.mubr.f32.gmra.mrb[0].mxu0 %v997
        %v1102 = vpop.f32.mrb[0].mxu0
        %v1103 = vadd.f32 %v1019, %v1102
        %v1104 = vpop.f32.mrb[0].mxu0
        %1105 = vdwg.mxu0
        %v1106 = vmul.f32 %v1088, 0.17677669
        %v1107 = vmul.f32 %v1093, 0.17677669
        %v1108 = vmul.f32 %v1098, 0.17677669
        %v1109 = vmul.f32 %v1103, 0.17677669
        %v1110 = vld [vmem:[#allocation2] sm:$0xff]
        %v1111 = vld [vmem:[#allocation2 + $0x8] sm:$0xff]
        %v1112 = vld [vmem:[#allocation2 + $0x10] sm:$0xff]
        %v1113 = vld [vmem:[#allocation2 + $0x18] sm:$0xff]
        %v1114 = vld [vmem:[#allocation3] sm:$0xff]
        %v1115 = vld [vmem:[#allocation3 + $0x8] sm:$0xff]
        %v1116 = vld [vmem:[#allocation3 + $0x10] sm:$0xff]
        %v1117 = vld [vmem:[#allocation3 + $0x18] sm:$0xff]
        %v1118 = vld [vmem:[#allocation3 + $0x20] sm:$0xff]
        %v1119 = vld [vmem:[#allocation3 + $0x28] sm:$0xff]
        %v1120 = vld [vmem:[#allocation3 + $0x30] sm:$0xff]
        %v1121 = vld [vmem:[#allocation3 + $0x38] sm:$0xff]
        %v1122 = vld [vmem:[#allocation3 + $0x40] sm:$0xff]
        %v1123 = vld [vmem:[#allocation3 + $0x48] sm:$0xff]
        %v1124 = vld [vmem:[#allocation3 + $0x50] sm:$0xff]
        %v1125 = vld [vmem:[#allocation3 + $0x58] sm:$0xff]
        %v1126 = vld [vmem:[#allocation3 + $0x60] sm:$0xff]
        %v1127 = vld [vmem:[#allocation3 + $0x68] sm:$0xff]
        %v1128 = vld [vmem:[#allocation3 + $0x70] sm:$0xff]
        %v1129 = vld [vmem:[#allocation3 + $0x78] sm:$0xff]
        %vm1130 = vcmask 261120
        %v1132 = vsel %vm1130, %v1106, 0
        %v1135 = vsel %vm1130, %v1107, 0
        %v1138 = vsel %vm1130, %v1108, 0
        %v1141 = vsel %vm1130, %v1109, 0
        %1143 = vmatprep.subr.mxu0 0.0
        %1144 = vmatpush1.msra.mxu0 %v1110
        %1145 = vmatprep.subr.mxu0 0.0
        %1146 = vmatpush1.msra.mxu0 %v1111
        %1147 = vmatprep.subr.mxu0 0.0
        %1148 = vmatpush1.msra.mxu0 %v1112
        %1149 = vmatprep.subr.mxu0 0.0
        %1150 = vmatpush1.msra.mxu0 %v1113
        %1151 = vmatprep.subr.mxu0 0.0
        %1152 = vmatpush1.msra.mxu0 0.0
        %1153 = vmatprep.subr.mxu0 0.0
        %1154 = vmatpush1.msra.mxu0 0.0
        %1155 = vmatprep.subr.mxu0 0.0
        %1156 = vmatpush1.msra.mxu0 0.0
        %1157 = vmatprep.subr.mxu0 0.0
        %1158 = vmatpush1.msra.mxu0 0.0
        %1159 = vmatprep.subr.mxu0 0.0
        %1160 = vmatpush1.msra.mxu0 0.0
        %1161 = vmatprep.subr.mxu0 0.0
        %1162 = vmatpush1.msra.mxu0 0.0
        %1163 = vmatprep.subr.mxu0 0.0
        %1164 = vmatpush1.msra.mxu0 0.0
        %1165 = vmatprep.subr.mxu0 0.0
        %1166 = vmatpush1.msra.mxu0 0.0
        %1167 = vmatprep.subr.mxu0 0.0
        %1168 = vmatpush1.msra.mxu0 0.0
        %1169 = vmatprep.subr.mxu0 0.0
        %1170 = vmatpush1.msra.mxu0 0.0
        %1171 = vmatprep.subr.mxu0 0.0
        %1172 = vmatpush1.msra.mxu0 0.0
        %1173 = vmatprep.subr.mxu0 0.0
        %1174 = vmatpush1.msra.mxu0 0.0
        %1175 = vmatprep.subr.mxu0 0.0
        %1176 = vmatpush1.msra.mxu0 0.0
        %1177 = vmatprep.subr.mxu0 0.0
        %1178 = vmatpush1.msra.mxu0 0.0
        %1179 = vmatprep.subr.mxu0 0.0
        %1180 = vmatpush1.msra.mxu0 0.0
        %1181 = vmatprep.subr.mxu0 0.0
        %1182 = vmatpush1.msra.mxu0 0.0
        %1183 = vmatprep.subr.mxu0 0.0
        %1184 = vmatpush1.msra.mxu0 0.0
        %1185 = vmatprep.subr.mxu0 0.0
        %1186 = vmatpush1.msra.mxu0 0.0
        %1187 = vmatprep.subr.mxu0 0.0
        %1188 = vmatpush1.msra.mxu0 0.0
        %1189 = vmatprep.subr.mxu0 0.0
        %1190 = vmatpush1.msra.mxu0 0.0
        %1191 = vmatprep.subr.mxu0 0.0
        %1192 = vmatpush1.msra.mxu0 0.0
        %1193 = vmatprep.subr.mxu0 0.0
        %1194 = vmatpush1.msra.mxu0 0.0
        %1195 = vmatprep.subr.mxu0 0.0
        %1196 = vmatpush1.msra.mxu0 0.0
        %1197 = vmatprep.subr.mxu0 0.0
        %1198 = vmatpush1.msra.mxu0 0.0
        %1199 = vmatprep.subr.mxu0 0.0
        %1200 = vmatpush1.msra.mxu0 0.0
        %1201 = vmatprep.subr.mxu0 0.0
        %1202 = vmatpush1.msra.mxu0 0.0
        %1203 = vmatprep.subr.mxu0 0.0
        %1204 = vmatpush1.msra.mxu0 0.0
        %1205 = vmatprep.subr.mxu0 0.0
        %1206 = vmatpush1.msra.mxu0 0.0
        %1207 = vmatprep.mubr.f32.mxu0 0.0
        %1208 = vmatmul.mubr.f32.gmra.mrb[0].mxu0 %v1132
        %v1209 = vpop.f32.mrb[0].mxu0
        %v1210 = vadd.f32 0.0, %v1209
        %v1211 = vpop.f32.mrb[0].mxu0
        %1212 = vmatprep.mubr.f32.mxu0 0.0
        %1213 = vmatmul.mubr.f32.gmra.mrb[0].mxu0 %v1135
        %v1214 = vpop.f32.mrb[0].mxu0
        %v1215 = vadd.f32 0.0, %v1214
        %v1216 = vpop.f32.mrb[0].mxu0
        %1217 = vmatprep.mubr.f32.mxu0 0.0
        %1218 = vmatmul.mubr.f32.gmra.mrb[0].mxu0 %v1138
        %v1219 = vpop.f32.mrb[0].mxu0
        %v1220 = vadd.f32 0.0, %v1219
        %v1221 = vpop.f32.mrb[0].mxu0
        %1222 = vmatprep.mubr.f32.mxu0 0.0
        %1223 = vmatmul.mubr.f32.gmra.mrb[0].mxu0 %v1141
        %v1224 = vpop.f32.mrb[0].mxu0
        %v1225 = vadd.f32 0.0, %v1224
        %v1226 = vpop.f32.mrb[0].mxu0
        %1227 = vdwg.mxu0
        %1228 = vmax.xlane.f32.xlu0 %v1210
        %v1229 = vpop.xlane.xlu0 %1228
        %1230 = vmax.xlane.f32.xlu0 %v1215
        %v1231 = vpop.xlane.xlu0 %1230
        %1232 = vmax.xlane.f32.xlu0 %v1220
        %v1233 = vpop.xlane.xlu0 %1232
        %1234 = vmax.xlane.f32.xlu0 %v1225
        %v1235 = vpop.xlane.xlu0 %1234
        %v1236 = vsub.f32 -inf, %v1229
        %v1237 = vsub.f32 -inf, %v1231
        %v1238 = vsub.f32 -inf, %v1233
        %v1239 = vsub.f32 -inf, %v1235
        %v1240 = vmul.f32 %v1236, 1.442695
        %v1241 = vpow.pop %v1240
        %v1242 = vmul.f32 %v1237, 1.442695
        %v1243 = vpow.pop %v1242
        %v1244 = vmul.f32 %v1238, 1.442695
        %v1245 = vpow.pop %v1244
        %v1246 = vmul.f32 %v1239, 1.442695
        %v1247 = vpow.pop %v1246
        %v1248 = vsub.f32 %v1210, %v1229
        %v1249 = vsub.f32 %v1215, %v1231
        %v1250 = vsub.f32 %v1220, %v1233
        %v1251 = vsub.f32 %v1225, %v1235
        %v1252 = vmul.f32 %v1248, 1.442695
        %v1253 = vpow.pop %v1252
        %v1254 = vmul.f32 %v1249, 1.442695
        %v1255 = vpow.pop %v1254
        %v1256 = vmul.f32 %v1250, 1.442695
        %v1257 = vpow.pop %v1256
        %v1258 = vmul.f32 %v1251, 1.442695
        %v1259 = vpow.pop %v1258
        %v1260 = vmul.f32 %v1241, 0.0
        %v1261 = vmul.f32 %v1243, 0.0
        %v1262 = vmul.f32 %v1245, 0.0
        %v1263 = vmul.f32 %v1247, 0.0
        %1264 = vadd.xlane.f32.xlu0 %v1253
        %v1265 = vpop.xlane.xlu0 %1264
        %1266 = vadd.xlane.f32.xlu0 %v1255
        %v1267 = vpop.xlane.xlu0 %1266
        %1268 = vadd.xlane.f32.xlu0 %v1257
        %v1269 = vpop.xlane.xlu0 %1268
        %1270 = vadd.xlane.f32.xlu0 %v1259
        %v1271 = vpop.xlane.xlu0 %1270
        %v1272 = vadd.f32 %v1260, %v1265
        %v1273 = vadd.f32 %v1261, %v1267
        %v1274 = vadd.f32 %v1262, %v1269
        %v1275 = vadd.f32 %v1263, %v1271
        %1276 = vmatprep.subr.mxu0 0.0
        %1277 = vmatpush1.msra.mxu0 %v1114
        %1278 = vmatprep.subr.mxu0 0.0
        %1279 = vmatpush1.msra.mxu0 %v1115
        %1280 = vmatprep.subr.mxu0 0.0
        %1281 = vmatpush1.msra.mxu0 %v1116
        %1282 = vmatprep.subr.mxu0 0.0
        %1283 = vmatpush1.msra.mxu0 %v1117
        %1284 = vmatprep.subr.mxu0 0.0
        %1285 = vmatpush1.msra.mxu0 %v1118
        %1286 = vmatprep.subr.mxu0 0.0
        %1287 = vmatpush1.msra.mxu0 %v1119
        %1288 = vmatprep.subr.mxu0 0.0
        %1289 = vmatpush1.msra.mxu0 %v1120
        %1290 = vmatprep.subr.mxu0 0.0
        %1291 = vmatpush1.msra.mxu0 %v1121
        %1292 = vmatprep.subr.mxu0 0.0
        %1293 = vmatpush1.msra.mxu0 %v1122
        %1294 = vmatprep.subr.mxu0 0.0
        %1295 = vmatpush1.msra.mxu0 %v1123
        %1296 = vmatprep.subr.mxu0 0.0
        %1297 = vmatpush1.msra.mxu0 %v1124
        %1298 = vmatprep.subr.mxu0 0.0
        %1299 = vmatpush1.msra.mxu0 %v1125
        %1300 = vmatprep.subr.mxu0 0.0
        %1301 = vmatpush1.msra.mxu0 %v1126
        %1302 = vmatprep.subr.mxu0 0.0
        %1303 = vmatpush1.msra.mxu0 %v1127
        %1304 = vmatprep.subr.mxu0 0.0
        %1305 = vmatpush1.msra.mxu0 %v1128
        %1306 = vmatprep.subr.mxu0 0.0
        %1307 = vmatpush1.msra.mxu0 %v1129
        %1308 = vmatprep.subr.mxu0 0.0
        %1309 = vmatpush1.msra.mxu0 0.0
        %1310 = vmatprep.subr.mxu0 0.0
        %1311 = vmatpush1.msra.mxu0 0.0
        %1312 = vmatprep.subr.mxu0 0.0
        %1313 = vmatpush1.msra.mxu0 0.0
        %1314 = vmatprep.subr.mxu0 0.0
        %1315 = vmatpush1.msra.mxu0 0.0
        %1316 = vmatprep.subr.mxu0 0.0
        %1317 = vmatpush1.msra.mxu0 0.0
        %1318 = vmatprep.subr.mxu0 0.0
        %1319 = vmatpush1.msra.mxu0 0.0
        %1320 = vmatprep.subr.mxu0 0.0
        %1321 = vmatpush1.msra.mxu0 0.0
        %1322 = vmatprep.subr.mxu0 0.0
        %1323 = vmatpush1.msra.mxu0 0.0
        %1324 = vmatprep.subr.mxu0 0.0
        %1325 = vmatpush1.msra.mxu0 0.0
        %1326 = vmatprep.subr.mxu0 0.0
        %1327 = vmatpush1.msra.mxu0 0.0
        %1328 = vmatprep.subr.mxu0 0.0
        %1329 = vmatpush1.msra.mxu0 0.0
        %1330 = vmatprep.subr.mxu0 0.0
        %1331 = vmatpush1.msra.mxu0 0.0
        %1332 = vmatprep.subr.mxu0 0.0
        %1333 = vmatpush1.msra.mxu0 0.0
        %1334 = vmatprep.subr.mxu0 0.0
        %1335 = vmatpush1.msra.mxu0 0.0
        %1336 = vmatprep.subr.mxu0 0.0
        %1337 = vmatpush1.msra.mxu0 0.0
        %1338 = vmatprep.subr.mxu0 0.0
        %1339 = vmatpush1.msra.mxu0 0.0
        %1340 = vmatprep.mubr.f32.mxu0 0.0
        %1341 = vmatmul.mubr.f32.gmra.mrb[0].mxu0 %v1253
        %v1342 = vpop.f32.mrb[0].mxu0
        %v1343 = vadd.f32 0.0, %v1342
        %v1344 = vpop.f32.mrb[0].mxu0
        %1345 = vmatprep.mubr.f32.mxu0 0.0
        %1346 = vmatmul.mubr.f32.gmra.mrb[0].mxu0 %v1255
        %v1347 = vpop.f32.mrb[0].mxu0
        %v1348 = vadd.f32 0.0, %v1347
        %v1349 = vpop.f32.mrb[0].mxu0
        %1350 = vmatprep.mubr.f32.mxu0 0.0
        %1351 = vmatmul.mubr.f32.gmra.mrb[0].mxu0 %v1257
        %v1352 = vpop.f32.mrb[0].mxu0
        %v1353 = vadd.f32 0.0, %v1352
        %v1354 = vpop.f32.mrb[0].mxu0
        %1355 = vmatprep.mubr.f32.mxu0 0.0
        %1356 = vmatmul.mubr.f32.gmra.mrb[0].mxu0 %v1259
        %v1357 = vpop.f32.mrb[0].mxu0
        %v1358 = vadd.f32 0.0, %v1357
        %v1359 = vpop.f32.mrb[0].mxu0
        %1360 = vdwg.mxu0
        %v1361 = vadd.f32 %v1260, %v1343
        %v1362 = vadd.f32 %v1261, %v1348
        %v1363 = vadd.f32 %v1262, %v1353
        %v1364 = vadd.f32 %v1263, %v1358
        %v1365 = vrcp.pop %v1272
        %v1366 = vrcp.pop %v1273
        %v1367 = vrcp.pop %v1274
        %v1368 = vrcp.pop %v1275
        %v1369 = vmul.f32 %v1361, %v1365
        %v1370 = vmul.f32 %v1362, %v1366
        %v1371 = vmul.f32 %v1363, %v1367
        %v1372 = vmul.f32 %v1364, %v1368
        %1373 = vst.msk [vmem:[#allocation4] sm:$0xff] %vm1130, %v1369
        %1374 = vst.msk [vmem:[#allocation4 + $0x8] sm:$0xff] %vm1130, %v1370
        %1375 = vst.msk [vmem:[#allocation4 + $0x10] sm:$0xff] %vm1130, %v1371
        %1376 = vst.msk [vmem:[#allocation4 + $0x18] sm:$0xff] %vm1130, %v1372
        %v1377 = vld [vmem:[#allocation2 + $0x20] sm:$0xff]
        %v1378 = vld [vmem:[#allocation2 + $0x28] sm:$0xff]
        %v1379 = vld [vmem:[#allocation2 + $0x30] sm:$0xff]
        %v1380 = vld [vmem:[#allocation2 + $0x38] sm:$0xff]
        %v1381 = vld [vmem:[#allocation3] sm:$0xff]
        %v1382 = vld [vmem:[#allocation3 + $0x8] sm:$0xff]
        %v1383 = vld [vmem:[#allocation3 + $0x10] sm:$0xff]
        %v1384 = vld [vmem:[#allocation3 + $0x18] sm:$0xff]
        %v1385 = vld [vmem:[#allocation3 + $0x20] sm:$0xff]
        %v1386 = vld [vmem:[#allocation3 + $0x28] sm:$0xff]
        %v1387 = vld [vmem:[#allocation3 + $0x30] sm:$0xff]
        %v1388 = vld [vmem:[#allocation3 + $0x38] sm:$0xff]
        %v1389 = vld [vmem:[#allocation3 + $0x40] sm:$0xff]
        %v1390 = vld [vmem:[#allocation3 + $0x48] sm:$0xff]
        %v1391 = vld [vmem:[#allocation3 + $0x50] sm:$0xff]
        %v1392 = vld [vmem:[#allocation3 + $0x58] sm:$0xff]
        %v1393 = vld [vmem:[#allocation3 + $0x60] sm:$0xff]
        %v1394 = vld [vmem:[#allocation3 + $0x68] sm:$0xff]
        %v1395 = vld [vmem:[#allocation3 + $0x70] sm:$0xff]
        %v1396 = vld [vmem:[#allocation3 + $0x78] sm:$0xff]
        %1397 = vrot.lane.b32.xlu0 %v1106, 96
        %v1398 = vpop.permute.xlu0 %1397
        %1399 = vrot.lane.b32.xlu0 %v1107, 96
        %v1400 = vpop.permute.xlu0 %1399
        %1401 = vrot.lane.b32.xlu0 %v1108, 96
        %v1402 = vpop.permute.xlu0 %1401
        %1403 = vrot.lane.b32.xlu0 %v1109, 96
        %v1404 = vpop.permute.xlu0 %1403
        %v1405 = vsel %vm1130, %v1398, 0
        %v1407 = vsel %vm1130, %v1400, 0
        %v1409 = vsel %vm1130, %v1402, 0
        %v1411 = vsel %vm1130, %v1404, 0
        %1413 = vmatprep.subr.mxu0 0.0
        %1414 = vmatpush1.msra.mxu0 %v1377
        %1415 = vmatprep.subr.mxu0 0.0
        %1416 = vmatpush1.msra.mxu0 %v1378
        %1417 = vmatprep.subr.mxu0 0.0
        %1418 = vmatpush1.msra.mxu0 %v1379
        %1419 = vmatprep.subr.mxu0 0.0
        %1420 = vmatpush1.msra.mxu0 %v1380
        %1421 = vmatprep.subr.mxu0 0.0
        %1422 = vmatpush1.msra.mxu0 0.0
        %1423 = vmatprep.subr.mxu0 0.0
        %1424 = vmatpush1.msra.mxu0 0.0
        %1425 = vmatprep.subr.mxu0 0.0
        %1426 = vmatpush1.msra.mxu0 0.0
        %1427 = vmatprep.subr.mxu0 0.0
        %1428 = vmatpush1.msra.mxu0 0.0
        %1429 = vmatprep.subr.mxu0 0.0
        %1430 = vmatpush1.msra.mxu0 0.0
        %1431 = vmatprep.subr.mxu0 0.0
        %1432 = vmatpush1.msra.mxu0 0.0
        %1433 = vmatprep.subr.mxu0 0.0
        %1434 = vmatpush1.msra.mxu0 0.0
        %1435 = vmatprep.subr.mxu0 0.0
        %1436 = vmatpush1.msra.mxu0 0.0
        %1437 = vmatprep.subr.mxu0 0.0
        %1438 = vmatpush1.msra.mxu0 0.0
        %1439 = vmatprep.subr.mxu0 0.0
        %1440 = vmatpush1.msra.mxu0 0.0
        %1441 = vmatprep.subr.mxu0 0.0
        %1442 = vmatpush1.msra.mxu0 0.0
        %1443 = vmatprep.subr.mxu0 0.0
        %1444 = vmatpush1.msra.mxu0 0.0
        %1445 = vmatprep.subr.mxu0 0.0
        %1446 = vmatpush1.msra.mxu0 0.0
        %1447 = vmatprep.subr.mxu0 0.0
        %1448 = vmatpush1.msra.mxu0 0.0
        %1449 = vmatprep.subr.mxu0 0.0
        %1450 = vmatpush1.msra.mxu0 0.0
        %1451 = vmatprep.subr.mxu0 0.0
        %1452 = vmatpush1.msra.mxu0 0.0
        %1453 = vmatprep.subr.mxu0 0.0
        %1454 = vmatpush1.msra.mxu0 0.0
        %1455 = vmatprep.subr.mxu0 0.0
        %1456 = vmatpush1.msra.mxu0 0.0
        %1457 = vmatprep.subr.mxu0 0.0
        %1458 = vmatpush1.msra.mxu0 0.0
        %1459 = vmatprep.subr.mxu0 0.0
        %1460 = vmatpush1.msra.mxu0 0.0
        %1461 = vmatprep.subr.mxu0 0.0
        %1462 = vmatpush1.msra.mxu0 0.0
        %1463 = vmatprep.subr.mxu0 0.0
        %1464 = vmatpush1.msra.mxu0 0.0
        %1465 = vmatprep.subr.mxu0 0.0
        %1466 = vmatpush1.msra.mxu0 0.0
        %1467 = vmatprep.subr.mxu0 0.0
        %1468 = vmatpush1.msra.mxu0 0.0
        %1469 = vmatprep.subr.mxu0 0.0
        %1470 = vmatpush1.msra.mxu0 0.0
        %1471 = vmatprep.subr.mxu0 0.0
        %1472 = vmatpush1.msra.mxu0 0.0
        %1473 = vmatprep.subr.mxu0 0.0
        %1474 = vmatpush1.msra.mxu0 0.0
        %1475 = vmatprep.subr.mxu0 0.0
        %1476 = vmatpush1.msra.mxu0 0.0
        %1477 = vmatprep.mubr.f32.mxu0 0.0
        %1478 = vmatmul.mubr.f32.gmra.mrb[0].mxu0 %v1405
        %v1479 = vpop.f32.mrb[0].mxu0
        %v1480 = vadd.f32 0.0, %v1479
        %v1481 = vpop.f32.mrb[0].mxu0
        %1482 = vmatprep.mubr.f32.mxu0 0.0
        %1483 = vmatmul.mubr.f32.gmra.mrb[0].mxu0 %v1407
        %v1484 = vpop.f32.mrb[0].mxu0
        %v1485 = vadd.f32 0.0, %v1484
        %v1486 = vpop.f32.mrb[0].mxu0
        %1487 = vmatprep.mubr.f32.mxu0 0.0
        %1488 = vmatmul.mubr.f32.gmra.mrb[0].mxu0 %v1409
        %v1489 = vpop.f32.mrb[0].mxu0
        %v1490 = vadd.f32 0.0, %v1489
        %v1491 = vpop.f32.mrb[0].mxu0
        %1492 = vmatprep.mubr.f32.mxu0 0.0
        %1493 = vmatmul.mubr.f32.gmra.mrb[0].mxu0 %v1411
        %v1494 = vpop.f32.mrb[0].mxu0
        %v1495 = vadd.f32 0.0, %v1494
        %v1496 = vpop.f32.mrb[0].mxu0
        %1497 = vdwg.mxu0
        %1498 = vmax.xlane.f32.xlu0 %v1480
        %v1499 = vpop.xlane.xlu0 %1498
        %1500 = vmax.xlane.f32.xlu0 %v1485
        %v1501 = vpop.xlane.xlu0 %1500
        %1502 = vmax.xlane.f32.xlu0 %v1490
        %v1503 = vpop.xlane.xlu0 %1502
        %1504 = vmax.xlane.f32.xlu0 %v1495
        %v1505 = vpop.xlane.xlu0 %1504
        %v1506 = vsub.f32 -inf, %v1499
        %v1507 = vsub.f32 -inf, %v1501
        %v1508 = vsub.f32 -inf, %v1503
        %v1509 = vsub.f32 -inf, %v1505
        %v1510 = vmul.f32 %v1506, 1.442695
        %v1511 = vpow.pop %v1510
        %v1512 = vmul.f32 %v1507, 1.442695
        %v1513 = vpow.pop %v1512
        %v1514 = vmul.f32 %v1508, 1.442695
        %v1515 = vpow.pop %v1514
        %v1516 = vmul.f32 %v1509, 1.442695
        %v1517 = vpow.pop %v1516
        %v1518 = vsub.f32 %v1480, %v1499
        %v1519 = vsub.f32 %v1485, %v1501
        %v1520 = vsub.f32 %v1490, %v1503
        %v1521 = vsub.f32 %v1495, %v1505
        %v1522 = vmul.f32 %v1518, 1.442695
        %v1523 = vpow.pop %v1522
        %v1524 = vmul.f32 %v1519, 1.442695
        %v1525 = vpow.pop %v1524
        %v1526 = vmul.f32 %v1520, 1.442695
        %v1527 = vpow.pop %v1526
        %v1528 = vmul.f32 %v1521, 1.442695
        %v1529 = vpow.pop %v1528
        %v1530 = vmul.f32 %v1511, 0.0
        %v1531 = vmul.f32 %v1513, 0.0
        %v1532 = vmul.f32 %v1515, 0.0
        %v1533 = vmul.f32 %v1517, 0.0
        %1534 = vadd.xlane.f32.xlu0 %v1523
        %v1535 = vpop.xlane.xlu0 %1534
        %1536 = vadd.xlane.f32.xlu0 %v1525
        %v1537 = vpop.xlane.xlu0 %1536
        %1538 = vadd.xlane.f32.xlu0 %v1527
        %v1539 = vpop.xlane.xlu0 %1538
        %1540 = vadd.xlane.f32.xlu0 %v1529
        %v1541 = vpop.xlane.xlu0 %1540
        %v1542 = vadd.f32 %v1530, %v1535
        %v1543 = vadd.f32 %v1531, %v1537
        %v1544 = vadd.f32 %v1532, %v1539
        %v1545 = vadd.f32 %v1533, %v1541
        %1562 = vrot.lane.b32.xlu0 %v1381, 96
        %v1563 = vpop.permute.xlu0 %1562
        %1564 = vrot.lane.b32.xlu0 %v1382, 96
        %v1565 = vpop.permute.xlu0 %1564
        %1566 = vrot.lane.b32.xlu0 %v1383, 96
        %v1567 = vpop.permute.xlu0 %1566
        %1568 = vrot.lane.b32.xlu0 %v1384, 96
        %v1569 = vpop.permute.xlu0 %1568
        %1570 = vrot.lane.b32.xlu0 %v1385, 96
        %v1571 = vpop.permute.xlu0 %1570
        %1572 = vrot.lane.b32.xlu0 %v1386, 96
        %v1573 = vpop.permute.xlu0 %1572
        %1574 = vrot.lane.b32.xlu0 %v1387, 96
        %v1575 = vpop.permute.xlu0 %1574
        %1576 = vrot.lane.b32.xlu0 %v1388, 96
        %v1577 = vpop.permute.xlu0 %1576
        %1578 = vrot.lane.b32.xlu0 %v1389, 96
        %v1579 = vpop.permute.xlu0 %1578
        %1580 = vrot.lane.b32.xlu0 %v1390, 96
        %v1581 = vpop.permute.xlu0 %1580
        %1582 = vrot.lane.b32.xlu0 %v1391, 96
        %v1583 = vpop.permute.xlu0 %1582
        %1584 = vrot.lane.b32.xlu0 %v1392, 96
        %v1585 = vpop.permute.xlu0 %1584
        %1586 = vrot.lane.b32.xlu0 %v1393, 96
        %v1587 = vpop.permute.xlu0 %1586
        %1588 = vrot.lane.b32.xlu0 %v1394, 96
        %v1589 = vpop.permute.xlu0 %1588
        %1590 = vrot.lane.b32.xlu0 %v1395, 96
        %v1591 = vpop.permute.xlu0 %1590
        %1592 = vrot.lane.b32.xlu0 %v1396, 96
        %v1593 = vpop.permute.xlu0 %1592
        %1610 = vmatprep.subr.mxu0 0.0
        %1611 = vmatpush1.msra.mxu0 %v1563
        %1612 = vmatprep.subr.mxu0 0.0
        %1613 = vmatpush1.msra.mxu0 %v1565
        %1614 = vmatprep.subr.mxu0 0.0
        %1615 = vmatpush1.msra.mxu0 %v1567
        %1616 = vmatprep.subr.mxu0 0.0
        %1617 = vmatpush1.msra.mxu0 %v1569
        %1618 = vmatprep.subr.mxu0 0.0
        %1619 = vmatpush1.msra.mxu0 %v1571
        %1620 = vmatprep.subr.mxu0 0.0
        %1621 = vmatpush1.msra.mxu0 %v1573
        %1622 = vmatprep.subr.mxu0 0.0
        %1623 = vmatpush1.msra.mxu0 %v1575
        %1624 = vmatprep.subr.mxu0 0.0
        %1625 = vmatpush1.msra.mxu0 %v1577
        %1626 = vmatprep.subr.mxu0 0.0
        %1627 = vmatpush1.msra.mxu0 %v1579
        %1628 = vmatprep.subr.mxu0 0.0
        %1629 = vmatpush1.msra.mxu0 %v1581
        %1630 = vmatprep.subr.mxu0 0.0
        %1631 = vmatpush1.msra.mxu0 %v1583
        %1632 = vmatprep.subr.mxu0 0.0
        %1633 = vmatpush1.msra.mxu0 %v1585
        %1634 = vmatprep.subr.mxu0 0.0
        %1635 = vmatpush1.msra.mxu0 %v1587
        %1636 = vmatprep.subr.mxu0 0.0
        %1637 = vmatpush1.msra.mxu0 %v1589
        %1638 = vmatprep.subr.mxu0 0.0
        %1639 = vmatpush1.msra.mxu0 %v1591
        %1640 = vmatprep.subr.mxu0 0.0
        %1641 = vmatpush1.msra.mxu0 %v1593
        %1642 = vmatprep.subr.mxu0 0.0
        %1643 = vmatpush1.msra.mxu0 0.0
        %1644 = vmatprep.subr.mxu0 0.0
        %1645 = vmatpush1.msra.mxu0 0.0
        %1646 = vmatprep.subr.mxu0 0.0
        %1647 = vmatpush1.msra.mxu0 0.0
        %1648 = vmatprep.subr.mxu0 0.0
        %1649 = vmatpush1.msra.mxu0 0.0
        %1650 = vmatprep.subr.mxu0 0.0
        %1651 = vmatpush1.msra.mxu0 0.0
        %1652 = vmatprep.subr.mxu0 0.0
        %1653 = vmatpush1.msra.mxu0 0.0
        %1654 = vmatprep.subr.mxu0 0.0
        %1655 = vmatpush1.msra.mxu0 0.0
        %1656 = vmatprep.subr.mxu0 0.0
        %1657 = vmatpush1.msra.mxu0 0.0
        %1658 = vmatprep.subr.mxu0 0.0
        %1659 = vmatpush1.msra.mxu0 0.0
        %1660 = vmatprep.subr.mxu0 0.0
        %1661 = vmatpush1.msra.mxu0 0.0
        %1662 = vmatprep.subr.mxu0 0.0
        %1663 = vmatpush1.msra.mxu0 0.0
        %1664 = vmatprep.subr.mxu0 0.0
        %1665 = vmatpush1.msra.mxu0 0.0
        %1666 = vmatprep.subr.mxu0 0.0
        %1667 = vmatpush1.msra.mxu0 0.0
        %1668 = vmatprep.subr.mxu0 0.0
        %1669 = vmatpush1.msra.mxu0 0.0
        %1670 = vmatprep.subr.mxu0 0.0
        %1671 = vmatpush1.msra.mxu0 0.0
        %1672 = vmatprep.subr.mxu0 0.0
        %1673 = vmatpush1.msra.mxu0 0.0
        %1674 = vmatprep.mubr.f32.mxu0 0.0
        %1675 = vmatmul.mubr.f32.gmra.mrb[0].mxu0 %v1523
        %v1676 = vpop.f32.mrb[0].mxu0
        %v1677 = vadd.f32 0.0, %v1676
        %v1678 = vpop.f32.mrb[0].mxu0
        %1679 = vmatprep.mubr.f32.mxu0 0.0
        %1680 = vmatmul.mubr.f32.gmra.mrb[0].mxu0 %v1525
        %v1681 = vpop.f32.mrb[0].mxu0
        %v1682 = vadd.f32 0.0, %v1681
        %v1683 = vpop.f32.mrb[0].mxu0
        %1684 = vmatprep.mubr.f32.mxu0 0.0
        %1685 = vmatmul.mubr.f32.gmra.mrb[0].mxu0 %v1527
        %v1686 = vpop.f32.mrb[0].mxu0
        %v1687 = vadd.f32 0.0, %v1686
        %v1688 = vpop.f32.mrb[0].mxu0
        %1689 = vmatprep.mubr.f32.mxu0 0.0
        %1690 = vmatmul.mubr.f32.gmra.mrb[0].mxu0 %v1529
        %v1691 = vpop.f32.mrb[0].mxu0
        %v1692 = vadd.f32 0.0, %v1691
        %v1693 = vpop.f32.mrb[0].mxu0
        %1694 = vdwg.mxu0
        %v1695 = vadd.f32 %v1530, %v1677
        %v1696 = vadd.f32 %v1531, %v1682
        %v1697 = vadd.f32 %v1532, %v1687
        %v1698 = vadd.f32 %v1533, %v1692
        %v1699 = vrcp.pop %v1542
        %v1700 = vrcp.pop %v1543
        %v1701 = vrcp.pop %v1544
        %v1702 = vrcp.pop %v1545
        %v1703 = vmul.f32 %v1695, %v1699
        %v1704 = vmul.f32 %v1696, %v1700
        %v1705 = vmul.f32 %v1697, %v1701
        %v1706 = vmul.f32 %v1698, %v1702
        %1711 = vrot.lane.b32.xlu0 %v1703, 32
        %v1712 = vpop.permute.xlu0 %1711
        %1713 = vrot.lane.b32.xlu0 %v1704, 32
        %v1714 = vpop.permute.xlu0 %1713
        %1715 = vrot.lane.b32.xlu0 %v1705, 32
        %v1716 = vpop.permute.xlu0 %1715
        %1717 = vrot.lane.b32.xlu0 %v1706, 32
        %v1718 = vpop.permute.xlu0 %1717
        %vm1723 = vcmask 523520
        %1724 = vst.msk [vmem:[#allocation4] sm:$0xff] %vm1723, %v1712
        %1725 = vst.msk [vmem:[#allocation4 + $0x8] sm:$0xff] %vm1723, %v1714
        %1726 = vst.msk [vmem:[#allocation4 + $0x10] sm:$0xff] %vm1723, %v1716
        %1727 = vst.msk [vmem:[#allocation4 + $0x18] sm:$0xff] %vm1723, %v1718
        %v1728 = vld [vmem:[#allocation2 + $0x40] sm:$0xff]
        %v1729 = vld [vmem:[#allocation2 + $0x48] sm:$0xff]
        %v1730 = vld [vmem:[#allocation2 + $0x50] sm:$0xff]
        %v1731 = vld [vmem:[#allocation2 + $0x58] sm:$0xff]
        %v1732 = vld [vmem:[#allocation3] sm:$0xff]
        %v1733 = vld [vmem:[#allocation3 + $0x8] sm:$0xff]
        %v1734 = vld [vmem:[#allocation3 + $0x10] sm:$0xff]
        %v1735 = vld [vmem:[#allocation3 + $0x18] sm:$0xff]
        %v1736 = vld [vmem:[#allocation3 + $0x20] sm:$0xff]
        %v1737 = vld [vmem:[#allocation3 + $0x28] sm:$0xff]
        %v1738 = vld [vmem:[#allocation3 + $0x30] sm:$0xff]
        %v1739 = vld [vmem:[#allocation3 + $0x38] sm:$0xff]
        %v1740 = vld [vmem:[#allocation3 + $0x40] sm:$0xff]
        %v1741 = vld [vmem:[#allocation3 + $0x48] sm:$0xff]
        %v1742 = vld [vmem:[#allocation3 + $0x50] sm:$0xff]
        %v1743 = vld [vmem:[#allocation3 + $0x58] sm:$0xff]
        %v1744 = vld [vmem:[#allocation3 + $0x60] sm:$0xff]
        %v1745 = vld [vmem:[#allocation3 + $0x68] sm:$0xff]
        %v1746 = vld [vmem:[#allocation3 + $0x70] sm:$0xff]
        %v1747 = vld [vmem:[#allocation3 + $0x78] sm:$0xff]
        %1748 = vrot.lane.b32.xlu0 %v1106, 64
        %v1749 = vpop.permute.xlu0 %1748
        %1750 = vrot.lane.b32.xlu0 %v1107, 64
        %v1751 = vpop.permute.xlu0 %1750
        %1752 = vrot.lane.b32.xlu0 %v1108, 64
        %v1753 = vpop.permute.xlu0 %1752
        %1754 = vrot.lane.b32.xlu0 %v1109, 64
        %v1755 = vpop.permute.xlu0 %1754
        %v1756 = vsel %vm1130, %v1749, 0
        %v1758 = vsel %vm1130, %v1751, 0
        %v1760 = vsel %vm1130, %v1753, 0
        %v1762 = vsel %vm1130, %v1755, 0
        %1764 = vmatprep.subr.mxu0 0.0
        %1765 = vmatpush1.msra.mxu0 %v1728
        %1766 = vmatprep.subr.mxu0 0.0
        %1767 = vmatpush1.msra.mxu0 %v1729
        %1768 = vmatprep.subr.mxu0 0.0
        %1769 = vmatpush1.msra.mxu0 %v1730
        %1770 = vmatprep.subr.mxu0 0.0
        %1771 = vmatpush1.msra.mxu0 %v1731
        %1772 = vmatprep.subr.mxu0 0.0
        %1773 = vmatpush1.msra.mxu0 0.0
        %1774 = vmatprep.subr.mxu0 0.0
        %1775 = vmatpush1.msra.mxu0 0.0
        %1776 = vmatprep.subr.mxu0 0.0
        %1777 = vmatpush1.msra.mxu0 0.0
        %1778 = vmatprep.subr.mxu0 0.0
        %1779 = vmatpush1.msra.mxu0 0.0
        %1780 = vmatprep.subr.mxu0 0.0
        %1781 = vmatpush1.msra.mxu0 0.0
        %1782 = vmatprep.subr.mxu0 0.0
        %1783 = vmatpush1.msra.mxu0 0.0
        %1784 = vmatprep.subr.mxu0 0.0
        %1785 = vmatpush1.msra.mxu0 0.0
        %1786 = vmatprep.subr.mxu0 0.0
        %1787 = vmatpush1.msra.mxu0 0.0
        %1788 = vmatprep.subr.mxu0 0.0
        %1789 = vmatpush1.msra.mxu0 0.0
        %1790 = vmatprep.subr.mxu0 0.0
        %1791 = vmatpush1.msra.mxu0 0.0
        %1792 = vmatprep.subr.mxu0 0.0
        %1793 = vmatpush1.msra.mxu0 0.0
        %1794 = vmatprep.subr.mxu0 0.0
        %1795 = vmatpush1.msra.mxu0 0.0
        %1796 = vmatprep.subr.mxu0 0.0
        %1797 = vmatpush1.msra.mxu0 0.0
        %1798 = vmatprep.subr.mxu0 0.0
        %1799 = vmatpush1.msra.mxu0 0.0
        %1800 = vmatprep.subr.mxu0 0.0
        %1801 = vmatpush1.msra.mxu0 0.0
        %1802 = vmatprep.subr.mxu0 0.0
        %1803 = vmatpush1.msra.mxu0 0.0
        %1804 = vmatprep.subr.mxu0 0.0
        %1805 = vmatpush1.msra.mxu0 0.0
        %1806 = vmatprep.subr.mxu0 0.0
        %1807 = vmatpush1.msra.mxu0 0.0
        %1808 = vmatprep.subr.mxu0 0.0
        %1809 = vmatpush1.msra.mxu0 0.0
        %1810 = vmatprep.subr.mxu0 0.0
        %1811 = vmatpush1.msra.mxu0 0.0
        %1812 = vmatprep.subr.mxu0 0.0
        %1813 = vmatpush1.msra.mxu0 0.0
        %1814 = vmatprep.subr.mxu0 0.0
        %1815 = vmatpush1.msra.mxu0 0.0
        %1816 = vmatprep.subr.mxu0 0.0
        %1817 = vmatpush1.msra.mxu0 0.0
        %1818 = vmatprep.subr.mxu0 0.0
        %1819 = vmatpush1.msra.mxu0 0.0
        %1820 = vmatprep.subr.mxu0 0.0
        %1821 = vmatpush1.msra.mxu0 0.0
        %1822 = vmatprep.subr.mxu0 0.0
        %1823 = vmatpush1.msra.mxu0 0.0
        %1824 = vmatprep.subr.mxu0 0.0
        %1825 = vmatpush1.msra.mxu0 0.0
        %1826 = vmatprep.subr.mxu0 0.0
        %1827 = vmatpush1.msra.mxu0 0.0
        %1828 = vmatprep.mubr.f32.mxu0 0.0
        %1829 = vmatmul.mubr.f32.gmra.mrb[0].mxu0 %v1756
        %v1830 = vpop.f32.mrb[0].mxu0
        %v1831 = vadd.f32 0.0, %v1830
        %v1832 = vpop.f32.mrb[0].mxu0
        %1833 = vmatprep.mubr.f32.mxu0 0.0
        %1834 = vmatmul.mubr.f32.gmra.mrb[0].mxu0 %v1758
        %v1835 = vpop.f32.mrb[0].mxu0
        %v1836 = vadd.f32 0.0, %v1835
        %v1837 = vpop.f32.mrb[0].mxu0
        %1838 = vmatprep.mubr.f32.mxu0 0.0
        %1839 = vmatmul.mubr.f32.gmra.mrb[0].mxu0 %v1760
        %v1840 = vpop.f32.mrb[0].mxu0
        %v1841 = vadd.f32 0.0, %v1840
        %v1842 = vpop.f32.mrb[0].mxu0
        %1843 = vmatprep.mubr.f32.mxu0 0.0
        %1844 = vmatmul.mubr.f32.gmra.mrb[0].mxu0 %v1762
        %v1845 = vpop.f32.mrb[0].mxu0
        %v1846 = vadd.f32 0.0, %v1845
        %v1847 = vpop.f32.mrb[0].mxu0
        %1848 = vdwg.mxu0
        %1849 = vmax.xlane.f32.xlu0 %v1831
        %v1850 = vpop.xlane.xlu0 %1849
        %1851 = vmax.xlane.f32.xlu0 %v1836
        %v1852 = vpop.xlane.xlu0 %1851
        %1853 = vmax.xlane.f32.xlu0 %v1841
        %v1854 = vpop.xlane.xlu0 %1853
        %1855 = vmax.xlane.f32.xlu0 %v1846
        %v1856 = vpop.xlane.xlu0 %1855
        %v1857 = vsub.f32 -inf, %v1850
        %v1858 = vsub.f32 -inf, %v1852
        %v1859 = vsub.f32 -inf, %v1854
        %v1860 = vsub.f32 -inf, %v1856
        %v1861 = vmul.f32 %v1857, 1.442695
        %v1862 = vpow.pop %v1861
        %v1863 = vmul.f32 %v1858, 1.442695
        %v1864 = vpow.pop %v1863
        %v1865 = vmul.f32 %v1859, 1.442695
        %v1866 = vpow.pop %v1865
        %v1867 = vmul.f32 %v1860, 1.442695
        %v1868 = vpow.pop %v1867
        %v1869 = vsub.f32 %v1831, %v1850
        %v1870 = vsub.f32 %v1836, %v1852
        %v1871 = vsub.f32 %v1841, %v1854
        %v1872 = vsub.f32 %v1846, %v1856
        %v1873 = vmul.f32 %v1869, 1.442695
        %v1874 = vpow.pop %v1873
        %v1875 = vmul.f32 %v1870, 1.442695
        %v1876 = vpow.pop %v1875
        %v1877 = vmul.f32 %v1871, 1.442695
        %v1878 = vpow.pop %v1877
        %v1879 = vmul.f32 %v1872, 1.442695
        %v1880 = vpow.pop %v1879
        %v1881 = vmul.f32 %v1862, 0.0
        %v1882 = vmul.f32 %v1864, 0.0
        %v1883 = vmul.f32 %v1866, 0.0
        %v1884 = vmul.f32 %v1868, 0.0
        %1885 = vadd.xlane.f32.xlu0 %v1874
        %v1886 = vpop.xlane.xlu0 %1885
        %1887 = vadd.xlane.f32.xlu0 %v1876
        %v1888 = vpop.xlane.xlu0 %1887
        %1889 = vadd.xlane.f32.xlu0 %v1878
        %v1890 = vpop.xlane.xlu0 %1889
        %1891 = vadd.xlane.f32.xlu0 %v1880
        %v1892 = vpop.xlane.xlu0 %1891
        %v1893 = vadd.f32 %v1881, %v1886
        %v1894 = vadd.f32 %v1882, %v1888
        %v1895 = vadd.f32 %v1883, %v1890
        %v1896 = vadd.f32 %v1884, %v1892
        %1913 = vrot.lane.b32.xlu0 %v1732, 64
        %v1914 = vpop.permute.xlu0 %1913
        %1915 = vrot.lane.b32.xlu0 %v1733, 64
        %v1916 = vpop.permute.xlu0 %1915
        %1917 = vrot.lane.b32.xlu0 %v1734, 64
        %v1918 = vpop.permute.xlu0 %1917
        %1919 = vrot.lane.b32.xlu0 %v1735, 64
        %v1920 = vpop.permute.xlu0 %1919
        %1921 = vrot.lane.b32.xlu0 %v1736, 64
        %v1922 = vpop.permute.xlu0 %1921
        %1923 = vrot.lane.b32.xlu0 %v1737, 64
        %v1924 = vpop.permute.xlu0 %1923
        %1925 = vrot.lane.b32.xlu0 %v1738, 64
        %v1926 = vpop.permute.xlu0 %1925
        %1927 = vrot.lane.b32.xlu0 %v1739, 64
        %v1928 = vpop.permute.xlu0 %1927
        %1929 = vrot.lane.b32.xlu0 %v1740, 64
        %v1930 = vpop.permute.xlu0 %1929
        %1931 = vrot.lane.b32.xlu0 %v1741, 64
        %v1932 = vpop.permute.xlu0 %1931
        %1933 = vrot.lane.b32.xlu0 %v1742, 64
        %v1934 = vpop.permute.xlu0 %1933
        %1935 = vrot.lane.b32.xlu0 %v1743, 64
        %v1936 = vpop.permute.xlu0 %1935
        %1937 = vrot.lane.b32.xlu0 %v1744, 64
        %v1938 = vpop.permute.xlu0 %1937
        %1939 = vrot.lane.b32.xlu0 %v1745, 64
        %v1940 = vpop.permute.xlu0 %1939
        %1941 = vrot.lane.b32.xlu0 %v1746, 64
        %v1942 = vpop.permute.xlu0 %1941
        %1943 = vrot.lane.b32.xlu0 %v1747, 64
        %v1944 = vpop.permute.xlu0 %1943
        %1961 = vmatprep.subr.mxu0 0.0
        %1962 = vmatpush1.msra.mxu0 %v1914
        %1963 = vmatprep.subr.mxu0 0.0
        %1964 = vmatpush1.msra.mxu0 %v1916
        %1965 = vmatprep.subr.mxu0 0.0
        %1966 = vmatpush1.msra.mxu0 %v1918
        %1967 = vmatprep.subr.mxu0 0.0
        %1968 = vmatpush1.msra.mxu0 %v1920
        %1969 = vmatprep.subr.mxu0 0.0
        %1970 = vmatpush1.msra.mxu0 %v1922
        %1971 = vmatprep.subr.mxu0 0.0
        %1972 = vmatpush1.msra.mxu0 %v1924
        %1973 = vmatprep.subr.mxu0 0.0
        %1974 = vmatpush1.msra.mxu0 %v1926
        %1975 = vmatprep.subr.mxu0 0.0
        %1976 = vmatpush1.msra.mxu0 %v1928
        %1977 = vmatprep.subr.mxu0 0.0
        %1978 = vmatpush1.msra.mxu0 %v1930
        %1979 = vmatprep.subr.mxu0 0.0
        %1980 = vmatpush1.msra.mxu0 %v1932
        %1981 = vmatprep.subr.mxu0 0.0
        %1982 = vmatpush1.msra.mxu0 %v1934
        %1983 = vmatprep.subr.mxu0 0.0
        %1984 = vmatpush1.msra.mxu0 %v1936
        %1985 = vmatprep.subr.mxu0 0.0
        %1986 = vmatpush1.msra.mxu0 %v1938
        %1987 = vmatprep.subr.mxu0 0.0
        %1988 = vmatpush1.msra.mxu0 %v1940
        %1989 = vmatprep.subr.mxu0 0.0
        %1990 = vmatpush1.msra.mxu0 %v1942
        %1991 = vmatprep.subr.mxu0 0.0
        %1992 = vmatpush1.msra.mxu0 %v1944
        %1993 = vmatprep.subr.mxu0 0.0
        %1994 = vmatpush1.msra.mxu0 0.0
        %1995 = vmatprep.subr.mxu0 0.0
        %1996 = vmatpush1.msra.mxu0 0.0
        %1997 = vmatprep.subr.mxu0 0.0
        %1998 = vmatpush1.msra.mxu0 0.0
        %1999 = vmatprep.subr.mxu0 0.0
        %2000 = vmatpush1.msra.mxu0 0.0
        %2001 = vmatprep.subr.mxu0 0.0
        %2002 = vmatpush1.msra.mxu0 0.0
        %2003 = vmatprep.subr.mxu0 0.0
        %2004 = vmatpush1.msra.mxu0 0.0
        %2005 = vmatprep.subr.mxu0 0.0
        %2006 = vmatpush1.msra.mxu0 0.0
        %2007 = vmatprep.subr.mxu0 0.0
        %2008 = vmatpush1.msra.mxu0 0.0
        %2009 = vmatprep.subr.mxu0 0.0
        %2010 = vmatpush1.msra.mxu0 0.0
        %2011 = vmatprep.subr.mxu0 0.0
        %2012 = vmatpush1.msra.mxu0 0.0
        %2013 = vmatprep.subr.mxu0 0.0
        %2014 = vmatpush1.msra.mxu0 0.0
        %2015 = vmatprep.subr.mxu0 0.0
        %2016 = vmatpush1.msra.mxu0 0.0
        %2017 = vmatprep.subr.mxu0 0.0
        %2018 = vmatpush1.msra.mxu0 0.0
        %2019 = vmatprep.subr.mxu0 0.0
        %2020 = vmatpush1.msra.mxu0 0.0
        %2021 = vmatprep.subr.mxu0 0.0
        %2022 = vmatpush1.msra.mxu0 0.0
        %2023 = vmatprep.subr.mxu0 0.0
        %2024 = vmatpush1.msra.mxu0 0.0
        %2025 = vmatprep.mubr.f32.mxu0 0.0
        %2026 = vmatmul.mubr.f32.gmra.mrb[0].mxu0 %v1874
        %v2027 = vpop.f32.mrb[0].mxu0
        %v2028 = vadd.f32 0.0, %v2027
        %v2029 = vpop.f32.mrb[0].mxu0
        %2030 = vmatprep.mubr.f32.mxu0 0.0
        %2031 = vmatmul.mubr.f32.gmra.mrb[0].mxu0 %v1876
        %v2032 = vpop.f32.mrb[0].mxu0
        %v2033 = vadd.f32 0.0, %v2032
        %v2034 = vpop.f32.mrb[0].mxu0
        %2035 = vmatprep.mubr.f32.mxu0 0.0
        %2036 = vmatmul.mubr.f32.gmra.mrb[0].mxu0 %v1878
        %v2037 = vpop.f32.mrb[0].mxu0
        %v2038 = vadd.f32 0.0, %v2037
        %v2039 = vpop.f32.mrb[0].mxu0
        %2040 = vmatprep.mubr.f32.mxu0 0.0
        %2041 = vmatmul.mubr.f32.gmra.mrb[0].mxu0 %v1880
        %v2042 = vpop.f32.mrb[0].mxu0
        %v2043 = vadd.f32 0.0, %v2042
        %v2044 = vpop.f32.mrb[0].mxu0
        %2045 = vdwg.mxu0
        %v2046 = vadd.f32 %v1881, %v2028
        %v2047 = vadd.f32 %v1882, %v2033
        %v2048 = vadd.f32 %v1883, %v2038
        %v2049 = vadd.f32 %v1884, %v2043
        %v2050 = vrcp.pop %v1893
        %v2051 = vrcp.pop %v1894
        %v2052 = vrcp.pop %v1895
        %v2053 = vrcp.pop %v1896
        %v2054 = vmul.f32 %v2046, %v2050
        %v2055 = vmul.f32 %v2047, %v2051
        %v2056 = vmul.f32 %v2048, %v2052
        %v2057 = vmul.f32 %v2049, %v2053
        %2062 = vrot.lane.b32.xlu0 %v2054, 64
        %v2063 = vpop.permute.xlu0 %2062
        %2064 = vrot.lane.b32.xlu0 %v2055, 64
        %v2065 = vpop.permute.xlu0 %2064
        %2066 = vrot.lane.b32.xlu0 %v2056, 64
        %v2067 = vpop.permute.xlu0 %2066
        %2068 = vrot.lane.b32.xlu0 %v2057, 64
        %v2069 = vpop.permute.xlu0 %2068
        %vm2074 = vcmask 785920
        %2075 = vst.msk [vmem:[#allocation4] sm:$0xff] %vm2074, %v2063
        %2076 = vst.msk [vmem:[#allocation4 + $0x8] sm:$0xff] %vm2074, %v2065
        %2077 = vst.msk [vmem:[#allocation4 + $0x10] sm:$0xff] %vm2074, %v2067
        %2078 = vst.msk [vmem:[#allocation4 + $0x18] sm:$0xff] %vm2074, %v2069
        %v2079 = vld [vmem:[#allocation2 + $0x60] sm:$0xff]
        %v2080 = vld [vmem:[#allocation2 + $0x68] sm:$0xff]
        %v2081 = vld [vmem:[#allocation2 + $0x70] sm:$0xff]
        %v2082 = vld [vmem:[#allocation2 + $0x78] sm:$0xff]
        %v2083 = vld [vmem:[#allocation3] sm:$0xff]
        %v2084 = vld [vmem:[#allocation3 + $0x8] sm:$0xff]
        %v2085 = vld [vmem:[#allocation3 + $0x10] sm:$0xff]
        %v2086 = vld [vmem:[#allocation3 + $0x18] sm:$0xff]
        %v2087 = vld [vmem:[#allocation3 + $0x20] sm:$0xff]
        %v2088 = vld [vmem:[#allocation3 + $0x28] sm:$0xff]
        %v2089 = vld [vmem:[#allocation3 + $0x30] sm:$0xff]
        %v2090 = vld [vmem:[#allocation3 + $0x38] sm:$0xff]
        %v2091 = vld [vmem:[#allocation3 + $0x40] sm:$0xff]
        %v2092 = vld [vmem:[#allocation3 + $0x48] sm:$0xff]
        %v2093 = vld [vmem:[#allocation3 + $0x50] sm:$0xff]
        %v2094 = vld [vmem:[#allocation3 + $0x58] sm:$0xff]
        %v2095 = vld [vmem:[#allocation3 + $0x60] sm:$0xff]
        %v2096 = vld [vmem:[#allocation3 + $0x68] sm:$0xff]
        %v2097 = vld [vmem:[#allocation3 + $0x70] sm:$0xff]
        %v2098 = vld [vmem:[#allocation3 + $0x78] sm:$0xff]
        %2099 = vrot.lane.b32.xlu0 %v1106, 32
        %v2100 = vpop.permute.xlu0 %2099
        %2101 = vrot.lane.b32.xlu0 %v1107, 32
        %v2102 = vpop.permute.xlu0 %2101
        %2103 = vrot.lane.b32.xlu0 %v1108, 32
        %v2104 = vpop.permute.xlu0 %2103
        %2105 = vrot.lane.b32.xlu0 %v1109, 32
        %v2106 = vpop.permute.xlu0 %2105
        %v2107 = vsel %vm1130, %v2100, 0
        %v2109 = vsel %vm1130, %v2102, 0
        %v2111 = vsel %vm1130, %v2104, 0
        %v2113 = vsel %vm1130, %v2106, 0
        %2115 = vmatprep.subr.mxu0 0.0
        %2116 = vmatpush1.msra.mxu0 %v2079
        %2117 = vmatprep.subr.mxu0 0.0
        %2118 = vmatpush1.msra.mxu0 %v2080
        %2119 = vmatprep.subr.mxu0 0.0
        %2120 = vmatpush1.msra.mxu0 %v2081
        %2121 = vmatprep.subr.mxu0 0.0
        %2122 = vmatpush1.msra.mxu0 %v2082
        %2123 = vmatprep.subr.mxu0 0.0
        %2124 = vmatpush1.msra.mxu0 0.0
        %2125 = vmatprep.subr.mxu0 0.0
        %2126 = vmatpush1.msra.mxu0 0.0
        %2127 = vmatprep.subr.mxu0 0.0
        %2128 = vmatpush1.msra.mxu0 0.0
        %2129 = vmatprep.subr.mxu0 0.0
        %2130 = vmatpush1.msra.mxu0 0.0
        %2131 = vmatprep.subr.mxu0 0.0
        %2132 = vmatpush1.msra.mxu0 0.0
        %2133 = vmatprep.subr.mxu0 0.0
        %2134 = vmatpush1.msra.mxu0 0.0
        %2135 = vmatprep.subr.mxu0 0.0
        %2136 = vmatpush1.msra.mxu0 0.0
        %2137 = vmatprep.subr.mxu0 0.0
        %2138 = vmatpush1.msra.mxu0 0.0
        %2139 = vmatprep.subr.mxu0 0.0
        %2140 = vmatpush1.msra.mxu0 0.0
        %2141 = vmatprep.subr.mxu0 0.0
        %2142 = vmatpush1.msra.mxu0 0.0
        %2143 = vmatprep.subr.mxu0 0.0
        %2144 = vmatpush1.msra.mxu0 0.0
        %2145 = vmatprep.subr.mxu0 0.0
        %2146 = vmatpush1.msra.mxu0 0.0
        %2147 = vmatprep.subr.mxu0 0.0
        %2148 = vmatpush1.msra.mxu0 0.0
        %2149 = vmatprep.subr.mxu0 0.0
        %2150 = vmatpush1.msra.mxu0 0.0
        %2151 = vmatprep.subr.mxu0 0.0
        %2152 = vmatpush1.msra.mxu0 0.0
        %2153 = vmatprep.subr.mxu0 0.0
        %2154 = vmatpush1.msra.mxu0 0.0
        %2155 = vmatprep.subr.mxu0 0.0
        %2156 = vmatpush1.msra.mxu0 0.0
        %2157 = vmatprep.subr.mxu0 0.0
        %2158 = vmatpush1.msra.mxu0 0.0
        %2159 = vmatprep.subr.mxu0 0.0
        %2160 = vmatpush1.msra.mxu0 0.0
        %2161 = vmatprep.subr.mxu0 0.0
        %2162 = vmatpush1.msra.mxu0 0.0
        %2163 = vmatprep.subr.mxu0 0.0
        %2164 = vmatpush1.msra.mxu0 0.0
        %2165 = vmatprep.subr.mxu0 0.0
        %2166 = vmatpush1.msra.mxu0 0.0
        %2167 = vmatprep.subr.mxu0 0.0
        %2168 = vmatpush1.msra.mxu0 0.0
        %2169 = vmatprep.subr.mxu0 0.0
        %2170 = vmatpush1.msra.mxu0 0.0
        %2171 = vmatprep.subr.mxu0 0.0
        %2172 = vmatpush1.msra.mxu0 0.0
        %2173 = vmatprep.subr.mxu0 0.0
        %2174 = vmatpush1.msra.mxu0 0.0
        %2175 = vmatprep.subr.mxu0 0.0
        %2176 = vmatpush1.msra.mxu0 0.0
        %2177 = vmatprep.subr.mxu0 0.0
        %2178 = vmatpush1.msra.mxu0 0.0
        %2179 = vmatprep.mubr.f32.mxu0 0.0
        %2180 = vmatmul.mubr.f32.gmra.mrb[0].mxu0 %v2107
        %v2181 = vpop.f32.mrb[0].mxu0
        %v2182 = vadd.f32 0.0, %v2181
        %v2183 = vpop.f32.mrb[0].mxu0
        %2184 = vmatprep.mubr.f32.mxu0 0.0
        %2185 = vmatmul.mubr.f32.gmra.mrb[0].mxu0 %v2109
        %v2186 = vpop.f32.mrb[0].mxu0
        %v2187 = vadd.f32 0.0, %v2186
        %v2188 = vpop.f32.mrb[0].mxu0
        %2189 = vmatprep.mubr.f32.mxu0 0.0
        %2190 = vmatmul.mubr.f32.gmra.mrb[0].mxu0 %v2111
        %v2191 = vpop.f32.mrb[0].mxu0
        %v2192 = vadd.f32 0.0, %v2191
        %v2193 = vpop.f32.mrb[0].mxu0
        %2194 = vmatprep.mubr.f32.mxu0 0.0
        %2195 = vmatmul.mubr.f32.gmra.mrb[0].mxu0 %v2113
        %v2196 = vpop.f32.mrb[0].mxu0
        %v2197 = vadd.f32 0.0, %v2196
        %v2198 = vpop.f32.mrb[0].mxu0
        %2199 = vdwg.mxu0
        %2200 = vmax.xlane.f32.xlu0 %v2182
        %v2201 = vpop.xlane.xlu0 %2200
        %2202 = vmax.xlane.f32.xlu0 %v2187
        %v2203 = vpop.xlane.xlu0 %2202
        %2204 = vmax.xlane.f32.xlu0 %v2192
        %v2205 = vpop.xlane.xlu0 %2204
        %2206 = vmax.xlane.f32.xlu0 %v2197
        %v2207 = vpop.xlane.xlu0 %2206
        %v2208 = vsub.f32 -inf, %v2201
        %v2209 = vsub.f32 -inf, %v2203
        %v2210 = vsub.f32 -inf, %v2205
        %v2211 = vsub.f32 -inf, %v2207
        %v2212 = vmul.f32 %v2208, 1.442695
        %v2213 = vpow.pop %v2212
        %v2214 = vmul.f32 %v2209, 1.442695
        %v2215 = vpow.pop %v2214
        %v2216 = vmul.f32 %v2210, 1.442695
        %v2217 = vpow.pop %v2216
        %v2218 = vmul.f32 %v2211, 1.442695
        %v2219 = vpow.pop %v2218
        %v2220 = vsub.f32 %v2182, %v2201
        %v2221 = vsub.f32 %v2187, %v2203
        %v2222 = vsub.f32 %v2192, %v2205
        %v2223 = vsub.f32 %v2197, %v2207
        %v2224 = vmul.f32 %v2220, 1.442695
        %v2225 = vpow.pop %v2224
        %v2226 = vmul.f32 %v2221, 1.442695
        %v2227 = vpow.pop %v2226
        %v2228 = vmul.f32 %v2222, 1.442695
        %v2229 = vpow.pop %v2228
        %v2230 = vmul.f32 %v2223, 1.442695
        %v2231 = vpow.pop %v2230
        %v2232 = vmul.f32 %v2213, 0.0
        %v2233 = vmul.f32 %v2215, 0.0
        %v2234 = vmul.f32 %v2217, 0.0
        %v2235 = vmul.f32 %v2219, 0.0
        %2236 = vadd.xlane.f32.xlu0 %v2225
        %v2237 = vpop.xlane.xlu0 %2236
        %2238 = vadd.xlane.f32.xlu0 %v2227
        %v2239 = vpop.xlane.xlu0 %2238
        %2240 = vadd.xlane.f32.xlu0 %v2229
        %v2241 = vpop.xlane.xlu0 %2240
        %2242 = vadd.xlane.f32.xlu0 %v2231
        %v2243 = vpop.xlane.xlu0 %2242
        %v2244 = vadd.f32 %v2232, %v2237
        %v2245 = vadd.f32 %v2233, %v2239
        %v2246 = vadd.f32 %v2234, %v2241
        %v2247 = vadd.f32 %v2235, %v2243
        %2264 = vrot.lane.b32.xlu0 %v2083, 32
        %v2265 = vpop.permute.xlu0 %2264
        %2266 = vrot.lane.b32.xlu0 %v2084, 32
        %v2267 = vpop.permute.xlu0 %2266
        %2268 = vrot.lane.b32.xlu0 %v2085, 32
        %v2269 = vpop.permute.xlu0 %2268
        %2270 = vrot.lane.b32.xlu0 %v2086, 32
        %v2271 = vpop.permute.xlu0 %2270
        %2272 = vrot.lane.b32.xlu0 %v2087, 32
        %v2273 = vpop.permute.xlu0 %2272
        %2274 = vrot.lane.b32.xlu0 %v2088, 32
        %v2275 = vpop.permute.xlu0 %2274
        %2276 = vrot.lane.b32.xlu0 %v2089, 32
        %v2277 = vpop.permute.xlu0 %2276
        %2278 = vrot.lane.b32.xlu0 %v2090, 32
        %v2279 = vpop.permute.xlu0 %2278
        %2280 = vrot.lane.b32.xlu0 %v2091, 32
        %v2281 = vpop.permute.xlu0 %2280
        %2282 = vrot.lane.b32.xlu0 %v2092, 32
        %v2283 = vpop.permute.xlu0 %2282
        %2284 = vrot.lane.b32.xlu0 %v2093, 32
        %v2285 = vpop.permute.xlu0 %2284
        %2286 = vrot.lane.b32.xlu0 %v2094, 32
        %v2287 = vpop.permute.xlu0 %2286
        %2288 = vrot.lane.b32.xlu0 %v2095, 32
        %v2289 = vpop.permute.xlu0 %2288
        %2290 = vrot.lane.b32.xlu0 %v2096, 32
        %v2291 = vpop.permute.xlu0 %2290
        %2292 = vrot.lane.b32.xlu0 %v2097, 32
        %v2293 = vpop.permute.xlu0 %2292
        %2294 = vrot.lane.b32.xlu0 %v2098, 32
        %v2295 = vpop.permute.xlu0 %2294
        %2312 = vmatprep.subr.mxu0 0.0
        %2313 = vmatpush1.msra.mxu0 %v2265
        %2314 = vmatprep.subr.mxu0 0.0
        %2315 = vmatpush1.msra.mxu0 %v2267
        %2316 = vmatprep.subr.mxu0 0.0
        %2317 = vmatpush1.msra.mxu0 %v2269
        %2318 = vmatprep.subr.mxu0 0.0
        %2319 = vmatpush1.msra.mxu0 %v2271
        %2320 = vmatprep.subr.mxu0 0.0
        %2321 = vmatpush1.msra.mxu0 %v2273
        %2322 = vmatprep.subr.mxu0 0.0
        %2323 = vmatpush1.msra.mxu0 %v2275
        %2324 = vmatprep.subr.mxu0 0.0
        %2325 = vmatpush1.msra.mxu0 %v2277
        %2326 = vmatprep.subr.mxu0 0.0
        %2327 = vmatpush1.msra.mxu0 %v2279
        %2328 = vmatprep.subr.mxu0 0.0
        %2329 = vmatpush1.msra.mxu0 %v2281
        %2330 = vmatprep.subr.mxu0 0.0
        %2331 = vmatpush1.msra.mxu0 %v2283
        %2332 = vmatprep.subr.mxu0 0.0
        %2333 = vmatpush1.msra.mxu0 %v2285
        %2334 = vmatprep.subr.mxu0 0.0
        %2335 = vmatpush1.msra.mxu0 %v2287
        %2336 = vmatprep.subr.mxu0 0.0
        %2337 = vmatpush1.msra.mxu0 %v2289
        %2338 = vmatprep.subr.mxu0 0.0
        %2339 = vmatpush1.msra.mxu0 %v2291
        %2340 = vmatprep.subr.mxu0 0.0
        %2341 = vmatpush1.msra.mxu0 %v2293
        %2342 = vmatprep.subr.mxu0 0.0
        %2343 = vmatpush1.msra.mxu0 %v2295
        %2344 = vmatprep.subr.mxu0 0.0
        %2345 = vmatpush1.msra.mxu0 0.0
        %2346 = vmatprep.subr.mxu0 0.0
        %2347 = vmatpush1.msra.mxu0 0.0
        %2348 = vmatprep.subr.mxu0 0.0
        %2349 = vmatpush1.msra.mxu0 0.0
        %2350 = vmatprep.subr.mxu0 0.0
        %2351 = vmatpush1.msra.mxu0 0.0
        %2352 = vmatprep.subr.mxu0 0.0
        %2353 = vmatpush1.msra.mxu0 0.0
        %2354 = vmatprep.subr.mxu0 0.0
        %2355 = vmatpush1.msra.mxu0 0.0
        %2356 = vmatprep.subr.mxu0 0.0
        %2357 = vmatpush1.msra.mxu0 0.0
        %2358 = vmatprep.subr.mxu0 0.0
        %2359 = vmatpush1.msra.mxu0 0.0
        %2360 = vmatprep.subr.mxu0 0.0
        %2361 = vmatpush1.msra.mxu0 0.0
        %2362 = vmatprep.subr.mxu0 0.0
        %2363 = vmatpush1.msra.mxu0 0.0
        %2364 = vmatprep.subr.mxu0 0.0
        %2365 = vmatpush1.msra.mxu0 0.0
        %2366 = vmatprep.subr.mxu0 0.0
        %2367 = vmatpush1.msra.mxu0 0.0
        %2368 = vmatprep.subr.mxu0 0.0
        %2369 = vmatpush1.msra.mxu0 0.0
        %2370 = vmatprep.subr.mxu0 0.0
        %2371 = vmatpush1.msra.mxu0 0.0
        %2372 = vmatprep.subr.mxu0 0.0
        %2373 = vmatpush1.msra.mxu0 0.0
        %2374 = vmatprep.subr.mxu0 0.0
        %2375 = vmatpush1.msra.mxu0 0.0
        %2376 = vmatprep.mubr.f32.mxu0 0.0
        %2377 = vmatmul.mubr.f32.gmra.mrb[0].mxu0 %v2225
        %v2378 = vpop.f32.mrb[0].mxu0
        %v2379 = vadd.f32 0.0, %v2378
        %v2380 = vpop.f32.mrb[0].mxu0
        %2381 = vmatprep.mubr.f32.mxu0 0.0
        %2382 = vmatmul.mubr.f32.gmra.mrb[0].mxu0 %v2227
        %v2383 = vpop.f32.mrb[0].mxu0
        %v2384 = vadd.f32 0.0, %v2383
        %v2385 = vpop.f32.mrb[0].mxu0
        %2386 = vmatprep.mubr.f32.mxu0 0.0
        %2387 = vmatmul.mubr.f32.gmra.mrb[0].mxu0 %v2229
        %v2388 = vpop.f32.mrb[0].mxu0
        %v2389 = vadd.f32 0.0, %v2388
        %v2390 = vpop.f32.mrb[0].mxu0
        %2391 = vmatprep.mubr.f32.mxu0 0.0
        %2392 = vmatmul.mubr.f32.gmra.mrb[0].mxu0 %v2231
        %v2393 = vpop.f32.mrb[0].mxu0
        %v2394 = vadd.f32 0.0, %v2393
        %v2395 = vpop.f32.mrb[0].mxu0
        %2396 = vdwg.mxu0
        %v2397 = vadd.f32 %v2232, %v2379
        %v2398 = vadd.f32 %v2233, %v2384
        %v2399 = vadd.f32 %v2234, %v2389
        %v2400 = vadd.f32 %v2235, %v2394
        %v2401 = vrcp.pop %v2244
        %v2402 = vrcp.pop %v2245
        %v2403 = vrcp.pop %v2246
        %v2404 = vrcp.pop %v2247
        %v2405 = vmul.f32 %v2397, %v2401
        %v2406 = vmul.f32 %v2398, %v2402
        %v2407 = vmul.f32 %v2399, %v2403
        %v2408 = vmul.f32 %v2400, %v2404
        %2413 = vrot.lane.b32.xlu0 %v2405, 96
        %v2414 = vpop.permute.xlu0 %2413
        %2415 = vrot.lane.b32.xlu0 %v2406, 96
        %v2416 = vpop.permute.xlu0 %2415
        %2417 = vrot.lane.b32.xlu0 %v2407, 96
        %v2418 = vpop.permute.xlu0 %2417
        %2419 = vrot.lane.b32.xlu0 %v2408, 96
        %v2420 = vpop.permute.xlu0 %2419
        %vm2425 = vcmask 1048320
        %2426 = vst.msk [vmem:[#allocation4] sm:$0xff] %vm2425, %v2414
        %2427 = vst.msk [vmem:[#allocation4 + $0x8] sm:$0xff] %vm2425, %v2416
        %2428 = vst.msk [vmem:[#allocation4 + $0x10] sm:$0xff] %vm2425, %v2418
        %2429 = vst.msk [vmem:[#allocation4 + $0x18] sm:$0xff] %vm2425, %v2420
        %v2430 = vld [vmem:[#allocation4] sm:$0xff]
        %v2431 = vld [vmem:[#allocation4 + $0x8] sm:$0xff]
        %v2432 = vld [vmem:[#allocation4 + $0x10] sm:$0xff]
        %v2433 = vld [vmem:[#allocation4 + $0x18] sm:$0xff]
        %v2434 = vld [vmem:[#allocation14] sm:$0xff]
        %v2435 = vld [vmem:[#allocation14 + $0x8] sm:$0xff]
        %v2436 = vld [vmem:[#allocation14 + $0x10] sm:$0xff]
        %v2437 = vld [vmem:[#allocation14 + $0x18] sm:$0xff]
        %v2438 = vld [vmem:[#allocation14 + $0x20] sm:$0xff]
        %v2439 = vld [vmem:[#allocation14 + $0x28] sm:$0xff]
        %v2440 = vld [vmem:[#allocation14 + $0x30] sm:$0xff]
        %v2441 = vld [vmem:[#allocation14 + $0x38] sm:$0xff]
        %v2442 = vld [vmem:[#allocation14 + $0x40] sm:$0xff]
        %v2443 = vld [vmem:[#allocation14 + $0x48] sm:$0xff]
        %v2444 = vld [vmem:[#allocation14 + $0x50] sm:$0xff]
        %v2445 = vld [vmem:[#allocation14 + $0x58] sm:$0xff]
        %v2446 = vld [vmem:[#allocation14 + $0x60] sm:$0xff]
        %v2447 = vld [vmem:[#allocation14 + $0x68] sm:$0xff]
        %v2448 = vld [vmem:[#allocation14 + $0x70] sm:$0xff]
        %v2449 = vld [vmem:[#allocation14 + $0x78] sm:$0xff]
        %s2450 = sld [smem:[#allocation5]]
        %v2451 = vld [vmem:[%s9] sm:$0x1]
        %v2453 = vlaneseq
        %v2454 = vshrl.u32 %v2453, 7
        %v2455 = vsub.s32 0, %v2454
        %v2456 = vrot.slane %v2451, %v2455
        %2458 = vmatprep.subr.mxu0 0.0
        %2459 = vmatpush1.msra.mxu0 %v2434
        %2460 = vmatprep.subr.mxu0 0.0
        %2461 = vmatpush1.msra.mxu0 %v2435
        %2462 = vmatprep.subr.mxu0 0.0
        %2463 = vmatpush1.msra.mxu0 %v2436
        %2464 = vmatprep.subr.mxu0 0.0
        %2465 = vmatpush1.msra.mxu0 %v2437
        %2466 = vmatprep.subr.mxu0 0.0
        %2467 = vmatpush1.msra.mxu0 %v2438
        %2468 = vmatprep.subr.mxu0 0.0
        %2469 = vmatpush1.msra.mxu0 %v2439
        %2470 = vmatprep.subr.mxu0 0.0
        %2471 = vmatpush1.msra.mxu0 %v2440
        %2472 = vmatprep.subr.mxu0 0.0
        %2473 = vmatpush1.msra.mxu0 %v2441
        %2474 = vmatprep.subr.mxu0 0.0
        %2475 = vmatpush1.msra.mxu0 %v2442
        %2476 = vmatprep.subr.mxu0 0.0
        %2477 = vmatpush1.msra.mxu0 %v2443
        %2478 = vmatprep.subr.mxu0 0.0
        %2479 = vmatpush1.msra.mxu0 %v2444
        %2480 = vmatprep.subr.mxu0 0.0
        %2481 = vmatpush1.msra.mxu0 %v2445
        %2482 = vmatprep.subr.mxu0 0.0
        %2483 = vmatpush1.msra.mxu0 %v2446
        %2484 = vmatprep.subr.mxu0 0.0
        %2485 = vmatpush1.msra.mxu0 %v2447
        %2486 = vmatprep.subr.mxu0 0.0
        %2487 = vmatpush1.msra.mxu0 %v2448
        %2488 = vmatprep.subr.mxu0 0.0
        %2489 = vmatpush1.msra.mxu0 %v2449
        %2490 = vmatprep.subr.mxu0 0.0
        %2491 = vmatpush1.msra.mxu0 0.0
        %2492 = vmatprep.subr.mxu0 0.0
        %2493 = vmatpush1.msra.mxu0 0.0
        %2494 = vmatprep.subr.mxu0 0.0
        %2495 = vmatpush1.msra.mxu0 0.0
        %2496 = vmatprep.subr.mxu0 0.0
        %2497 = vmatpush1.msra.mxu0 0.0
        %2498 = vmatprep.subr.mxu0 0.0
        %2499 = vmatpush1.msra.mxu0 0.0
        %2500 = vmatprep.subr.mxu0 0.0
        %2501 = vmatpush1.msra.mxu0 0.0
        %2502 = vmatprep.subr.mxu0 0.0
        %2503 = vmatpush1.msra.mxu0 0.0
        %2504 = vmatprep.subr.mxu0 0.0
        %2505 = vmatpush1.msra.mxu0 0.0
        %2506 = vmatprep.subr.mxu0 0.0
        %2507 = vmatpush1.msra.mxu0 0.0
        %2508 = vmatprep.subr.mxu0 0.0
        %2509 = vmatpush1.msra.mxu0 0.0
        %2510 = vmatprep.subr.mxu0 0.0
        %2511 = vmatpush1.msra.mxu0 0.0
        %2512 = vmatprep.subr.mxu0 0.0
        %2513 = vmatpush1.msra.mxu0 0.0
        %2514 = vmatprep.subr.mxu0 0.0
        %2515 = vmatpush1.msra.mxu0 0.0
        %2516 = vmatprep.subr.mxu0 0.0
        %2517 = vmatpush1.msra.mxu0 0.0
        %2518 = vmatprep.subr.mxu0 0.0
        %2519 = vmatpush1.msra.mxu0 0.0
        %2520 = vmatprep.subr.mxu0 0.0
        %2521 = vmatpush1.msra.mxu0 0.0
        %2522 = vmatprep.mubr.f32.mxu0 0.0
        %2523 = vmatmul.mubr.f32.gmra.mrb[0].mxu0 %v2430
        %v2524 = vpop.f32.mrb[0].mxu0
        %v2525 = vadd.f32 %v2456, %v2524
        %v2526 = vpop.f32.mrb[0].mxu0
        %2527 = vmatprep.mubr.f32.mxu0 0.0
        %2528 = vmatmul.mubr.f32.gmra.mrb[0].mxu0 %v2431
        %v2529 = vpop.f32.mrb[0].mxu0
        %v2530 = vadd.f32 %v2456, %v2529
        %v2531 = vpop.f32.mrb[0].mxu0
        %2532 = vmatprep.mubr.f32.mxu0 0.0
        %2533 = vmatmul.mubr.f32.gmra.mrb[0].mxu0 %v2432
        %v2534 = vpop.f32.mrb[0].mxu0
        %v2535 = vadd.f32 %v2456, %v2534
        %v2536 = vpop.f32.mrb[0].mxu0
        %2537 = vmatprep.mubr.f32.mxu0 0.0
        %2538 = vmatmul.mubr.f32.gmra.mrb[0].mxu0 %v2433
        %v2539 = vpop.f32.mrb[0].mxu0
        %v2540 = vadd.f32 %v2456, %v2539
        %v2541 = vpop.f32.mrb[0].mxu0
        %2542 = vdwg.mxu0
        %v2543 = vstv %s2450
        %v2544 = vmul.f32 %v2543, %v2525
        %v2545 = vmul.f32 %v2543, %v2530
        %v2546 = vmul.f32 %v2543, %v2535
        %v2547 = vmul.f32 %v2543, %v2540
        %v2548 = vadd.f32 %v994, %v2544
        %v2549 = vadd.f32 %v995, %v2545
        %v2550 = vadd.f32 %v996, %v2546
        %v2551 = vadd.f32 %v997, %v2547
        %v2552 = vld [vmem:[#allocation15] sm:$0xff]
        %v2553 = vld [vmem:[#allocation15 + $0x8] sm:$0xff]
        %v2554 = vld [vmem:[#allocation15 + $0x10] sm:$0xff]
        %v2555 = vld [vmem:[#allocation15 + $0x18] sm:$0xff]
        %v2556 = vld [vmem:[#allocation15 + $0x20] sm:$0xff]
        %v2557 = vld [vmem:[#allocation15 + $0x28] sm:$0xff]
        %v2558 = vld [vmem:[#allocation15 + $0x30] sm:$0xff]
        %v2559 = vld [vmem:[#allocation15 + $0x38] sm:$0xff]
        %v2560 = vld [vmem:[#allocation15 + $0x40] sm:$0xff]
        %v2561 = vld [vmem:[#allocation15 + $0x48] sm:$0xff]
        %v2562 = vld [vmem:[#allocation15 + $0x50] sm:$0xff]
        %v2563 = vld [vmem:[#allocation15 + $0x58] sm:$0xff]
        %v2564 = vld [vmem:[#allocation15 + $0x60] sm:$0xff]
        %v2565 = vld [vmem:[#allocation15 + $0x68] sm:$0xff]
        %v2566 = vld [vmem:[#allocation15 + $0x70] sm:$0xff]
        %v2567 = vld [vmem:[#allocation15 + $0x78] sm:$0xff]
        %v2568 = vld [vmem:[#allocation15 + $0x80] sm:$0xff]
        %v2569 = vld [vmem:[#allocation15 + $0x88] sm:$0xff]
        %v2570 = vld [vmem:[#allocation15 + $0x90] sm:$0xff]
        %v2571 = vld [vmem:[#allocation15 + $0x98] sm:$0xff]
        %v2572 = vld [vmem:[#allocation15 + $0xa0] sm:$0xff]
        %v2573 = vld [vmem:[#allocation15 + $0xa8] sm:$0xff]
        %v2574 = vld [vmem:[#allocation15 + $0xb0] sm:$0xff]
        %v2575 = vld [vmem:[#allocation15 + $0xb8] sm:$0xff]
        %v2576 = vld [vmem:[#allocation15 + $0xc0] sm:$0xff]
        %v2577 = vld [vmem:[#allocation15 + $0xc8] sm:$0xff]
        %v2578 = vld [vmem:[#allocation15 + $0xd0] sm:$0xff]
        %v2579 = vld [vmem:[#allocation15 + $0xd8] sm:$0xff]
        %v2580 = vld [vmem:[#allocation15 + $0xe0] sm:$0xff]
        %v2581 = vld [vmem:[#allocation15 + $0xe8] sm:$0xff]
        %v2582 = vld [vmem:[#allocation15 + $0xf0] sm:$0xff]
        %v2583 = vld [vmem:[#allocation15 + $0xf8] sm:$0xff]
        %v2584 = vld [vmem:[%s11] sm:$0x3]
        %v2586 = vlaneseq
        %v2587 = vshrl.u32 %v2586, 7
        %v2588 = vsub.s32 0, %v2587
        %v2589 = vrot.slane %v2584, %v2588
        %v2590 = vlaneseq
        %v2591 = vshrl.u32 %v2590, 7
        %v2592 = vsub.s32 1, %v2591
        %v2593 = vrot.slane %v2584, %v2592
        %2596 = vmatprep.subr.mxu0 %v2553
        %2597 = vmatpush1.msra.mxu0 %v2552
        %2598 = vmatprep.subr.mxu0 %v2555
        %2599 = vmatpush1.msra.mxu0 %v2554
        %2600 = vmatprep.subr.mxu0 %v2557
        %2601 = vmatpush1.msra.mxu0 %v2556
        %2602 = vmatprep.subr.mxu0 %v2559
        %2603 = vmatpush1.msra.mxu0 %v2558
        %2604 = vmatprep.subr.mxu0 %v2561
        %2605 = vmatpush1.msra.mxu0 %v2560
        %2606 = vmatprep.subr.mxu0 %v2563
        %2607 = vmatpush1.msra.mxu0 %v2562
        %2608 = vmatprep.subr.mxu0 %v2565
        %2609 = vmatpush1.msra.mxu0 %v2564
        %2610 = vmatprep.subr.mxu0 %v2567
        %2611 = vmatpush1.msra.mxu0 %v2566
        %2612 = vmatprep.subr.mxu0 %v2569
        %2613 = vmatpush1.msra.mxu0 %v2568
        %2614 = vmatprep.subr.mxu0 %v2571
        %2615 = vmatpush1.msra.mxu0 %v2570
        %2616 = vmatprep.subr.mxu0 %v2573
        %2617 = vmatpush1.msra.mxu0 %v2572
        %2618 = vmatprep.subr.mxu0 %v2575
        %2619 = vmatpush1.msra.mxu0 %v2574
        %2620 = vmatprep.subr.mxu0 %v2577
        %2621 = vmatpush1.msra.mxu0 %v2576
        %2622 = vmatprep.subr.mxu0 %v2579
        %2623 = vmatpush1.msra.mxu0 %v2578
        %2624 = vmatprep.subr.mxu0 %v2581
        %2625 = vmatpush1.msra.mxu0 %v2580
        %2626 = vmatprep.subr.mxu0 %v2583
        %2627 = vmatpush1.msra.mxu0 %v2582
        %2628 = vmatprep.subr.mxu0 0.0
        %2629 = vmatpush1.msra.mxu0 0.0
        %2630 = vmatprep.subr.mxu0 0.0
        %2631 = vmatpush1.msra.mxu0 0.0
        %2632 = vmatprep.subr.mxu0 0.0
        %2633 = vmatpush1.msra.mxu0 0.0
        %2634 = vmatprep.subr.mxu0 0.0
        %2635 = vmatpush1.msra.mxu0 0.0
        %2636 = vmatprep.subr.mxu0 0.0
        %2637 = vmatpush1.msra.mxu0 0.0
        %2638 = vmatprep.subr.mxu0 0.0
        %2639 = vmatpush1.msra.mxu0 0.0
        %2640 = vmatprep.subr.mxu0 0.0
        %2641 = vmatpush1.msra.mxu0 0.0
        %2642 = vmatprep.subr.mxu0 0.0
        %2643 = vmatpush1.msra.mxu0 0.0
        %2644 = vmatprep.subr.mxu0 0.0
        %2645 = vmatpush1.msra.mxu0 0.0
        %2646 = vmatprep.subr.mxu0 0.0
        %2647 = vmatpush1.msra.mxu0 0.0
        %2648 = vmatprep.subr.mxu0 0.0
        %2649 = vmatpush1.msra.mxu0 0.0
        %2650 = vmatprep.subr.mxu0 0.0
        %2651 = vmatpush1.msra.mxu0 0.0
        %2652 = vmatprep.subr.mxu0 0.0
        %2653 = vmatpush1.msra.mxu0 0.0
        %2654 = vmatprep.subr.mxu0 0.0
        %2655 = vmatpush1.msra.mxu0 0.0
        %2656 = vmatprep.subr.mxu0 0.0
        %2657 = vmatpush1.msra.mxu0 0.0
        %2658 = vmatprep.subr.mxu0 0.0
        %2659 = vmatpush1.msra.mxu0 0.0
        %2660 = vmatprep.mubr.f32.mxu0 0.0
        %2661 = vmatmul.mubr.f32.gmra.mrb[0].mxu0 %v2548
        %v2662 = vpop.f32.mrb[0].mxu0
        %v2663 = vadd.f32 %v2589, %v2662
        %v2664 = vpop.f32.mrb[0].mxu0
        %v2665 = vadd.f32 %v2593, %v2664
        %2666 = vmatprep.mubr.f32.mxu0 0.0
        %2667 = vmatmul.mubr.f32.gmra.mrb[0].mxu0 %v2549
        %v2668 = vpop.f32.mrb[0].mxu0
        %v2669 = vadd.f32 %v2589, %v2668
        %v2670 = vpop.f32.mrb[0].mxu0
        %v2671 = vadd.f32 %v2593, %v2670
        %2672 = vmatprep.mubr.f32.mxu0 0.0
        %2673 = vmatmul.mubr.f32.gmra.mrb[0].mxu0 %v2550
        %v2674 = vpop.f32.mrb[0].mxu0
        %v2675 = vadd.f32 %v2589, %v2674
        %v2676 = vpop.f32.mrb[0].mxu0
        %v2677 = vadd.f32 %v2593, %v2676
        %2678 = vmatprep.mubr.f32.mxu0 0.0
        %2679 = vmatmul.mubr.f32.gmra.mrb[0].mxu0 %v2551
        %v2680 = vpop.f32.mrb[0].mxu0
        %v2681 = vadd.f32 %v2589, %v2680
        %v2682 = vpop.f32.mrb[0].mxu0
        %v2683 = vadd.f32 %v2593, %v2682
        %2684 = vdwg.mxu0
        %v2685 = vmax.f32 %v2663, 0.0
        %v2686 = vmax.f32 %v2665, 0.0
        %v2687 = vmax.f32 %v2669, 0.0
        %v2688 = vmax.f32 %v2671, 0.0
        %v2689 = vmax.f32 %v2675, 0.0
        %v2690 = vmax.f32 %v2677, 0.0
        %v2691 = vmax.f32 %v2681, 0.0
        %v2692 = vmax.f32 %v2683, 0.0
        %v2693 = vld [vmem:[#allocation17] sm:$0xff]
        %v2694 = vld [vmem:[#allocation17 + $0x8] sm:$0xff]
        %v2695 = vld [vmem:[#allocation17 + $0x10] sm:$0xff]
        %v2696 = vld [vmem:[#allocation17 + $0x18] sm:$0xff]
        %v2697 = vld [vmem:[#allocation17 + $0x20] sm:$0xff]
        %v2698 = vld [vmem:[#allocation17 + $0x28] sm:$0xff]
        %v2699 = vld [vmem:[#allocation17 + $0x30] sm:$0xff]
        %v2700 = vld [vmem:[#allocation17 + $0x38] sm:$0xff]
        %v2701 = vld [vmem:[#allocation17 + $0x40] sm:$0xff]
        %v2702 = vld [vmem:[#allocation17 + $0x48] sm:$0xff]
        %v2703 = vld [vmem:[#allocation17 + $0x50] sm:$0xff]
        %v2704 = vld [vmem:[#allocation17 + $0x58] sm:$0xff]
        %v2705 = vld [vmem:[#allocation17 + $0x60] sm:$0xff]
        %v2706 = vld [vmem:[#allocation17 + $0x68] sm:$0xff]
        %v2707 = vld [vmem:[#allocation17 + $0x70] sm:$0xff]
        %v2708 = vld [vmem:[#allocation17 + $0x78] sm:$0xff]
        %v2709 = vld [vmem:[#allocation17 + $0x80] sm:$0xff]
        %v2710 = vld [vmem:[#allocation17 + $0x88] sm:$0xff]
        %v2711 = vld [vmem:[#allocation17 + $0x90] sm:$0xff]
        %v2712 = vld [vmem:[#allocation17 + $0x98] sm:$0xff]
        %v2713 = vld [vmem:[#allocation17 + $0xa0] sm:$0xff]
        %v2714 = vld [vmem:[#allocation17 + $0xa8] sm:$0xff]
        %v2715 = vld [vmem:[#allocation17 + $0xb0] sm:$0xff]
        %v2716 = vld [vmem:[#allocation17 + $0xb8] sm:$0xff]
        %v2717 = vld [vmem:[#allocation17 + $0xc0] sm:$0xff]
        %v2718 = vld [vmem:[#allocation17 + $0xc8] sm:$0xff]
        %v2719 = vld [vmem:[#allocation17 + $0xd0] sm:$0xff]
        %v2720 = vld [vmem:[#allocation17 + $0xd8] sm:$0xff]
        %v2721 = vld [vmem:[#allocation17 + $0xe0] sm:$0xff]
        %v2722 = vld [vmem:[#allocation17 + $0xe8] sm:$0xff]
        %v2723 = vld [vmem:[#allocation17 + $0xf0] sm:$0xff]
        %v2724 = vld [vmem:[#allocation17 + $0xf8] sm:$0xff]
        %v2725 = vld [vmem:[%s13] sm:$0x1]
        %v2727 = vlaneseq
        %v2728 = vshrl.u32 %v2727, 7
        %v2729 = vsub.s32 0, %v2728
        %v2730 = vrot.slane %v2725, %v2729
        %2732 = vmatprep.subr.mxu0 0.0
        %2733 = vmatpush1.msra.mxu0 %v2693
        %2734 = vmatprep.subr.mxu0 0.0
        %2735 = vmatpush1.msra.mxu0 %v2694
        %2736 = vmatprep.subr.mxu0 0.0
        %2737 = vmatpush1.msra.mxu0 %v2695
        %2738 = vmatprep.subr.mxu0 0.0
        %2739 = vmatpush1.msra.mxu0 %v2696
        %2740 = vmatprep.subr.mxu0 0.0
        %2741 = vmatpush1.msra.mxu0 %v2697
        %2742 = vmatprep.subr.mxu0 0.0
        %2743 = vmatpush1.msra.mxu0 %v2698
        %2744 = vmatprep.subr.mxu0 0.0
        %2745 = vmatpush1.msra.mxu0 %v2699
        %2746 = vmatprep.subr.mxu0 0.0
        %2747 = vmatpush1.msra.mxu0 %v2700
        %2748 = vmatprep.subr.mxu0 0.0
        %2749 = vmatpush1.msra.mxu0 %v2701
        %2750 = vmatprep.subr.mxu0 0.0
        %2751 = vmatpush1.msra.mxu0 %v2702
        %2752 = vmatprep.subr.mxu0 0.0
        %2753 = vmatpush1.msra.mxu0 %v2703
        %2754 = vmatprep.subr.mxu0 0.0
        %2755 = vmatpush1.msra.mxu0 %v2704
        %2756 = vmatprep.subr.mxu0 0.0
        %2757 = vmatpush1.msra.mxu0 %v2705
        %2758 = vmatprep.subr.mxu0 0.0
        %2759 = vmatpush1.msra.mxu0 %v2706
        %2760 = vmatprep.subr.mxu0 0.0
        %2761 = vmatpush1.msra.mxu0 %v2707
        %2762 = vmatprep.subr.mxu0 0.0
        %2763 = vmatpush1.msra.mxu0 %v2708
        %2764 = vmatprep.subr.mxu0 0.0
        %2765 = vmatpush1.msra.mxu0 %v2709
        %2766 = vmatprep.subr.mxu0 0.0
        %2767 = vmatpush1.msra.mxu0 %v2710
        %2768 = vmatprep.subr.mxu0 0.0
        %2769 = vmatpush1.msra.mxu0 %v2711
        %2770 = vmatprep.subr.mxu0 0.0
        %2771 = vmatpush1.msra.mxu0 %v2712
        %2772 = vmatprep.subr.mxu0 0.0
        %2773 = vmatpush1.msra.mxu0 %v2713
        %2774 = vmatprep.subr.mxu0 0.0
        %2775 = vmatpush1.msra.mxu0 %v2714
        %2776 = vmatprep.subr.mxu0 0.0
        %2777 = vmatpush1.msra.mxu0 %v2715
        %2778 = vmatprep.subr.mxu0 0.0
        %2779 = vmatpush1.msra.mxu0 %v2716
        %2780 = vmatprep.subr.mxu0 0.0
        %2781 = vmatpush1.msra.mxu0 %v2717
        %2782 = vmatprep.subr.mxu0 0.0
        %2783 = vmatpush1.msra.mxu0 %v2718
        %2784 = vmatprep.subr.mxu0 0.0
        %2785 = vmatpush1.msra.mxu0 %v2719
        %2786 = vmatprep.subr.mxu0 0.0
        %2787 = vmatpush1.msra.mxu0 %v2720
        %2788 = vmatprep.subr.mxu0 0.0
        %2789 = vmatpush1.msra.mxu0 %v2721
        %2790 = vmatprep.subr.mxu0 0.0
        %2791 = vmatpush1.msra.mxu0 %v2722
        %2792 = vmatprep.subr.mxu0 0.0
        %2793 = vmatpush1.msra.mxu0 %v2723
        %2794 = vmatprep.subr.mxu0 0.0
        %2795 = vmatpush1.msra.mxu0 %v2724
        %2796 = vmatprep.mubr.f32.mxu0 %v2686
        %2797 = vmatmul.mubr.f32.gmra.mrb[0].mxu0 %v2685
        %v2798 = vpop.f32.mrb[0].mxu0
        %v2799 = vadd.f32 %v2730, %v2798
        %v2800 = vpop.f32.mrb[0].mxu0
        %2801 = vmatprep.mubr.f32.mxu0 %v2688
        %2802 = vmatmul.mubr.f32.gmra.mrb[0].mxu0 %v2687
        %v2803 = vpop.f32.mrb[0].mxu0
        %v2804 = vadd.f32 %v2730, %v2803
        %v2805 = vpop.f32.mrb[0].mxu0
        %2806 = vmatprep.mubr.f32.mxu0 %v2690
        %2807 = vmatmul.mubr.f32.gmra.mrb[0].mxu0 %v2689
        %v2808 = vpop.f32.mrb[0].mxu0
        %v2809 = vadd.f32 %v2730, %v2808
        %v2810 = vpop.f32.mrb[0].mxu0
        %2811 = vmatprep.mubr.f32.mxu0 %v2692
        %2812 = vmatmul.mubr.f32.gmra.mrb[0].mxu0 %v2691
        %v2813 = vpop.f32.mrb[0].mxu0
        %v2814 = vadd.f32 %v2730, %v2813
        %v2815 = vpop.f32.mrb[0].mxu0
        %2816 = vdwg.mxu0
        %v2817 = vmul.f32 %v2543, %v2799
        %v2818 = vmul.f32 %v2543, %v2804
        %v2819 = vmul.f32 %v2543, %v2809
        %v2820 = vmul.f32 %v2543, %v2814
        %v2821 = vadd.f32 %v2548, %v2817
        %v2822 = vadd.f32 %v2549, %v2818
        %v2823 = vadd.f32 %v2550, %v2819
        %v2824 = vadd.f32 %v2551, %v2820
        %2825 = vst [vmem:[%s570] sm:$0xff] %v2821
        %2826 = vst [vmem:[%s570 + $0x8] sm:$0xff] %v2822
        %2827 = vst [vmem:[%s570 + $0x10] sm:$0xff] %v2823
        %2828 = vst [vmem:[%s570 + $0x18] sm:$0xff] %v2824
        %s2829 = sand.u32 %s354, 1
        %s2830 = scalar_lea.sflag [#allocation8], %s2829
        %s2831 = sand.u32 %s354, 1
        %s2832 = smul.addr %s2831, 32
        %s2833 = scalar_lea.vmem [#allocation18], %s2832
        // Predicated region
        $region109: #{tpu_custom_call.1} parent=75 // pred_check
          %p2834 = pneg %p364
        $region110: #{tpu_custom_call.1} parent=75 // pred_check_branch
          %2836 = sbr.rel (%p2834) target = $region112
        $region111: #{tpu_custom_call.1} parent=75 // pred_region
          %s2837 = smul.u32 4, %s38
          %s2839 = ssub.s32 512, 512
          %2840 = vsyncadd %s2830, %s2839
          %s2841 = smul.addr %s37, 16
          %s2842 = sadd.s32 %s2837, %s2841
          %s2843 = smul.addr %s2842, 128
          %s2844 = scalar_lea.hbm %s14, %s2843
          %s2845 = sshll.u32 %s2833, 4
          %s2846 = int_to_ptr.vmem [resolvable:$true] %s2845
          %2851 = dma.vmem_to_hbm [thread:$0]  %s2846, 512, %s2844, %s2830, 128, 128, 8
        $region112: #{tpu_custom_call.1} parent=75 // pred_fallthru
          _
      $region76: #{tpu_custom_call.1} parent=5 // pred_fallthru
        _
      %p2852 = scmp.le.s32.totalorder 2, %s28
      // Predicated region
      $region113: #{tpu_custom_call.1} parent=5 // pred_check
        %p2853 = pneg %p2852
      $region114: #{tpu_custom_call.1} parent=5 // pred_check_branch
        %2855 = sbr.rel (%p2853) target = $region116
      $region115: #{tpu_custom_call.1} parent=5 // pred_region
        %s2856 = ssub.s32 %s28, 2
        // Predicated region
        $region117: #{tpu_custom_call.1} parent=115 // pred_check
          %p2857 = pneg %p370
        $region118: #{tpu_custom_call.1} parent=115 // pred_check_branch
          %2859 = sbr.rel (%p2857) target = $region120
        $region119: #{tpu_custom_call.1} parent=115 // pred_region
          %s2860 = sand.u32 %s355, 1
          %s2861 = scalar_lea.sflag [#allocation8], %s2860
          %s2862 = sand.u32 %s355, 1
          %s2863 = smul.addr %s2862, 32
          %s2864 = scalar_lea.vmem [#allocation18], %s2863
          %2865 = dma.done %s2861, 512
        $region120: #{tpu_custom_call.1} parent=115 // pred_fallthru
          _
      $region116: #{tpu_custom_call.1} parent=5 // pred_fallthru
        _
    $region6: #{tpu_custom_call.1} parent=1 // loop_footer
      %s32 = sadd.s32 1, %s28
    $region7: #{tpu_custom_call.1} parent=1 // loop_footer_branch
      %27 = sbr.rel target = $region3
    $region8: #{tpu_custom_call.1} parent=1 // loop_exit
      _
    %2866 = vsyncpa [#allocation7], 1
    %s2867 = scalar_lea.sflag [#allocation7], 1
    %2868 = vsyncpa %s2867, 1
    %2869 = vsyncpa [#allocation10], 1
    %2870 = vsyncpa [#allocation13], 1
    %2871 = vsyncpa [#allocation16], 1
    %2872 = vsyncpa [#allocation8], 1
    %s2873 = scalar_lea.sflag [#allocation8], 1
    %2874 = vsyncpa %s2873, 1

// kernel: tpu_custom_call.1
$region0: #{tpu_custom_call.1}
  #allocation0 [shape = 'u32[]', space=smem, size = 0x4, offset = 0x4, fixed_abs, tag = 'smem constant byte address 0x4 - core index']
  #allocation1 [shape = 'u32[144,128]{1,0:T(1,128)}', space=vmem, size = 0x12000, scoped, tag = 'internal scratch']
  #allocation2 [shape = 'f32[128,128]{1,0:T(8,128)}', space=vmem, size = 0x10000, scoped, tag = 'scratch operand']
  #allocation3 [shape = 'f32[128,128]{1,0:T(8,128)}', space=vmem, size = 0x10000, scoped, tag = 'scratch operand']
  #allocation4 [shape = 'f32[32,128]{1,0:T(8,128)}', space=vmem, size = 0x4000, scoped, tag = 'scratch operand']
  #allocation5 [shape = 'f32[1]{0:T(128)S(6)}', space=smem, size = 0x200, scoped, tag = 'scoped memory for tpu_custom_call.1']
  %s0 = inlined_call_operand.<no memory space> [shape: f32[1], index: 0, kind: input, shape index: {}]
  %s1 = inlined_call_operand.hbm [shape: f32[2,128,128], index: 1, kind: input, shape index: {}]
  %s2 = inlined_call_operand.hbm [shape: f32[128,128], index: 2, kind: input, shape index: {}]
  %s3 = inlined_call_operand.vmem [shape: f32[1,128], index: 3, kind: input, shape index: {}]
  %s4 = inlined_call_operand.hbm [shape: f32[128,128], index: 4, kind: input, shape index: {}]
  %s5 = inlined_call_operand.vmem [shape: f32[1,128], index: 5, kind: input, shape index: {}]
  %s6 = inlined_call_operand.hbm [shape: f32[128,128], index: 6, kind: input, shape index: {}]
  %s7 = inlined_call_operand.vmem [shape: f32[1,128], index: 7, kind: input, shape index: {}]
  %s8 = inlined_call_operand.hbm [shape: f32[128,128], index: 8, kind: input, shape index: {}]
  %s9 = inlined_call_operand.vmem [shape: f32[1,128], index: 9, kind: input, shape index: {}]
  %s10 = inlined_call_operand.hbm [shape: f32[128,256], index: 10, kind: input, shape index: {}]
  %s11 = inlined_call_operand.vmem [shape: f32[1,256], index: 11, kind: input, shape index: {}]
  %s12 = inlined_call_operand.hbm [shape: f32[256,128], index: 12, kind: input, shape index: {}]
  %s13 = inlined_call_operand.vmem [shape: f32[1,128], index: 13, kind: input, shape index: {}]
  %s14 = inlined_call_operand.hbm [shape: f32[2,128,128], index: 14, kind: output, shape index: {}]
  %s15 = sld [smem:[#allocation0]]
  $region121: #{tpu_custom_call.1} parent=0
    _
  %s17 = ssub.s32 1, %s15
  %s18 = scalar_select 0, %s17, %s15
  %19 = sst [smem:[#allocation5]] %s0
  $region1: #{tpu_custom_call.1} parent=0
    #allocation6 [shape = 'u8[131072]{0}', space=vmem, size = 0x20000, scoped, tag = 'input window, operand 1']
    #allocation7 [shape = 's32[2]{0}', space=sflag, size = 0x8, scoped, tag = 'scoped memory for tpu_custom_call.1']
    #allocation8 [shape = 's32[2]{0}', space=sflag, size = 0x8, scoped, tag = 'scoped memory for tpu_custom_call.1']
    #allocation9 [shape = 'u8[65536]{0}', space=vmem, size = 0x10000, scoped, tag = 'input window, operand 2, single buffered']
    #allocation10 [shape = 's32[1]{0}', space=sflag, size = 0x4, scoped, tag = 'scoped memory for tpu_custom_call.1']
    #allocation11 [shape = 'u8[65536]{0}', space=vmem, size = 0x10000, scoped, tag = 'input window, operand 4, single buffered']
    #allocation12 [shape = 'u8[65536]{0}', space=vmem, size = 0x10000, scoped, tag = 'input window, operand 6, single buffered']
    #allocation13 [shape = 's32[1]{0}', space=sflag, size = 0x4, scoped, tag = 'scoped memory for tpu_custom_call.1']
    #allocation14 [shape = 'u8[65536]{0}', space=vmem, size = 0x10000, scoped, tag = 'input window, operand 8, single buffered']
    #allocation15 [shape = 'u8[131072]{0}', space=vmem, size = 0x20000, scoped, tag = 'input window, operand 10, single buffered']
    #allocation16 [shape = 's32[1]{0}', space=sflag, size = 0x4, scoped, tag = 'scoped memory for tpu_custom_call.1']
    #allocation17 [shape = 'u8[131072]{0}', space=vmem, size = 0x20000, scoped, tag = 'input window, operand 12, single buffered']
    #allocation18 [shape = 'u8[32768]{0}', space=vmem, size = 0x8000, scoped, tag = 'output window, operand 0']
    %20 = vsyncpa [#allocation7], 0
    %s21 = scalar_lea.sflag [#allocation7], 1
    %22 = vsyncpa %s21, 0
    %23 = vsyncpa [#allocation10], 0
    %24 = vsyncpa [#allocation13], 0
    %25 = vsyncpa [#allocation16], 0
    %26 = vsyncpa [#allocation8], 0
    %s27 = scalar_lea.sflag [#allocation8], 1
    %28 = vsyncpa %s27, 0
    loop: start=0, step=1, limit=10
    $region2: #{tpu_custom_call.1} parent=1 // loop_pre_header
      _
    $region3: #{tpu_custom_call.1} parent=1 // loop_header
      %s30 = sphi 0, %s34
      %p31 = scmp.ge.s32.totalorder %s30, 10
      %s37 = sphi 0, %s49
      %s38 = sphi 0, %s45
      %s39 = sphi 0, %s37
      %s40 = sphi 0, %s38
      %s41 = sphi 0, %s39
      %s42 = sphi 0, %s40
      %s50 = sphi 0, %s50
      %s52 = sphi 0, %s50
      %s53 = sphi 0, %s52
      %s67 = sphi 0, %s53
      %s73 = sphi 0, %s75
      %s76 = sphi 0, %s73
      %s77 = sphi 0, %s76
      %s93 = sphi 0, %s77
      %s97 = sphi 0, %s97
      %s99 = sphi 0, %s97
      %s100 = sphi 0, %s99
      %s114 = sphi 0, %s100
      %s118 = sphi 0, %s118
      %s120 = sphi 0, %s118
      %s121 = sphi 0, %s120
      %s135 = sphi 0, %s121
      %s139 = sphi 0, %s139
      %s141 = sphi 0, %s139
      %s142 = sphi 0, %s141
      %s156 = sphi 0, %s142
      %s160 = sphi 0, %s160
      %s162 = sphi 0, %s160
      %s163 = sphi 0, %s162
      %s177 = sphi 0, %s163
      %s181 = sphi 0, %s181
      %s183 = sphi 0, %s181
      %s184 = sphi 0, %s183
      %s198 = sphi 0, %s184
      %s202 = sphi 0, %s202
      %s204 = sphi 0, %s202
      %s205 = sphi 0, %s204
      %s219 = sphi 0, %s205
      %s223 = sphi 0, %s223
      %s225 = sphi 0, %s223
      %s226 = sphi 0, %s225
      %s240 = sphi 0, %s226
      %s244 = sphi 0, %s244
      %s246 = sphi 0, %s244
      %s247 = sphi 0, %s246
      %s261 = sphi 0, %s247
      %s265 = sphi 0, %s265
      %s267 = sphi 0, %s265
      %s268 = sphi 0, %s267
      %s282 = sphi 0, %s268
      %s286 = sphi 0, %s286
      %s288 = sphi 0, %s286
      %s289 = sphi 0, %s288
      %s303 = sphi 0, %s289
      %s307 = sphi 0, %s307
      %s309 = sphi 0, %s307
      %s310 = sphi 0, %s309
      %s324 = sphi 0, %s310
      %s328 = sphi 0, %s328
      %s330 = sphi 0, %s328
      %s331 = sphi 0, %s330
      %s345 = sphi 0, %s331
      %s353 = sphi 0, %s355
      %s356 = sphi 0, %s353
      %s357 = sphi 0, %s356
      %s373 = sphi 0, %s357
    $region4: #{tpu_custom_call.1} parent=1 // loop_header_branch
      %33 = sbr.rel (%p31) target = $region8
    $region5: #{tpu_custom_call.1} parent=1 // loop_body
      %s35 = ssub.s32 %s30, 1
      %s36 = ssub.s32 %s30, 2
      %s43 = sadd.s32 1, %s38
      %p44 = scmp.ge.s32.totalorder %s43, 4
      %s45 = scalar_select %p44, 0, %s43
      %s46 = sadd.s32 1, %s37
      %s47 = scalar_select %p44, %s46, %s37
      %p48 = scmp.ge.s32.totalorder %s47, 2
      %s49 = scalar_select %p48, 0, %s47
      %s51 = sadd.s32 %s50, 1
      %p54 = scmp.eq.s32.totalorder %s30, 7
      %p55 = scmp.ne.s32.totalorder %s50, %s52
      %p56 = scmp.eq.s32.totalorder %s30, 0
      %p57 = por %p55, %p56
      %p58 = scmp.ne.s32.totalorder %s50, %s52
      %p59 = scmp.eq.s32.totalorder %s35, 7
      %p60 = por %p58, %p59
      %p61 = scmp.ne.s32.totalorder %s52, %s53
      %p62 = scmp.eq.s32.totalorder %s35, 0
      %p63 = por %p61, %p62
      %p64 = scmp.ne.s32.totalorder %s52, %s53
      %p65 = scmp.eq.s32.totalorder %s36, 7
      %p66 = por %p64, %p65
      %p68 = scmp.ne.s32.totalorder %s53, %s67
      %p69 = scmp.eq.s32.totalorder %s36, 0
      %p70 = por %p68, %p69
      %s71 = ssub.s32 %s37, %s49
      %p72 = scmp.eq.s32.totalorder %s71, 0
      %s74 = sadd.s32 %s73, 1
      %s75 = scalar_select %p72, %s73, %s74
      %p78 = pneg %p72
      %p79 = scmp.eq.s32.totalorder %s30, 7
      %p80 = por %p78, %p79
      %p81 = scmp.ne.s32.totalorder %s73, %s76
      %p82 = scmp.eq.s32.totalorder %s30, 0
      %p83 = por %p81, %p82
      %p84 = scmp.ne.s32.totalorder %s73, %s76
      %p85 = scmp.eq.s32.totalorder %s35, 7
      %p86 = por %p84, %p85
      %p87 = scmp.ne.s32.totalorder %s76, %s77
      %p88 = scmp.eq.s32.totalorder %s35, 0
      %p89 = por %p87, %p88
      %p90 = scmp.ne.s32.totalorder %s76, %s77
      %p91 = scmp.eq.s32.totalorder %s36, 7
      %p92 = por %p90, %p91
      %p94 = scmp.ne.s32.totalorder %s77, %s93
      %p95 = scmp.eq.s32.totalorder %s36, 0
      %p96 = por %p94, %p95
      %s98 = sadd.s32 %s97, 1
      %p101 = scmp.eq.s32.totalorder %s30, 7
      %p102 = scmp.ne.s32.totalorder %s97, %s99
      %p103 = scmp.eq.s32.totalorder %s30, 0
      %p104 = por %p102, %p103
      %p105 = scmp.ne.s32.totalorder %s97, %s99
      %p106 = scmp.eq.s32.totalorder %s35, 7
      %p107 = por %p105, %p106
      %p108 = scmp.ne.s32.totalorder %s99, %s100
      %p109 = scmp.eq.s32.totalorder %s35, 0
      %p110 = por %p108, %p109
      %p111 = scmp.ne.s32.totalorder %s99, %s100
      %p112 = scmp.eq.s32.totalorder %s36, 7
      %p113 = por %p111, %p112
      %p115 = scmp.ne.s32.totalorder %s100, %s114
      %p116 = scmp.eq.s32.totalorder %s36, 0
      %p117 = por %p115, %p116
      %s119 = sadd.s32 %s118, 1
      %p122 = scmp.eq.s32.totalorder %s30, 7
      %p123 = scmp.ne.s32.totalorder %s118, %s120
      %p124 = scmp.eq.s32.totalorder %s30, 0
      %p125 = por %p123, %p124
      %p126 = scmp.ne.s32.totalorder %s118, %s120
      %p127 = scmp.eq.s32.totalorder %s35, 7
      %p128 = por %p126, %p127
      %p129 = scmp.ne.s32.totalorder %s120, %s121
      %p130 = scmp.eq.s32.totalorder %s35, 0
      %p131 = por %p129, %p130
      %p132 = scmp.ne.s32.totalorder %s120, %s121
      %p133 = scmp.eq.s32.totalorder %s36, 7
      %p134 = por %p132, %p133
      %p136 = scmp.ne.s32.totalorder %s121, %s135
      %p137 = scmp.eq.s32.totalorder %s36, 0
      %p138 = por %p136, %p137
      %s140 = sadd.s32 %s139, 1
      %p143 = scmp.eq.s32.totalorder %s30, 7
      %p144 = scmp.ne.s32.totalorder %s139, %s141
      %p145 = scmp.eq.s32.totalorder %s30, 0
      %p146 = por %p144, %p145
      %p147 = scmp.ne.s32.totalorder %s139, %s141
      %p148 = scmp.eq.s32.totalorder %s35, 7
      %p149 = por %p147, %p148
      %p150 = scmp.ne.s32.totalorder %s141, %s142
      %p151 = scmp.eq.s32.totalorder %s35, 0
      %p152 = por %p150, %p151
      %p153 = scmp.ne.s32.totalorder %s141, %s142
      %p154 = scmp.eq.s32.totalorder %s36, 7
      %p155 = por %p153, %p154
      %p157 = scmp.ne.s32.totalorder %s142, %s156
      %p158 = scmp.eq.s32.totalorder %s36, 0
      %p159 = por %p157, %p158
      %s161 = sadd.s32 %s160, 1
      %p164 = scmp.eq.s32.totalorder %s30, 7
      %p165 = scmp.ne.s32.totalorder %s160, %s162
      %p166 = scmp.eq.s32.totalorder %s30, 0
      %p167 = por %p165, %p166
      %p168 = scmp.ne.s32.totalorder %s160, %s162
      %p169 = scmp.eq.s32.totalorder %s35, 7
      %p170 = por %p168, %p169
      %p171 = scmp.ne.s32.totalorder %s162, %s163
      %p172 = scmp.eq.s32.totalorder %s35, 0
      %p173 = por %p171, %p172
      %p174 = scmp.ne.s32.totalorder %s162, %s163
      %p175 = scmp.eq.s32.totalorder %s36, 7
      %p176 = por %p174, %p175
      %p178 = scmp.ne.s32.totalorder %s163, %s177
      %p179 = scmp.eq.s32.totalorder %s36, 0
      %p180 = por %p178, %p179
      %s182 = sadd.s32 %s181, 1
      %p185 = scmp.eq.s32.totalorder %s30, 7
      %p186 = scmp.ne.s32.totalorder %s181, %s183
      %p187 = scmp.eq.s32.totalorder %s30, 0
      %p188 = por %p186, %p187
      %p189 = scmp.ne.s32.totalorder %s181, %s183
      %p190 = scmp.eq.s32.totalorder %s35, 7
      %p191 = por %p189, %p190
      %p192 = scmp.ne.s32.totalorder %s183, %s184
      %p193 = scmp.eq.s32.totalorder %s35, 0
      %p194 = por %p192, %p193
      %p195 = scmp.ne.s32.totalorder %s183, %s184
      %p196 = scmp.eq.s32.totalorder %s36, 7
      %p197 = por %p195, %p196
      %p199 = scmp.ne.s32.totalorder %s184, %s198
      %p200 = scmp.eq.s32.totalorder %s36, 0
      %p201 = por %p199, %p200
      %s203 = sadd.s32 %s202, 1
      %p206 = scmp.eq.s32.totalorder %s30, 7
      %p207 = scmp.ne.s32.totalorder %s202, %s204
      %p208 = scmp.eq.s32.totalorder %s30, 0
      %p209 = por %p207, %p208
      %p210 = scmp.ne.s32.totalorder %s202, %s204
      %p211 = scmp.eq.s32.totalorder %s35, 7
      %p212 = por %p210, %p211
      %p213 = scmp.ne.s32.totalorder %s204, %s205
      %p214 = scmp.eq.s32.totalorder %s35, 0
      %p215 = por %p213, %p214
      %p216 = scmp.ne.s32.totalorder %s204, %s205
      %p217 = scmp.eq.s32.totalorder %s36, 7
      %p218 = por %p216, %p217
      %p220 = scmp.ne.s32.totalorder %s205, %s219
      %p221 = scmp.eq.s32.totalorder %s36, 0
      %p222 = por %p220, %p221
      %s224 = sadd.s32 %s223, 1
      %p227 = scmp.eq.s32.totalorder %s30, 7
      %p228 = scmp.ne.s32.totalorder %s223, %s225
      %p229 = scmp.eq.s32.totalorder %s30, 0
      %p230 = por %p228, %p229
      %p231 = scmp.ne.s32.totalorder %s223, %s225
      %p232 = scmp.eq.s32.totalorder %s35, 7
      %p233 = por %p231, %p232
      %p234 = scmp.ne.s32.totalorder %s225, %s226
      %p235 = scmp.eq.s32.totalorder %s35, 0
      %p236 = por %p234, %p235
      %p237 = scmp.ne.s32.totalorder %s225, %s226
      %p238 = scmp.eq.s32.totalorder %s36, 7
      %p239 = por %p237, %p238
      %p241 = scmp.ne.s32.totalorder %s226, %s240
      %p242 = scmp.eq.s32.totalorder %s36, 0
      %p243 = por %p241, %p242
      %s245 = sadd.s32 %s244, 1
      %p248 = scmp.eq.s32.totalorder %s30, 7
      %p249 = scmp.ne.s32.totalorder %s244, %s246
      %p250 = scmp.eq.s32.totalorder %s30, 0
      %p251 = por %p249, %p250
      %p252 = scmp.ne.s32.totalorder %s244, %s246
      %p253 = scmp.eq.s32.totalorder %s35, 7
      %p254 = por %p252, %p253
      %p255 = scmp.ne.s32.totalorder %s246, %s247
      %p256 = scmp.eq.s32.totalorder %s35, 0
      %p257 = por %p255, %p256
      %p258 = scmp.ne.s32.totalorder %s246, %s247
      %p259 = scmp.eq.s32.totalorder %s36, 7
      %p260 = por %p258, %p259
      %p262 = scmp.ne.s32.totalorder %s247, %s261
      %p263 = scmp.eq.s32.totalorder %s36, 0
      %p264 = por %p262, %p263
      %s266 = sadd.s32 %s265, 1
      %p269 = scmp.eq.s32.totalorder %s30, 7
      %p270 = scmp.ne.s32.totalorder %s265, %s267
      %p271 = scmp.eq.s32.totalorder %s30, 0
      %p272 = por %p270, %p271
      %p273 = scmp.ne.s32.totalorder %s265, %s267
      %p274 = scmp.eq.s32.totalorder %s35, 7
      %p275 = por %p273, %p274
      %p276 = scmp.ne.s32.totalorder %s267, %s268
      %p277 = scmp.eq.s32.totalorder %s35, 0
      %p278 = por %p276, %p277
      %p279 = scmp.ne.s32.totalorder %s267, %s268
      %p280 = scmp.eq.s32.totalorder %s36, 7
      %p281 = por %p279, %p280
      %p283 = scmp.ne.s32.totalorder %s268, %s282
      %p284 = scmp.eq.s32.totalorder %s36, 0
      %p285 = por %p283, %p284
      %s287 = sadd.s32 %s286, 1
      %p290 = scmp.eq.s32.totalorder %s30, 7
      %p291 = scmp.ne.s32.totalorder %s286, %s288
      %p292 = scmp.eq.s32.totalorder %s30, 0
      %p293 = por %p291, %p292
      %p294 = scmp.ne.s32.totalorder %s286, %s288
      %p295 = scmp.eq.s32.totalorder %s35, 7
      %p296 = por %p294, %p295
      %p297 = scmp.ne.s32.totalorder %s288, %s289
      %p298 = scmp.eq.s32.totalorder %s35, 0
      %p299 = por %p297, %p298
      %p300 = scmp.ne.s32.totalorder %s288, %s289
      %p301 = scmp.eq.s32.totalorder %s36, 7
      %p302 = por %p300, %p301
      %p304 = scmp.ne.s32.totalorder %s289, %s303
      %p305 = scmp.eq.s32.totalorder %s36, 0
      %p306 = por %p304, %p305
      %s308 = sadd.s32 %s307, 1
      %p311 = scmp.eq.s32.totalorder %s30, 7
      %p312 = scmp.ne.s32.totalorder %s307, %s309
      %p313 = scmp.eq.s32.totalorder %s30, 0
      %p314 = por %p312, %p313
      %p315 = scmp.ne.s32.totalorder %s307, %s309
      %p316 = scmp.eq.s32.totalorder %s35, 7
      %p317 = por %p315, %p316
      %p318 = scmp.ne.s32.totalorder %s309, %s310
      %p319 = scmp.eq.s32.totalorder %s35, 0
      %p320 = por %p318, %p319
      %p321 = scmp.ne.s32.totalorder %s309, %s310
      %p322 = scmp.eq.s32.totalorder %s36, 7
      %p323 = por %p321, %p322
      %p325 = scmp.ne.s32.totalorder %s310, %s324
      %p326 = scmp.eq.s32.totalorder %s36, 0
      %p327 = por %p325, %p326
      %s329 = sadd.s32 %s328, 1
      %p332 = scmp.eq.s32.totalorder %s30, 7
      %p333 = scmp.ne.s32.totalorder %s328, %s330
      %p334 = scmp.eq.s32.totalorder %s30, 0
      %p335 = por %p333, %p334
      %p336 = scmp.ne.s32.totalorder %s328, %s330
      %p337 = scmp.eq.s32.totalorder %s35, 7
      %p338 = por %p336, %p337
      %p339 = scmp.ne.s32.totalorder %s330, %s331
      %p340 = scmp.eq.s32.totalorder %s35, 0
      %p341 = por %p339, %p340
      %p342 = scmp.ne.s32.totalorder %s330, %s331
      %p343 = scmp.eq.s32.totalorder %s36, 7
      %p344 = por %p342, %p343
      %p346 = scmp.ne.s32.totalorder %s331, %s345
      %p347 = scmp.eq.s32.totalorder %s36, 0
      %p348 = por %p346, %p347
      %s349 = ssub.s32 %s37, %s49
      %s350 = ssub.s32 %s38, %s45
      %s351 = sor.u32 %s349, %s350
      %p352 = scmp.eq.s32.totalorder %s351, 0
      %s354 = sadd.s32 %s353, 1
      %s355 = scalar_select %p352, %s353, %s354
      %p358 = pneg %p352
      %p359 = scmp.eq.s32.totalorder %s30, 7
      %p360 = por %p358, %p359
      %p361 = scmp.ne.s32.totalorder %s353, %s356
      %p362 = scmp.eq.s32.totalorder %s30, 0
      %p363 = por %p361, %p362
      %p364 = scmp.ne.s32.totalorder %s353, %s356
      %p365 = scmp.eq.s32.totalorder %s35, 7
      %p366 = por %p364, %p365
      %p367 = scmp.ne.s32.totalorder %s356, %s357
      %p368 = scmp.eq.s32.totalorder %s35, 0
      %p369 = por %p367, %p368
      %p370 = scmp.ne.s32.totalorder %s356, %s357
      %p371 = scmp.eq.s32.totalorder %s36, 7
      %p372 = por %p370, %p371
      %p374 = scmp.ne.s32.totalorder %s357, %s373
      %p375 = scmp.eq.s32.totalorder %s36, 0
      %p376 = por %p374, %p375
      %p377 = scmp.le.s32.totalorder 1, %s30
      %p378 = scmp.lt.s32.totalorder %s30, 9
      %p379 = pnand %p377, %p378
      %p380 = pneg %p379
      // Predicated region
      $region9: #{tpu_custom_call.1} parent=5 // pred_check
        _
      $region10: #{tpu_custom_call.1} parent=5 // pred_check_branch
        %382 = sbr.rel (%p379) target = $region12
      $region11: #{tpu_custom_call.1} parent=5 // pred_region
        %s383 = ssub.s32 %s30, 1
        // Predicated region
        $region13: #{tpu_custom_call.1} parent=11 // pred_check
          %p384 = pneg %p63
        $region14: #{tpu_custom_call.1} parent=11 // pred_check_branch
          %386 = sbr.rel (%p384) target = $region16
        $region15: #{tpu_custom_call.1} parent=11 // pred_region
          _
        $region16: #{tpu_custom_call.1} parent=11 // pred_fallthru
          _
        // Predicated region
        $region17: #{tpu_custom_call.1} parent=11 // pred_check
          %p387 = pneg %p110
        $region18: #{tpu_custom_call.1} parent=11 // pred_check_branch
          %389 = sbr.rel (%p387) target = $region20
        $region19: #{tpu_custom_call.1} parent=11 // pred_region
          %s391 = ssub.s32 2048, 2048
          %392 = vsyncadd [#allocation10], %s391
          %s393 = sshll.u32 [#allocation9], 4
          %s394 = int_to_ptr.vmem [resolvable:$true] %s393
          %399 = dma.hbm_to_vmem [thread:$0]  %s2, 2048, %s394, [#allocation10], 128, 128, 8
        $region20: #{tpu_custom_call.1} parent=11 // pred_fallthru
          _
        // Predicated region
        $region21: #{tpu_custom_call.1} parent=11 // pred_check
          %p400 = pneg %p131
        $region22: #{tpu_custom_call.1} parent=11 // pred_check_branch
          %402 = sbr.rel (%p400) target = $region24
        $region23: #{tpu_custom_call.1} parent=11 // pred_region
          _
        $region24: #{tpu_custom_call.1} parent=11 // pred_fallthru
          _
        // Predicated region
        $region25: #{tpu_custom_call.1} parent=11 // pred_check
          %p403 = pneg %p152
        $region26: #{tpu_custom_call.1} parent=11 // pred_check_branch
          %405 = sbr.rel (%p403) target = $region28
        $region27: #{tpu_custom_call.1} parent=11 // pred_region
          %s407 = ssub.s32 2048, 2048
          %408 = vsyncadd [#allocation10], %s407
          %s409 = sshll.u32 [#allocation11], 4
          %s410 = int_to_ptr.vmem [resolvable:$true] %s409
          %415 = dma.hbm_to_vmem [thread:$0]  %s4, 2048, %s410, [#allocation10], 128, 128, 8
        $region28: #{tpu_custom_call.1} parent=11 // pred_fallthru
          _
        // Predicated region
        $region29: #{tpu_custom_call.1} parent=11 // pred_check
          %p416 = pneg %p173
        $region30: #{tpu_custom_call.1} parent=11 // pred_check_branch
          %418 = sbr.rel (%p416) target = $region32
        $region31: #{tpu_custom_call.1} parent=11 // pred_region
          _
        $region32: #{tpu_custom_call.1} parent=11 // pred_fallthru
          _
        // Predicated region
        $region33: #{tpu_custom_call.1} parent=11 // pred_check
          %p419 = pneg %p194
        $region34: #{tpu_custom_call.1} parent=11 // pred_check_branch
          %421 = sbr.rel (%p419) target = $region36
        $region35: #{tpu_custom_call.1} parent=11 // pred_region
          %s423 = ssub.s32 2048, 2048
          %424 = vsyncadd [#allocation13], %s423
          %s425 = sshll.u32 [#allocation12], 4
          %s426 = int_to_ptr.vmem [resolvable:$true] %s425
          %431 = dma.hbm_to_vmem [thread:$0]  %s6, 2048, %s426, [#allocation13], 128, 128, 8
        $region36: #{tpu_custom_call.1} parent=11 // pred_fallthru
          _
        // Predicated region
        $region37: #{tpu_custom_call.1} parent=11 // pred_check
          %p432 = pneg %p215
        $region38: #{tpu_custom_call.1} parent=11 // pred_check_branch
          %434 = sbr.rel (%p432) target = $region40
        $region39: #{tpu_custom_call.1} parent=11 // pred_region
          _
        $region40: #{tpu_custom_call.1} parent=11 // pred_fallthru
          _
        // Predicated region
        $region41: #{tpu_custom_call.1} parent=11 // pred_check
          %p435 = pneg %p236
        $region42: #{tpu_custom_call.1} parent=11 // pred_check_branch
          %437 = sbr.rel (%p435) target = $region44
        $region43: #{tpu_custom_call.1} parent=11 // pred_region
          %s439 = ssub.s32 2048, 2048
          %440 = vsyncadd [#allocation13], %s439
          %s441 = sshll.u32 [#allocation14], 4
          %s442 = int_to_ptr.vmem [resolvable:$true] %s441
          %447 = dma.hbm_to_vmem [thread:$0]  %s8, 2048, %s442, [#allocation13], 128, 128, 8
        $region44: #{tpu_custom_call.1} parent=11 // pred_fallthru
          _
        // Predicated region
        $region45: #{tpu_custom_call.1} parent=11 // pred_check
          %p448 = pneg %p257
        $region46: #{tpu_custom_call.1} parent=11 // pred_check_branch
          %450 = sbr.rel (%p448) target = $region48
        $region47: #{tpu_custom_call.1} parent=11 // pred_region
          _
        $region48: #{tpu_custom_call.1} parent=11 // pred_fallthru
          _
        // Predicated region
        $region49: #{tpu_custom_call.1} parent=11 // pred_check
          %p451 = pneg %p278
        $region50: #{tpu_custom_call.1} parent=11 // pred_check_branch
          %453 = sbr.rel (%p451) target = $region52
        $region51: #{tpu_custom_call.1} parent=11 // pred_region
          %s455 = ssub.s32 4096, 4096
          %456 = vsyncadd [#allocation16], %s455
          %s457 = sshll.u32 [#allocation15], 4
          %s458 = int_to_ptr.vmem [resolvable:$true] %s457
          %463 = dma.hbm_to_vmem [thread:$0]  %s10, 4096, %s458, [#allocation16], 256, 256, 16
        $region52: #{tpu_custom_call.1} parent=11 // pred_fallthru
          _
        // Predicated region
        $region53: #{tpu_custom_call.1} parent=11 // pred_check
          %p464 = pneg %p299
        $region54: #{tpu_custom_call.1} parent=11 // pred_check_branch
          %466 = sbr.rel (%p464) target = $region56
        $region55: #{tpu_custom_call.1} parent=11 // pred_region
          _
        $region56: #{tpu_custom_call.1} parent=11 // pred_fallthru
          _
        // Predicated region
        $region57: #{tpu_custom_call.1} parent=11 // pred_check
          %p467 = pneg %p320
        $region58: #{tpu_custom_call.1} parent=11 // pred_check_branch
          %469 = sbr.rel (%p467) target = $region60
        $region59: #{tpu_custom_call.1} parent=11 // pred_region
          %s471 = ssub.s32 4096, 4096
          %472 = vsyncadd [#allocation16], %s471
          %s473 = sshll.u32 [#allocation17], 4
          %s474 = int_to_ptr.vmem [resolvable:$true] %s473
          %479 = dma.hbm_to_vmem [thread:$0]  %s12, 4096, %s474, [#allocation16], 128, 128, 8
        $region60: #{tpu_custom_call.1} parent=11 // pred_fallthru
          _
        // Predicated region
        $region61: #{tpu_custom_call.1} parent=11 // pred_check
          %p480 = pneg %p341
        $region62: #{tpu_custom_call.1} parent=11 // pred_check_branch
          %482 = sbr.rel (%p480) target = $region64
        $region63: #{tpu_custom_call.1} parent=11 // pred_region
          _
        $region64: #{tpu_custom_call.1} parent=11 // pred_fallthru
          _
      $region12: #{tpu_custom_call.1} parent=5 // pred_fallthru
        _
      %p483 = scmp.lt.s32.totalorder %s30, 8
      // Predicated region
      $region65: #{tpu_custom_call.1} parent=5 // pred_check
        %p484 = pneg %p483
      $region66: #{tpu_custom_call.1} parent=5 // pred_check_branch
        %486 = sbr.rel (%p484) target = $region68
      $region67: #{tpu_custom_call.1} parent=5 // pred_region
        // Predicated region
        $region69: #{tpu_custom_call.1} parent=67 // pred_check
          %p487 = pneg %p83
        $region70: #{tpu_custom_call.1} parent=67 // pred_check_branch
          %489 = sbr.rel (%p487) target = $region72
        $region71: #{tpu_custom_call.1} parent=67 // pred_region
          %s490 = sand.u32 %s73, 1
          %s491 = scalar_lea.sflag [#allocation7], %s490
          %s492 = sand.u32 %s73, 1
          %s493 = smul.addr %s492, 128
          %s494 = scalar_lea.vmem [#allocation6], %s493
          %s496 = ssub.s32 2048, 2048
          %497 = vsyncadd %s491, %s496
          %s498 = smul.addr %s37, 16
          %s499 = smul.addr %s498, 128
          %s500 = scalar_lea.hbm %s1, %s499
          %s501 = sshll.u32 %s494, 4
          %s502 = int_to_ptr.vmem [resolvable:$true] %s501
          %507 = dma.hbm_to_vmem [thread:$0]  %s500, 2048, %s502, %s491, 128, 128, 8
        $region72: #{tpu_custom_call.1} parent=67 // pred_fallthru
          _
      $region68: #{tpu_custom_call.1} parent=5 // pred_fallthru
        _
      %p508 = scmp.le.s32.totalorder 1, %s30
      %p509 = scmp.lt.s32.totalorder %s30, 9
      %p510 = pnand %p508, %p509
      %p511 = pneg %p510
      // Predicated region
      $region73: #{tpu_custom_call.1} parent=5 // pred_check
        _
      $region74: #{tpu_custom_call.1} parent=5 // pred_check_branch
        %513 = sbr.rel (%p510) target = $region76
      $region75: #{tpu_custom_call.1} parent=5 // pred_region
        %s514 = ssub.s32 %s30, 1
        %s515 = sand.u32 %s76, 1
        %s516 = scalar_lea.sflag [#allocation7], %s515
        %s517 = sand.u32 %s76, 1
        %s518 = smul.addr %s517, 128
        %s519 = scalar_lea.vmem [#allocation6], %s518
        // Predicated region
        $region77: #{tpu_custom_call.1} parent=75 // pred_check
          %p520 = pneg %p89
        $region78: #{tpu_custom_call.1} parent=75 // pred_check_branch
          %522 = sbr.rel (%p520) target = $region80
        $region79: #{tpu_custom_call.1} parent=75 // pred_region
          %523 = dma.done %s516, 2048
        $region80: #{tpu_custom_call.1} parent=75 // pred_fallthru
          _
        // Predicated region
        $region81: #{tpu_custom_call.1} parent=75 // pred_check
          %p524 = pneg %p110
        $region82: #{tpu_custom_call.1} parent=75 // pred_check_branch
          %526 = sbr.rel (%p524) target = $region84
        $region83: #{tpu_custom_call.1} parent=75 // pred_region
          %527 = dma.done [#allocation10], 2048
        $region84: #{tpu_custom_call.1} parent=75 // pred_fallthru
          _
        // Predicated region
        $region85: #{tpu_custom_call.1} parent=75 // pred_check
          %p528 = pneg %p152
        $region86: #{tpu_custom_call.1} parent=75 // pred_check_branch
          %530 = sbr.rel (%p528) target = $region88
        $region87: #{tpu_custom_call.1} parent=75 // pred_region
          %531 = dma.done [#allocation10], 2048
        $region88: #{tpu_custom_call.1} parent=75 // pred_fallthru
          _
        // Predicated region
        $region89: #{tpu_custom_call.1} parent=75 // pred_check
          %p532 = pneg %p194
        $region90: #{tpu_custom_call.1} parent=75 // pred_check_branch
          %534 = sbr.rel (%p532) target = $region92
        $region91: #{tpu_custom_call.1} parent=75 // pred_region
          %535 = dma.done [#allocation13], 2048
        $region92: #{tpu_custom_call.1} parent=75 // pred_fallthru
          _
        // Predicated region
        $region93: #{tpu_custom_call.1} parent=75 // pred_check
          %p536 = pneg %p236
        $region94: #{tpu_custom_call.1} parent=75 // pred_check_branch
          %538 = sbr.rel (%p536) target = $region96
        $region95: #{tpu_custom_call.1} parent=75 // pred_region
          %539 = dma.done [#allocation13], 2048
        $region96: #{tpu_custom_call.1} parent=75 // pred_fallthru
          _
        // Predicated region
        $region97: #{tpu_custom_call.1} parent=75 // pred_check
          %p540 = pneg %p278
        $region98: #{tpu_custom_call.1} parent=75 // pred_check_branch
          %542 = sbr.rel (%p540) target = $region100
        $region99: #{tpu_custom_call.1} parent=75 // pred_region
          %543 = dma.done [#allocation16], 4096
        $region100: #{tpu_custom_call.1} parent=75 // pred_fallthru
          _
        // Predicated region
        $region101: #{tpu_custom_call.1} parent=75 // pred_check
          %p544 = pneg %p320
        $region102: #{tpu_custom_call.1} parent=75 // pred_check_branch
          %546 = sbr.rel (%p544) target = $region104
        $region103: #{tpu_custom_call.1} parent=75 // pred_region
          %547 = dma.done [#allocation16], 4096
        $region104: #{tpu_custom_call.1} parent=75 // pred_fallthru
          _
        %p548 = pneg %p63
        %p549 = pneg %p60
        %s550 = sand.u32 %s76, 1
        %s551 = scalar_lea.sflag [#allocation7], %s550
        %s552 = sand.u32 %s76, 1
        %s553 = smul.addr %s552, 128
        %s554 = scalar_lea.vmem [#allocation6], %s553
        %p555 = pneg %p89
        %p556 = pneg %p86
        %p557 = pneg %p110
        %p558 = pneg %p107
        %p559 = pneg %p131
        %p560 = pneg %p128
        %p561 = pneg %p152
        %p562 = pneg %p149
        %p563 = pneg %p173
        %p564 = pneg %p170
        %p565 = pneg %p194
        %p566 = pneg %p191
        %p567 = pneg %p215
        %p568 = pneg %p212
        %p569 = pneg %p236
        %p570 = pneg %p233
        %p571 = pneg %p257
        %p572 = pneg %p254
        %p573 = pneg %p278
        %p574 = pneg %p275
        %p575 = pneg %p299
        %p576 = pneg %p296
        %p577 = pneg %p320
        %p578 = pneg %p317
        %p579 = pneg %p341
        %p580 = pneg %p338
        %p581 = pneg %p369
        %p582 = pneg %p366
        %s583 = sand.u32 %s356, 1
        %s584 = scalar_lea.sflag [#allocation8], %s583
        %s585 = sand.u32 %s356, 1
        %s586 = smul.addr %s585, 32
        %s587 = scalar_lea.vmem [#allocation18], %s586
        %s588 = smul.u32 4, %s40
        %p589 = scmp.eq.s32.totalorder %s40, 0
        // Predicated region
        $region105: #{tpu_custom_call.1} parent=75 // pred_check
          %p590 = pneg %p589
        $region106: #{tpu_custom_call.1} parent=75 // pred_check_branch
          %592 = sbr.rel (%p590) target = $region108
        $region107: #{tpu_custom_call.1} parent=75 // pred_region
          %v593 = vld [vmem:[%s519] sm:$0xff]
          %v594 = vld [vmem:[%s519 + $0x8] sm:$0xff]
          %v595 = vld [vmem:[%s519 + $0x10] sm:$0xff]
          %v596 = vld [vmem:[%s519 + $0x18] sm:$0xff]
          %v597 = vld [vmem:[%s519 + $0x20] sm:$0xff]
          %v598 = vld [vmem:[%s519 + $0x28] sm:$0xff]
          %v599 = vld [vmem:[%s519 + $0x30] sm:$0xff]
          %v600 = vld [vmem:[%s519 + $0x38] sm:$0xff]
          %v601 = vld [vmem:[%s519 + $0x40] sm:$0xff]
          %v602 = vld [vmem:[%s519 + $0x48] sm:$0xff]
          %v603 = vld [vmem:[%s519 + $0x50] sm:$0xff]
          %v604 = vld [vmem:[%s519 + $0x58] sm:$0xff]
          %v605 = vld [vmem:[%s519 + $0x60] sm:$0xff]
          %v606 = vld [vmem:[%s519 + $0x68] sm:$0xff]
          %v607 = vld [vmem:[%s519 + $0x70] sm:$0xff]
          %v608 = vld [vmem:[%s519 + $0x78] sm:$0xff]
          %v609 = vld [vmem:[#allocation11] sm:$0xff]
          %v610 = vld [vmem:[#allocation11 + $0x8] sm:$0xff]
          %v611 = vld [vmem:[#allocation11 + $0x10] sm:$0xff]
          %v612 = vld [vmem:[#allocation11 + $0x18] sm:$0xff]
          %v613 = vld [vmem:[#allocation11 + $0x20] sm:$0xff]
          %v614 = vld [vmem:[#allocation11 + $0x28] sm:$0xff]
          %v615 = vld [vmem:[#allocation11 + $0x30] sm:$0xff]
          %v616 = vld [vmem:[#allocation11 + $0x38] sm:$0xff]
          %v617 = vld [vmem:[#allocation11 + $0x40] sm:$0xff]
          %v618 = vld [vmem:[#allocation11 + $0x48] sm:$0xff]
          %v619 = vld [vmem:[#allocation11 + $0x50] sm:$0xff]
          %v620 = vld [vmem:[#allocation11 + $0x58] sm:$0xff]
          %v621 = vld [vmem:[#allocation11 + $0x60] sm:$0xff]
          %v622 = vld [vmem:[#allocation11 + $0x68] sm:$0xff]
          %v623 = vld [vmem:[#allocation11 + $0x70] sm:$0xff]
          %v624 = vld [vmem:[#allocation11 + $0x78] sm:$0xff]
          %v625 = vld [vmem:[%s5] sm:$0x1]
          %v627 = vlaneseq
          %v628 = vshrl.u32 %v627, 7
          %v629 = vsub.s32 0, %v628
          %v630 = vrot.slane %v625, %v629
          %632 = vmatprep.subr.mxu0 0.0
          %633 = vmatpush1.msra.mxu0 %v609
          %634 = vmatprep.subr.mxu0 0.0
          %635 = vmatpush1.msra.mxu0 %v610
          %636 = vmatprep.subr.mxu0 0.0
          %637 = vmatpush1.msra.mxu0 %v611
          %638 = vmatprep.subr.mxu0 0.0
          %639 = vmatpush1.msra.mxu0 %v612
          %640 = vmatprep.subr.mxu0 0.0
          %641 = vmatpush1.msra.mxu0 %v613
          %642 = vmatprep.subr.mxu0 0.0
          %643 = vmatpush1.msra.mxu0 %v614
          %644 = vmatprep.subr.mxu0 0.0
          %645 = vmatpush1.msra.mxu0 %v615
          %646 = vmatprep.subr.mxu0 0.0
          %647 = vmatpush1.msra.mxu0 %v616
          %648 = vmatprep.subr.mxu0 0.0
          %649 = vmatpush1.msra.mxu0 %v617
          %650 = vmatprep.subr.mxu0 0.0
          %651 = vmatpush1.msra.mxu0 %v618
          %652 = vmatprep.subr.mxu0 0.0
          %653 = vmatpush1.msra.mxu0 %v619
          %654 = vmatprep.subr.mxu0 0.0
          %655 = vmatpush1.msra.mxu0 %v620
          %656 = vmatprep.subr.mxu0 0.0
          %657 = vmatpush1.msra.mxu0 %v621
          %658 = vmatprep.subr.mxu0 0.0
          %659 = vmatpush1.msra.mxu0 %v622
          %660 = vmatprep.subr.mxu0 0.0
          %661 = vmatpush1.msra.mxu0 %v623
          %662 = vmatprep.subr.mxu0 0.0
          %663 = vmatpush1.msra.mxu0 %v624
          %664 = vmatprep.subr.mxu0 0.0
          %665 = vmatpush1.msra.mxu0 0.0
          %666 = vmatprep.subr.mxu0 0.0
          %667 = vmatpush1.msra.mxu0 0.0
          %668 = vmatprep.subr.mxu0 0.0
          %669 = vmatpush1.msra.mxu0 0.0
          %670 = vmatprep.subr.mxu0 0.0
          %671 = vmatpush1.msra.mxu0 0.0
          %672 = vmatprep.subr.mxu0 0.0
          %673 = vmatpush1.msra.mxu0 0.0
          %674 = vmatprep.subr.mxu0 0.0
          %675 = vmatpush1.msra.mxu0 0.0
          %676 = vmatprep.subr.mxu0 0.0
          %677 = vmatpush1.msra.mxu0 0.0
          %678 = vmatprep.subr.mxu0 0.0
          %679 = vmatpush1.msra.mxu0 0.0
          %680 = vmatprep.subr.mxu0 0.0
          %681 = vmatpush1.msra.mxu0 0.0
          %682 = vmatprep.subr.mxu0 0.0
          %683 = vmatpush1.msra.mxu0 0.0
          %684 = vmatprep.subr.mxu0 0.0
          %685 = vmatpush1.msra.mxu0 0.0
          %686 = vmatprep.subr.mxu0 0.0
          %687 = vmatpush1.msra.mxu0 0.0
          %688 = vmatprep.subr.mxu0 0.0
          %689 = vmatpush1.msra.mxu0 0.0
          %690 = vmatprep.subr.mxu0 0.0
          %691 = vmatpush1.msra.mxu0 0.0
          %692 = vmatprep.subr.mxu0 0.0
          %693 = vmatpush1.msra.mxu0 0.0
          %694 = vmatprep.subr.mxu0 0.0
          %695 = vmatpush1.msra.mxu0 0.0
          %696 = vmatprep.mubr.f32.mxu0 0.0
          %697 = vmatmul.mubr.f32.gmra.mrb[0].mxu0 %v593
          %v698 = vpop.f32.mrb[0].mxu0
          %v699 = vadd.f32 %v630, %v698
          %v700 = vpop.f32.mrb[0].mxu0
          %701 = vmatprep.mubr.f32.mxu0 0.0
          %702 = vmatmul.mubr.f32.gmra.mrb[0].mxu0 %v594
          %v703 = vpop.f32.mrb[0].mxu0
          %v704 = vadd.f32 %v630, %v703
          %v705 = vpop.f32.mrb[0].mxu0
          %706 = vmatprep.mubr.f32.mxu0 0.0
          %707 = vmatmul.mubr.f32.gmra.mrb[0].mxu0 %v595
          %v708 = vpop.f32.mrb[0].mxu0
          %v709 = vadd.f32 %v630, %v708
          %v710 = vpop.f32.mrb[0].mxu0
          %711 = vmatprep.mubr.f32.mxu0 0.0
          %712 = vmatmul.mubr.f32.gmra.mrb[0].mxu0 %v596
          %v713 = vpop.f32.mrb[0].mxu0
          %v714 = vadd.f32 %v630, %v713
          %v715 = vpop.f32.mrb[0].mxu0
          %716 = vmatprep.mubr.f32.mxu0 0.0
          %717 = vmatmul.mubr.f32.gmra.mrb[0].mxu0 %v597
          %v718 = vpop.f32.mrb[0].mxu0
          %v719 = vadd.f32 %v630, %v718
          %v720 = vpop.f32.mrb[0].mxu0
          %721 = vmatprep.mubr.f32.mxu0 0.0
          %722 = vmatmul.mubr.f32.gmra.mrb[0].mxu0 %v598
          %v723 = vpop.f32.mrb[0].mxu0
          %v724 = vadd.f32 %v630, %v723
          %v725 = vpop.f32.mrb[0].mxu0
          %726 = vmatprep.mubr.f32.mxu0 0.0
          %727 = vmatmul.mubr.f32.gmra.mrb[0].mxu0 %v599
          %v728 = vpop.f32.mrb[0].mxu0
          %v729 = vadd.f32 %v630, %v728
          %v730 = vpop.f32.mrb[0].mxu0
          %731 = vmatprep.mubr.f32.mxu0 0.0
          %732 = vmatmul.mubr.f32.gmra.mrb[0].mxu0 %v600
          %v733 = vpop.f32.mrb[0].mxu0
          %v734 = vadd.f32 %v630, %v733
          %v735 = vpop.f32.mrb[0].mxu0
          %736 = vmatprep.mubr.f32.mxu0 0.0
          %737 = vmatmul.mubr.f32.gmra.mrb[0].mxu0 %v601
          %v738 = vpop.f32.mrb[0].mxu0
          %v739 = vadd.f32 %v630, %v738
          %v740 = vpop.f32.mrb[0].mxu0
          %741 = vmatprep.mubr.f32.mxu0 0.0
          %742 = vmatmul.mubr.f32.gmra.mrb[0].mxu0 %v602
          %v743 = vpop.f32.mrb[0].mxu0
          %v744 = vadd.f32 %v630, %v743
          %v745 = vpop.f32.mrb[0].mxu0
          %746 = vmatprep.mubr.f32.mxu0 0.0
          %747 = vmatmul.mubr.f32.gmra.mrb[0].mxu0 %v603
          %v748 = vpop.f32.mrb[0].mxu0
          %v749 = vadd.f32 %v630, %v748
          %v750 = vpop.f32.mrb[0].mxu0
          %751 = vmatprep.mubr.f32.mxu0 0.0
          %752 = vmatmul.mubr.f32.gmra.mrb[0].mxu0 %v604
          %v753 = vpop.f32.mrb[0].mxu0
          %v754 = vadd.f32 %v630, %v753
          %v755 = vpop.f32.mrb[0].mxu0
          %756 = vmatprep.mubr.f32.mxu0 0.0
          %757 = vmatmul.mubr.f32.gmra.mrb[0].mxu0 %v605
          %v758 = vpop.f32.mrb[0].mxu0
          %v759 = vadd.f32 %v630, %v758
          %v760 = vpop.f32.mrb[0].mxu0
          %761 = vmatprep.mubr.f32.mxu0 0.0
          %762 = vmatmul.mubr.f32.gmra.mrb[0].mxu0 %v606
          %v763 = vpop.f32.mrb[0].mxu0
          %v764 = vadd.f32 %v630, %v763
          %v765 = vpop.f32.mrb[0].mxu0
          %766 = vmatprep.mubr.f32.mxu0 0.0
          %767 = vmatmul.mubr.f32.gmra.mrb[0].mxu0 %v607
          %v768 = vpop.f32.mrb[0].mxu0
          %v769 = vadd.f32 %v630, %v768
          %v770 = vpop.f32.mrb[0].mxu0
          %771 = vmatprep.mubr.f32.mxu0 0.0
          %772 = vmatmul.mubr.f32.gmra.mrb[0].mxu0 %v608
          %v773 = vpop.f32.mrb[0].mxu0
          %v774 = vadd.f32 %v630, %v773
          %v775 = vpop.f32.mrb[0].mxu0
          %776 = vdwg.mxu0
          %v777 = vld [vmem:[#allocation12] sm:$0xff]
          %v778 = vld [vmem:[#allocation12 + $0x8] sm:$0xff]
          %v779 = vld [vmem:[#allocation12 + $0x10] sm:$0xff]
          %v780 = vld [vmem:[#allocation12 + $0x18] sm:$0xff]
          %v781 = vld [vmem:[#allocation12 + $0x20] sm:$0xff]
          %v782 = vld [vmem:[#allocation12 + $0x28] sm:$0xff]
          %v783 = vld [vmem:[#allocation12 + $0x30] sm:$0xff]
          %v784 = vld [vmem:[#allocation12 + $0x38] sm:$0xff]
          %v785 = vld [vmem:[#allocation12 + $0x40] sm:$0xff]
          %v786 = vld [vmem:[#allocation12 + $0x48] sm:$0xff]
          %v787 = vld [vmem:[#allocation12 + $0x50] sm:$0xff]
          %v788 = vld [vmem:[#allocation12 + $0x58] sm:$0xff]
          %v789 = vld [vmem:[#allocation12 + $0x60] sm:$0xff]
          %v790 = vld [vmem:[#allocation12 + $0x68] sm:$0xff]
          %v791 = vld [vmem:[#allocation12 + $0x70] sm:$0xff]
          %v792 = vld [vmem:[#allocation12 + $0x78] sm:$0xff]
          %v793 = vld [vmem:[%s7] sm:$0x1]
          %v795 = vlaneseq
          %v796 = vshrl.u32 %v795, 7
          %v797 = vsub.s32 0, %v796
          %v798 = vrot.slane %v793, %v797
          %800 = vmatprep.subr.mxu0 0.0
          %801 = vmatpush1.msra.mxu0 %v777
          %802 = vmatprep.subr.mxu0 0.0
          %803 = vmatpush1.msra.mxu0 %v778
          %804 = vmatprep.subr.mxu0 0.0
          %805 = vmatpush1.msra.mxu0 %v779
          %806 = vmatprep.subr.mxu0 0.0
          %807 = vmatpush1.msra.mxu0 %v780
          %808 = vmatprep.subr.mxu0 0.0
          %809 = vmatpush1.msra.mxu0 %v781
          %810 = vmatprep.subr.mxu0 0.0
          %811 = vmatpush1.msra.mxu0 %v782
          %812 = vmatprep.subr.mxu0 0.0
          %813 = vmatpush1.msra.mxu0 %v783
          %814 = vmatprep.subr.mxu0 0.0
          %815 = vmatpush1.msra.mxu0 %v784
          %816 = vmatprep.subr.mxu0 0.0
          %817 = vmatpush1.msra.mxu0 %v785
          %818 = vmatprep.subr.mxu0 0.0
          %819 = vmatpush1.msra.mxu0 %v786
          %820 = vmatprep.subr.mxu0 0.0
          %821 = vmatpush1.msra.mxu0 %v787
          %822 = vmatprep.subr.mxu0 0.0
          %823 = vmatpush1.msra.mxu0 %v788
          %824 = vmatprep.subr.mxu0 0.0
          %825 = vmatpush1.msra.mxu0 %v789
          %826 = vmatprep.subr.mxu0 0.0
          %827 = vmatpush1.msra.mxu0 %v790
          %828 = vmatprep.subr.mxu0 0.0
          %829 = vmatpush1.msra.mxu0 %v791
          %830 = vmatprep.subr.mxu0 0.0
          %831 = vmatpush1.msra.mxu0 %v792
          %832 = vmatprep.subr.mxu0 0.0
          %833 = vmatpush1.msra.mxu0 0.0
          %834 = vmatprep.subr.mxu0 0.0
          %835 = vmatpush1.msra.mxu0 0.0
          %836 = vmatprep.subr.mxu0 0.0
          %837 = vmatpush1.msra.mxu0 0.0
          %838 = vmatprep.subr.mxu0 0.0
          %839 = vmatpush1.msra.mxu0 0.0
          %840 = vmatprep.subr.mxu0 0.0
          %841 = vmatpush1.msra.mxu0 0.0
          %842 = vmatprep.subr.mxu0 0.0
          %843 = vmatpush1.msra.mxu0 0.0
          %844 = vmatprep.subr.mxu0 0.0
          %845 = vmatpush1.msra.mxu0 0.0
          %846 = vmatprep.subr.mxu0 0.0
          %847 = vmatpush1.msra.mxu0 0.0
          %848 = vmatprep.subr.mxu0 0.0
          %849 = vmatpush1.msra.mxu0 0.0
          %850 = vmatprep.subr.mxu0 0.0
          %851 = vmatpush1.msra.mxu0 0.0
          %852 = vmatprep.subr.mxu0 0.0
          %853 = vmatpush1.msra.mxu0 0.0
          %854 = vmatprep.subr.mxu0 0.0
          %855 = vmatpush1.msra.mxu0 0.0
          %856 = vmatprep.subr.mxu0 0.0
          %857 = vmatpush1.msra.mxu0 0.0
          %858 = vmatprep.subr.mxu0 0.0
          %859 = vmatpush1.msra.mxu0 0.0
          %860 = vmatprep.subr.mxu0 0.0
          %861 = vmatpush1.msra.mxu0 0.0
          %862 = vmatprep.subr.mxu0 0.0
          %863 = vmatpush1.msra.mxu0 0.0
          %864 = vmatprep.mubr.f32.mxu0 0.0
          %865 = vmatmul.mubr.f32.gmra.mrb[0].mxu0 %v593
          %v866 = vpop.f32.mrb[0].mxu0
          %v867 = vadd.f32 %v798, %v866
          %v868 = vpop.f32.mrb[0].mxu0
          %869 = vmatprep.mubr.f32.mxu0 0.0
          %870 = vmatmul.mubr.f32.gmra.mrb[0].mxu0 %v594
          %v871 = vpop.f32.mrb[0].mxu0
          %v872 = vadd.f32 %v798, %v871
          %v873 = vpop.f32.mrb[0].mxu0
          %874 = vmatprep.mubr.f32.mxu0 0.0
          %875 = vmatmul.mubr.f32.gmra.mrb[0].mxu0 %v595
          %v876 = vpop.f32.mrb[0].mxu0
          %v877 = vadd.f32 %v798, %v876
          %v878 = vpop.f32.mrb[0].mxu0
          %879 = vmatprep.mubr.f32.mxu0 0.0
          %880 = vmatmul.mubr.f32.gmra.mrb[0].mxu0 %v596
          %v881 = vpop.f32.mrb[0].mxu0
          %v882 = vadd.f32 %v798, %v881
          %v883 = vpop.f32.mrb[0].mxu0
          %884 = vmatprep.mubr.f32.mxu0 0.0
          %885 = vmatmul.mubr.f32.gmra.mrb[0].mxu0 %v597
          %v886 = vpop.f32.mrb[0].mxu0
          %v887 = vadd.f32 %v798, %v886
          %v888 = vpop.f32.mrb[0].mxu0
          %889 = vmatprep.mubr.f32.mxu0 0.0
          %890 = vmatmul.mubr.f32.gmra.mrb[0].mxu0 %v598
          %v891 = vpop.f32.mrb[0].mxu0
          %v892 = vadd.f32 %v798, %v891
          %v893 = vpop.f32.mrb[0].mxu0
          %894 = vmatprep.mubr.f32.mxu0 0.0
          %895 = vmatmul.mubr.f32.gmra.mrb[0].mxu0 %v599
          %v896 = vpop.f32.mrb[0].mxu0
          %v897 = vadd.f32 %v798, %v896
          %v898 = vpop.f32.mrb[0].mxu0
          %899 = vmatprep.mubr.f32.mxu0 0.0
          %900 = vmatmul.mubr.f32.gmra.mrb[0].mxu0 %v600
          %v901 = vpop.f32.mrb[0].mxu0
          %v902 = vadd.f32 %v798, %v901
          %v903 = vpop.f32.mrb[0].mxu0
          %904 = vmatprep.mubr.f32.mxu0 0.0
          %905 = vmatmul.mubr.f32.gmra.mrb[0].mxu0 %v601
          %v906 = vpop.f32.mrb[0].mxu0
          %v907 = vadd.f32 %v798, %v906
          %v908 = vpop.f32.mrb[0].mxu0
          %909 = vmatprep.mubr.f32.mxu0 0.0
          %910 = vmatmul.mubr.f32.gmra.mrb[0].mxu0 %v602
          %v911 = vpop.f32.mrb[0].mxu0
          %v912 = vadd.f32 %v798, %v911
          %v913 = vpop.f32.mrb[0].mxu0
          %914 = vmatprep.mubr.f32.mxu0 0.0
          %915 = vmatmul.mubr.f32.gmra.mrb[0].mxu0 %v603
          %v916 = vpop.f32.mrb[0].mxu0
          %v917 = vadd.f32 %v798, %v916
          %v918 = vpop.f32.mrb[0].mxu0
          %919 = vmatprep.mubr.f32.mxu0 0.0
          %920 = vmatmul.mubr.f32.gmra.mrb[0].mxu0 %v604
          %v921 = vpop.f32.mrb[0].mxu0
          %v922 = vadd.f32 %v798, %v921
          %v923 = vpop.f32.mrb[0].mxu0
          %924 = vmatprep.mubr.f32.mxu0 0.0
          %925 = vmatmul.mubr.f32.gmra.mrb[0].mxu0 %v605
          %v926 = vpop.f32.mrb[0].mxu0
          %v927 = vadd.f32 %v798, %v926
          %v928 = vpop.f32.mrb[0].mxu0
          %929 = vmatprep.mubr.f32.mxu0 0.0
          %930 = vmatmul.mubr.f32.gmra.mrb[0].mxu0 %v606
          %v931 = vpop.f32.mrb[0].mxu0
          %v932 = vadd.f32 %v798, %v931
          %v933 = vpop.f32.mrb[0].mxu0
          %934 = vmatprep.mubr.f32.mxu0 0.0
          %935 = vmatmul.mubr.f32.gmra.mrb[0].mxu0 %v607
          %v936 = vpop.f32.mrb[0].mxu0
          %v937 = vadd.f32 %v798, %v936
          %v938 = vpop.f32.mrb[0].mxu0
          %939 = vmatprep.mubr.f32.mxu0 0.0
          %940 = vmatmul.mubr.f32.gmra.mrb[0].mxu0 %v608
          %v941 = vpop.f32.mrb[0].mxu0
          %v942 = vadd.f32 %v798, %v941
          %v943 = vpop.f32.mrb[0].mxu0
          %944 = vdwg.mxu0
          %945 = vxpose.xlu0.b32.start [1/16] %v699, 128
          %946 = vxpose.xlu0.b32.cont [2/16] %v704, 128
          %947 = vxpose.xlu0.b32.cont [3/16] %v709, 128
          %948 = vxpose.xlu0.b32.cont [4/16] %v714, 128
          %949 = vxpose.xlu0.b32.cont [5/16] %v719, 128
          %950 = vxpose.xlu0.b32.cont [6/16] %v724, 128
          %951 = vxpose.xlu0.b32.cont [7/16] %v729, 128
          %952 = vxpose.xlu0.b32.cont [8/16] %v734, 128
          %953 = vxpose.xlu0.b32.cont [9/16] %v739, 128
          %954 = vxpose.xlu0.b32.cont [10/16] %v744, 128
          %955 = vxpose.xlu0.b32.cont [11/16] %v749, 128
          %956 = vxpose.xlu0.b32.cont [12/16] %v754, 128
          %957 = vxpose.xlu0.b32.cont [13/16] %v759, 128
          %958 = vxpose.xlu0.b32.cont [14/16] %v764, 128
          %959 = vxpose.xlu0.b32.cont [15/16] %v769, 128
          %960 = vxpose.xlu0.b32.end [16/16] %v774, 128
          %v961 = vpop.trf.xlu0
          %v962 = vpop.trf.xlu0
          %v963 = vpop.trf.xlu0
          %v964 = vpop.trf.xlu0
          %v965 = vpop.trf.xlu0
          %v966 = vpop.trf.xlu0
          %v967 = vpop.trf.xlu0
          %v968 = vpop.trf.xlu0
          %v969 = vpop.trf.xlu0
          %v970 = vpop.trf.xlu0
          %v971 = vpop.trf.xlu0
          %v972 = vpop.trf.xlu0
          %v973 = vpop.trf.xlu0
          %v974 = vpop.trf.xlu0
          %v975 = vpop.trf.xlu0
          %v976 = vpop.trf.xlu0
          %977 = vst [vmem:[#allocation2] sm:$0xff] %v961
          %978 = vst [vmem:[#allocation2 + $0x8] sm:$0xff] %v962
          %979 = vst [vmem:[#allocation2 + $0x10] sm:$0xff] %v963
          %980 = vst [vmem:[#allocation2 + $0x18] sm:$0xff] %v964
          %981 = vst [vmem:[#allocation2 + $0x20] sm:$0xff] %v965
          %982 = vst [vmem:[#allocation2 + $0x28] sm:$0xff] %v966
          %983 = vst [vmem:[#allocation2 + $0x30] sm:$0xff] %v967
          %984 = vst [vmem:[#allocation2 + $0x38] sm:$0xff] %v968
          %985 = vst [vmem:[#allocation2 + $0x40] sm:$0xff] %v969
          %986 = vst [vmem:[#allocation2 + $0x48] sm:$0xff] %v970
          %987 = vst [vmem:[#allocation2 + $0x50] sm:$0xff] %v971
          %988 = vst [vmem:[#allocation2 + $0x58] sm:$0xff] %v972
          %989 = vst [vmem:[#allocation2 + $0x60] sm:$0xff] %v973
          %990 = vst [vmem:[#allocation2 + $0x68] sm:$0xff] %v974
          %991 = vst [vmem:[#allocation2 + $0x70] sm:$0xff] %v975
          %992 = vst [vmem:[#allocation2 + $0x78] sm:$0xff] %v976
          %993 = vst [vmem:[#allocation3] sm:$0xff] %v867
          %994 = vst [vmem:[#allocation3 + $0x8] sm:$0xff] %v872
          %995 = vst [vmem:[#allocation3 + $0x10] sm:$0xff] %v877
          %996 = vst [vmem:[#allocation3 + $0x18] sm:$0xff] %v882
          %997 = vst [vmem:[#allocation3 + $0x20] sm:$0xff] %v887
          %998 = vst [vmem:[#allocation3 + $0x28] sm:$0xff] %v892
          %999 = vst [vmem:[#allocation3 + $0x30] sm:$0xff] %v897
          %1000 = vst [vmem:[#allocation3 + $0x38] sm:$0xff] %v902
          %1001 = vst [vmem:[#allocation3 + $0x40] sm:$0xff] %v907
          %1002 = vst [vmem:[#allocation3 + $0x48] sm:$0xff] %v912
          %1003 = vst [vmem:[#allocation3 + $0x50] sm:$0xff] %v917
          %1004 = vst [vmem:[#allocation3 + $0x58] sm:$0xff] %v922
          %1005 = vst [vmem:[#allocation3 + $0x60] sm:$0xff] %v927
          %1006 = vst [vmem:[#allocation3 + $0x68] sm:$0xff] %v932
          %1007 = vst [vmem:[#allocation3 + $0x70] sm:$0xff] %v937
          %1008 = vst [vmem:[#allocation3 + $0x78] sm:$0xff] %v942
        $region108: #{tpu_custom_call.1} parent=75 // pred_fallthru
          _
        %s1009 = smul.u32 %s40, 32
        %s1010 = scalar_lea.vmem %s519, %s1009 [#allocation6]
        %v1011 = vld [vmem:[%s1010] sm:$0xff]
        %v1012 = vld [vmem:[%s1010 + $0x8] sm:$0xff]
        %v1013 = vld [vmem:[%s1010 + $0x10] sm:$0xff]
        %v1014 = vld [vmem:[%s1010 + $0x18] sm:$0xff]
        %v1015 = vld [vmem:[#allocation9] sm:$0xff]
        %v1016 = vld [vmem:[#allocation9 + $0x8] sm:$0xff]
        %v1017 = vld [vmem:[#allocation9 + $0x10] sm:$0xff]
        %v1018 = vld [vmem:[#allocation9 + $0x18] sm:$0xff]
        %v1019 = vld [vmem:[#allocation9 + $0x20] sm:$0xff]
        %v1020 = vld [vmem:[#allocation9 + $0x28] sm:$0xff]
        %v1021 = vld [vmem:[#allocation9 + $0x30] sm:$0xff]
        %v1022 = vld [vmem:[#allocation9 + $0x38] sm:$0xff]
        %v1023 = vld [vmem:[#allocation9 + $0x40] sm:$0xff]
        %v1024 = vld [vmem:[#allocation9 + $0x48] sm:$0xff]
        %v1025 = vld [vmem:[#allocation9 + $0x50] sm:$0xff]
        %v1026 = vld [vmem:[#allocation9 + $0x58] sm:$0xff]
        %v1027 = vld [vmem:[#allocation9 + $0x60] sm:$0xff]
        %v1028 = vld [vmem:[#allocation9 + $0x68] sm:$0xff]
        %v1029 = vld [vmem:[#allocation9 + $0x70] sm:$0xff]
        %v1030 = vld [vmem:[#allocation9 + $0x78] sm:$0xff]
        %v1031 = vld [vmem:[%s3] sm:$0x1]
        %v1033 = vlaneseq
        %v1034 = vshrl.u32 %v1033, 7
        %v1035 = vsub.s32 0, %v1034
        %v1036 = vrot.slane %v1031, %v1035
        %1038 = vmatprep.subr.mxu0 0.0
        %1039 = vmatpush1.msra.mxu0 %v1015
        %1040 = vmatprep.subr.mxu0 0.0
        %1041 = vmatpush1.msra.mxu0 %v1016
        %1042 = vmatprep.subr.mxu0 0.0
        %1043 = vmatpush1.msra.mxu0 %v1017
        %1044 = vmatprep.subr.mxu0 0.0
        %1045 = vmatpush1.msra.mxu0 %v1018
        %1046 = vmatprep.subr.mxu0 0.0
        %1047 = vmatpush1.msra.mxu0 %v1019
        %1048 = vmatprep.subr.mxu0 0.0
        %1049 = vmatpush1.msra.mxu0 %v1020
        %1050 = vmatprep.subr.mxu0 0.0
        %1051 = vmatpush1.msra.mxu0 %v1021
        %1052 = vmatprep.subr.mxu0 0.0
        %1053 = vmatpush1.msra.mxu0 %v1022
        %1054 = vmatprep.subr.mxu0 0.0
        %1055 = vmatpush1.msra.mxu0 %v1023
        %1056 = vmatprep.subr.mxu0 0.0
        %1057 = vmatpush1.msra.mxu0 %v1024
        %1058 = vmatprep.subr.mxu0 0.0
        %1059 = vmatpush1.msra.mxu0 %v1025
        %1060 = vmatprep.subr.mxu0 0.0
        %1061 = vmatpush1.msra.mxu0 %v1026
        %1062 = vmatprep.subr.mxu0 0.0
        %1063 = vmatpush1.msra.mxu0 %v1027
        %1064 = vmatprep.subr.mxu0 0.0
        %1065 = vmatpush1.msra.mxu0 %v1028
        %1066 = vmatprep.subr.mxu0 0.0
        %1067 = vmatpush1.msra.mxu0 %v1029
        %1068 = vmatprep.subr.mxu0 0.0
        %1069 = vmatpush1.msra.mxu0 %v1030
        %1070 = vmatprep.subr.mxu0 0.0
        %1071 = vmatpush1.msra.mxu0 0.0
        %1072 = vmatprep.subr.mxu0 0.0
        %1073 = vmatpush1.msra.mxu0 0.0
        %1074 = vmatprep.subr.mxu0 0.0
        %1075 = vmatpush1.msra.mxu0 0.0
        %1076 = vmatprep.subr.mxu0 0.0
        %1077 = vmatpush1.msra.mxu0 0.0
        %1078 = vmatprep.subr.mxu0 0.0
        %1079 = vmatpush1.msra.mxu0 0.0
        %1080 = vmatprep.subr.mxu0 0.0
        %1081 = vmatpush1.msra.mxu0 0.0
        %1082 = vmatprep.subr.mxu0 0.0
        %1083 = vmatpush1.msra.mxu0 0.0
        %1084 = vmatprep.subr.mxu0 0.0
        %1085 = vmatpush1.msra.mxu0 0.0
        %1086 = vmatprep.subr.mxu0 0.0
        %1087 = vmatpush1.msra.mxu0 0.0
        %1088 = vmatprep.subr.mxu0 0.0
        %1089 = vmatpush1.msra.mxu0 0.0
        %1090 = vmatprep.subr.mxu0 0.0
        %1091 = vmatpush1.msra.mxu0 0.0
        %1092 = vmatprep.subr.mxu0 0.0
        %1093 = vmatpush1.msra.mxu0 0.0
        %1094 = vmatprep.subr.mxu0 0.0
        %1095 = vmatpush1.msra.mxu0 0.0
        %1096 = vmatprep.subr.mxu0 0.0
        %1097 = vmatpush1.msra.mxu0 0.0
        %1098 = vmatprep.subr.mxu0 0.0
        %1099 = vmatpush1.msra.mxu0 0.0
        %1100 = vmatprep.subr.mxu0 0.0
        %1101 = vmatpush1.msra.mxu0 0.0
        %1102 = vmatprep.mubr.f32.mxu0 0.0
        %1103 = vmatmul.mubr.f32.gmra.mrb[0].mxu0 %v1011
        %v1104 = vpop.f32.mrb[0].mxu0
        %v1105 = vadd.f32 %v1036, %v1104
        %v1106 = vpop.f32.mrb[0].mxu0
        %1107 = vmatprep.mubr.f32.mxu0 0.0
        %1108 = vmatmul.mubr.f32.gmra.mrb[0].mxu0 %v1012
        %v1109 = vpop.f32.mrb[0].mxu0
        %v1110 = vadd.f32 %v1036, %v1109
        %v1111 = vpop.f32.mrb[0].mxu0
        %1112 = vmatprep.mubr.f32.mxu0 0.0
        %1113 = vmatmul.mubr.f32.gmra.mrb[0].mxu0 %v1013
        %v1114 = vpop.f32.mrb[0].mxu0
        %v1115 = vadd.f32 %v1036, %v1114
        %v1116 = vpop.f32.mrb[0].mxu0
        %1117 = vmatprep.mubr.f32.mxu0 0.0
        %1118 = vmatmul.mubr.f32.gmra.mrb[0].mxu0 %v1014
        %v1119 = vpop.f32.mrb[0].mxu0
        %v1120 = vadd.f32 %v1036, %v1119
        %v1121 = vpop.f32.mrb[0].mxu0
        %1122 = vdwg.mxu0
        %v1123 = vmul.f32 %v1105, 0.17677669
        %v1124 = vmul.f32 %v1110, 0.17677669
        %v1125 = vmul.f32 %v1115, 0.17677669
        %v1126 = vmul.f32 %v1120, 0.17677669
        %v1127 = vld [vmem:[#allocation2] sm:$0xff]
        %v1128 = vld [vmem:[#allocation2 + $0x8] sm:$0xff]
        %v1129 = vld [vmem:[#allocation2 + $0x10] sm:$0xff]
        %v1130 = vld [vmem:[#allocation2 + $0x18] sm:$0xff]
        %v1131 = vld [vmem:[#allocation3] sm:$0xff]
        %v1132 = vld [vmem:[#allocation3 + $0x8] sm:$0xff]
        %v1133 = vld [vmem:[#allocation3 + $0x10] sm:$0xff]
        %v1134 = vld [vmem:[#allocation3 + $0x18] sm:$0xff]
        %v1135 = vld [vmem:[#allocation3 + $0x20] sm:$0xff]
        %v1136 = vld [vmem:[#allocation3 + $0x28] sm:$0xff]
        %v1137 = vld [vmem:[#allocation3 + $0x30] sm:$0xff]
        %v1138 = vld [vmem:[#allocation3 + $0x38] sm:$0xff]
        %v1139 = vld [vmem:[#allocation3 + $0x40] sm:$0xff]
        %v1140 = vld [vmem:[#allocation3 + $0x48] sm:$0xff]
        %v1141 = vld [vmem:[#allocation3 + $0x50] sm:$0xff]
        %v1142 = vld [vmem:[#allocation3 + $0x58] sm:$0xff]
        %v1143 = vld [vmem:[#allocation3 + $0x60] sm:$0xff]
        %v1144 = vld [vmem:[#allocation3 + $0x68] sm:$0xff]
        %v1145 = vld [vmem:[#allocation3 + $0x70] sm:$0xff]
        %v1146 = vld [vmem:[#allocation3 + $0x78] sm:$0xff]
        %vm1147 = vcmask 261120
        %v1149 = vsel %vm1147, %v1123, 0
        %v1152 = vsel %vm1147, %v1124, 0
        %v1155 = vsel %vm1147, %v1125, 0
        %v1158 = vsel %vm1147, %v1126, 0
        %1160 = vmatprep.subr.mxu0 0.0
        %1161 = vmatpush1.msra.mxu0 %v1127
        %1162 = vmatprep.subr.mxu0 0.0
        %1163 = vmatpush1.msra.mxu0 %v1128
        %1164 = vmatprep.subr.mxu0 0.0
        %1165 = vmatpush1.msra.mxu0 %v1129
        %1166 = vmatprep.subr.mxu0 0.0
        %1167 = vmatpush1.msra.mxu0 %v1130
        %1168 = vmatprep.subr.mxu0 0.0
        %1169 = vmatpush1.msra.mxu0 0.0
        %1170 = vmatprep.subr.mxu0 0.0
        %1171 = vmatpush1.msra.mxu0 0.0
        %1172 = vmatprep.subr.mxu0 0.0
        %1173 = vmatpush1.msra.mxu0 0.0
        %1174 = vmatprep.subr.mxu0 0.0
        %1175 = vmatpush1.msra.mxu0 0.0
        %1176 = vmatprep.subr.mxu0 0.0
        %1177 = vmatpush1.msra.mxu0 0.0
        %1178 = vmatprep.subr.mxu0 0.0
        %1179 = vmatpush1.msra.mxu0 0.0
        %1180 = vmatprep.subr.mxu0 0.0
        %1181 = vmatpush1.msra.mxu0 0.0
        %1182 = vmatprep.subr.mxu0 0.0
        %1183 = vmatpush1.msra.mxu0 0.0
        %1184 = vmatprep.subr.mxu0 0.0
        %1185 = vmatpush1.msra.mxu0 0.0
        %1186 = vmatprep.subr.mxu0 0.0
        %1187 = vmatpush1.msra.mxu0 0.0
        %1188 = vmatprep.subr.mxu0 0.0
        %1189 = vmatpush1.msra.mxu0 0.0
        %1190 = vmatprep.subr.mxu0 0.0
        %1191 = vmatpush1.msra.mxu0 0.0
        %1192 = vmatprep.subr.mxu0 0.0
        %1193 = vmatpush1.msra.mxu0 0.0
        %1194 = vmatprep.subr.mxu0 0.0
        %1195 = vmatpush1.msra.mxu0 0.0
        %1196 = vmatprep.subr.mxu0 0.0
        %1197 = vmatpush1.msra.mxu0 0.0
        %1198 = vmatprep.subr.mxu0 0.0
        %1199 = vmatpush1.msra.mxu0 0.0
        %1200 = vmatprep.subr.mxu0 0.0
        %1201 = vmatpush1.msra.mxu0 0.0
        %1202 = vmatprep.subr.mxu0 0.0
        %1203 = vmatpush1.msra.mxu0 0.0
        %1204 = vmatprep.subr.mxu0 0.0
        %1205 = vmatpush1.msra.mxu0 0.0
        %1206 = vmatprep.subr.mxu0 0.0
        %1207 = vmatpush1.msra.mxu0 0.0
        %1208 = vmatprep.subr.mxu0 0.0
        %1209 = vmatpush1.msra.mxu0 0.0
        %1210 = vmatprep.subr.mxu0 0.0
        %1211 = vmatpush1.msra.mxu0 0.0
        %1212 = vmatprep.subr.mxu0 0.0
        %1213 = vmatpush1.msra.mxu0 0.0
        %1214 = vmatprep.subr.mxu0 0.0
        %1215 = vmatpush1.msra.mxu0 0.0
        %1216 = vmatprep.subr.mxu0 0.0
        %1217 = vmatpush1.msra.mxu0 0.0
        %1218 = vmatprep.subr.mxu0 0.0
        %1219 = vmatpush1.msra.mxu0 0.0
        %1220 = vmatprep.subr.mxu0 0.0
        %1221 = vmatpush1.msra.mxu0 0.0
        %1222 = vmatprep.subr.mxu0 0.0
        %1223 = vmatpush1.msra.mxu0 0.0
        %1224 = vmatprep.mubr.f32.mxu0 0.0
        %1225 = vmatmul.mubr.f32.gmra.mrb[0].mxu0 %v1149
        %v1226 = vpop.f32.mrb[0].mxu0
        %v1227 = vadd.f32 0.0, %v1226
        %v1228 = vpop.f32.mrb[0].mxu0
        %1229 = vmatprep.mubr.f32.mxu0 0.0
        %1230 = vmatmul.mubr.f32.gmra.mrb[0].mxu0 %v1152
        %v1231 = vpop.f32.mrb[0].mxu0
        %v1232 = vadd.f32 0.0, %v1231
        %v1233 = vpop.f32.mrb[0].mxu0
        %1234 = vmatprep.mubr.f32.mxu0 0.0
        %1235 = vmatmul.mubr.f32.gmra.mrb[0].mxu0 %v1155
        %v1236 = vpop.f32.mrb[0].mxu0
        %v1237 = vadd.f32 0.0, %v1236
        %v1238 = vpop.f32.mrb[0].mxu0
        %1239 = vmatprep.mubr.f32.mxu0 0.0
        %1240 = vmatmul.mubr.f32.gmra.mrb[0].mxu0 %v1158
        %v1241 = vpop.f32.mrb[0].mxu0
        %v1242 = vadd.f32 0.0, %v1241
        %v1243 = vpop.f32.mrb[0].mxu0
        %1244 = vdwg.mxu0
        %1245 = vmax.xlane.f32.xlu0 %v1227
        %v1246 = vpop.xlane.xlu0 %1245
        %1247 = vmax.xlane.f32.xlu0 %v1232
        %v1248 = vpop.xlane.xlu0 %1247
        %1249 = vmax.xlane.f32.xlu0 %v1237
        %v1250 = vpop.xlane.xlu0 %1249
        %1251 = vmax.xlane.f32.xlu0 %v1242
        %v1252 = vpop.xlane.xlu0 %1251
        %v1253 = vsub.f32 -inf, %v1246
        %v1254 = vsub.f32 -inf, %v1248
        %v1255 = vsub.f32 -inf, %v1250
        %v1256 = vsub.f32 -inf, %v1252
        %v1257 = vmul.f32 %v1253, 1.442695
        %v1258 = vpow.pop %v1257
        %v1259 = vmul.f32 %v1254, 1.442695
        %v1260 = vpow.pop %v1259
        %v1261 = vmul.f32 %v1255, 1.442695
        %v1262 = vpow.pop %v1261
        %v1263 = vmul.f32 %v1256, 1.442695
        %v1264 = vpow.pop %v1263
        %v1265 = vsub.f32 %v1227, %v1246
        %v1266 = vsub.f32 %v1232, %v1248
        %v1267 = vsub.f32 %v1237, %v1250
        %v1268 = vsub.f32 %v1242, %v1252
        %v1269 = vmul.f32 %v1265, 1.442695
        %v1270 = vpow.pop %v1269
        %v1271 = vmul.f32 %v1266, 1.442695
        %v1272 = vpow.pop %v1271
        %v1273 = vmul.f32 %v1267, 1.442695
        %v1274 = vpow.pop %v1273
        %v1275 = vmul.f32 %v1268, 1.442695
        %v1276 = vpow.pop %v1275
        %v1277 = vmul.f32 %v1258, 0.0
        %v1278 = vmul.f32 %v1260, 0.0
        %v1279 = vmul.f32 %v1262, 0.0
        %v1280 = vmul.f32 %v1264, 0.0
        %1281 = vadd.xlane.f32.xlu0 %v1270
        %v1282 = vpop.xlane.xlu0 %1281
        %1283 = vadd.xlane.f32.xlu0 %v1272
        %v1284 = vpop.xlane.xlu0 %1283
        %1285 = vadd.xlane.f32.xlu0 %v1274
        %v1286 = vpop.xlane.xlu0 %1285
        %1287 = vadd.xlane.f32.xlu0 %v1276
        %v1288 = vpop.xlane.xlu0 %1287
        %v1289 = vadd.f32 %v1277, %v1282
        %v1290 = vadd.f32 %v1278, %v1284
        %v1291 = vadd.f32 %v1279, %v1286
        %v1292 = vadd.f32 %v1280, %v1288
        %1293 = vmatprep.subr.mxu0 0.0
        %1294 = vmatpush1.msra.mxu0 %v1131
        %1295 = vmatprep.subr.mxu0 0.0
        %1296 = vmatpush1.msra.mxu0 %v1132
        %1297 = vmatprep.subr.mxu0 0.0
        %1298 = vmatpush1.msra.mxu0 %v1133
        %1299 = vmatprep.subr.mxu0 0.0
        %1300 = vmatpush1.msra.mxu0 %v1134
        %1301 = vmatprep.subr.mxu0 0.0
        %1302 = vmatpush1.msra.mxu0 %v1135
        %1303 = vmatprep.subr.mxu0 0.0
        %1304 = vmatpush1.msra.mxu0 %v1136
        %1305 = vmatprep.subr.mxu0 0.0
        %1306 = vmatpush1.msra.mxu0 %v1137
        %1307 = vmatprep.subr.mxu0 0.0
        %1308 = vmatpush1.msra.mxu0 %v1138
        %1309 = vmatprep.subr.mxu0 0.0
        %1310 = vmatpush1.msra.mxu0 %v1139
        %1311 = vmatprep.subr.mxu0 0.0
        %1312 = vmatpush1.msra.mxu0 %v1140
        %1313 = vmatprep.subr.mxu0 0.0
        %1314 = vmatpush1.msra.mxu0 %v1141
        %1315 = vmatprep.subr.mxu0 0.0
        %1316 = vmatpush1.msra.mxu0 %v1142
        %1317 = vmatprep.subr.mxu0 0.0
        %1318 = vmatpush1.msra.mxu0 %v1143
        %1319 = vmatprep.subr.mxu0 0.0
        %1320 = vmatpush1.msra.mxu0 %v1144
        %1321 = vmatprep.subr.mxu0 0.0
        %1322 = vmatpush1.msra.mxu0 %v1145
        %1323 = vmatprep.subr.mxu0 0.0
        %1324 = vmatpush1.msra.mxu0 %v1146
        %1325 = vmatprep.subr.mxu0 0.0
        %1326 = vmatpush1.msra.mxu0 0.0
        %1327 = vmatprep.subr.mxu0 0.0
        %1328 = vmatpush1.msra.mxu0 0.0
        %1329 = vmatprep.subr.mxu0 0.0
        %1330 = vmatpush1.msra.mxu0 0.0
        %1331 = vmatprep.subr.mxu0 0.0
        %1332 = vmatpush1.msra.mxu0 0.0
        %1333 = vmatprep.subr.mxu0 0.0
        %1334 = vmatpush1.msra.mxu0 0.0
        %1335 = vmatprep.subr.mxu0 0.0
        %1336 = vmatpush1.msra.mxu0 0.0
        %1337 = vmatprep.subr.mxu0 0.0
        %1338 = vmatpush1.msra.mxu0 0.0
        %1339 = vmatprep.subr.mxu0 0.0
        %1340 = vmatpush1.msra.mxu0 0.0
        %1341 = vmatprep.subr.mxu0 0.0
        %1342 = vmatpush1.msra.mxu0 0.0
        %1343 = vmatprep.subr.mxu0 0.0
        %1344 = vmatpush1.msra.mxu0 0.0
        %1345 = vmatprep.subr.mxu0 0.0
        %1346 = vmatpush1.msra.mxu0 0.0
        %1347 = vmatprep.subr.mxu0 0.0
        %1348 = vmatpush1.msra.mxu0 0.0
        %1349 = vmatprep.subr.mxu0 0.0
        %1350 = vmatpush1.msra.mxu0 0.0
        %1351 = vmatprep.subr.mxu0 0.0
        %1352 = vmatpush1.msra.mxu0 0.0
        %1353 = vmatprep.subr.mxu0 0.0
        %1354 = vmatpush1.msra.mxu0 0.0
        %1355 = vmatprep.subr.mxu0 0.0
        %1356 = vmatpush1.msra.mxu0 0.0
        %1357 = vmatprep.mubr.f32.mxu0 0.0
        %1358 = vmatmul.mubr.f32.gmra.mrb[0].mxu0 %v1270
        %v1359 = vpop.f32.mrb[0].mxu0
        %v1360 = vadd.f32 0.0, %v1359
        %v1361 = vpop.f32.mrb[0].mxu0
        %1362 = vmatprep.mubr.f32.mxu0 0.0
        %1363 = vmatmul.mubr.f32.gmra.mrb[0].mxu0 %v1272
        %v1364 = vpop.f32.mrb[0].mxu0
        %v1365 = vadd.f32 0.0, %v1364
        %v1366 = vpop.f32.mrb[0].mxu0
        %1367 = vmatprep.mubr.f32.mxu0 0.0
        %1368 = vmatmul.mubr.f32.gmra.mrb[0].mxu0 %v1274
        %v1369 = vpop.f32.mrb[0].mxu0
        %v1370 = vadd.f32 0.0, %v1369
        %v1371 = vpop.f32.mrb[0].mxu0
        %1372 = vmatprep.mubr.f32.mxu0 0.0
        %1373 = vmatmul.mubr.f32.gmra.mrb[0].mxu0 %v1276
        %v1374 = vpop.f32.mrb[0].mxu0
        %v1375 = vadd.f32 0.0, %v1374
        %v1376 = vpop.f32.mrb[0].mxu0
        %1377 = vdwg.mxu0
        %v1378 = vadd.f32 %v1277, %v1360
        %v1379 = vadd.f32 %v1278, %v1365
        %v1380 = vadd.f32 %v1279, %v1370
        %v1381 = vadd.f32 %v1280, %v1375
        %v1382 = vrcp.pop %v1289
        %v1383 = vrcp.pop %v1290
        %v1384 = vrcp.pop %v1291
        %v1385 = vrcp.pop %v1292
        %v1386 = vmul.f32 %v1378, %v1382
        %v1387 = vmul.f32 %v1379, %v1383
        %v1388 = vmul.f32 %v1380, %v1384
        %v1389 = vmul.f32 %v1381, %v1385
        %1390 = vst.msk [vmem:[#allocation4] sm:$0xff] %vm1147, %v1386
        %1391 = vst.msk [vmem:[#allocation4 + $0x8] sm:$0xff] %vm1147, %v1387
        %1392 = vst.msk [vmem:[#allocation4 + $0x10] sm:$0xff] %vm1147, %v1388
        %1393 = vst.msk [vmem:[#allocation4 + $0x18] sm:$0xff] %vm1147, %v1389
        %v1394 = vld [vmem:[#allocation2 + $0x20] sm:$0xff]
        %v1395 = vld [vmem:[#allocation2 + $0x28] sm:$0xff]
        %v1396 = vld [vmem:[#allocation2 + $0x30] sm:$0xff]
        %v1397 = vld [vmem:[#allocation2 + $0x38] sm:$0xff]
        %v1398 = vld [vmem:[#allocation3] sm:$0xff]
        %v1399 = vld [vmem:[#allocation3 + $0x8] sm:$0xff]
        %v1400 = vld [vmem:[#allocation3 + $0x10] sm:$0xff]
        %v1401 = vld [vmem:[#allocation3 + $0x18] sm:$0xff]
        %v1402 = vld [vmem:[#allocation3 + $0x20] sm:$0xff]
        %v1403 = vld [vmem:[#allocation3 + $0x28] sm:$0xff]
        %v1404 = vld [vmem:[#allocation3 + $0x30] sm:$0xff]
        %v1405 = vld [vmem:[#allocation3 + $0x38] sm:$0xff]
        %v1406 = vld [vmem:[#allocation3 + $0x40] sm:$0xff]
        %v1407 = vld [vmem:[#allocation3 + $0x48] sm:$0xff]
        %v1408 = vld [vmem:[#allocation3 + $0x50] sm:$0xff]
        %v1409 = vld [vmem:[#allocation3 + $0x58] sm:$0xff]
        %v1410 = vld [vmem:[#allocation3 + $0x60] sm:$0xff]
        %v1411 = vld [vmem:[#allocation3 + $0x68] sm:$0xff]
        %v1412 = vld [vmem:[#allocation3 + $0x70] sm:$0xff]
        %v1413 = vld [vmem:[#allocation3 + $0x78] sm:$0xff]
        %1414 = vrot.lane.b32.xlu0 %v1123, 96
        %v1415 = vpop.permute.xlu0 %1414
        %1416 = vrot.lane.b32.xlu0 %v1124, 96
        %v1417 = vpop.permute.xlu0 %1416
        %1418 = vrot.lane.b32.xlu0 %v1125, 96
        %v1419 = vpop.permute.xlu0 %1418
        %1420 = vrot.lane.b32.xlu0 %v1126, 96
        %v1421 = vpop.permute.xlu0 %1420
        %v1422 = vsel %vm1147, %v1415, 0
        %v1424 = vsel %vm1147, %v1417, 0
        %v1426 = vsel %vm1147, %v1419, 0
        %v1428 = vsel %vm1147, %v1421, 0
        %1430 = vmatprep.subr.mxu0 0.0
        %1431 = vmatpush1.msra.mxu0 %v1394
        %1432 = vmatprep.subr.mxu0 0.0
        %1433 = vmatpush1.msra.mxu0 %v1395
        %1434 = vmatprep.subr.mxu0 0.0
        %1435 = vmatpush1.msra.mxu0 %v1396
        %1436 = vmatprep.subr.mxu0 0.0
        %1437 = vmatpush1.msra.mxu0 %v1397
        %1438 = vmatprep.subr.mxu0 0.0
        %1439 = vmatpush1.msra.mxu0 0.0
        %1440 = vmatprep.subr.mxu0 0.0
        %1441 = vmatpush1.msra.mxu0 0.0
        %1442 = vmatprep.subr.mxu0 0.0
        %1443 = vmatpush1.msra.mxu0 0.0
        %1444 = vmatprep.subr.mxu0 0.0
        %1445 = vmatpush1.msra.mxu0 0.0
        %1446 = vmatprep.subr.mxu0 0.0
        %1447 = vmatpush1.msra.mxu0 0.0
        %1448 = vmatprep.subr.mxu0 0.0
        %1449 = vmatpush1.msra.mxu0 0.0
        %1450 = vmatprep.subr.mxu0 0.0
        %1451 = vmatpush1.msra.mxu0 0.0
        %1452 = vmatprep.subr.mxu0 0.0
        %1453 = vmatpush1.msra.mxu0 0.0
        %1454 = vmatprep.subr.mxu0 0.0
        %1455 = vmatpush1.msra.mxu0 0.0
        %1456 = vmatprep.subr.mxu0 0.0
        %1457 = vmatpush1.msra.mxu0 0.0
        %1458 = vmatprep.subr.mxu0 0.0
        %1459 = vmatpush1.msra.mxu0 0.0
        %1460 = vmatprep.subr.mxu0 0.0
        %1461 = vmatpush1.msra.mxu0 0.0
        %1462 = vmatprep.subr.mxu0 0.0
        %1463 = vmatpush1.msra.mxu0 0.0
        %1464 = vmatprep.subr.mxu0 0.0
        %1465 = vmatpush1.msra.mxu0 0.0
        %1466 = vmatprep.subr.mxu0 0.0
        %1467 = vmatpush1.msra.mxu0 0.0
        %1468 = vmatprep.subr.mxu0 0.0
        %1469 = vmatpush1.msra.mxu0 0.0
        %1470 = vmatprep.subr.mxu0 0.0
        %1471 = vmatpush1.msra.mxu0 0.0
        %1472 = vmatprep.subr.mxu0 0.0
        %1473 = vmatpush1.msra.mxu0 0.0
        %1474 = vmatprep.subr.mxu0 0.0
        %1475 = vmatpush1.msra.mxu0 0.0
        %1476 = vmatprep.subr.mxu0 0.0
        %1477 = vmatpush1.msra.mxu0 0.0
        %1478 = vmatprep.subr.mxu0 0.0
        %1479 = vmatpush1.msra.mxu0 0.0
        %1480 = vmatprep.subr.mxu0 0.0
        %1481 = vmatpush1.msra.mxu0 0.0
        %1482 = vmatprep.subr.mxu0 0.0
        %1483 = vmatpush1.msra.mxu0 0.0
        %1484 = vmatprep.subr.mxu0 0.0
        %1485 = vmatpush1.msra.mxu0 0.0
        %1486 = vmatprep.subr.mxu0 0.0
        %1487 = vmatpush1.msra.mxu0 0.0
        %1488 = vmatprep.subr.mxu0 0.0
        %1489 = vmatpush1.msra.mxu0 0.0
        %1490 = vmatprep.subr.mxu0 0.0
        %1491 = vmatpush1.msra.mxu0 0.0
        %1492 = vmatprep.subr.mxu0 0.0
        %1493 = vmatpush1.msra.mxu0 0.0
        %1494 = vmatprep.mubr.f32.mxu0 0.0
        %1495 = vmatmul.mubr.f32.gmra.mrb[0].mxu0 %v1422
        %v1496 = vpop.f32.mrb[0].mxu0
        %v1497 = vadd.f32 0.0, %v1496
        %v1498 = vpop.f32.mrb[0].mxu0
        %1499 = vmatprep.mubr.f32.mxu0 0.0
        %1500 = vmatmul.mubr.f32.gmra.mrb[0].mxu0 %v1424
        %v1501 = vpop.f32.mrb[0].mxu0
        %v1502 = vadd.f32 0.0, %v1501
        %v1503 = vpop.f32.mrb[0].mxu0
        %1504 = vmatprep.mubr.f32.mxu0 0.0
        %1505 = vmatmul.mubr.f32.gmra.mrb[0].mxu0 %v1426
        %v1506 = vpop.f32.mrb[0].mxu0
        %v1507 = vadd.f32 0.0, %v1506
        %v1508 = vpop.f32.mrb[0].mxu0
        %1509 = vmatprep.mubr.f32.mxu0 0.0
        %1510 = vmatmul.mubr.f32.gmra.mrb[0].mxu0 %v1428
        %v1511 = vpop.f32.mrb[0].mxu0
        %v1512 = vadd.f32 0.0, %v1511
        %v1513 = vpop.f32.mrb[0].mxu0
        %1514 = vdwg.mxu0
        %1515 = vmax.xlane.f32.xlu0 %v1497
        %v1516 = vpop.xlane.xlu0 %1515
        %1517 = vmax.xlane.f32.xlu0 %v1502
        %v1518 = vpop.xlane.xlu0 %1517
        %1519 = vmax.xlane.f32.xlu0 %v1507
        %v1520 = vpop.xlane.xlu0 %1519
        %1521 = vmax.xlane.f32.xlu0 %v1512
        %v1522 = vpop.xlane.xlu0 %1521
        %v1523 = vsub.f32 -inf, %v1516
        %v1524 = vsub.f32 -inf, %v1518
        %v1525 = vsub.f32 -inf, %v1520
        %v1526 = vsub.f32 -inf, %v1522
        %v1527 = vmul.f32 %v1523, 1.442695
        %v1528 = vpow.pop %v1527
        %v1529 = vmul.f32 %v1524, 1.442695
        %v1530 = vpow.pop %v1529
        %v1531 = vmul.f32 %v1525, 1.442695
        %v1532 = vpow.pop %v1531
        %v1533 = vmul.f32 %v1526, 1.442695
        %v1534 = vpow.pop %v1533
        %v1535 = vsub.f32 %v1497, %v1516
        %v1536 = vsub.f32 %v1502, %v1518
        %v1537 = vsub.f32 %v1507, %v1520
        %v1538 = vsub.f32 %v1512, %v1522
        %v1539 = vmul.f32 %v1535, 1.442695
        %v1540 = vpow.pop %v1539
        %v1541 = vmul.f32 %v1536, 1.442695
        %v1542 = vpow.pop %v1541
        %v1543 = vmul.f32 %v1537, 1.442695
        %v1544 = vpow.pop %v1543
        %v1545 = vmul.f32 %v1538, 1.442695
        %v1546 = vpow.pop %v1545
        %v1547 = vmul.f32 %v1528, 0.0
        %v1548 = vmul.f32 %v1530, 0.0
        %v1549 = vmul.f32 %v1532, 0.0
        %v1550 = vmul.f32 %v1534, 0.0
        %1551 = vadd.xlane.f32.xlu0 %v1540
        %v1552 = vpop.xlane.xlu0 %1551
        %1553 = vadd.xlane.f32.xlu0 %v1542
        %v1554 = vpop.xlane.xlu0 %1553
        %1555 = vadd.xlane.f32.xlu0 %v1544
        %v1556 = vpop.xlane.xlu0 %1555
        %1557 = vadd.xlane.f32.xlu0 %v1546
        %v1558 = vpop.xlane.xlu0 %1557
        %v1559 = vadd.f32 %v1547, %v1552
        %v1560 = vadd.f32 %v1548, %v1554
        %v1561 = vadd.f32 %v1549, %v1556
        %v1562 = vadd.f32 %v1550, %v1558
        %1579 = vrot.lane.b32.xlu0 %v1398, 96
        %v1580 = vpop.permute.xlu0 %1579
        %1581 = vrot.lane.b32.xlu0 %v1399, 96
        %v1582 = vpop.permute.xlu0 %1581
        %1583 = vrot.lane.b32.xlu0 %v1400, 96
        %v1584 = vpop.permute.xlu0 %1583
        %1585 = vrot.lane.b32.xlu0 %v1401, 96
        %v1586 = vpop.permute.xlu0 %1585
        %1587 = vrot.lane.b32.xlu0 %v1402, 96
        %v1588 = vpop.permute.xlu0 %1587
        %1589 = vrot.lane.b32.xlu0 %v1403, 96
        %v1590 = vpop.permute.xlu0 %1589
        %1591 = vrot.lane.b32.xlu0 %v1404, 96
        %v1592 = vpop.permute.xlu0 %1591
        %1593 = vrot.lane.b32.xlu0 %v1405, 96
        %v1594 = vpop.permute.xlu0 %1593
        %1595 = vrot.lane.b32.xlu0 %v1406, 96
        %v1596 = vpop.permute.xlu0 %1595
        %1597 = vrot.lane.b32.xlu0 %v1407, 96
        %v1598 = vpop.permute.xlu0 %1597
        %1599 = vrot.lane.b32.xlu0 %v1408, 96
        %v1600 = vpop.permute.xlu0 %1599
        %1601 = vrot.lane.b32.xlu0 %v1409, 96
        %v1602 = vpop.permute.xlu0 %1601
        %1603 = vrot.lane.b32.xlu0 %v1410, 96
        %v1604 = vpop.permute.xlu0 %1603
        %1605 = vrot.lane.b32.xlu0 %v1411, 96
        %v1606 = vpop.permute.xlu0 %1605
        %1607 = vrot.lane.b32.xlu0 %v1412, 96
        %v1608 = vpop.permute.xlu0 %1607
        %1609 = vrot.lane.b32.xlu0 %v1413, 96
        %v1610 = vpop.permute.xlu0 %1609
        %1627 = vmatprep.subr.mxu0 0.0
        %1628 = vmatpush1.msra.mxu0 %v1580
        %1629 = vmatprep.subr.mxu0 0.0
        %1630 = vmatpush1.msra.mxu0 %v1582
        %1631 = vmatprep.subr.mxu0 0.0
        %1632 = vmatpush1.msra.mxu0 %v1584
        %1633 = vmatprep.subr.mxu0 0.0
        %1634 = vmatpush1.msra.mxu0 %v1586
        %1635 = vmatprep.subr.mxu0 0.0
        %1636 = vmatpush1.msra.mxu0 %v1588
        %1637 = vmatprep.subr.mxu0 0.0
        %1638 = vmatpush1.msra.mxu0 %v1590
        %1639 = vmatprep.subr.mxu0 0.0
        %1640 = vmatpush1.msra.mxu0 %v1592
        %1641 = vmatprep.subr.mxu0 0.0
        %1642 = vmatpush1.msra.mxu0 %v1594
        %1643 = vmatprep.subr.mxu0 0.0
        %1644 = vmatpush1.msra.mxu0 %v1596
        %1645 = vmatprep.subr.mxu0 0.0
        %1646 = vmatpush1.msra.mxu0 %v1598
        %1647 = vmatprep.subr.mxu0 0.0
        %1648 = vmatpush1.msra.mxu0 %v1600
        %1649 = vmatprep.subr.mxu0 0.0
        %1650 = vmatpush1.msra.mxu0 %v1602
        %1651 = vmatprep.subr.mxu0 0.0
        %1652 = vmatpush1.msra.mxu0 %v1604
        %1653 = vmatprep.subr.mxu0 0.0
        %1654 = vmatpush1.msra.mxu0 %v1606
        %1655 = vmatprep.subr.mxu0 0.0
        %1656 = vmatpush1.msra.mxu0 %v1608
        %1657 = vmatprep.subr.mxu0 0.0
        %1658 = vmatpush1.msra.mxu0 %v1610
        %1659 = vmatprep.subr.mxu0 0.0
        %1660 = vmatpush1.msra.mxu0 0.0
        %1661 = vmatprep.subr.mxu0 0.0
        %1662 = vmatpush1.msra.mxu0 0.0
        %1663 = vmatprep.subr.mxu0 0.0
        %1664 = vmatpush1.msra.mxu0 0.0
        %1665 = vmatprep.subr.mxu0 0.0
        %1666 = vmatpush1.msra.mxu0 0.0
        %1667 = vmatprep.subr.mxu0 0.0
        %1668 = vmatpush1.msra.mxu0 0.0
        %1669 = vmatprep.subr.mxu0 0.0
        %1670 = vmatpush1.msra.mxu0 0.0
        %1671 = vmatprep.subr.mxu0 0.0
        %1672 = vmatpush1.msra.mxu0 0.0
        %1673 = vmatprep.subr.mxu0 0.0
        %1674 = vmatpush1.msra.mxu0 0.0
        %1675 = vmatprep.subr.mxu0 0.0
        %1676 = vmatpush1.msra.mxu0 0.0
        %1677 = vmatprep.subr.mxu0 0.0
        %1678 = vmatpush1.msra.mxu0 0.0
        %1679 = vmatprep.subr.mxu0 0.0
        %1680 = vmatpush1.msra.mxu0 0.0
        %1681 = vmatprep.subr.mxu0 0.0
        %1682 = vmatpush1.msra.mxu0 0.0
        %1683 = vmatprep.subr.mxu0 0.0
        %1684 = vmatpush1.msra.mxu0 0.0
        %1685 = vmatprep.subr.mxu0 0.0
        %1686 = vmatpush1.msra.mxu0 0.0
        %1687 = vmatprep.subr.mxu0 0.0
        %1688 = vmatpush1.msra.mxu0 0.0
        %1689 = vmatprep.subr.mxu0 0.0
        %1690 = vmatpush1.msra.mxu0 0.0
        %1691 = vmatprep.mubr.f32.mxu0 0.0
        %1692 = vmatmul.mubr.f32.gmra.mrb[0].mxu0 %v1540
        %v1693 = vpop.f32.mrb[0].mxu0
        %v1694 = vadd.f32 0.0, %v1693
        %v1695 = vpop.f32.mrb[0].mxu0
        %1696 = vmatprep.mubr.f32.mxu0 0.0
        %1697 = vmatmul.mubr.f32.gmra.mrb[0].mxu0 %v1542
        %v1698 = vpop.f32.mrb[0].mxu0
        %v1699 = vadd.f32 0.0, %v1698
        %v1700 = vpop.f32.mrb[0].mxu0
        %1701 = vmatprep.mubr.f32.mxu0 0.0
        %1702 = vmatmul.mubr.f32.gmra.mrb[0].mxu0 %v1544
        %v1703 = vpop.f32.mrb[0].mxu0
        %v1704 = vadd.f32 0.0, %v1703
        %v1705 = vpop.f32.mrb[0].mxu0
        %1706 = vmatprep.mubr.f32.mxu0 0.0
        %1707 = vmatmul.mubr.f32.gmra.mrb[0].mxu0 %v1546
        %v1708 = vpop.f32.mrb[0].mxu0
        %v1709 = vadd.f32 0.0, %v1708
        %v1710 = vpop.f32.mrb[0].mxu0
        %1711 = vdwg.mxu0
        %v1712 = vadd.f32 %v1547, %v1694
        %v1713 = vadd.f32 %v1548, %v1699
        %v1714 = vadd.f32 %v1549, %v1704
        %v1715 = vadd.f32 %v1550, %v1709
        %v1716 = vrcp.pop %v1559
        %v1717 = vrcp.pop %v1560
        %v1718 = vrcp.pop %v1561
        %v1719 = vrcp.pop %v1562
        %v1720 = vmul.f32 %v1712, %v1716
        %v1721 = vmul.f32 %v1713, %v1717
        %v1722 = vmul.f32 %v1714, %v1718
        %v1723 = vmul.f32 %v1715, %v1719
        %1728 = vrot.lane.b32.xlu0 %v1720, 32
        %v1729 = vpop.permute.xlu0 %1728
        %1730 = vrot.lane.b32.xlu0 %v1721, 32
        %v1731 = vpop.permute.xlu0 %1730
        %1732 = vrot.lane.b32.xlu0 %v1722, 32
        %v1733 = vpop.permute.xlu0 %1732
        %1734 = vrot.lane.b32.xlu0 %v1723, 32
        %v1735 = vpop.permute.xlu0 %1734
        %vm1740 = vcmask 523520
        %1741 = vst.msk [vmem:[#allocation4] sm:$0xff] %vm1740, %v1729
        %1742 = vst.msk [vmem:[#allocation4 + $0x8] sm:$0xff] %vm1740, %v1731
        %1743 = vst.msk [vmem:[#allocation4 + $0x10] sm:$0xff] %vm1740, %v1733
        %1744 = vst.msk [vmem:[#allocation4 + $0x18] sm:$0xff] %vm1740, %v1735
        %v1745 = vld [vmem:[#allocation2 + $0x40] sm:$0xff]
        %v1746 = vld [vmem:[#allocation2 + $0x48] sm:$0xff]
        %v1747 = vld [vmem:[#allocation2 + $0x50] sm:$0xff]
        %v1748 = vld [vmem:[#allocation2 + $0x58] sm:$0xff]
        %v1749 = vld [vmem:[#allocation3] sm:$0xff]
        %v1750 = vld [vmem:[#allocation3 + $0x8] sm:$0xff]
        %v1751 = vld [vmem:[#allocation3 + $0x10] sm:$0xff]
        %v1752 = vld [vmem:[#allocation3 + $0x18] sm:$0xff]
        %v1753 = vld [vmem:[#allocation3 + $0x20] sm:$0xff]
        %v1754 = vld [vmem:[#allocation3 + $0x28] sm:$0xff]
        %v1755 = vld [vmem:[#allocation3 + $0x30] sm:$0xff]
        %v1756 = vld [vmem:[#allocation3 + $0x38] sm:$0xff]
        %v1757 = vld [vmem:[#allocation3 + $0x40] sm:$0xff]
        %v1758 = vld [vmem:[#allocation3 + $0x48] sm:$0xff]
        %v1759 = vld [vmem:[#allocation3 + $0x50] sm:$0xff]
        %v1760 = vld [vmem:[#allocation3 + $0x58] sm:$0xff]
        %v1761 = vld [vmem:[#allocation3 + $0x60] sm:$0xff]
        %v1762 = vld [vmem:[#allocation3 + $0x68] sm:$0xff]
        %v1763 = vld [vmem:[#allocation3 + $0x70] sm:$0xff]
        %v1764 = vld [vmem:[#allocation3 + $0x78] sm:$0xff]
        %1765 = vrot.lane.b32.xlu0 %v1123, 64
        %v1766 = vpop.permute.xlu0 %1765
        %1767 = vrot.lane.b32.xlu0 %v1124, 64
        %v1768 = vpop.permute.xlu0 %1767
        %1769 = vrot.lane.b32.xlu0 %v1125, 64
        %v1770 = vpop.permute.xlu0 %1769
        %1771 = vrot.lane.b32.xlu0 %v1126, 64
        %v1772 = vpop.permute.xlu0 %1771
        %v1773 = vsel %vm1147, %v1766, 0
        %v1775 = vsel %vm1147, %v1768, 0
        %v1777 = vsel %vm1147, %v1770, 0
        %v1779 = vsel %vm1147, %v1772, 0
        %1781 = vmatprep.subr.mxu0 0.0
        %1782 = vmatpush1.msra.mxu0 %v1745
        %1783 = vmatprep.subr.mxu0 0.0
        %1784 = vmatpush1.msra.mxu0 %v1746
        %1785 = vmatprep.subr.mxu0 0.0
        %1786 = vmatpush1.msra.mxu0 %v1747
        %1787 = vmatprep.subr.mxu0 0.0
        %1788 = vmatpush1.msra.mxu0 %v1748
        %1789 = vmatprep.subr.mxu0 0.0
        %1790 = vmatpush1.msra.mxu0 0.0
        %1791 = vmatprep.subr.mxu0 0.0
        %1792 = vmatpush1.msra.mxu0 0.0
        %1793 = vmatprep.subr.mxu0 0.0
        %1794 = vmatpush1.msra.mxu0 0.0
        %1795 = vmatprep.subr.mxu0 0.0
        %1796 = vmatpush1.msra.mxu0 0.0
        %1797 = vmatprep.subr.mxu0 0.0
        %1798 = vmatpush1.msra.mxu0 0.0
        %1799 = vmatprep.subr.mxu0 0.0
        %1800 = vmatpush1.msra.mxu0 0.0
        %1801 = vmatprep.subr.mxu0 0.0
        %1802 = vmatpush1.msra.mxu0 0.0
        %1803 = vmatprep.subr.mxu0 0.0
        %1804 = vmatpush1.msra.mxu0 0.0
        %1805 = vmatprep.subr.mxu0 0.0
        %1806 = vmatpush1.msra.mxu0 0.0
        %1807 = vmatprep.subr.mxu0 0.0
        %1808 = vmatpush1.msra.mxu0 0.0
        %1809 = vmatprep.subr.mxu0 0.0
        %1810 = vmatpush1.msra.mxu0 0.0
        %1811 = vmatprep.subr.mxu0 0.0
        %1812 = vmatpush1.msra.mxu0 0.0
        %1813 = vmatprep.subr.mxu0 0.0
        %1814 = vmatpush1.msra.mxu0 0.0
        %1815 = vmatprep.subr.mxu0 0.0
        %1816 = vmatpush1.msra.mxu0 0.0
        %1817 = vmatprep.subr.mxu0 0.0
        %1818 = vmatpush1.msra.mxu0 0.0
        %1819 = vmatprep.subr.mxu0 0.0
        %1820 = vmatpush1.msra.mxu0 0.0
        %1821 = vmatprep.subr.mxu0 0.0
        %1822 = vmatpush1.msra.mxu0 0.0
        %1823 = vmatprep.subr.mxu0 0.0
        %1824 = vmatpush1.msra.mxu0 0.0
        %1825 = vmatprep.subr.mxu0 0.0
        %1826 = vmatpush1.msra.mxu0 0.0
        %1827 = vmatprep.subr.mxu0 0.0
        %1828 = vmatpush1.msra.mxu0 0.0
        %1829 = vmatprep.subr.mxu0 0.0
        %1830 = vmatpush1.msra.mxu0 0.0
        %1831 = vmatprep.subr.mxu0 0.0
        %1832 = vmatpush1.msra.mxu0 0.0
        %1833 = vmatprep.subr.mxu0 0.0
        %1834 = vmatpush1.msra.mxu0 0.0
        %1835 = vmatprep.subr.mxu0 0.0
        %1836 = vmatpush1.msra.mxu0 0.0
        %1837 = vmatprep.subr.mxu0 0.0
        %1838 = vmatpush1.msra.mxu0 0.0
        %1839 = vmatprep.subr.mxu0 0.0
        %1840 = vmatpush1.msra.mxu0 0.0
        %1841 = vmatprep.subr.mxu0 0.0
        %1842 = vmatpush1.msra.mxu0 0.0
        %1843 = vmatprep.subr.mxu0 0.0
        %1844 = vmatpush1.msra.mxu0 0.0
        %1845 = vmatprep.mubr.f32.mxu0 0.0
        %1846 = vmatmul.mubr.f32.gmra.mrb[0].mxu0 %v1773
        %v1847 = vpop.f32.mrb[0].mxu0
        %v1848 = vadd.f32 0.0, %v1847
        %v1849 = vpop.f32.mrb[0].mxu0
        %1850 = vmatprep.mubr.f32.mxu0 0.0
        %1851 = vmatmul.mubr.f32.gmra.mrb[0].mxu0 %v1775
        %v1852 = vpop.f32.mrb[0].mxu0
        %v1853 = vadd.f32 0.0, %v1852
        %v1854 = vpop.f32.mrb[0].mxu0
        %1855 = vmatprep.mubr.f32.mxu0 0.0
        %1856 = vmatmul.mubr.f32.gmra.mrb[0].mxu0 %v1777
        %v1857 = vpop.f32.mrb[0].mxu0
        %v1858 = vadd.f32 0.0, %v1857
        %v1859 = vpop.f32.mrb[0].mxu0
        %1860 = vmatprep.mubr.f32.mxu0 0.0
        %1861 = vmatmul.mubr.f32.gmra.mrb[0].mxu0 %v1779
        %v1862 = vpop.f32.mrb[0].mxu0
        %v1863 = vadd.f32 0.0, %v1862
        %v1864 = vpop.f32.mrb[0].mxu0
        %1865 = vdwg.mxu0
        %1866 = vmax.xlane.f32.xlu0 %v1848
        %v1867 = vpop.xlane.xlu0 %1866
        %1868 = vmax.xlane.f32.xlu0 %v1853
        %v1869 = vpop.xlane.xlu0 %1868
        %1870 = vmax.xlane.f32.xlu0 %v1858
        %v1871 = vpop.xlane.xlu0 %1870
        %1872 = vmax.xlane.f32.xlu0 %v1863
        %v1873 = vpop.xlane.xlu0 %1872
        %v1874 = vsub.f32 -inf, %v1867
        %v1875 = vsub.f32 -inf, %v1869
        %v1876 = vsub.f32 -inf, %v1871
        %v1877 = vsub.f32 -inf, %v1873
        %v1878 = vmul.f32 %v1874, 1.442695
        %v1879 = vpow.pop %v1878
        %v1880 = vmul.f32 %v1875, 1.442695
        %v1881 = vpow.pop %v1880
        %v1882 = vmul.f32 %v1876, 1.442695
        %v1883 = vpow.pop %v1882
        %v1884 = vmul.f32 %v1877, 1.442695
        %v1885 = vpow.pop %v1884
        %v1886 = vsub.f32 %v1848, %v1867
        %v1887 = vsub.f32 %v1853, %v1869
        %v1888 = vsub.f32 %v1858, %v1871
        %v1889 = vsub.f32 %v1863, %v1873
        %v1890 = vmul.f32 %v1886, 1.442695
        %v1891 = vpow.pop %v1890
        %v1892 = vmul.f32 %v1887, 1.442695
        %v1893 = vpow.pop %v1892
        %v1894 = vmul.f32 %v1888, 1.442695
        %v1895 = vpow.pop %v1894
        %v1896 = vmul.f32 %v1889, 1.442695
        %v1897 = vpow.pop %v1896
        %v1898 = vmul.f32 %v1879, 0.0
        %v1899 = vmul.f32 %v1881, 0.0
        %v1900 = vmul.f32 %v1883, 0.0
        %v1901 = vmul.f32 %v1885, 0.0
        %1902 = vadd.xlane.f32.xlu0 %v1891
        %v1903 = vpop.xlane.xlu0 %1902
        %1904 = vadd.xlane.f32.xlu0 %v1893
        %v1905 = vpop.xlane.xlu0 %1904
        %1906 = vadd.xlane.f32.xlu0 %v1895
        %v1907 = vpop.xlane.xlu0 %1906
        %1908 = vadd.xlane.f32.xlu0 %v1897
        %v1909 = vpop.xlane.xlu0 %1908
        %v1910 = vadd.f32 %v1898, %v1903
        %v1911 = vadd.f32 %v1899, %v1905
        %v1912 = vadd.f32 %v1900, %v1907
        %v1913 = vadd.f32 %v1901, %v1909
        %1930 = vrot.lane.b32.xlu0 %v1749, 64
        %v1931 = vpop.permute.xlu0 %1930
        %1932 = vrot.lane.b32.xlu0 %v1750, 64
        %v1933 = vpop.permute.xlu0 %1932
        %1934 = vrot.lane.b32.xlu0 %v1751, 64
        %v1935 = vpop.permute.xlu0 %1934
        %1936 = vrot.lane.b32.xlu0 %v1752, 64
        %v1937 = vpop.permute.xlu0 %1936
        %1938 = vrot.lane.b32.xlu0 %v1753, 64
        %v1939 = vpop.permute.xlu0 %1938
        %1940 = vrot.lane.b32.xlu0 %v1754, 64
        %v1941 = vpop.permute.xlu0 %1940
        %1942 = vrot.lane.b32.xlu0 %v1755, 64
        %v1943 = vpop.permute.xlu0 %1942
        %1944 = vrot.lane.b32.xlu0 %v1756, 64
        %v1945 = vpop.permute.xlu0 %1944
        %1946 = vrot.lane.b32.xlu0 %v1757, 64
        %v1947 = vpop.permute.xlu0 %1946
        %1948 = vrot.lane.b32.xlu0 %v1758, 64
        %v1949 = vpop.permute.xlu0 %1948
        %1950 = vrot.lane.b32.xlu0 %v1759, 64
        %v1951 = vpop.permute.xlu0 %1950
        %1952 = vrot.lane.b32.xlu0 %v1760, 64
        %v1953 = vpop.permute.xlu0 %1952
        %1954 = vrot.lane.b32.xlu0 %v1761, 64
        %v1955 = vpop.permute.xlu0 %1954
        %1956 = vrot.lane.b32.xlu0 %v1762, 64
        %v1957 = vpop.permute.xlu0 %1956
        %1958 = vrot.lane.b32.xlu0 %v1763, 64
        %v1959 = vpop.permute.xlu0 %1958
        %1960 = vrot.lane.b32.xlu0 %v1764, 64
        %v1961 = vpop.permute.xlu0 %1960
        %1978 = vmatprep.subr.mxu0 0.0
        %1979 = vmatpush1.msra.mxu0 %v1931
        %1980 = vmatprep.subr.mxu0 0.0
        %1981 = vmatpush1.msra.mxu0 %v1933
        %1982 = vmatprep.subr.mxu0 0.0
        %1983 = vmatpush1.msra.mxu0 %v1935
        %1984 = vmatprep.subr.mxu0 0.0
        %1985 = vmatpush1.msra.mxu0 %v1937
        %1986 = vmatprep.subr.mxu0 0.0
        %1987 = vmatpush1.msra.mxu0 %v1939
        %1988 = vmatprep.subr.mxu0 0.0
        %1989 = vmatpush1.msra.mxu0 %v1941
        %1990 = vmatprep.subr.mxu0 0.0
        %1991 = vmatpush1.msra.mxu0 %v1943
        %1992 = vmatprep.subr.mxu0 0.0
        %1993 = vmatpush1.msra.mxu0 %v1945
        %1994 = vmatprep.subr.mxu0 0.0
        %1995 = vmatpush1.msra.mxu0 %v1947
        %1996 = vmatprep.subr.mxu0 0.0
        %1997 = vmatpush1.msra.mxu0 %v1949
        %1998 = vmatprep.subr.mxu0 0.0
        %1999 = vmatpush1.msra.mxu0 %v1951
        %2000 = vmatprep.subr.mxu0 0.0
        %2001 = vmatpush1.msra.mxu0 %v1953
        %2002 = vmatprep.subr.mxu0 0.0
        %2003 = vmatpush1.msra.mxu0 %v1955
        %2004 = vmatprep.subr.mxu0 0.0
        %2005 = vmatpush1.msra.mxu0 %v1957
        %2006 = vmatprep.subr.mxu0 0.0
        %2007 = vmatpush1.msra.mxu0 %v1959
        %2008 = vmatprep.subr.mxu0 0.0
        %2009 = vmatpush1.msra.mxu0 %v1961
        %2010 = vmatprep.subr.mxu0 0.0
        %2011 = vmatpush1.msra.mxu0 0.0
        %2012 = vmatprep.subr.mxu0 0.0
        %2013 = vmatpush1.msra.mxu0 0.0
        %2014 = vmatprep.subr.mxu0 0.0
        %2015 = vmatpush1.msra.mxu0 0.0
        %2016 = vmatprep.subr.mxu0 0.0
        %2017 = vmatpush1.msra.mxu0 0.0
        %2018 = vmatprep.subr.mxu0 0.0
        %2019 = vmatpush1.msra.mxu0 0.0
        %2020 = vmatprep.subr.mxu0 0.0
        %2021 = vmatpush1.msra.mxu0 0.0
        %2022 = vmatprep.subr.mxu0 0.0
        %2023 = vmatpush1.msra.mxu0 0.0
        %2024 = vmatprep.subr.mxu0 0.0
        %2025 = vmatpush1.msra.mxu0 0.0
        %2026 = vmatprep.subr.mxu0 0.0
        %2027 = vmatpush1.msra.mxu0 0.0
        %2028 = vmatprep.subr.mxu0 0.0
        %2029 = vmatpush1.msra.mxu0 0.0
        %2030 = vmatprep.subr.mxu0 0.0
        %2031 = vmatpush1.msra.mxu0 0.0
        %2032 = vmatprep.subr.mxu0 0.0
        %2033 = vmatpush1.msra.mxu0 0.0
        %2034 = vmatprep.subr.mxu0 0.0
        %2035 = vmatpush1.msra.mxu0 0.0
        %2036 = vmatprep.subr.mxu0 0.0
        %2037 = vmatpush1.msra.mxu0 0.0
        %2038 = vmatprep.subr.mxu0 0.0
        %2039 = vmatpush1.msra.mxu0 0.0
        %2040 = vmatprep.subr.mxu0 0.0
        %2041 = vmatpush1.msra.mxu0 0.0
        %2042 = vmatprep.mubr.f32.mxu0 0.0
        %2043 = vmatmul.mubr.f32.gmra.mrb[0].mxu0 %v1891
        %v2044 = vpop.f32.mrb[0].mxu0
        %v2045 = vadd.f32 0.0, %v2044
        %v2046 = vpop.f32.mrb[0].mxu0
        %2047 = vmatprep.mubr.f32.mxu0 0.0
        %2048 = vmatmul.mubr.f32.gmra.mrb[0].mxu0 %v1893
        %v2049 = vpop.f32.mrb[0].mxu0
        %v2050 = vadd.f32 0.0, %v2049
        %v2051 = vpop.f32.mrb[0].mxu0
        %2052 = vmatprep.mubr.f32.mxu0 0.0
        %2053 = vmatmul.mubr.f32.gmra.mrb[0].mxu0 %v1895
        %v2054 = vpop.f32.mrb[0].mxu0
        %v2055 = vadd.f32 0.0, %v2054
        %v2056 = vpop.f32.mrb[0].mxu0
        %2057 = vmatprep.mubr.f32.mxu0 0.0
        %2058 = vmatmul.mubr.f32.gmra.mrb[0].mxu0 %v1897
        %v2059 = vpop.f32.mrb[0].mxu0
        %v2060 = vadd.f32 0.0, %v2059
        %v2061 = vpop.f32.mrb[0].mxu0
        %2062 = vdwg.mxu0
        %v2063 = vadd.f32 %v1898, %v2045
        %v2064 = vadd.f32 %v1899, %v2050
        %v2065 = vadd.f32 %v1900, %v2055
        %v2066 = vadd.f32 %v1901, %v2060
        %v2067 = vrcp.pop %v1910
        %v2068 = vrcp.pop %v1911
        %v2069 = vrcp.pop %v1912
        %v2070 = vrcp.pop %v1913
        %v2071 = vmul.f32 %v2063, %v2067
        %v2072 = vmul.f32 %v2064, %v2068
        %v2073 = vmul.f32 %v2065, %v2069
        %v2074 = vmul.f32 %v2066, %v2070
        %2079 = vrot.lane.b32.xlu0 %v2071, 64
        %v2080 = vpop.permute.xlu0 %2079
        %2081 = vrot.lane.b32.xlu0 %v2072, 64
        %v2082 = vpop.permute.xlu0 %2081
        %2083 = vrot.lane.b32.xlu0 %v2073, 64
        %v2084 = vpop.permute.xlu0 %2083
        %2085 = vrot.lane.b32.xlu0 %v2074, 64
        %v2086 = vpop.permute.xlu0 %2085
        %vm2091 = vcmask 785920
        %2092 = vst.msk [vmem:[#allocation4] sm:$0xff] %vm2091, %v2080
        %2093 = vst.msk [vmem:[#allocation4 + $0x8] sm:$0xff] %vm2091, %v2082
        %2094 = vst.msk [vmem:[#allocation4 + $0x10] sm:$0xff] %vm2091, %v2084
        %2095 = vst.msk [vmem:[#allocation4 + $0x18] sm:$0xff] %vm2091, %v2086
        %v2096 = vld [vmem:[#allocation2 + $0x60] sm:$0xff]
        %v2097 = vld [vmem:[#allocation2 + $0x68] sm:$0xff]
        %v2098 = vld [vmem:[#allocation2 + $0x70] sm:$0xff]
        %v2099 = vld [vmem:[#allocation2 + $0x78] sm:$0xff]
        %v2100 = vld [vmem:[#allocation3] sm:$0xff]
        %v2101 = vld [vmem:[#allocation3 + $0x8] sm:$0xff]
        %v2102 = vld [vmem:[#allocation3 + $0x10] sm:$0xff]
        %v2103 = vld [vmem:[#allocation3 + $0x18] sm:$0xff]
        %v2104 = vld [vmem:[#allocation3 + $0x20] sm:$0xff]
        %v2105 = vld [vmem:[#allocation3 + $0x28] sm:$0xff]
        %v2106 = vld [vmem:[#allocation3 + $0x30] sm:$0xff]
        %v2107 = vld [vmem:[#allocation3 + $0x38] sm:$0xff]
        %v2108 = vld [vmem:[#allocation3 + $0x40] sm:$0xff]
        %v2109 = vld [vmem:[#allocation3 + $0x48] sm:$0xff]
        %v2110 = vld [vmem:[#allocation3 + $0x50] sm:$0xff]
        %v2111 = vld [vmem:[#allocation3 + $0x58] sm:$0xff]
        %v2112 = vld [vmem:[#allocation3 + $0x60] sm:$0xff]
        %v2113 = vld [vmem:[#allocation3 + $0x68] sm:$0xff]
        %v2114 = vld [vmem:[#allocation3 + $0x70] sm:$0xff]
        %v2115 = vld [vmem:[#allocation3 + $0x78] sm:$0xff]
        %2116 = vrot.lane.b32.xlu0 %v1123, 32
        %v2117 = vpop.permute.xlu0 %2116
        %2118 = vrot.lane.b32.xlu0 %v1124, 32
        %v2119 = vpop.permute.xlu0 %2118
        %2120 = vrot.lane.b32.xlu0 %v1125, 32
        %v2121 = vpop.permute.xlu0 %2120
        %2122 = vrot.lane.b32.xlu0 %v1126, 32
        %v2123 = vpop.permute.xlu0 %2122
        %v2124 = vsel %vm1147, %v2117, 0
        %v2126 = vsel %vm1147, %v2119, 0
        %v2128 = vsel %vm1147, %v2121, 0
        %v2130 = vsel %vm1147, %v2123, 0
        %2132 = vmatprep.subr.mxu0 0.0
        %2133 = vmatpush1.msra.mxu0 %v2096
        %2134 = vmatprep.subr.mxu0 0.0
        %2135 = vmatpush1.msra.mxu0 %v2097
        %2136 = vmatprep.subr.mxu0 0.0
        %2137 = vmatpush1.msra.mxu0 %v2098
        %2138 = vmatprep.subr.mxu0 0.0
        %2139 = vmatpush1.msra.mxu0 %v2099
        %2140 = vmatprep.subr.mxu0 0.0
        %2141 = vmatpush1.msra.mxu0 0.0
        %2142 = vmatprep.subr.mxu0 0.0
        %2143 = vmatpush1.msra.mxu0 0.0
        %2144 = vmatprep.subr.mxu0 0.0
        %2145 = vmatpush1.msra.mxu0 0.0
        %2146 = vmatprep.subr.mxu0 0.0
        %2147 = vmatpush1.msra.mxu0 0.0
        %2148 = vmatprep.subr.mxu0 0.0
        %2149 = vmatpush1.msra.mxu0 0.0
        %2150 = vmatprep.subr.mxu0 0.0
        %2151 = vmatpush1.msra.mxu0 0.0
        %2152 = vmatprep.subr.mxu0 0.0
        %2153 = vmatpush1.msra.mxu0 0.0
        %2154 = vmatprep.subr.mxu0 0.0
        %2155 = vmatpush1.msra.mxu0 0.0
        %2156 = vmatprep.subr.mxu0 0.0
        %2157 = vmatpush1.msra.mxu0 0.0
        %2158 = vmatprep.subr.mxu0 0.0
        %2159 = vmatpush1.msra.mxu0 0.0
        %2160 = vmatprep.subr.mxu0 0.0
        %2161 = vmatpush1.msra.mxu0 0.0
        %2162 = vmatprep.subr.mxu0 0.0
        %2163 = vmatpush1.msra.mxu0 0.0
        %2164 = vmatprep.subr.mxu0 0.0
        %2165 = vmatpush1.msra.mxu0 0.0
        %2166 = vmatprep.subr.mxu0 0.0
        %2167 = vmatpush1.msra.mxu0 0.0
        %2168 = vmatprep.subr.mxu0 0.0
        %2169 = vmatpush1.msra.mxu0 0.0
        %2170 = vmatprep.subr.mxu0 0.0
        %2171 = vmatpush1.msra.mxu0 0.0
        %2172 = vmatprep.subr.mxu0 0.0
        %2173 = vmatpush1.msra.mxu0 0.0
        %2174 = vmatprep.subr.mxu0 0.0
        %2175 = vmatpush1.msra.mxu0 0.0
        %2176 = vmatprep.subr.mxu0 0.0
        %2177 = vmatpush1.msra.mxu0 0.0
        %2178 = vmatprep.subr.mxu0 0.0
        %2179 = vmatpush1.msra.mxu0 0.0
        %2180 = vmatprep.subr.mxu0 0.0
        %2181 = vmatpush1.msra.mxu0 0.0
        %2182 = vmatprep.subr.mxu0 0.0
        %2183 = vmatpush1.msra.mxu0 0.0
        %2184 = vmatprep.subr.mxu0 0.0
        %2185 = vmatpush1.msra.mxu0 0.0
        %2186 = vmatprep.subr.mxu0 0.0
        %2187 = vmatpush1.msra.mxu0 0.0
        %2188 = vmatprep.subr.mxu0 0.0
        %2189 = vmatpush1.msra.mxu0 0.0
        %2190 = vmatprep.subr.mxu0 0.0
        %2191 = vmatpush1.msra.mxu0 0.0
        %2192 = vmatprep.subr.mxu0 0.0
        %2193 = vmatpush1.msra.mxu0 0.0
        %2194 = vmatprep.subr.mxu0 0.0
        %2195 = vmatpush1.msra.mxu0 0.0
        %2196 = vmatprep.mubr.f32.mxu0 0.0
        %2197 = vmatmul.mubr.f32.gmra.mrb[0].mxu0 %v2124
        %v2198 = vpop.f32.mrb[0].mxu0
        %v2199 = vadd.f32 0.0, %v2198
        %v2200 = vpop.f32.mrb[0].mxu0
        %2201 = vmatprep.mubr.f32.mxu0 0.0
        %2202 = vmatmul.mubr.f32.gmra.mrb[0].mxu0 %v2126
        %v2203 = vpop.f32.mrb[0].mxu0
        %v2204 = vadd.f32 0.0, %v2203
        %v2205 = vpop.f32.mrb[0].mxu0
        %2206 = vmatprep.mubr.f32.mxu0 0.0
        %2207 = vmatmul.mubr.f32.gmra.mrb[0].mxu0 %v2128
        %v2208 = vpop.f32.mrb[0].mxu0
        %v2209 = vadd.f32 0.0, %v2208
        %v2210 = vpop.f32.mrb[0].mxu0
        %2211 = vmatprep.mubr.f32.mxu0 0.0
        %2212 = vmatmul.mubr.f32.gmra.mrb[0].mxu0 %v2130
        %v2213 = vpop.f32.mrb[0].mxu0
        %v2214 = vadd.f32 0.0, %v2213
        %v2215 = vpop.f32.mrb[0].mxu0
        %2216 = vdwg.mxu0
        %2217 = vmax.xlane.f32.xlu0 %v2199
        %v2218 = vpop.xlane.xlu0 %2217
        %2219 = vmax.xlane.f32.xlu0 %v2204
        %v2220 = vpop.xlane.xlu0 %2219
        %2221 = vmax.xlane.f32.xlu0 %v2209
        %v2222 = vpop.xlane.xlu0 %2221
        %2223 = vmax.xlane.f32.xlu0 %v2214
        %v2224 = vpop.xlane.xlu0 %2223
        %v2225 = vsub.f32 -inf, %v2218
        %v2226 = vsub.f32 -inf, %v2220
        %v2227 = vsub.f32 -inf, %v2222
        %v2228 = vsub.f32 -inf, %v2224
        %v2229 = vmul.f32 %v2225, 1.442695
        %v2230 = vpow.pop %v2229
        %v2231 = vmul.f32 %v2226, 1.442695
        %v2232 = vpow.pop %v2231
        %v2233 = vmul.f32 %v2227, 1.442695
        %v2234 = vpow.pop %v2233
        %v2235 = vmul.f32 %v2228, 1.442695
        %v2236 = vpow.pop %v2235
        %v2237 = vsub.f32 %v2199, %v2218
        %v2238 = vsub.f32 %v2204, %v2220
        %v2239 = vsub.f32 %v2209, %v2222
        %v2240 = vsub.f32 %v2214, %v2224
        %v2241 = vmul.f32 %v2237, 1.442695
        %v2242 = vpow.pop %v2241
        %v2243 = vmul.f32 %v2238, 1.442695
        %v2244 = vpow.pop %v2243
        %v2245 = vmul.f32 %v2239, 1.442695
        %v2246 = vpow.pop %v2245
        %v2247 = vmul.f32 %v2240, 1.442695
        %v2248 = vpow.pop %v2247
        %v2249 = vmul.f32 %v2230, 0.0
        %v2250 = vmul.f32 %v2232, 0.0
        %v2251 = vmul.f32 %v2234, 0.0
        %v2252 = vmul.f32 %v2236, 0.0
        %2253 = vadd.xlane.f32.xlu0 %v2242
        %v2254 = vpop.xlane.xlu0 %2253
        %2255 = vadd.xlane.f32.xlu0 %v2244
        %v2256 = vpop.xlane.xlu0 %2255
        %2257 = vadd.xlane.f32.xlu0 %v2246
        %v2258 = vpop.xlane.xlu0 %2257
        %2259 = vadd.xlane.f32.xlu0 %v2248
        %v2260 = vpop.xlane.xlu0 %2259
        %v2261 = vadd.f32 %v2249, %v2254
        %v2262 = vadd.f32 %v2250, %v2256
        %v2263 = vadd.f32 %v2251, %v2258
        %v2264 = vadd.f32 %v2252, %v2260
        %2281 = vrot.lane.b32.xlu0 %v2100, 32
        %v2282 = vpop.permute.xlu0 %2281
        %2283 = vrot.lane.b32.xlu0 %v2101, 32
        %v2284 = vpop.permute.xlu0 %2283
        %2285 = vrot.lane.b32.xlu0 %v2102, 32
        %v2286 = vpop.permute.xlu0 %2285
        %2287 = vrot.lane.b32.xlu0 %v2103, 32
        %v2288 = vpop.permute.xlu0 %2287
        %2289 = vrot.lane.b32.xlu0 %v2104, 32
        %v2290 = vpop.permute.xlu0 %2289
        %2291 = vrot.lane.b32.xlu0 %v2105, 32
        %v2292 = vpop.permute.xlu0 %2291
        %2293 = vrot.lane.b32.xlu0 %v2106, 32
        %v2294 = vpop.permute.xlu0 %2293
        %2295 = vrot.lane.b32.xlu0 %v2107, 32
        %v2296 = vpop.permute.xlu0 %2295
        %2297 = vrot.lane.b32.xlu0 %v2108, 32
        %v2298 = vpop.permute.xlu0 %2297
        %2299 = vrot.lane.b32.xlu0 %v2109, 32
        %v2300 = vpop.permute.xlu0 %2299
        %2301 = vrot.lane.b32.xlu0 %v2110, 32
        %v2302 = vpop.permute.xlu0 %2301
        %2303 = vrot.lane.b32.xlu0 %v2111, 32
        %v2304 = vpop.permute.xlu0 %2303
        %2305 = vrot.lane.b32.xlu0 %v2112, 32
        %v2306 = vpop.permute.xlu0 %2305
        %2307 = vrot.lane.b32.xlu0 %v2113, 32
        %v2308 = vpop.permute.xlu0 %2307
        %2309 = vrot.lane.b32.xlu0 %v2114, 32
        %v2310 = vpop.permute.xlu0 %2309
        %2311 = vrot.lane.b32.xlu0 %v2115, 32
        %v2312 = vpop.permute.xlu0 %2311
        %2329 = vmatprep.subr.mxu0 0.0
        %2330 = vmatpush1.msra.mxu0 %v2282
        %2331 = vmatprep.subr.mxu0 0.0
        %2332 = vmatpush1.msra.mxu0 %v2284
        %2333 = vmatprep.subr.mxu0 0.0
        %2334 = vmatpush1.msra.mxu0 %v2286
        %2335 = vmatprep.subr.mxu0 0.0
        %2336 = vmatpush1.msra.mxu0 %v2288
        %2337 = vmatprep.subr.mxu0 0.0
        %2338 = vmatpush1.msra.mxu0 %v2290
        %2339 = vmatprep.subr.mxu0 0.0
        %2340 = vmatpush1.msra.mxu0 %v2292
        %2341 = vmatprep.subr.mxu0 0.0
        %2342 = vmatpush1.msra.mxu0 %v2294
        %2343 = vmatprep.subr.mxu0 0.0
        %2344 = vmatpush1.msra.mxu0 %v2296
        %2345 = vmatprep.subr.mxu0 0.0
        %2346 = vmatpush1.msra.mxu0 %v2298
        %2347 = vmatprep.subr.mxu0 0.0
        %2348 = vmatpush1.msra.mxu0 %v2300
        %2349 = vmatprep.subr.mxu0 0.0
        %2350 = vmatpush1.msra.mxu0 %v2302
        %2351 = vmatprep.subr.mxu0 0.0
        %2352 = vmatpush1.msra.mxu0 %v2304
        %2353 = vmatprep.subr.mxu0 0.0
        %2354 = vmatpush1.msra.mxu0 %v2306
        %2355 = vmatprep.subr.mxu0 0.0
        %2356 = vmatpush1.msra.mxu0 %v2308
        %2357 = vmatprep.subr.mxu0 0.0
        %2358 = vmatpush1.msra.mxu0 %v2310
        %2359 = vmatprep.subr.mxu0 0.0
        %2360 = vmatpush1.msra.mxu0 %v2312
        %2361 = vmatprep.subr.mxu0 0.0
        %2362 = vmatpush1.msra.mxu0 0.0
        %2363 = vmatprep.subr.mxu0 0.0
        %2364 = vmatpush1.msra.mxu0 0.0
        %2365 = vmatprep.subr.mxu0 0.0
        %2366 = vmatpush1.msra.mxu0 0.0
        %2367 = vmatprep.subr.mxu0 0.0
        %2368 = vmatpush1.msra.mxu0 0.0
        %2369 = vmatprep.subr.mxu0 0.0
        %2370 = vmatpush1.msra.mxu0 0.0
        %2371 = vmatprep.subr.mxu0 0.0
        %2372 = vmatpush1.msra.mxu0 0.0
        %2373 = vmatprep.subr.mxu0 0.0
        %2374 = vmatpush1.msra.mxu0 0.0
        %2375 = vmatprep.subr.mxu0 0.0
        %2376 = vmatpush1.msra.mxu0 0.0
        %2377 = vmatprep.subr.mxu0 0.0
        %2378 = vmatpush1.msra.mxu0 0.0
        %2379 = vmatprep.subr.mxu0 0.0
        %2380 = vmatpush1.msra.mxu0 0.0
        %2381 = vmatprep.subr.mxu0 0.0
        %2382 = vmatpush1.msra.mxu0 0.0
        %2383 = vmatprep.subr.mxu0 0.0
        %2384 = vmatpush1.msra.mxu0 0.0
        %2385 = vmatprep.subr.mxu0 0.0
        %2386 = vmatpush1.msra.mxu0 0.0
        %2387 = vmatprep.subr.mxu0 0.0
        %2388 = vmatpush1.msra.mxu0 0.0
        %2389 = vmatprep.subr.mxu0 0.0
        %2390 = vmatpush1.msra.mxu0 0.0
        %2391 = vmatprep.subr.mxu0 0.0
        %2392 = vmatpush1.msra.mxu0 0.0
        %2393 = vmatprep.mubr.f32.mxu0 0.0
        %2394 = vmatmul.mubr.f32.gmra.mrb[0].mxu0 %v2242
        %v2395 = vpop.f32.mrb[0].mxu0
        %v2396 = vadd.f32 0.0, %v2395
        %v2397 = vpop.f32.mrb[0].mxu0
        %2398 = vmatprep.mubr.f32.mxu0 0.0
        %2399 = vmatmul.mubr.f32.gmra.mrb[0].mxu0 %v2244
        %v2400 = vpop.f32.mrb[0].mxu0
        %v2401 = vadd.f32 0.0, %v2400
        %v2402 = vpop.f32.mrb[0].mxu0
        %2403 = vmatprep.mubr.f32.mxu0 0.0
        %2404 = vmatmul.mubr.f32.gmra.mrb[0].mxu0 %v2246
        %v2405 = vpop.f32.mrb[0].mxu0
        %v2406 = vadd.f32 0.0, %v2405
        %v2407 = vpop.f32.mrb[0].mxu0
        %2408 = vmatprep.mubr.f32.mxu0 0.0
        %2409 = vmatmul.mubr.f32.gmra.mrb[0].mxu0 %v2248
        %v2410 = vpop.f32.mrb[0].mxu0
        %v2411 = vadd.f32 0.0, %v2410
        %v2412 = vpop.f32.mrb[0].mxu0
        %2413 = vdwg.mxu0
        %v2414 = vadd.f32 %v2249, %v2396
        %v2415 = vadd.f32 %v2250, %v2401
        %v2416 = vadd.f32 %v2251, %v2406
        %v2417 = vadd.f32 %v2252, %v2411
        %v2418 = vrcp.pop %v2261
        %v2419 = vrcp.pop %v2262
        %v2420 = vrcp.pop %v2263
        %v2421 = vrcp.pop %v2264
        %v2422 = vmul.f32 %v2414, %v2418
        %v2423 = vmul.f32 %v2415, %v2419
        %v2424 = vmul.f32 %v2416, %v2420
        %v2425 = vmul.f32 %v2417, %v2421
        %2430 = vrot.lane.b32.xlu0 %v2422, 96
        %v2431 = vpop.permute.xlu0 %2430
        %2432 = vrot.lane.b32.xlu0 %v2423, 96
        %v2433 = vpop.permute.xlu0 %2432
        %2434 = vrot.lane.b32.xlu0 %v2424, 96
        %v2435 = vpop.permute.xlu0 %2434
        %2436 = vrot.lane.b32.xlu0 %v2425, 96
        %v2437 = vpop.permute.xlu0 %2436
        %vm2442 = vcmask 1048320
        %2443 = vst.msk [vmem:[#allocation4] sm:$0xff] %vm2442, %v2431
        %2444 = vst.msk [vmem:[#allocation4 + $0x8] sm:$0xff] %vm2442, %v2433
        %2445 = vst.msk [vmem:[#allocation4 + $0x10] sm:$0xff] %vm2442, %v2435
        %2446 = vst.msk [vmem:[#allocation4 + $0x18] sm:$0xff] %vm2442, %v2437
        %v2447 = vld [vmem:[#allocation4] sm:$0xff]
        %v2448 = vld [vmem:[#allocation4 + $0x8] sm:$0xff]
        %v2449 = vld [vmem:[#allocation4 + $0x10] sm:$0xff]
        %v2450 = vld [vmem:[#allocation4 + $0x18] sm:$0xff]
        %v2451 = vld [vmem:[#allocation14] sm:$0xff]
        %v2452 = vld [vmem:[#allocation14 + $0x8] sm:$0xff]
        %v2453 = vld [vmem:[#allocation14 + $0x10] sm:$0xff]
        %v2454 = vld [vmem:[#allocation14 + $0x18] sm:$0xff]
        %v2455 = vld [vmem:[#allocation14 + $0x20] sm:$0xff]
        %v2456 = vld [vmem:[#allocation14 + $0x28] sm:$0xff]
        %v2457 = vld [vmem:[#allocation14 + $0x30] sm:$0xff]
        %v2458 = vld [vmem:[#allocation14 + $0x38] sm:$0xff]
        %v2459 = vld [vmem:[#allocation14 + $0x40] sm:$0xff]
        %v2460 = vld [vmem:[#allocation14 + $0x48] sm:$0xff]
        %v2461 = vld [vmem:[#allocation14 + $0x50] sm:$0xff]
        %v2462 = vld [vmem:[#allocation14 + $0x58] sm:$0xff]
        %v2463 = vld [vmem:[#allocation14 + $0x60] sm:$0xff]
        %v2464 = vld [vmem:[#allocation14 + $0x68] sm:$0xff]
        %v2465 = vld [vmem:[#allocation14 + $0x70] sm:$0xff]
        %v2466 = vld [vmem:[#allocation14 + $0x78] sm:$0xff]
        %s2467 = sld [smem:[#allocation5]]
        %v2468 = vld [vmem:[%s9] sm:$0x1]
        %v2470 = vlaneseq
        %v2471 = vshrl.u32 %v2470, 7
        %v2472 = vsub.s32 0, %v2471
        %v2473 = vrot.slane %v2468, %v2472
        %2475 = vmatprep.subr.mxu0 0.0
        %2476 = vmatpush1.msra.mxu0 %v2451
        %2477 = vmatprep.subr.mxu0 0.0
        %2478 = vmatpush1.msra.mxu0 %v2452
        %2479 = vmatprep.subr.mxu0 0.0
        %2480 = vmatpush1.msra.mxu0 %v2453
        %2481 = vmatprep.subr.mxu0 0.0
        %2482 = vmatpush1.msra.mxu0 %v2454
        %2483 = vmatprep.subr.mxu0 0.0
        %2484 = vmatpush1.msra.mxu0 %v2455
        %2485 = vmatprep.subr.mxu0 0.0
        %2486 = vmatpush1.msra.mxu0 %v2456
        %2487 = vmatprep.subr.mxu0 0.0
        %2488 = vmatpush1.msra.mxu0 %v2457
        %2489 = vmatprep.subr.mxu0 0.0
        %2490 = vmatpush1.msra.mxu0 %v2458
        %2491 = vmatprep.subr.mxu0 0.0
        %2492 = vmatpush1.msra.mxu0 %v2459
        %2493 = vmatprep.subr.mxu0 0.0
        %2494 = vmatpush1.msra.mxu0 %v2460
        %2495 = vmatprep.subr.mxu0 0.0
        %2496 = vmatpush1.msra.mxu0 %v2461
        %2497 = vmatprep.subr.mxu0 0.0
        %2498 = vmatpush1.msra.mxu0 %v2462
        %2499 = vmatprep.subr.mxu0 0.0
        %2500 = vmatpush1.msra.mxu0 %v2463
        %2501 = vmatprep.subr.mxu0 0.0
        %2502 = vmatpush1.msra.mxu0 %v2464
        %2503 = vmatprep.subr.mxu0 0.0
        %2504 = vmatpush1.msra.mxu0 %v2465
        %2505 = vmatprep.subr.mxu0 0.0
        %2506 = vmatpush1.msra.mxu0 %v2466
        %2507 = vmatprep.subr.mxu0 0.0
        %2508 = vmatpush1.msra.mxu0 0.0
        %2509 = vmatprep.subr.mxu0 0.0
        %2510 = vmatpush1.msra.mxu0 0.0
        %2511 = vmatprep.subr.mxu0 0.0
        %2512 = vmatpush1.msra.mxu0 0.0
        %2513 = vmatprep.subr.mxu0 0.0
        %2514 = vmatpush1.msra.mxu0 0.0
        %2515 = vmatprep.subr.mxu0 0.0
        %2516 = vmatpush1.msra.mxu0 0.0
        %2517 = vmatprep.subr.mxu0 0.0
        %2518 = vmatpush1.msra.mxu0 0.0
        %2519 = vmatprep.subr.mxu0 0.0
        %2520 = vmatpush1.msra.mxu0 0.0
        %2521 = vmatprep.subr.mxu0 0.0
        %2522 = vmatpush1.msra.mxu0 0.0
        %2523 = vmatprep.subr.mxu0 0.0
        %2524 = vmatpush1.msra.mxu0 0.0
        %2525 = vmatprep.subr.mxu0 0.0
        %2526 = vmatpush1.msra.mxu0 0.0
        %2527 = vmatprep.subr.mxu0 0.0
        %2528 = vmatpush1.msra.mxu0 0.0
        %2529 = vmatprep.subr.mxu0 0.0
        %2530 = vmatpush1.msra.mxu0 0.0
        %2531 = vmatprep.subr.mxu0 0.0
        %2532 = vmatpush1.msra.mxu0 0.0
        %2533 = vmatprep.subr.mxu0 0.0
        %2534 = vmatpush1.msra.mxu0 0.0
        %2535 = vmatprep.subr.mxu0 0.0
        %2536 = vmatpush1.msra.mxu0 0.0
        %2537 = vmatprep.subr.mxu0 0.0
        %2538 = vmatpush1.msra.mxu0 0.0
        %2539 = vmatprep.mubr.f32.mxu0 0.0
        %2540 = vmatmul.mubr.f32.gmra.mrb[0].mxu0 %v2447
        %v2541 = vpop.f32.mrb[0].mxu0
        %v2542 = vadd.f32 %v2473, %v2541
        %v2543 = vpop.f32.mrb[0].mxu0
        %2544 = vmatprep.mubr.f32.mxu0 0.0
        %2545 = vmatmul.mubr.f32.gmra.mrb[0].mxu0 %v2448
        %v2546 = vpop.f32.mrb[0].mxu0
        %v2547 = vadd.f32 %v2473, %v2546
        %v2548 = vpop.f32.mrb[0].mxu0
        %2549 = vmatprep.mubr.f32.mxu0 0.0
        %2550 = vmatmul.mubr.f32.gmra.mrb[0].mxu0 %v2449
        %v2551 = vpop.f32.mrb[0].mxu0
        %v2552 = vadd.f32 %v2473, %v2551
        %v2553 = vpop.f32.mrb[0].mxu0
        %2554 = vmatprep.mubr.f32.mxu0 0.0
        %2555 = vmatmul.mubr.f32.gmra.mrb[0].mxu0 %v2450
        %v2556 = vpop.f32.mrb[0].mxu0
        %v2557 = vadd.f32 %v2473, %v2556
        %v2558 = vpop.f32.mrb[0].mxu0
        %2559 = vdwg.mxu0
        %v2560 = vstv %s2467
        %v2561 = vmul.f32 %v2560, %v2542
        %v2562 = vmul.f32 %v2560, %v2547
        %v2563 = vmul.f32 %v2560, %v2552
        %v2564 = vmul.f32 %v2560, %v2557
        %v2565 = vadd.f32 %v1011, %v2561
        %v2566 = vadd.f32 %v1012, %v2562
        %v2567 = vadd.f32 %v1013, %v2563
        %v2568 = vadd.f32 %v1014, %v2564
        %v2569 = vld [vmem:[#allocation15] sm:$0xff]
        %v2570 = vld [vmem:[#allocation15 + $0x8] sm:$0xff]
        %v2571 = vld [vmem:[#allocation15 + $0x10] sm:$0xff]
        %v2572 = vld [vmem:[#allocation15 + $0x18] sm:$0xff]
        %v2573 = vld [vmem:[#allocation15 + $0x20] sm:$0xff]
        %v2574 = vld [vmem:[#allocation15 + $0x28] sm:$0xff]
        %v2575 = vld [vmem:[#allocation15 + $0x30] sm:$0xff]
        %v2576 = vld [vmem:[#allocation15 + $0x38] sm:$0xff]
        %v2577 = vld [vmem:[#allocation15 + $0x40] sm:$0xff]
        %v2578 = vld [vmem:[#allocation15 + $0x48] sm:$0xff]
        %v2579 = vld [vmem:[#allocation15 + $0x50] sm:$0xff]
        %v2580 = vld [vmem:[#allocation15 + $0x58] sm:$0xff]
        %v2581 = vld [vmem:[#allocation15 + $0x60] sm:$0xff]
        %v2582 = vld [vmem:[#allocation15 + $0x68] sm:$0xff]
        %v2583 = vld [vmem:[#allocation15 + $0x70] sm:$0xff]
        %v2584 = vld [vmem:[#allocation15 + $0x78] sm:$0xff]
        %v2585 = vld [vmem:[#allocation15 + $0x80] sm:$0xff]
        %v2586 = vld [vmem:[#allocation15 + $0x88] sm:$0xff]
        %v2587 = vld [vmem:[#allocation15 + $0x90] sm:$0xff]
        %v2588 = vld [vmem:[#allocation15 + $0x98] sm:$0xff]
        %v2589 = vld [vmem:[#allocation15 + $0xa0] sm:$0xff]
        %v2590 = vld [vmem:[#allocation15 + $0xa8] sm:$0xff]
        %v2591 = vld [vmem:[#allocation15 + $0xb0] sm:$0xff]
        %v2592 = vld [vmem:[#allocation15 + $0xb8] sm:$0xff]
        %v2593 = vld [vmem:[#allocation15 + $0xc0] sm:$0xff]
        %v2594 = vld [vmem:[#allocation15 + $0xc8] sm:$0xff]
        %v2595 = vld [vmem:[#allocation15 + $0xd0] sm:$0xff]
        %v2596 = vld [vmem:[#allocation15 + $0xd8] sm:$0xff]
        %v2597 = vld [vmem:[#allocation15 + $0xe0] sm:$0xff]
        %v2598 = vld [vmem:[#allocation15 + $0xe8] sm:$0xff]
        %v2599 = vld [vmem:[#allocation15 + $0xf0] sm:$0xff]
        %v2600 = vld [vmem:[#allocation15 + $0xf8] sm:$0xff]
        %v2601 = vld [vmem:[%s11] sm:$0x3]
        %v2603 = vlaneseq
        %v2604 = vshrl.u32 %v2603, 7
        %v2605 = vsub.s32 0, %v2604
        %v2606 = vrot.slane %v2601, %v2605
        %v2607 = vlaneseq
        %v2608 = vshrl.u32 %v2607, 7
        %v2609 = vsub.s32 1, %v2608
        %v2610 = vrot.slane %v2601, %v2609
        %2613 = vmatprep.subr.mxu0 %v2570
        %2614 = vmatpush1.msra.mxu0 %v2569
        %2615 = vmatprep.subr.mxu0 %v2572
        %2616 = vmatpush1.msra.mxu0 %v2571
        %2617 = vmatprep.subr.mxu0 %v2574
        %2618 = vmatpush1.msra.mxu0 %v2573
        %2619 = vmatprep.subr.mxu0 %v2576
        %2620 = vmatpush1.msra.mxu0 %v2575
        %2621 = vmatprep.subr.mxu0 %v2578
        %2622 = vmatpush1.msra.mxu0 %v2577
        %2623 = vmatprep.subr.mxu0 %v2580
        %2624 = vmatpush1.msra.mxu0 %v2579
        %2625 = vmatprep.subr.mxu0 %v2582
        %2626 = vmatpush1.msra.mxu0 %v2581
        %2627 = vmatprep.subr.mxu0 %v2584
        %2628 = vmatpush1.msra.mxu0 %v2583
        %2629 = vmatprep.subr.mxu0 %v2586
        %2630 = vmatpush1.msra.mxu0 %v2585
        %2631 = vmatprep.subr.mxu0 %v2588
        %2632 = vmatpush1.msra.mxu0 %v2587
        %2633 = vmatprep.subr.mxu0 %v2590
        %2634 = vmatpush1.msra.mxu0 %v2589
        %2635 = vmatprep.subr.mxu0 %v2592
        %2636 = vmatpush1.msra.mxu0 %v2591
        %2637 = vmatprep.subr.mxu0 %v2594
        %2638 = vmatpush1.msra.mxu0 %v2593
        %2639 = vmatprep.subr.mxu0 %v2596
        %2640 = vmatpush1.msra.mxu0 %v2595
        %2641 = vmatprep.subr.mxu0 %v2598
        %2642 = vmatpush1.msra.mxu0 %v2597
        %2643 = vmatprep.subr.mxu0 %v2600
        %2644 = vmatpush1.msra.mxu0 %v2599
        %2645 = vmatprep.subr.mxu0 0.0
        %2646 = vmatpush1.msra.mxu0 0.0
        %2647 = vmatprep.subr.mxu0 0.0
        %2648 = vmatpush1.msra.mxu0 0.0
        %2649 = vmatprep.subr.mxu0 0.0
        %2650 = vmatpush1.msra.mxu0 0.0
        %2651 = vmatprep.subr.mxu0 0.0
        %2652 = vmatpush1.msra.mxu0 0.0
        %2653 = vmatprep.subr.mxu0 0.0
        %2654 = vmatpush1.msra.mxu0 0.0
        %2655 = vmatprep.subr.mxu0 0.0
        %2656 = vmatpush1.msra.mxu0 0.0
        %2657 = vmatprep.subr.mxu0 0.0
        %2658 = vmatpush1.msra.mxu0 0.0
        %2659 = vmatprep.subr.mxu0 0.0
        %2660 = vmatpush1.msra.mxu0 0.0
        %2661 = vmatprep.subr.mxu0 0.0
        %2662 = vmatpush1.msra.mxu0 0.0
        %2663 = vmatprep.subr.mxu0 0.0
        %2664 = vmatpush1.msra.mxu0 0.0
        %2665 = vmatprep.subr.mxu0 0.0
        %2666 = vmatpush1.msra.mxu0 0.0
        %2667 = vmatprep.subr.mxu0 0.0
        %2668 = vmatpush1.msra.mxu0 0.0
        %2669 = vmatprep.subr.mxu0 0.0
        %2670 = vmatpush1.msra.mxu0 0.0
        %2671 = vmatprep.subr.mxu0 0.0
        %2672 = vmatpush1.msra.mxu0 0.0
        %2673 = vmatprep.subr.mxu0 0.0
        %2674 = vmatpush1.msra.mxu0 0.0
        %2675 = vmatprep.subr.mxu0 0.0
        %2676 = vmatpush1.msra.mxu0 0.0
        %2677 = vmatprep.mubr.f32.mxu0 0.0
        %2678 = vmatmul.mubr.f32.gmra.mrb[0].mxu0 %v2565
        %v2679 = vpop.f32.mrb[0].mxu0
        %v2680 = vadd.f32 %v2606, %v2679
        %v2681 = vpop.f32.mrb[0].mxu0
        %v2682 = vadd.f32 %v2610, %v2681
        %2683 = vmatprep.mubr.f32.mxu0 0.0
        %2684 = vmatmul.mubr.f32.gmra.mrb[0].mxu0 %v2566
        %v2685 = vpop.f32.mrb[0].mxu0
        %v2686 = vadd.f32 %v2606, %v2685
        %v2687 = vpop.f32.mrb[0].mxu0
        %v2688 = vadd.f32 %v2610, %v2687
        %2689 = vmatprep.mubr.f32.mxu0 0.0
        %2690 = vmatmul.mubr.f32.gmra.mrb[0].mxu0 %v2567
        %v2691 = vpop.f32.mrb[0].mxu0
        %v2692 = vadd.f32 %v2606, %v2691
        %v2693 = vpop.f32.mrb[0].mxu0
        %v2694 = vadd.f32 %v2610, %v2693
        %2695 = vmatprep.mubr.f32.mxu0 0.0
        %2696 = vmatmul.mubr.f32.gmra.mrb[0].mxu0 %v2568
        %v2697 = vpop.f32.mrb[0].mxu0
        %v2698 = vadd.f32 %v2606, %v2697
        %v2699 = vpop.f32.mrb[0].mxu0
        %v2700 = vadd.f32 %v2610, %v2699
        %2701 = vdwg.mxu0
        %v2702 = vmax.f32 %v2680, 0.0
        %v2703 = vmax.f32 %v2682, 0.0
        %v2704 = vmax.f32 %v2686, 0.0
        %v2705 = vmax.f32 %v2688, 0.0
        %v2706 = vmax.f32 %v2692, 0.0
        %v2707 = vmax.f32 %v2694, 0.0
        %v2708 = vmax.f32 %v2698, 0.0
        %v2709 = vmax.f32 %v2700, 0.0
        %v2710 = vld [vmem:[#allocation17] sm:$0xff]
        %v2711 = vld [vmem:[#allocation17 + $0x8] sm:$0xff]
        %v2712 = vld [vmem:[#allocation17 + $0x10] sm:$0xff]
        %v2713 = vld [vmem:[#allocation17 + $0x18] sm:$0xff]
        %v2714 = vld [vmem:[#allocation17 + $0x20] sm:$0xff]
        %v2715 = vld [vmem:[#allocation17 + $0x28] sm:$0xff]
        %v2716 = vld [vmem:[#allocation17 + $0x30] sm:$0xff]
        %v2717 = vld [vmem:[#allocation17 + $0x38] sm:$0xff]
        %v2718 = vld [vmem:[#allocation17 + $0x40] sm:$0xff]
        %v2719 = vld [vmem:[#allocation17 + $0x48] sm:$0xff]
        %v2720 = vld [vmem:[#allocation17 + $0x50] sm:$0xff]
        %v2721 = vld [vmem:[#allocation17 + $0x58] sm:$0xff]
        %v2722 = vld [vmem:[#allocation17 + $0x60] sm:$0xff]
        %v2723 = vld [vmem:[#allocation17 + $0x68] sm:$0xff]
        %v2724 = vld [vmem:[#allocation17 + $0x70] sm:$0xff]
        %v2725 = vld [vmem:[#allocation17 + $0x78] sm:$0xff]
        %v2726 = vld [vmem:[#allocation17 + $0x80] sm:$0xff]
        %v2727 = vld [vmem:[#allocation17 + $0x88] sm:$0xff]
        %v2728 = vld [vmem:[#allocation17 + $0x90] sm:$0xff]
        %v2729 = vld [vmem:[#allocation17 + $0x98] sm:$0xff]
        %v2730 = vld [vmem:[#allocation17 + $0xa0] sm:$0xff]
        %v2731 = vld [vmem:[#allocation17 + $0xa8] sm:$0xff]
        %v2732 = vld [vmem:[#allocation17 + $0xb0] sm:$0xff]
        %v2733 = vld [vmem:[#allocation17 + $0xb8] sm:$0xff]
        %v2734 = vld [vmem:[#allocation17 + $0xc0] sm:$0xff]
        %v2735 = vld [vmem:[#allocation17 + $0xc8] sm:$0xff]
        %v2736 = vld [vmem:[#allocation17 + $0xd0] sm:$0xff]
        %v2737 = vld [vmem:[#allocation17 + $0xd8] sm:$0xff]
        %v2738 = vld [vmem:[#allocation17 + $0xe0] sm:$0xff]
        %v2739 = vld [vmem:[#allocation17 + $0xe8] sm:$0xff]
        %v2740 = vld [vmem:[#allocation17 + $0xf0] sm:$0xff]
        %v2741 = vld [vmem:[#allocation17 + $0xf8] sm:$0xff]
        %v2742 = vld [vmem:[%s13] sm:$0x1]
        %v2744 = vlaneseq
        %v2745 = vshrl.u32 %v2744, 7
        %v2746 = vsub.s32 0, %v2745
        %v2747 = vrot.slane %v2742, %v2746
        %2749 = vmatprep.subr.mxu0 0.0
        %2750 = vmatpush1.msra.mxu0 %v2710
        %2751 = vmatprep.subr.mxu0 0.0
        %2752 = vmatpush1.msra.mxu0 %v2711
        %2753 = vmatprep.subr.mxu0 0.0
        %2754 = vmatpush1.msra.mxu0 %v2712
        %2755 = vmatprep.subr.mxu0 0.0
        %2756 = vmatpush1.msra.mxu0 %v2713
        %2757 = vmatprep.subr.mxu0 0.0
        %2758 = vmatpush1.msra.mxu0 %v2714
        %2759 = vmatprep.subr.mxu0 0.0
        %2760 = vmatpush1.msra.mxu0 %v2715
        %2761 = vmatprep.subr.mxu0 0.0
        %2762 = vmatpush1.msra.mxu0 %v2716
        %2763 = vmatprep.subr.mxu0 0.0
        %2764 = vmatpush1.msra.mxu0 %v2717
        %2765 = vmatprep.subr.mxu0 0.0
        %2766 = vmatpush1.msra.mxu0 %v2718
        %2767 = vmatprep.subr.mxu0 0.0
        %2768 = vmatpush1.msra.mxu0 %v2719
        %2769 = vmatprep.subr.mxu0 0.0
        %2770 = vmatpush1.msra.mxu0 %v2720
        %2771 = vmatprep.subr.mxu0 0.0
        %2772 = vmatpush1.msra.mxu0 %v2721
        %2773 = vmatprep.subr.mxu0 0.0
        %2774 = vmatpush1.msra.mxu0 %v2722
        %2775 = vmatprep.subr.mxu0 0.0
        %2776 = vmatpush1.msra.mxu0 %v2723
        %2777 = vmatprep.subr.mxu0 0.0
        %2778 = vmatpush1.msra.mxu0 %v2724
        %2779 = vmatprep.subr.mxu0 0.0
        %2780 = vmatpush1.msra.mxu0 %v2725
        %2781 = vmatprep.subr.mxu0 0.0
        %2782 = vmatpush1.msra.mxu0 %v2726
        %2783 = vmatprep.subr.mxu0 0.0
        %2784 = vmatpush1.msra.mxu0 %v2727
        %2785 = vmatprep.subr.mxu0 0.0
        %2786 = vmatpush1.msra.mxu0 %v2728
        %2787 = vmatprep.subr.mxu0 0.0
        %2788 = vmatpush1.msra.mxu0 %v2729
        %2789 = vmatprep.subr.mxu0 0.0
        %2790 = vmatpush1.msra.mxu0 %v2730
        %2791 = vmatprep.subr.mxu0 0.0
        %2792 = vmatpush1.msra.mxu0 %v2731
        %2793 = vmatprep.subr.mxu0 0.0
        %2794 = vmatpush1.msra.mxu0 %v2732
        %2795 = vmatprep.subr.mxu0 0.0
        %2796 = vmatpush1.msra.mxu0 %v2733
        %2797 = vmatprep.subr.mxu0 0.0
        %2798 = vmatpush1.msra.mxu0 %v2734
        %2799 = vmatprep.subr.mxu0 0.0
        %2800 = vmatpush1.msra.mxu0 %v2735
        %2801 = vmatprep.subr.mxu0 0.0
        %2802 = vmatpush1.msra.mxu0 %v2736
        %2803 = vmatprep.subr.mxu0 0.0
        %2804 = vmatpush1.msra.mxu0 %v2737
        %2805 = vmatprep.subr.mxu0 0.0
        %2806 = vmatpush1.msra.mxu0 %v2738
        %2807 = vmatprep.subr.mxu0 0.0
        %2808 = vmatpush1.msra.mxu0 %v2739
        %2809 = vmatprep.subr.mxu0 0.0
        %2810 = vmatpush1.msra.mxu0 %v2740
        %2811 = vmatprep.subr.mxu0 0.0
        %2812 = vmatpush1.msra.mxu0 %v2741
        %2813 = vmatprep.mubr.f32.mxu0 %v2703
        %2814 = vmatmul.mubr.f32.gmra.mrb[0].mxu0 %v2702
        %v2815 = vpop.f32.mrb[0].mxu0
        %v2816 = vadd.f32 %v2747, %v2815
        %v2817 = vpop.f32.mrb[0].mxu0
        %2818 = vmatprep.mubr.f32.mxu0 %v2705
        %2819 = vmatmul.mubr.f32.gmra.mrb[0].mxu0 %v2704
        %v2820 = vpop.f32.mrb[0].mxu0
        %v2821 = vadd.f32 %v2747, %v2820
        %v2822 = vpop.f32.mrb[0].mxu0
        %2823 = vmatprep.mubr.f32.mxu0 %v2707
        %2824 = vmatmul.mubr.f32.gmra.mrb[0].mxu0 %v2706
        %v2825 = vpop.f32.mrb[0].mxu0
        %v2826 = vadd.f32 %v2747, %v2825
        %v2827 = vpop.f32.mrb[0].mxu0
        %2828 = vmatprep.mubr.f32.mxu0 %v2709
        %2829 = vmatmul.mubr.f32.gmra.mrb[0].mxu0 %v2708
        %v2830 = vpop.f32.mrb[0].mxu0
        %v2831 = vadd.f32 %v2747, %v2830
        %v2832 = vpop.f32.mrb[0].mxu0
        %2833 = vdwg.mxu0
        %v2834 = vmul.f32 %v2560, %v2816
        %v2835 = vmul.f32 %v2560, %v2821
        %v2836 = vmul.f32 %v2560, %v2826
        %v2837 = vmul.f32 %v2560, %v2831
        %v2838 = vadd.f32 %v2565, %v2834
        %v2839 = vadd.f32 %v2566, %v2835
        %v2840 = vadd.f32 %v2567, %v2836
        %v2841 = vadd.f32 %v2568, %v2837
        %2842 = vst [vmem:[%s587] sm:$0xff] %v2838
        %2843 = vst [vmem:[%s587 + $0x8] sm:$0xff] %v2839
        %2844 = vst [vmem:[%s587 + $0x10] sm:$0xff] %v2840
        %2845 = vst [vmem:[%s587 + $0x18] sm:$0xff] %v2841
        %s2846 = sand.u32 %s356, 1
        %s2847 = scalar_lea.sflag [#allocation8], %s2846
        %s2848 = sand.u32 %s356, 1
        %s2849 = smul.addr %s2848, 32
        %s2850 = scalar_lea.vmem [#allocation18], %s2849
        // Predicated region
        $region109: #{tpu_custom_call.1} parent=75 // pred_check
          %p2851 = pneg %p366
        $region110: #{tpu_custom_call.1} parent=75 // pred_check_branch
          %2853 = sbr.rel (%p2851) target = $region112
        $region111: #{tpu_custom_call.1} parent=75 // pred_region
          %s2854 = smul.u32 4, %s40
          %s2856 = ssub.s32 512, 512
          %2857 = vsyncadd %s2847, %s2856
          %s2858 = smul.addr %s39, 16
          %s2859 = sadd.s32 %s2854, %s2858
          %s2860 = smul.addr %s2859, 128
          %s2861 = scalar_lea.hbm %s14, %s2860
          %s2862 = sshll.u32 %s2850, 4
          %s2863 = int_to_ptr.vmem [resolvable:$true] %s2862
          %2868 = dma.vmem_to_hbm [thread:$0]  %s2863, 512, %s2861, %s2847, 128, 128, 8
        $region112: #{tpu_custom_call.1} parent=75 // pred_fallthru
          _
      $region76: #{tpu_custom_call.1} parent=5 // pred_fallthru
        _
      %p2869 = scmp.le.s32.totalorder 2, %s30
      // Predicated region
      $region113: #{tpu_custom_call.1} parent=5 // pred_check
        %p2870 = pneg %p2869
      $region114: #{tpu_custom_call.1} parent=5 // pred_check_branch
        %2872 = sbr.rel (%p2870) target = $region116
      $region115: #{tpu_custom_call.1} parent=5 // pred_region
        %s2873 = ssub.s32 %s30, 2
        // Predicated region
        $region117: #{tpu_custom_call.1} parent=115 // pred_check
          %p2874 = pneg %p372
        $region118: #{tpu_custom_call.1} parent=115 // pred_check_branch
          %2876 = sbr.rel (%p2874) target = $region120
        $region119: #{tpu_custom_call.1} parent=115 // pred_region
          %s2877 = sand.u32 %s357, 1
          %s2878 = scalar_lea.sflag [#allocation8], %s2877
          %s2879 = sand.u32 %s357, 1
          %s2880 = smul.addr %s2879, 32
          %s2881 = scalar_lea.vmem [#allocation18], %s2880
          %2882 = dma.done %s2878, 512
        $region120: #{tpu_custom_call.1} parent=115 // pred_fallthru
          _
      $region116: #{tpu_custom_call.1} parent=5 // pred_fallthru
        _
    $region6: #{tpu_custom_call.1} parent=1 // loop_footer
      %s34 = sadd.s32 1, %s30
    $region7: #{tpu_custom_call.1} parent=1 // loop_footer_branch
      %29 = sbr.rel target = $region3
    $region8: #{tpu_custom_call.1} parent=1 // loop_exit
      _
    %2883 = vsyncpa [#allocation7], 1
    %s2884 = scalar_lea.sflag [#allocation7], 1
    %2885 = vsyncpa %s2884, 1
    %2886 = vsyncpa [#allocation10], 1
    %2887 = vsyncpa [#allocation13], 1
    %2888 = vsyncpa [#allocation16], 1
    %2889 = vsyncpa [#allocation8], 1
    %s2890 = scalar_lea.sflag [#allocation8], 1
    %2891 = vsyncpa %s2890, 1

</llo_original>
